<compile_context>
chip_gen: v7x
topology: tpu7x:2x2x1
jax: 0.10.0
libtpu: 0.0.40
codegen_flags: <defaults>
</compile_context>

<pallas_src>
import numpy as np
import jax
import jax.numpy as jnp
from jax import lax
from jax.experimental import pallas as pl
from jax.experimental.pallas import tpu as pltpu


# ----------------------------- Pallas kernel -----------------------------

def lenet_kernel(p1_ref, w1_ref, b1_ref, w2_ref, b2_ref,
                 fw1_ref, fb1_ref, fw2_ref, fb2_ref, fw3_ref, fb3_ref,
                 out_ref):
    """Whole LeNet forward on one VMEM-resident block.

    p1_ref : (9, N*7*15, 9)   stage-1 im2col, duplicated g-major over conv2's
                              3x3 pooled receptive field (g = 3a+b).
    w1_ref : (9, 4*5)         conv1 2x2 kernel scattered into its 3x3 pooled
                              receptive field, 4 pool candidates concatenated.
    w2_ref : (9, 5, 4*15)     conv2 weights, per receptive-field position g.
    fw1_ref: (15, 105, 120)   fc1 weights with the NCHW flatten folded in.
    out_ref: (N, 3)
    """
    groups = p1_ref.shape[0]          # 9
    rows = p1_ref.shape[1]            # N * 7 * 15
    c1 = b1_ref.shape[1]              # 5
    c2 = b2_ref.shape[1]              # 15
    batch = out_ref.shape[0]          # N
    per_sample = rows // batch        # 105

    def pool_max(cand, c):
        # cand: (rows, 4*c) -- the 4 maxpool candidates concatenated on lanes.
        return jnp.maximum(jnp.maximum(cand[:, 0:c], cand[:, c:2 * c]),
                           jnp.maximum(cand[:, 2 * c:3 * c], cand[:, 3 * c:4 * c]))

    # ---- conv1+ReLU+pool fused with conv2+ReLU+pool -------------------------
    b1 = b1_ref[...]
    cand2 = jnp.zeros((rows, 4 * c2), jnp.float32)
    for g in range(groups):           # 9 receptive-field positions, unrolled
        cand1 = jnp.dot(p1_ref[g], w1_ref[...],
                        preferred_element_type=jnp.float32)         # (rows, 20)
        y1g = jnp.maximum(pool_max(cand1, c1) + b1, 0.0)             # (rows, 5)
        cand2 = cand2 + jnp.dot(y1g, w2_ref[g],
                                preferred_element_type=jnp.float32)  # (rows, 60)
    act2 = jnp.maximum(pool_max(cand2, c2) + b2_ref[...], 0.0)       # (rows, 15)

    # ---- fc1, with the NCHW flatten folded into fw1's (c, p, o) layout ------
    #   h[n, o] = sum_{c,p} act2[n*105 + p, c] * fw1[c, p, o]
    ones_row = jnp.ones((1, per_sample), jnp.float32)
    h_rows = []
    for s in range(batch):            # N = 2, unrolled
        blk = act2[s * per_sample:(s + 1) * per_sample, :]           # (105, 15)
        acc = blk[:, 0:1] * fw1_ref[0]
        for c in range(1, c2):
            acc = acc + blk[:, c:c + 1] * fw1_ref[c]                 # (105, 120)
        h_rows.append(jnp.dot(ones_row, acc,
                              preferred_element_type=jnp.float32))   # (1, 120)
    h = jnp.maximum(jnp.concatenate(h_rows, axis=0) + fb1_ref[...], 0.0)

    # ---- fc2, fc3 ------------------------------------------------------------
    h = jnp.maximum(jnp.dot(h, fw2_ref[...],
                            preferred_element_type=jnp.float32) + fb2_ref[...], 0.0)
    out_ref[...] = (jnp.dot(h, fw3_ref[...],
                            preferred_element_type=jnp.float32) + fb3_ref[...])


# ------------------------------ pallas_call wrapper ------------------------------

def _full_spec(shape):
    nd = len(shape)
    return pl.BlockSpec(shape, lambda i, nd=nd: (0,) * nd)


def lenet_forward_pallas(x_nchw, params):
    n = x_nchw.shape[0]
    p1 = build_stage1_patches(x_nchw.astype(jnp.float32))   # (9, N*105, 9)
    args = (p1,
            params["w1cat"], params["b1"],
            params["w2cat"], params["b2"],
            params["fw1_3d"], params["fb1"],
            params["fw2"], params["fb2"],
            params["fw3"], params["fb3"])
    # Total working set < 2.5 MiB, so a single VMEM-resident block with
    # grid=(1,) is optimal at this batch size.  For large batches, tile the
    # row dimension of p1 / the output over a grid axis marked "parallel"
    # (uses both TensorCores on v7x and keeps VMEM bounded).
    return pl.pallas_call(
        lenet_kernel,
        out_shape=jax.ShapeDtypeStruct((n, 3), jnp.float32),
        grid=(1,),
        in_specs=[_full_spec(a.shape) for a in args],
        out_specs=_full_spec((n, 3)),
        compiler_params=pltpu.CompilerParams(dimension_semantics=("arbitrary",)),
    )(*args)


# ------------------------------ plain-JAX glue ------------------------------

def build_stage1_patches(x_nchw):
    """x (N,1,31,63) -> (9, N*7*15, 9) stage-1 im2col, g-major duplication.

    p1[3a+b, n*105 + i*15 + j, 3dy+dx] = x[n, 0, 4i + 2a + dy, 4j + 2b + dx],
    i.e. the 3x3 input patch feeding conv1-pool output pixel (2i+a, 2j+b),
    which is position (a, b) of conv2-pool output (i, j)'s receptive field.
    """
    n = x_nchw.shape[0]
    xs = x_nchw[:, 0]                                              # (N, 31, 63)
    i = jnp.arange(7)
    j = jnp.arange(15)
    a = jnp.arange(3)
    d = jnp.arange(3)
    rr = 4 * i[:, None, None] + 2 * a[None, :, None] + d[None, None, :]  # (7,3,3)
    cc = 4 * j[:, None, None] + 2 * a[None, :, None] + d[None, None, :]  # (15,3,3)
    p = xs[:, rr]                        # (N, 7, 3, 3, 63)
    p = p[:, :, :, :, cc]                # (N, 7, 3, 3, 15, 3, 3) = (n,i,a,dy,j,b,dx)
    p = jnp.transpose(p, (2, 5, 0, 1, 4, 3, 6))                    # (a,b,n,i,j,dy,dx)
    return p.reshape(9, n * 7 * 15, 9)


def pack_conv1(w1):
    """(5, 1, 2, 2) -> (9, 4*5): 2x2 kernel scattered into the 3x3 pooled
    receptive field, the 4 pool candidates concatenated along the output axis."""
    w1 = np.asarray(w1)
    c_out = w1.shape[0]
    out = np.zeros((9, 4 * c_out), np.float32)
    for m, (d0, d1) in enumerate(((0, 0), (0, 1), (1, 0), (1, 1))):
        for k0 in range(2):
            for k1 in range(2):
                out[(d0 + k0) * 3 + (d1 + k1), m * c_out:(m + 1) * c_out] = w1[:, 0, k0, k1]
    return jnp.asarray(out)


def pack_conv2(w2):
    """(15, 5, 2, 2) -> (9, 5, 4*15): per receptive-field position g = 3a+b, the
    conv2 weight that multiplies y1[., 2i+a, 2j+b, :] for each pool candidate."""
    w2 = np.asarray(w2)
    c_out, c_in = w2.shape[0], w2.shape[1]
    out = np.zeros((9, c_in, 4 * c_out), np.float32)
    for m, (d0, d1) in enumerate(((0, 0), (0, 1), (1, 0), (1, 1))):
        for k0 in range(2):
            for k1 in range(2):
                g = (d0 + k0) * 3 + (d1 + k1)
                out[g, :, m * c_out:(m + 1) * c_out] = w2[:, :, k0, k1].T
    return jnp.asarray(out)


# ------------------------------ pure-JAX reference ------------------------------

def lenet_forward_ref(x_nchw, raw):
    def conv(x, w, b):
        y = lax.conv_general_dilated(x, w, (1, 1), "VALID",
                                     dimension_numbers=("NCHW", "OIHW", "NCHW"))
        return y + b[None, :, None, None]

    def pool(x):
        return lax.reduce_window(x, -jnp.inf, lax.max,
                                 (1, 1, 2, 2), (1, 1, 2, 2), "VALID")

    y = pool(jax.nn.relu(conv(x_nchw, raw["w1"], raw["b1"])))
    y = pool(jax.nn.relu(conv(y, raw["w2"], raw["b2"])))
    y = y.reshape(y.shape[0], -1)
    y = jax.nn.relu(jnp.dot(y, raw["fw1"]) + raw["fb1"])
    y = jax.nn.relu(jnp.dot(y, raw["fw2"]) + raw["fb2"])
    return jnp.dot(y, raw["fw3"]) + raw["fb3"]


# ------------------------------ main ------------------------------

if __name__ == "__main__":
    key = jax.random.PRNGKey(0)
    keys = jax.random.split(key, 8)

    # Input: (N, C, H, W) = (2, 1, 31, 63) — the spatial size implied by
    # the module's flatten to 15*7*15.
    x = jax.random.normal(keys[0], (2, 1, 31, 63), jnp.float32)

    # Deterministic synthetic parameters (shapes from LeNet.__init__).
    raw = {
        "w1": 0.2 * jax.random.normal(keys[1], (5, 1, 2, 2), jnp.float32),
        "b1": 0.1 * jax.random.normal(keys[2], (5,), jnp.float32),
        "w2": 0.2 * jax.random.normal(keys[3], (15, 5, 2, 2), jnp.float32),
        "b2": 0.1 * jax.random.normal(keys[4], (15,), jnp.float32),
        # Linear weights stored as (in, out) == PyTorch weight.T
        "fw1": 0.05 * jax.random.normal(keys[5], (15 * 7 * 15, 120), jnp.float32),
        "fb1": jnp.zeros((120,), jnp.float32) + 0.01,
        "fw2": 0.05 * jax.random.normal(keys[6], (120, 84), jnp.float32),
        "fb2": jnp.zeros((84,), jnp.float32) + 0.01,
        "fw3": 0.05 * jax.random.normal(keys[7], (84, 3), jnp.float32),
        "fb3": jnp.zeros((3,), jnp.float32),
    }

    params = {
        "w1cat": pack_conv1(raw["w1"]),                    # (9, 20)
        "b1": raw["b1"].reshape(1, -1),
        "w2cat": pack_conv2(raw["w2"]),                    # (9, 5, 60)
        "b2": raw["b2"].reshape(1, -1),
        # fc1 weight with the NCHW flatten folded into a (C2, H*W, out) layout.
        "fw1_3d": raw["fw1"].reshape(15, 7 * 15, 120),
        "fb1": raw["fb1"].reshape(1, -1),
        "fw2": raw["fw2"], "fb2": raw["fb2"].reshape(1, -1),
        "fw3": raw["fw3"], "fb3": raw["fb3"].reshape(1, -1),
    }

    fwd = jax.jit(lenet_forward_pallas)
    out = jax.block_until_ready(fwd(x, params))

    ref = jax.block_until_ready(lenet_forward_ref(x, raw))
    # Tolerance accounts for default (bf16-pass) MXU precision in the kernel's
    # matmuls vs. the XLA reference.
    np.testing.assert_allclose(np.asarray(out), np.asarray(ref),
                               rtol=2e-2, atol=2e-2)

    assert out.shape == (2, 3)
    print("KERNEL_OK")
</pallas_src>

<mosaic_0001>
module attributes {stable_mosaic.version = 11 : i64} {
  func.func @lenet_kernel(%arg0: i32, %arg1: memref<9x210x9xf32, #tpu.memory_space<vmem>>, %arg2: memref<9x20xf32, #tpu.memory_space<vmem>>, %arg3: memref<1x5xf32, #tpu.memory_space<vmem>>, %arg4: memref<9x5x60xf32, #tpu.memory_space<vmem>>, %arg5: memref<1x15xf32, #tpu.memory_space<vmem>>, %arg6: memref<15x105x120xf32, #tpu.memory_space<vmem>>, %arg7: memref<1x120xf32, #tpu.memory_space<vmem>>, %arg8: memref<120x84xf32, #tpu.memory_space<vmem>>, %arg9: memref<1x84xf32, #tpu.memory_space<vmem>>, %arg10: memref<84x3xf32, #tpu.memory_space<vmem>>, %arg11: memref<1x3xf32, #tpu.memory_space<vmem>>, %arg12: memref<2x3xf32, #tpu.memory_space<vmem>>) attributes {dimension_semantics = [#tpu.dimension_semantics<arbitrary>], iteration_bounds = array<i64: 1>, scalar_prefetch = 0 : i64, scratch_operands = 0 : i64, tpu.core_type = #tpu.core_type<tc>, window_params = [{pipeline_mode = #tpu.pipeline_mode<synchronous>, transform_indices = @transform_0, window_bounds = array<i64: 9, 210, 9>}, {pipeline_mode = #tpu.pipeline_mode<synchronous>, transform_indices = @transform_1, window_bounds = array<i64: 9, 20>}, {pipeline_mode = #tpu.pipeline_mode<synchronous>, transform_indices = @transform_2, window_bounds = array<i64: 1, 5>}, {pipeline_mode = #tpu.pipeline_mode<synchronous>, transform_indices = @transform_3, window_bounds = array<i64: 9, 5, 60>}, {pipeline_mode = #tpu.pipeline_mode<synchronous>, transform_indices = @transform_4, window_bounds = array<i64: 1, 15>}, {pipeline_mode = #tpu.pipeline_mode<synchronous>, transform_indices = @transform_5, window_bounds = array<i64: 15, 105, 120>}, {pipeline_mode = #tpu.pipeline_mode<synchronous>, transform_indices = @transform_6, window_bounds = array<i64: 1, 120>}, {pipeline_mode = #tpu.pipeline_mode<synchronous>, transform_indices = @transform_7, window_bounds = array<i64: 120, 84>}, {pipeline_mode = #tpu.pipeline_mode<synchronous>, transform_indices = @transform_8, window_bounds = array<i64: 1, 84>}, {pipeline_mode = #tpu.pipeline_mode<synchronous>, transform_indices = @transform_9, window_bounds = array<i64: 84, 3>}, {pipeline_mode = #tpu.pipeline_mode<synchronous>, transform_indices = @transform_10, window_bounds = array<i64: 1, 3>}, {pipeline_mode = #tpu.pipeline_mode<synchronous>, transform_indices = @transform_11, window_bounds = array<i64: 2, 3>}]} {
    %c0 = arith.constant 0 : index
    %c0_0 = arith.constant 0 : index
    %0 = vector.load %arg3[%c0, %c0_0] : memref<1x5xf32, #tpu.memory_space<vmem>>, vector<1x5xf32>
    %cst = arith.constant 0.000000e+00 : f32
    %1 = vector.broadcast %cst : f32 to vector<210x60xf32>
    %c0_1 = arith.constant 0 : index
    %c0_2 = arith.constant 0 : index
    %c0_3 = arith.constant 0 : index
    %2 = vector.load %arg1[%c0_1, %c0_2, %c0_3] : memref<9x210x9xf32, #tpu.memory_space<vmem>>, vector<1x210x9xf32>
    %3 = vector.shape_cast %2 : vector<1x210x9xf32> to vector<210x9xf32>
    %c0_4 = arith.constant 0 : index
    %c0_5 = arith.constant 0 : index
    %4 = vector.load %arg2[%c0_4, %c0_5] : memref<9x20xf32, #tpu.memory_space<vmem>>, vector<9x20xf32>
    %cst_6 = arith.constant dense<0.000000e+00> : vector<210x20xf32>
    %5 = tpu.matmul %3, %4, %cst_6 {dimension_numbers = #tpu.dot_dimension_numbers<[1], [0], [0], [1], [0, 0, 1, 1], [], []>} : vector<210x9xf32>, vector<9x20xf32>, vector<210x20xf32> -> vector<210x20xf32>
    %6 = vector.extract_strided_slice %5 {offsets = [0, 0], sizes = [210, 5], strides = [1, 1]} : vector<210x20xf32> to vector<210x5xf32>
    %7 = vector.extract_strided_slice %5 {offsets = [0, 5], sizes = [210, 5], strides = [1, 1]} : vector<210x20xf32> to vector<210x5xf32>
    %8 = arith.maximumf %6, %7 : vector<210x5xf32>
    %9 = vector.extract_strided_slice %5 {offsets = [0, 10], sizes = [210, 5], strides = [1, 1]} : vector<210x20xf32> to vector<210x5xf32>
    %10 = vector.extract_strided_slice %5 {offsets = [0, 15], sizes = [210, 5], strides = [1, 1]} : vector<210x20xf32> to vector<210x5xf32>
    %11 = arith.maximumf %9, %10 : vector<210x5xf32>
    %12 = arith.maximumf %8, %11 : vector<210x5xf32>
    %13 = vector.broadcast %0 : vector<1x5xf32> to vector<210x5xf32>
    %14 = arith.addf %12, %13 : vector<210x5xf32>
    %cst_7 = arith.constant 0.000000e+00 : f32
    %15 = vector.broadcast %cst_7 : f32 to vector<210x5xf32>
    %16 = arith.maximumf %14, %15 : vector<210x5xf32>
    %c0_8 = arith.constant 0 : index
    %c0_9 = arith.constant 0 : index
    %c0_10 = arith.constant 0 : index
    %17 = vector.load %arg4[%c0_8, %c0_9, %c0_10] : memref<9x5x60xf32, #tpu.memory_space<vmem>>, vector<1x5x60xf32>
    %18 = vector.shape_cast %17 : vector<1x5x60xf32> to vector<5x60xf32>
    %cst_11 = arith.constant dense<0.000000e+00> : vector<210x60xf32>
    %19 = tpu.matmul %16, %18, %cst_11 {dimension_numbers = #tpu.dot_dimension_numbers<[1], [0], [0], [1], [0, 0, 1, 1], [], []>} : vector<210x5xf32>, vector<5x60xf32>, vector<210x60xf32> -> vector<210x60xf32>
    %20 = arith.addf %1, %19 : vector<210x60xf32>
    %c1 = arith.constant 1 : index
    %c0_12 = arith.constant 0 : index
    %c0_13 = arith.constant 0 : index
    %21 = vector.load %arg1[%c1, %c0_12, %c0_13] : memref<9x210x9xf32, #tpu.memory_space<vmem>>, vector<1x210x9xf32>
    %22 = vector.shape_cast %21 : vector<1x210x9xf32> to vector<210x9xf32>
    %c0_14 = arith.constant 0 : index
    %c0_15 = arith.constant 0 : index
    %23 = vector.load %arg2[%c0_14, %c0_15] : memref<9x20xf32, #tpu.memory_space<vmem>>, vector<9x20xf32>
    %cst_16 = arith.constant dense<0.000000e+00> : vector<210x20xf32>
    %24 = tpu.matmul %22, %23, %cst_16 {dimension_numbers = #tpu.dot_dimension_numbers<[1], [0], [0], [1], [0, 0, 1, 1], [], []>} : vector<210x9xf32>, vector<9x20xf32>, vector<210x20xf32> -> vector<210x20xf32>
    %25 = vector.extract_strided_slice %24 {offsets = [0, 0], sizes = [210, 5], strides = [1, 1]} : vector<210x20xf32> to vector<210x5xf32>
    %26 = vector.extract_strided_slice %24 {offsets = [0, 5], sizes = [210, 5], strides = [1, 1]} : vector<210x20xf32> to vector<210x5xf32>
    %27 = arith.maximumf %25, %26 : vector<210x5xf32>
    %28 = vector.extract_strided_slice %24 {offsets = [0, 10], sizes = [210, 5], strides = [1, 1]} : vector<210x20xf32> to vector<210x5xf32>
    %29 = vector.extract_strided_slice %24 {offsets = [0, 15], sizes = [210, 5], strides = [1, 1]} : vector<210x20xf32> to vector<210x5xf32>
    %30 = arith.maximumf %28, %29 : vector<210x5xf32>
    %31 = arith.maximumf %27, %30 : vector<210x5xf32>
    %32 = vector.broadcast %0 : vector<1x5xf32> to vector<210x5xf32>
    %33 = arith.addf %31, %32 : vector<210x5xf32>
    %cst_17 = arith.constant 0.000000e+00 : f32
    %34 = vector.broadcast %cst_17 : f32 to vector<210x5xf32>
    %35 = arith.maximumf %33, %34 : vector<210x5xf32>
    %c1_18 = arith.constant 1 : index
    %c0_19 = arith.constant 0 : index
    %c0_20 = arith.constant 0 : index
    %36 = vector.load %arg4[%c1_18, %c0_19, %c0_20] : memref<9x5x60xf32, #tpu.memory_space<vmem>>, vector<1x5x60xf32>
    %37 = vector.shape_cast %36 : vector<1x5x60xf32> to vector<5x60xf32>
    %cst_21 = arith.constant dense<0.000000e+00> : vector<210x60xf32>
    %38 = tpu.matmul %35, %37, %cst_21 {dimension_numbers = #tpu.dot_dimension_numbers<[1], [0], [0], [1], [0, 0, 1, 1], [], []>} : vector<210x5xf32>, vector<5x60xf32>, vector<210x60xf32> -> vector<210x60xf32>
    %39 = arith.addf %20, %38 : vector<210x60xf32>
    %c2 = arith.constant 2 : index
    %c0_22 = arith.constant 0 : index
    %c0_23 = arith.constant 0 : index
    %40 = vector.load %arg1[%c2, %c0_22, %c0_23] : memref<9x210x9xf32, #tpu.memory_space<vmem>>, vector<1x210x9xf32>
    %41 = vector.shape_cast %40 : vector<1x210x9xf32> to vector<210x9xf32>
    %c0_24 = arith.constant 0 : index
    %c0_25 = arith.constant 0 : index
    %42 = vector.load %arg2[%c0_24, %c0_25] : memref<9x20xf32, #tpu.memory_space<vmem>>, vector<9x20xf32>
    %cst_26 = arith.constant dense<0.000000e+00> : vector<210x20xf32>
    %43 = tpu.matmul %41, %42, %cst_26 {dimension_numbers = #tpu.dot_dimension_numbers<[1], [0], [0], [1], [0, 0, 1, 1], [], []>} : vector<210x9xf32>, vector<9x20xf32>, vector<210x20xf32> -> vector<210x20xf32>
    %44 = vector.extract_strided_slice %43 {offsets = [0, 0], sizes = [210, 5], strides = [1, 1]} : vector<210x20xf32> to vector<210x5xf32>
    %45 = vector.extract_strided_slice %43 {offsets = [0, 5], sizes = [210, 5], strides = [1, 1]} : vector<210x20xf32> to vector<210x5xf32>
    %46 = arith.maximumf %44, %45 : vector<210x5xf32>
    %47 = vector.extract_strided_slice %43 {offsets = [0, 10], sizes = [210, 5], strides = [1, 1]} : vector<210x20xf32> to vector<210x5xf32>
    %48 = vector.extract_strided_slice %43 {offsets = [0, 15], sizes = [210, 5], strides = [1, 1]} : vector<210x20xf32> to vector<210x5xf32>
    %49 = arith.maximumf %47, %48 : vector<210x5xf32>
    %50 = arith.maximumf %46, %49 : vector<210x5xf32>
    %51 = vector.broadcast %0 : vector<1x5xf32> to vector<210x5xf32>
    %52 = arith.addf %50, %51 : vector<210x5xf32>
    %cst_27 = arith.constant 0.000000e+00 : f32
    %53 = vector.broadcast %cst_27 : f32 to vector<210x5xf32>
    %54 = arith.maximumf %52, %53 : vector<210x5xf32>
    %c2_28 = arith.constant 2 : index
    %c0_29 = arith.constant 0 : index
    %c0_30 = arith.constant 0 : index
    %55 = vector.load %arg4[%c2_28, %c0_29, %c0_30] : memref<9x5x60xf32, #tpu.memory_space<vmem>>, vector<1x5x60xf32>
    %56 = vector.shape_cast %55 : vector<1x5x60xf32> to vector<5x60xf32>
    %cst_31 = arith.constant dense<0.000000e+00> : vector<210x60xf32>
    %57 = tpu.matmul %54, %56, %cst_31 {dimension_numbers = #tpu.dot_dimension_numbers<[1], [0], [0], [1], [0, 0, 1, 1], [], []>} : vector<210x5xf32>, vector<5x60xf32>, vector<210x60xf32> -> vector<210x60xf32>
    %58 = arith.addf %39, %57 : vector<210x60xf32>
    %c3 = arith.constant 3 : index
    %c0_32 = arith.constant 0 : index
    %c0_33 = arith.constant 0 : index
    %59 = vector.load %arg1[%c3, %c0_32, %c0_33] : memref<9x210x9xf32, #tpu.memory_space<vmem>>, vector<1x210x9xf32>
    %60 = vector.shape_cast %59 : vector<1x210x9xf32> to vector<210x9xf32>
    %c0_34 = arith.constant 0 : index
    %c0_35 = arith.constant 0 : index
    %61 = vector.load %arg2[%c0_34, %c0_35] : memref<9x20xf32, #tpu.memory_space<vmem>>, vector<9x20xf32>
    %cst_36 = arith.constant dense<0.000000e+00> : vector<210x20xf32>
    %62 = tpu.matmul %60, %61, %cst_36 {dimension_numbers = #tpu.dot_dimension_numbers<[1], [0], [0], [1], [0, 0, 1, 1], [], []>} : vector<210x9xf32>, vector<9x20xf32>, vector<210x20xf32> -> vector<210x20xf32>
    %63 = vector.extract_strided_slice %62 {offsets = [0, 0], sizes = [210, 5], strides = [1, 1]} : vector<210x20xf32> to vector<210x5xf32>
    %64 = vector.extract_strided_slice %62 {offsets = [0, 5], sizes = [210, 5], strides = [1, 1]} : vector<210x20xf32> to vector<210x5xf32>
    %65 = arith.maximumf %63, %64 : vector<210x5xf32>
    %66 = vector.extract_strided_slice %62 {offsets = [0, 10], sizes = [210, 5], strides = [1, 1]} : vector<210x20xf32> to vector<210x5xf32>
    %67 = vector.extract_strided_slice %62 {offsets = [0, 15], sizes = [210, 5], strides = [1, 1]} : vector<210x20xf32> to vector<210x5xf32>
    %68 = arith.maximumf %66, %67 : vector<210x5xf32>
    %69 = arith.maximumf %65, %68 : vector<210x5xf32>
    %70 = vector.broadcast %0 : vector<1x5xf32> to vector<210x5xf32>
    %71 = arith.addf %69, %70 : vector<210x5xf32>
    %cst_37 = arith.constant 0.000000e+00 : f32
    %72 = vector.broadcast %cst_37 : f32 to vector<210x5xf32>
    %73 = arith.maximumf %71, %72 : vector<210x5xf32>
    %c3_38 = arith.constant 3 : index
    %c0_39 = arith.constant 0 : index
    %c0_40 = arith.constant 0 : index
    %74 = vector.load %arg4[%c3_38, %c0_39, %c0_40] : memref<9x5x60xf32, #tpu.memory_space<vmem>>, vector<1x5x60xf32>
    %75 = vector.shape_cast %74 : vector<1x5x60xf32> to vector<5x60xf32>
    %cst_41 = arith.constant dense<0.000000e+00> : vector<210x60xf32>
    %76 = tpu.matmul %73, %75, %cst_41 {dimension_numbers = #tpu.dot_dimension_numbers<[1], [0], [0], [1], [0, 0, 1, 1], [], []>} : vector<210x5xf32>, vector<5x60xf32>, vector<210x60xf32> -> vector<210x60xf32>
    %77 = arith.addf %58, %76 : vector<210x60xf32>
    %c4 = arith.constant 4 : index
    %c0_42 = arith.constant 0 : index
    %c0_43 = arith.constant 0 : index
    %78 = vector.load %arg1[%c4, %c0_42, %c0_43] : memref<9x210x9xf32, #tpu.memory_space<vmem>>, vector<1x210x9xf32>
    %79 = vector.shape_cast %78 : vector<1x210x9xf32> to vector<210x9xf32>
    %c0_44 = arith.constant 0 : index
    %c0_45 = arith.constant 0 : index
    %80 = vector.load %arg2[%c0_44, %c0_45] : memref<9x20xf32, #tpu.memory_space<vmem>>, vector<9x20xf32>
    %cst_46 = arith.constant dense<0.000000e+00> : vector<210x20xf32>
    %81 = tpu.matmul %79, %80, %cst_46 {dimension_numbers = #tpu.dot_dimension_numbers<[1], [0], [0], [1], [0, 0, 1, 1], [], []>} : vector<210x9xf32>, vector<9x20xf32>, vector<210x20xf32> -> vector<210x20xf32>
    %82 = vector.extract_strided_slice %81 {offsets = [0, 0], sizes = [210, 5], strides = [1, 1]} : vector<210x20xf32> to vector<210x5xf32>
    %83 = vector.extract_strided_slice %81 {offsets = [0, 5], sizes = [210, 5], strides = [1, 1]} : vector<210x20xf32> to vector<210x5xf32>
    %84 = arith.maximumf %82, %83 : vector<210x5xf32>
    %85 = vector.extract_strided_slice %81 {offsets = [0, 10], sizes = [210, 5], strides = [1, 1]} : vector<210x20xf32> to vector<210x5xf32>
    %86 = vector.extract_strided_slice %81 {offsets = [0, 15], sizes = [210, 5], strides = [1, 1]} : vector<210x20xf32> to vector<210x5xf32>
    %87 = arith.maximumf %85, %86 : vector<210x5xf32>
    %88 = arith.maximumf %84, %87 : vector<210x5xf32>
    %89 = vector.broadcast %0 : vector<1x5xf32> to vector<210x5xf32>
    %90 = arith.addf %88, %89 : vector<210x5xf32>
    %cst_47 = arith.constant 0.000000e+00 : f32
    %91 = vector.broadcast %cst_47 : f32 to vector<210x5xf32>
    %92 = arith.maximumf %90, %91 : vector<210x5xf32>
    %c4_48 = arith.constant 4 : index
    %c0_49 = arith.constant 0 : index
    %c0_50 = arith.constant 0 : index
    %93 = vector.load %arg4[%c4_48, %c0_49, %c0_50] : memref<9x5x60xf32, #tpu.memory_space<vmem>>, vector<1x5x60xf32>
    %94 = vector.shape_cast %93 : vector<1x5x60xf32> to vector<5x60xf32>
    %cst_51 = arith.constant dense<0.000000e+00> : vector<210x60xf32>
    %95 = tpu.matmul %92, %94, %cst_51 {dimension_numbers = #tpu.dot_dimension_numbers<[1], [0], [0], [1], [0, 0, 1, 1], [], []>} : vector<210x5xf32>, vector<5x60xf32>, vector<210x60xf32> -> vector<210x60xf32>
    %96 = arith.addf %77, %95 : vector<210x60xf32>
    %c5 = arith.constant 5 : index
    %c0_52 = arith.constant 0 : index
    %c0_53 = arith.constant 0 : index
    %97 = vector.load %arg1[%c5, %c0_52, %c0_53] : memref<9x210x9xf32, #tpu.memory_space<vmem>>, vector<1x210x9xf32>
    %98 = vector.shape_cast %97 : vector<1x210x9xf32> to vector<210x9xf32>
    %c0_54 = arith.constant 0 : index
    %c0_55 = arith.constant 0 : index
    %99 = vector.load %arg2[%c0_54, %c0_55] : memref<9x20xf32, #tpu.memory_space<vmem>>, vector<9x20xf32>
    %cst_56 = arith.constant dense<0.000000e+00> : vector<210x20xf32>
    %100 = tpu.matmul %98, %99, %cst_56 {dimension_numbers = #tpu.dot_dimension_numbers<[1], [0], [0], [1], [0, 0, 1, 1], [], []>} : vector<210x9xf32>, vector<9x20xf32>, vector<210x20xf32> -> vector<210x20xf32>
    %101 = vector.extract_strided_slice %100 {offsets = [0, 0], sizes = [210, 5], strides = [1, 1]} : vector<210x20xf32> to vector<210x5xf32>
    %102 = vector.extract_strided_slice %100 {offsets = [0, 5], sizes = [210, 5], strides = [1, 1]} : vector<210x20xf32> to vector<210x5xf32>
    %103 = arith.maximumf %101, %102 : vector<210x5xf32>
    %104 = vector.extract_strided_slice %100 {offsets = [0, 10], sizes = [210, 5], strides = [1, 1]} : vector<210x20xf32> to vector<210x5xf32>
    %105 = vector.extract_strided_slice %100 {offsets = [0, 15], sizes = [210, 5], strides = [1, 1]} : vector<210x20xf32> to vector<210x5xf32>
    %106 = arith.maximumf %104, %105 : vector<210x5xf32>
    %107 = arith.maximumf %103, %106 : vector<210x5xf32>
    %108 = vector.broadcast %0 : vector<1x5xf32> to vector<210x5xf32>
    %109 = arith.addf %107, %108 : vector<210x5xf32>
    %cst_57 = arith.constant 0.000000e+00 : f32
    %110 = vector.broadcast %cst_57 : f32 to vector<210x5xf32>
    %111 = arith.maximumf %109, %110 : vector<210x5xf32>
    %c5_58 = arith.constant 5 : index
    %c0_59 = arith.constant 0 : index
    %c0_60 = arith.constant 0 : index
    %112 = vector.load %arg4[%c5_58, %c0_59, %c0_60] : memref<9x5x60xf32, #tpu.memory_space<vmem>>, vector<1x5x60xf32>
    %113 = vector.shape_cast %112 : vector<1x5x60xf32> to vector<5x60xf32>
    %cst_61 = arith.constant dense<0.000000e+00> : vector<210x60xf32>
    %114 = tpu.matmul %111, %113, %cst_61 {dimension_numbers = #tpu.dot_dimension_numbers<[1], [0], [0], [1], [0, 0, 1, 1], [], []>} : vector<210x5xf32>, vector<5x60xf32>, vector<210x60xf32> -> vector<210x60xf32>
    %115 = arith.addf %96, %114 : vector<210x60xf32>
    %c6 = arith.constant 6 : index
    %c0_62 = arith.constant 0 : index
    %c0_63 = arith.constant 0 : index
    %116 = vector.load %arg1[%c6, %c0_62, %c0_63] : memref<9x210x9xf32, #tpu.memory_space<vmem>>, vector<1x210x9xf32>
    %117 = vector.shape_cast %116 : vector<1x210x9xf32> to vector<210x9xf32>
    %c0_64 = arith.constant 0 : index
    %c0_65 = arith.constant 0 : index
    %118 = vector.load %arg2[%c0_64, %c0_65] : memref<9x20xf32, #tpu.memory_space<vmem>>, vector<9x20xf32>
    %cst_66 = arith.constant dense<0.000000e+00> : vector<210x20xf32>
    %119 = tpu.matmul %117, %118, %cst_66 {dimension_numbers = #tpu.dot_dimension_numbers<[1], [0], [0], [1], [0, 0, 1, 1], [], []>} : vector<210x9xf32>, vector<9x20xf32>, vector<210x20xf32> -> vector<210x20xf32>
    %120 = vector.extract_strided_slice %119 {offsets = [0, 0], sizes = [210, 5], strides = [1, 1]} : vector<210x20xf32> to vector<210x5xf32>
    %121 = vector.extract_strided_slice %119 {offsets = [0, 5], sizes = [210, 5], strides = [1, 1]} : vector<210x20xf32> to vector<210x5xf32>
    %122 = arith.maximumf %120, %121 : vector<210x5xf32>
    %123 = vector.extract_strided_slice %119 {offsets = [0, 10], sizes = [210, 5], strides = [1, 1]} : vector<210x20xf32> to vector<210x5xf32>
    %124 = vector.extract_strided_slice %119 {offsets = [0, 15], sizes = [210, 5], strides = [1, 1]} : vector<210x20xf32> to vector<210x5xf32>
    %125 = arith.maximumf %123, %124 : vector<210x5xf32>
    %126 = arith.maximumf %122, %125 : vector<210x5xf32>
    %127 = vector.broadcast %0 : vector<1x5xf32> to vector<210x5xf32>
    %128 = arith.addf %126, %127 : vector<210x5xf32>
    %cst_67 = arith.constant 0.000000e+00 : f32
    %129 = vector.broadcast %cst_67 : f32 to vector<210x5xf32>
    %130 = arith.maximumf %128, %129 : vector<210x5xf32>
    %c6_68 = arith.constant 6 : index
    %c0_69 = arith.constant 0 : index
    %c0_70 = arith.constant 0 : index
    %131 = vector.load %arg4[%c6_68, %c0_69, %c0_70] : memref<9x5x60xf32, #tpu.memory_space<vmem>>, vector<1x5x60xf32>
    %132 = vector.shape_cast %131 : vector<1x5x60xf32> to vector<5x60xf32>
    %cst_71 = arith.constant dense<0.000000e+00> : vector<210x60xf32>
    %133 = tpu.matmul %130, %132, %cst_71 {dimension_numbers = #tpu.dot_dimension_numbers<[1], [0], [0], [1], [0, 0, 1, 1], [], []>} : vector<210x5xf32>, vector<5x60xf32>, vector<210x60xf32> -> vector<210x60xf32>
    %134 = arith.addf %115, %133 : vector<210x60xf32>
    %c7 = arith.constant 7 : index
    %c0_72 = arith.constant 0 : index
    %c0_73 = arith.constant 0 : index
    %135 = vector.load %arg1[%c7, %c0_72, %c0_73] : memref<9x210x9xf32, #tpu.memory_space<vmem>>, vector<1x210x9xf32>
    %136 = vector.shape_cast %135 : vector<1x210x9xf32> to vector<210x9xf32>
    %c0_74 = arith.constant 0 : index
    %c0_75 = arith.constant 0 : index
    %137 = vector.load %arg2[%c0_74, %c0_75] : memref<9x20xf32, #tpu.memory_space<vmem>>, vector<9x20xf32>
    %cst_76 = arith.constant dense<0.000000e+00> : vector<210x20xf32>
    %138 = tpu.matmul %136, %137, %cst_76 {dimension_numbers = #tpu.dot_dimension_numbers<[1], [0], [0], [1], [0, 0, 1, 1], [], []>} : vector<210x9xf32>, vector<9x20xf32>, vector<210x20xf32> -> vector<210x20xf32>
    %139 = vector.extract_strided_slice %138 {offsets = [0, 0], sizes = [210, 5], strides = [1, 1]} : vector<210x20xf32> to vector<210x5xf32>
    %140 = vector.extract_strided_slice %138 {offsets = [0, 5], sizes = [210, 5], strides = [1, 1]} : vector<210x20xf32> to vector<210x5xf32>
    %141 = arith.maximumf %139, %140 : vector<210x5xf32>
    %142 = vector.extract_strided_slice %138 {offsets = [0, 10], sizes = [210, 5], strides = [1, 1]} : vector<210x20xf32> to vector<210x5xf32>
    %143 = vector.extract_strided_slice %138 {offsets = [0, 15], sizes = [210, 5], strides = [1, 1]} : vector<210x20xf32> to vector<210x5xf32>
    %144 = arith.maximumf %142, %143 : vector<210x5xf32>
    %145 = arith.maximumf %141, %144 : vector<210x5xf32>
    %146 = vector.broadcast %0 : vector<1x5xf32> to vector<210x5xf32>
    %147 = arith.addf %145, %146 : vector<210x5xf32>
    %cst_77 = arith.constant 0.000000e+00 : f32
    %148 = vector.broadcast %cst_77 : f32 to vector<210x5xf32>
    %149 = arith.maximumf %147, %148 : vector<210x5xf32>
    %c7_78 = arith.constant 7 : index
    %c0_79 = arith.constant 0 : index
    %c0_80 = arith.constant 0 : index
    %150 = vector.load %arg4[%c7_78, %c0_79, %c0_80] : memref<9x5x60xf32, #tpu.memory_space<vmem>>, vector<1x5x60xf32>
    %151 = vector.shape_cast %150 : vector<1x5x60xf32> to vector<5x60xf32>
    %cst_81 = arith.constant dense<0.000000e+00> : vector<210x60xf32>
    %152 = tpu.matmul %149, %151, %cst_81 {dimension_numbers = #tpu.dot_dimension_numbers<[1], [0], [0], [1], [0, 0, 1, 1], [], []>} : vector<210x5xf32>, vector<5x60xf32>, vector<210x60xf32> -> vector<210x60xf32>
    %153 = arith.addf %134, %152 : vector<210x60xf32>
    %c8 = arith.constant 8 : index
    %c0_82 = arith.constant 0 : index
    %c0_83 = arith.constant 0 : index
    %154 = vector.load %arg1[%c8, %c0_82, %c0_83] : memref<9x210x9xf32, #tpu.memory_space<vmem>>, vector<1x210x9xf32>
    %155 = vector.shape_cast %154 : vector<1x210x9xf32> to vector<210x9xf32>
    %c0_84 = arith.constant 0 : index
    %c0_85 = arith.constant 0 : index
    %156 = vector.load %arg2[%c0_84, %c0_85] : memref<9x20xf32, #tpu.memory_space<vmem>>, vector<9x20xf32>
    %cst_86 = arith.constant dense<0.000000e+00> : vector<210x20xf32>
    %157 = tpu.matmul %155, %156, %cst_86 {dimension_numbers = #tpu.dot_dimension_numbers<[1], [0], [0], [1], [0, 0, 1, 1], [], []>} : vector<210x9xf32>, vector<9x20xf32>, vector<210x20xf32> -> vector<210x20xf32>
    %158 = vector.extract_strided_slice %157 {offsets = [0, 0], sizes = [210, 5], strides = [1, 1]} : vector<210x20xf32> to vector<210x5xf32>
    %159 = vector.extract_strided_slice %157 {offsets = [0, 5], sizes = [210, 5], strides = [1, 1]} : vector<210x20xf32> to vector<210x5xf32>
    %160 = arith.maximumf %158, %159 : vector<210x5xf32>
    %161 = vector.extract_strided_slice %157 {offsets = [0, 10], sizes = [210, 5], strides = [1, 1]} : vector<210x20xf32> to vector<210x5xf32>
    %162 = vector.extract_strided_slice %157 {offsets = [0, 15], sizes = [210, 5], strides = [1, 1]} : vector<210x20xf32> to vector<210x5xf32>
    %163 = arith.maximumf %161, %162 : vector<210x5xf32>
    %164 = arith.maximumf %160, %163 : vector<210x5xf32>
    %165 = vector.broadcast %0 : vector<1x5xf32> to vector<210x5xf32>
    %166 = arith.addf %164, %165 : vector<210x5xf32>
    %cst_87 = arith.constant 0.000000e+00 : f32
    %167 = vector.broadcast %cst_87 : f32 to vector<210x5xf32>
    %168 = arith.maximumf %166, %167 : vector<210x5xf32>
    %c8_88 = arith.constant 8 : index
    %c0_89 = arith.constant 0 : index
    %c0_90 = arith.constant 0 : index
    %169 = vector.load %arg4[%c8_88, %c0_89, %c0_90] : memref<9x5x60xf32, #tpu.memory_space<vmem>>, vector<1x5x60xf32>
    %170 = vector.shape_cast %169 : vector<1x5x60xf32> to vector<5x60xf32>
    %cst_91 = arith.constant dense<0.000000e+00> : vector<210x60xf32>
    %171 = tpu.matmul %168, %170, %cst_91 {dimension_numbers = #tpu.dot_dimension_numbers<[1], [0], [0], [1], [0, 0, 1, 1], [], []>} : vector<210x5xf32>, vector<5x60xf32>, vector<210x60xf32> -> vector<210x60xf32>
    %172 = arith.addf %153, %171 : vector<210x60xf32>
    %173 = vector.extract_strided_slice %172 {offsets = [0, 0], sizes = [210, 15], strides = [1, 1]} : vector<210x60xf32> to vector<210x15xf32>
    %174 = vector.extract_strided_slice %172 {offsets = [0, 15], sizes = [210, 15], strides = [1, 1]} : vector<210x60xf32> to vector<210x15xf32>
    %175 = arith.maximumf %173, %174 : vector<210x15xf32>
    %176 = vector.extract_strided_slice %172 {offsets = [0, 30], sizes = [210, 15], strides = [1, 1]} : vector<210x60xf32> to vector<210x15xf32>
    %177 = vector.extract_strided_slice %172 {offsets = [0, 45], sizes = [210, 15], strides = [1, 1]} : vector<210x60xf32> to vector<210x15xf32>
    %178 = arith.maximumf %176, %177 : vector<210x15xf32>
    %179 = arith.maximumf %175, %178 : vector<210x15xf32>
    %c0_92 = arith.constant 0 : index
    %c0_93 = arith.constant 0 : index
    %180 = vector.load %arg5[%c0_92, %c0_93] : memref<1x15xf32, #tpu.memory_space<vmem>>, vector<1x15xf32>
    %181 = vector.broadcast %180 : vector<1x15xf32> to vector<210x15xf32>
    %182 = arith.addf %179, %181 : vector<210x15xf32>
    %cst_94 = arith.constant 0.000000e+00 : f32
    %183 = vector.broadcast %cst_94 : f32 to vector<210x15xf32>
    %184 = arith.maximumf %182, %183 : vector<210x15xf32>
    %cst_95 = arith.constant 1.000000e+00 : f32
    %185 = vector.broadcast %cst_95 : f32 to vector<1x105xf32>
    %186 = vector.extract_strided_slice %184 {offsets = [0, 0], sizes = [105, 15], strides = [1, 1]} : vector<210x15xf32> to vector<105x15xf32>
    %187 = vector.extract_strided_slice %186 {offsets = [0, 0], sizes = [105, 1], strides = [1, 1]} : vector<105x15xf32> to vector<105x1xf32>
    %c0_96 = arith.constant 0 : index
    %c0_97 = arith.constant 0 : index
    %c0_98 = arith.constant 0 : index
    %188 = vector.load %arg6[%c0_96, %c0_97, %c0_98] : memref<15x105x120xf32, #tpu.memory_space<vmem>>, vector<1x105x120xf32>
    %189 = vector.shape_cast %188 : vector<1x105x120xf32> to vector<105x120xf32>
    %190 = vector.broadcast %187 : vector<105x1xf32> to vector<105x120xf32>
    %191 = arith.mulf %190, %189 : vector<105x120xf32>
    %192 = vector.extract_strided_slice %186 {offsets = [0, 1], sizes = [105, 1], strides = [1, 1]} : vector<105x15xf32> to vector<105x1xf32>
    %c1_99 = arith.constant 1 : index
    %c0_100 = arith.constant 0 : index
    %c0_101 = arith.constant 0 : index
    %193 = vector.load %arg6[%c1_99, %c0_100, %c0_101] : memref<15x105x120xf32, #tpu.memory_space<vmem>>, vector<1x105x120xf32>
    %194 = vector.shape_cast %193 : vector<1x105x120xf32> to vector<105x120xf32>
    %195 = vector.broadcast %192 : vector<105x1xf32> to vector<105x120xf32>
    %196 = arith.mulf %195, %194 : vector<105x120xf32>
    %197 = arith.addf %191, %196 : vector<105x120xf32>
    %198 = vector.extract_strided_slice %186 {offsets = [0, 2], sizes = [105, 1], strides = [1, 1]} : vector<105x15xf32> to vector<105x1xf32>
    %c2_102 = arith.constant 2 : index
    %c0_103 = arith.constant 0 : index
    %c0_104 = arith.constant 0 : index
    %199 = vector.load %arg6[%c2_102, %c0_103, %c0_104] : memref<15x105x120xf32, #tpu.memory_space<vmem>>, vector<1x105x120xf32>
    %200 = vector.shape_cast %199 : vector<1x105x120xf32> to vector<105x120xf32>
    %201 = vector.broadcast %198 : vector<105x1xf32> to vector<105x120xf32>
    %202 = arith.mulf %201, %200 : vector<105x120xf32>
    %203 = arith.addf %197, %202 : vector<105x120xf32>
    %204 = vector.extract_strided_slice %186 {offsets = [0, 3], sizes = [105, 1], strides = [1, 1]} : vector<105x15xf32> to vector<105x1xf32>
    %c3_105 = arith.constant 3 : index
    %c0_106 = arith.constant 0 : index
    %c0_107 = arith.constant 0 : index
    %205 = vector.load %arg6[%c3_105, %c0_106, %c0_107] : memref<15x105x120xf32, #tpu.memory_space<vmem>>, vector<1x105x120xf32>
    %206 = vector.shape_cast %205 : vector<1x105x120xf32> to vector<105x120xf32>
    %207 = vector.broadcast %204 : vector<105x1xf32> to vector<105x120xf32>
    %208 = arith.mulf %207, %206 : vector<105x120xf32>
    %209 = arith.addf %203, %208 : vector<105x120xf32>
    %210 = vector.extract_strided_slice %186 {offsets = [0, 4], sizes = [105, 1], strides = [1, 1]} : vector<105x15xf32> to vector<105x1xf32>
    %c4_108 = arith.constant 4 : index
    %c0_109 = arith.constant 0 : index
    %c0_110 = arith.constant 0 : index
    %211 = vector.load %arg6[%c4_108, %c0_109, %c0_110] : memref<15x105x120xf32, #tpu.memory_space<vmem>>, vector<1x105x120xf32>
    %212 = vector.shape_cast %211 : vector<1x105x120xf32> to vector<105x120xf32>
    %213 = vector.broadcast %210 : vector<105x1xf32> to vector<105x120xf32>
    %214 = arith.mulf %213, %212 : vector<105x120xf32>
    %215 = arith.addf %209, %214 : vector<105x120xf32>
    %216 = vector.extract_strided_slice %186 {offsets = [0, 5], sizes = [105, 1], strides = [1, 1]} : vector<105x15xf32> to vector<105x1xf32>
    %c5_111 = arith.constant 5 : index
    %c0_112 = arith.constant 0 : index
    %c0_113 = arith.constant 0 : index
    %217 = vector.load %arg6[%c5_111, %c0_112, %c0_113] : memref<15x105x120xf32, #tpu.memory_space<vmem>>, vector<1x105x120xf32>
    %218 = vector.shape_cast %217 : vector<1x105x120xf32> to vector<105x120xf32>
    %219 = vector.broadcast %216 : vector<105x1xf32> to vector<105x120xf32>
    %220 = arith.mulf %219, %218 : vector<105x120xf32>
    %221 = arith.addf %215, %220 : vector<105x120xf32>
    %222 = vector.extract_strided_slice %186 {offsets = [0, 6], sizes = [105, 1], strides = [1, 1]} : vector<105x15xf32> to vector<105x1xf32>
    %c6_114 = arith.constant 6 : index
    %c0_115 = arith.constant 0 : index
    %c0_116 = arith.constant 0 : index
    %223 = vector.load %arg6[%c6_114, %c0_115, %c0_116] : memref<15x105x120xf32, #tpu.memory_space<vmem>>, vector<1x105x120xf32>
    %224 = vector.shape_cast %223 : vector<1x105x120xf32> to vector<105x120xf32>
    %225 = vector.broadcast %222 : vector<105x1xf32> to vector<105x120xf32>
    %226 = arith.mulf %225, %224 : vector<105x120xf32>
    %227 = arith.addf %221, %226 : vector<105x120xf32>
    %228 = vector.extract_strided_slice %186 {offsets = [0, 7], sizes = [105, 1], strides = [1, 1]} : vector<105x15xf32> to vector<105x1xf32>
    %c7_117 = arith.constant 7 : index
    %c0_118 = arith.constant 0 : index
    %c0_119 = arith.constant 0 : index
    %229 = vector.load %arg6[%c7_117, %c0_118, %c0_119] : memref<15x105x120xf32, #tpu.memory_space<vmem>>, vector<1x105x120xf32>
    %230 = vector.shape_cast %229 : vector<1x105x120xf32> to vector<105x120xf32>
    %231 = vector.broadcast %228 : vector<105x1xf32> to vector<105x120xf32>
    %232 = arith.mulf %231, %230 : vector<105x120xf32>
    %233 = arith.addf %227, %232 : vector<105x120xf32>
    %234 = vector.extract_strided_slice %186 {offsets = [0, 8], sizes = [105, 1], strides = [1, 1]} : vector<105x15xf32> to vector<105x1xf32>
    %c8_120 = arith.constant 8 : index
    %c0_121 = arith.constant 0 : index
    %c0_122 = arith.constant 0 : index
    %235 = vector.load %arg6[%c8_120, %c0_121, %c0_122] : memref<15x105x120xf32, #tpu.memory_space<vmem>>, vector<1x105x120xf32>
    %236 = vector.shape_cast %235 : vector<1x105x120xf32> to vector<105x120xf32>
    %237 = vector.broadcast %234 : vector<105x1xf32> to vector<105x120xf32>
    %238 = arith.mulf %237, %236 : vector<105x120xf32>
    %239 = arith.addf %233, %238 : vector<105x120xf32>
    %240 = vector.extract_strided_slice %186 {offsets = [0, 9], sizes = [105, 1], strides = [1, 1]} : vector<105x15xf32> to vector<105x1xf32>
    %c9 = arith.constant 9 : index
    %c0_123 = arith.constant 0 : index
    %c0_124 = arith.constant 0 : index
    %241 = vector.load %arg6[%c9, %c0_123, %c0_124] : memref<15x105x120xf32, #tpu.memory_space<vmem>>, vector<1x105x120xf32>
    %242 = vector.shape_cast %241 : vector<1x105x120xf32> to vector<105x120xf32>
    %243 = vector.broadcast %240 : vector<105x1xf32> to vector<105x120xf32>
    %244 = arith.mulf %243, %242 : vector<105x120xf32>
    %245 = arith.addf %239, %244 : vector<105x120xf32>
    %246 = vector.extract_strided_slice %186 {offsets = [0, 10], sizes = [105, 1], strides = [1, 1]} : vector<105x15xf32> to vector<105x1xf32>
    %c10 = arith.constant 10 : index
    %c0_125 = arith.constant 0 : index
    %c0_126 = arith.constant 0 : index
    %247 = vector.load %arg6[%c10, %c0_125, %c0_126] : memref<15x105x120xf32, #tpu.memory_space<vmem>>, vector<1x105x120xf32>
    %248 = vector.shape_cast %247 : vector<1x105x120xf32> to vector<105x120xf32>
    %249 = vector.broadcast %246 : vector<105x1xf32> to vector<105x120xf32>
    %250 = arith.mulf %249, %248 : vector<105x120xf32>
    %251 = arith.addf %245, %250 : vector<105x120xf32>
    %252 = vector.extract_strided_slice %186 {offsets = [0, 11], sizes = [105, 1], strides = [1, 1]} : vector<105x15xf32> to vector<105x1xf32>
    %c11 = arith.constant 11 : index
    %c0_127 = arith.constant 0 : index
    %c0_128 = arith.constant 0 : index
    %253 = vector.load %arg6[%c11, %c0_127, %c0_128] : memref<15x105x120xf32, #tpu.memory_space<vmem>>, vector<1x105x120xf32>
    %254 = vector.shape_cast %253 : vector<1x105x120xf32> to vector<105x120xf32>
    %255 = vector.broadcast %252 : vector<105x1xf32> to vector<105x120xf32>
    %256 = arith.mulf %255, %254 : vector<105x120xf32>
    %257 = arith.addf %251, %256 : vector<105x120xf32>
    %258 = vector.extract_strided_slice %186 {offsets = [0, 12], sizes = [105, 1], strides = [1, 1]} : vector<105x15xf32> to vector<105x1xf32>
    %c12 = arith.constant 12 : index
    %c0_129 = arith.constant 0 : index
    %c0_130 = arith.constant 0 : index
    %259 = vector.load %arg6[%c12, %c0_129, %c0_130] : memref<15x105x120xf32, #tpu.memory_space<vmem>>, vector<1x105x120xf32>
    %260 = vector.shape_cast %259 : vector<1x105x120xf32> to vector<105x120xf32>
    %261 = vector.broadcast %258 : vector<105x1xf32> to vector<105x120xf32>
    %262 = arith.mulf %261, %260 : vector<105x120xf32>
    %263 = arith.addf %257, %262 : vector<105x120xf32>
    %264 = vector.extract_strided_slice %186 {offsets = [0, 13], sizes = [105, 1], strides = [1, 1]} : vector<105x15xf32> to vector<105x1xf32>
    %c13 = arith.constant 13 : index
    %c0_131 = arith.constant 0 : index
    %c0_132 = arith.constant 0 : index
    %265 = vector.load %arg6[%c13, %c0_131, %c0_132] : memref<15x105x120xf32, #tpu.memory_space<vmem>>, vector<1x105x120xf32>
    %266 = vector.shape_cast %265 : vector<1x105x120xf32> to vector<105x120xf32>
    %267 = vector.broadcast %264 : vector<105x1xf32> to vector<105x120xf32>
    %268 = arith.mulf %267, %266 : vector<105x120xf32>
    %269 = arith.addf %263, %268 : vector<105x120xf32>
    %270 = vector.extract_strided_slice %186 {offsets = [0, 14], sizes = [105, 1], strides = [1, 1]} : vector<105x15xf32> to vector<105x1xf32>
    %c14 = arith.constant 14 : index
    %c0_133 = arith.constant 0 : index
    %c0_134 = arith.constant 0 : index
    %271 = vector.load %arg6[%c14, %c0_133, %c0_134] : memref<15x105x120xf32, #tpu.memory_space<vmem>>, vector<1x105x120xf32>
    %272 = vector.shape_cast %271 : vector<1x105x120xf32> to vector<105x120xf32>
    %273 = vector.broadcast %270 : vector<105x1xf32> to vector<105x120xf32>
    %274 = arith.mulf %273, %272 : vector<105x120xf32>
    %275 = arith.addf %269, %274 : vector<105x120xf32>
    %cst_135 = arith.constant dense<0.000000e+00> : vector<1x120xf32>
    %276 = tpu.matmul %185, %275, %cst_135 {dimension_numbers = #tpu.dot_dimension_numbers<[1], [0], [0], [1], [0, 0, 1, 1], [], []>} : vector<1x105xf32>, vector<105x120xf32>, vector<1x120xf32> -> vector<1x120xf32>
    %277 = vector.extract_strided_slice %184 {offsets = [105, 0], sizes = [105, 15], strides = [1, 1]} : vector<210x15xf32> to vector<105x15xf32>
    %278 = vector.extract_strided_slice %277 {offsets = [0, 0], sizes = [105, 1], strides = [1, 1]} : vector<105x15xf32> to vector<105x1xf32>
    %c0_136 = arith.constant 0 : index
    %c0_137 = arith.constant 0 : index
    %c0_138 = arith.constant 0 : index
    %279 = vector.load %arg6[%c0_136, %c0_137, %c0_138] : memref<15x105x120xf32, #tpu.memory_space<vmem>>, vector<1x105x120xf32>
    %280 = vector.shape_cast %279 : vector<1x105x120xf32> to vector<105x120xf32>
    %281 = vector.broadcast %278 : vector<105x1xf32> to vector<105x120xf32>
    %282 = arith.mulf %281, %280 : vector<105x120xf32>
    %283 = vector.extract_strided_slice %277 {offsets = [0, 1], sizes = [105, 1], strides = [1, 1]} : vector<105x15xf32> to vector<105x1xf32>
    %c1_139 = arith.constant 1 : index
    %c0_140 = arith.constant 0 : index
    %c0_141 = arith.constant 0 : index
    %284 = vector.load %arg6[%c1_139, %c0_140, %c0_141] : memref<15x105x120xf32, #tpu.memory_space<vmem>>, vector<1x105x120xf32>
    %285 = vector.shape_cast %284 : vector<1x105x120xf32> to vector<105x120xf32>
    %286 = vector.broadcast %283 : vector<105x1xf32> to vector<105x120xf32>
    %287 = arith.mulf %286, %285 : vector<105x120xf32>
    %288 = arith.addf %282, %287 : vector<105x120xf32>
    %289 = vector.extract_strided_slice %277 {offsets = [0, 2], sizes = [105, 1], strides = [1, 1]} : vector<105x15xf32> to vector<105x1xf32>
    %c2_142 = arith.constant 2 : index
    %c0_143 = arith.constant 0 : index
    %c0_144 = arith.constant 0 : index
    %290 = vector.load %arg6[%c2_142, %c0_143, %c0_144] : memref<15x105x120xf32, #tpu.memory_space<vmem>>, vector<1x105x120xf32>
    %291 = vector.shape_cast %290 : vector<1x105x120xf32> to vector<105x120xf32>
    %292 = vector.broadcast %289 : vector<105x1xf32> to vector<105x120xf32>
    %293 = arith.mulf %292, %291 : vector<105x120xf32>
    %294 = arith.addf %288, %293 : vector<105x120xf32>
    %295 = vector.extract_strided_slice %277 {offsets = [0, 3], sizes = [105, 1], strides = [1, 1]} : vector<105x15xf32> to vector<105x1xf32>
    %c3_145 = arith.constant 3 : index
    %c0_146 = arith.constant 0 : index
    %c0_147 = arith.constant 0 : index
    %296 = vector.load %arg6[%c3_145, %c0_146, %c0_147] : memref<15x105x120xf32, #tpu.memory_space<vmem>>, vector<1x105x120xf32>
    %297 = vector.shape_cast %296 : vector<1x105x120xf32> to vector<105x120xf32>
    %298 = vector.broadcast %295 : vector<105x1xf32> to vector<105x120xf32>
    %299 = arith.mulf %298, %297 : vector<105x120xf32>
    %300 = arith.addf %294, %299 : vector<105x120xf32>
    %301 = vector.extract_strided_slice %277 {offsets = [0, 4], sizes = [105, 1], strides = [1, 1]} : vector<105x15xf32> to vector<105x1xf32>
    %c4_148 = arith.constant 4 : index
    %c0_149 = arith.constant 0 : index
    %c0_150 = arith.constant 0 : index
    %302 = vector.load %arg6[%c4_148, %c0_149, %c0_150] : memref<15x105x120xf32, #tpu.memory_space<vmem>>, vector<1x105x120xf32>
    %303 = vector.shape_cast %302 : vector<1x105x120xf32> to vector<105x120xf32>
    %304 = vector.broadcast %301 : vector<105x1xf32> to vector<105x120xf32>
    %305 = arith.mulf %304, %303 : vector<105x120xf32>
    %306 = arith.addf %300, %305 : vector<105x120xf32>
    %307 = vector.extract_strided_slice %277 {offsets = [0, 5], sizes = [105, 1], strides = [1, 1]} : vector<105x15xf32> to vector<105x1xf32>
    %c5_151 = arith.constant 5 : index
    %c0_152 = arith.constant 0 : index
    %c0_153 = arith.constant 0 : index
    %308 = vector.load %arg6[%c5_151, %c0_152, %c0_153] : memref<15x105x120xf32, #tpu.memory_space<vmem>>, vector<1x105x120xf32>
    %309 = vector.shape_cast %308 : vector<1x105x120xf32> to vector<105x120xf32>
    %310 = vector.broadcast %307 : vector<105x1xf32> to vector<105x120xf32>
    %311 = arith.mulf %310, %309 : vector<105x120xf32>
    %312 = arith.addf %306, %311 : vector<105x120xf32>
    %313 = vector.extract_strided_slice %277 {offsets = [0, 6], sizes = [105, 1], strides = [1, 1]} : vector<105x15xf32> to vector<105x1xf32>
    %c6_154 = arith.constant 6 : index
    %c0_155 = arith.constant 0 : index
    %c0_156 = arith.constant 0 : index
    %314 = vector.load %arg6[%c6_154, %c0_155, %c0_156] : memref<15x105x120xf32, #tpu.memory_space<vmem>>, vector<1x105x120xf32>
    %315 = vector.shape_cast %314 : vector<1x105x120xf32> to vector<105x120xf32>
    %316 = vector.broadcast %313 : vector<105x1xf32> to vector<105x120xf32>
    %317 = arith.mulf %316, %315 : vector<105x120xf32>
    %318 = arith.addf %312, %317 : vector<105x120xf32>
    %319 = vector.extract_strided_slice %277 {offsets = [0, 7], sizes = [105, 1], strides = [1, 1]} : vector<105x15xf32> to vector<105x1xf32>
    %c7_157 = arith.constant 7 : index
    %c0_158 = arith.constant 0 : index
    %c0_159 = arith.constant 0 : index
    %320 = vector.load %arg6[%c7_157, %c0_158, %c0_159] : memref<15x105x120xf32, #tpu.memory_space<vmem>>, vector<1x105x120xf32>
    %321 = vector.shape_cast %320 : vector<1x105x120xf32> to vector<105x120xf32>
    %322 = vector.broadcast %319 : vector<105x1xf32> to vector<105x120xf32>
    %323 = arith.mulf %322, %321 : vector<105x120xf32>
    %324 = arith.addf %318, %323 : vector<105x120xf32>
    %325 = vector.extract_strided_slice %277 {offsets = [0, 8], sizes = [105, 1], strides = [1, 1]} : vector<105x15xf32> to vector<105x1xf32>
    %c8_160 = arith.constant 8 : index
    %c0_161 = arith.constant 0 : index
    %c0_162 = arith.constant 0 : index
    %326 = vector.load %arg6[%c8_160, %c0_161, %c0_162] : memref<15x105x120xf32, #tpu.memory_space<vmem>>, vector<1x105x120xf32>
    %327 = vector.shape_cast %326 : vector<1x105x120xf32> to vector<105x120xf32>
    %328 = vector.broadcast %325 : vector<105x1xf32> to vector<105x120xf32>
    %329 = arith.mulf %328, %327 : vector<105x120xf32>
    %330 = arith.addf %324, %329 : vector<105x120xf32>
    %331 = vector.extract_strided_slice %277 {offsets = [0, 9], sizes = [105, 1], strides = [1, 1]} : vector<105x15xf32> to vector<105x1xf32>
    %c9_163 = arith.constant 9 : index
    %c0_164 = arith.constant 0 : index
    %c0_165 = arith.constant 0 : index
    %332 = vector.load %arg6[%c9_163, %c0_164, %c0_165] : memref<15x105x120xf32, #tpu.memory_space<vmem>>, vector<1x105x120xf32>
    %333 = vector.shape_cast %332 : vector<1x105x120xf32> to vector<105x120xf32>
    %334 = vector.broadcast %331 : vector<105x1xf32> to vector<105x120xf32>
    %335 = arith.mulf %334, %333 : vector<105x120xf32>
    %336 = arith.addf %330, %335 : vector<105x120xf32>
    %337 = vector.extract_strided_slice %277 {offsets = [0, 10], sizes = [105, 1], strides = [1, 1]} : vector<105x15xf32> to vector<105x1xf32>
    %c10_166 = arith.constant 10 : index
    %c0_167 = arith.constant 0 : index
    %c0_168 = arith.constant 0 : index
    %338 = vector.load %arg6[%c10_166, %c0_167, %c0_168] : memref<15x105x120xf32, #tpu.memory_space<vmem>>, vector<1x105x120xf32>
    %339 = vector.shape_cast %338 : vector<1x105x120xf32> to vector<105x120xf32>
    %340 = vector.broadcast %337 : vector<105x1xf32> to vector<105x120xf32>
    %341 = arith.mulf %340, %339 : vector<105x120xf32>
    %342 = arith.addf %336, %341 : vector<105x120xf32>
    %343 = vector.extract_strided_slice %277 {offsets = [0, 11], sizes = [105, 1], strides = [1, 1]} : vector<105x15xf32> to vector<105x1xf32>
    %c11_169 = arith.constant 11 : index
    %c0_170 = arith.constant 0 : index
    %c0_171 = arith.constant 0 : index
    %344 = vector.load %arg6[%c11_169, %c0_170, %c0_171] : memref<15x105x120xf32, #tpu.memory_space<vmem>>, vector<1x105x120xf32>
    %345 = vector.shape_cast %344 : vector<1x105x120xf32> to vector<105x120xf32>
    %346 = vector.broadcast %343 : vector<105x1xf32> to vector<105x120xf32>
    %347 = arith.mulf %346, %345 : vector<105x120xf32>
    %348 = arith.addf %342, %347 : vector<105x120xf32>
    %349 = vector.extract_strided_slice %277 {offsets = [0, 12], sizes = [105, 1], strides = [1, 1]} : vector<105x15xf32> to vector<105x1xf32>
    %c12_172 = arith.constant 12 : index
    %c0_173 = arith.constant 0 : index
    %c0_174 = arith.constant 0 : index
    %350 = vector.load %arg6[%c12_172, %c0_173, %c0_174] : memref<15x105x120xf32, #tpu.memory_space<vmem>>, vector<1x105x120xf32>
    %351 = vector.shape_cast %350 : vector<1x105x120xf32> to vector<105x120xf32>
    %352 = vector.broadcast %349 : vector<105x1xf32> to vector<105x120xf32>
    %353 = arith.mulf %352, %351 : vector<105x120xf32>
    %354 = arith.addf %348, %353 : vector<105x120xf32>
    %355 = vector.extract_strided_slice %277 {offsets = [0, 13], sizes = [105, 1], strides = [1, 1]} : vector<105x15xf32> to vector<105x1xf32>
    %c13_175 = arith.constant 13 : index
    %c0_176 = arith.constant 0 : index
    %c0_177 = arith.constant 0 : index
    %356 = vector.load %arg6[%c13_175, %c0_176, %c0_177] : memref<15x105x120xf32, #tpu.memory_space<vmem>>, vector<1x105x120xf32>
    %357 = vector.shape_cast %356 : vector<1x105x120xf32> to vector<105x120xf32>
    %358 = vector.broadcast %355 : vector<105x1xf32> to vector<105x120xf32>
    %359 = arith.mulf %358, %357 : vector<105x120xf32>
    %360 = arith.addf %354, %359 : vector<105x120xf32>
    %361 = vector.extract_strided_slice %277 {offsets = [0, 14], sizes = [105, 1], strides = [1, 1]} : vector<105x15xf32> to vector<105x1xf32>
    %c14_178 = arith.constant 14 : index
    %c0_179 = arith.constant 0 : index
    %c0_180 = arith.constant 0 : index
    %362 = vector.load %arg6[%c14_178, %c0_179, %c0_180] : memref<15x105x120xf32, #tpu.memory_space<vmem>>, vector<1x105x120xf32>
    %363 = vector.shape_cast %362 : vector<1x105x120xf32> to vector<105x120xf32>
    %364 = vector.broadcast %361 : vector<105x1xf32> to vector<105x120xf32>
    %365 = arith.mulf %364, %363 : vector<105x120xf32>
    %366 = arith.addf %360, %365 : vector<105x120xf32>
    %cst_181 = arith.constant dense<0.000000e+00> : vector<1x120xf32>
    %367 = tpu.matmul %185, %366, %cst_181 {dimension_numbers = #tpu.dot_dimension_numbers<[1], [0], [0], [1], [0, 0, 1, 1], [], []>} : vector<1x105xf32>, vector<105x120xf32>, vector<1x120xf32> -> vector<1x120xf32>
    %368 = tpu.concatenate %276, %367 in 0 : vector<1x120xf32>, vector<1x120xf32> -> vector<2x120xf32>
    %c0_182 = arith.constant 0 : index
    %c0_183 = arith.constant 0 : index
    %369 = vector.load %arg7[%c0_182, %c0_183] : memref<1x120xf32, #tpu.memory_space<vmem>>, vector<1x120xf32>
    %370 = vector.broadcast %369 : vector<1x120xf32> to vector<2x120xf32>
    %371 = arith.addf %368, %370 : vector<2x120xf32>
    %cst_184 = arith.constant 0.000000e+00 : f32
    %372 = vector.broadcast %cst_184 : f32 to vector<2x120xf32>
    %373 = arith.maximumf %371, %372 : vector<2x120xf32>
    %c0_185 = arith.constant 0 : index
    %c0_186 = arith.constant 0 : index
    %374 = vector.load %arg8[%c0_185, %c0_186] : memref<120x84xf32, #tpu.memory_space<vmem>>, vector<120x84xf32>
    %cst_187 = arith.constant dense<0.000000e+00> : vector<2x84xf32>
    %375 = tpu.matmul %373, %374, %cst_187 {dimension_numbers = #tpu.dot_dimension_numbers<[1], [0], [0], [1], [0, 0, 1, 1], [], []>} : vector<2x120xf32>, vector<120x84xf32>, vector<2x84xf32> -> vector<2x84xf32>
    %c0_188 = arith.constant 0 : index
    %c0_189 = arith.constant 0 : index
    %376 = vector.load %arg9[%c0_188, %c0_189] : memref<1x84xf32, #tpu.memory_space<vmem>>, vector<1x84xf32>
    %377 = vector.broadcast %376 : vector<1x84xf32> to vector<2x84xf32>
    %378 = arith.addf %375, %377 : vector<2x84xf32>
    %cst_190 = arith.constant 0.000000e+00 : f32
    %379 = vector.broadcast %cst_190 : f32 to vector<2x84xf32>
    %380 = arith.maximumf %378, %379 : vector<2x84xf32>
    %c0_191 = arith.constant 0 : index
    %c0_192 = arith.constant 0 : index
    %381 = vector.load %arg10[%c0_191, %c0_192] : memref<84x3xf32, #tpu.memory_space<vmem>>, vector<84x3xf32>
    %cst_193 = arith.constant dense<0.000000e+00> : vector<2x3xf32>
    %382 = tpu.matmul %380, %381, %cst_193 {dimension_numbers = #tpu.dot_dimension_numbers<[1], [0], [0], [1], [0, 0, 1, 1], [], []>} : vector<2x84xf32>, vector<84x3xf32>, vector<2x3xf32> -> vector<2x3xf32>
    %c0_194 = arith.constant 0 : index
    %c0_195 = arith.constant 0 : index
    %383 = vector.load %arg11[%c0_194, %c0_195] : memref<1x3xf32, #tpu.memory_space<vmem>>, vector<1x3xf32>
    %384 = vector.broadcast %383 : vector<1x3xf32> to vector<2x3xf32>
    %385 = arith.addf %382, %384 : vector<2x3xf32>
    %c0_196 = arith.constant 0 : index
    %c0_197 = arith.constant 0 : index
    %386 = vector.load %arg12[%c0_196, %c0_197] : memref<2x3xf32, #tpu.memory_space<vmem>>, vector<2x3xf32>
    tpu.vector_store %arg12[%c0_196, %c0_197], %385 {strides = array<i32>} : memref<2x3xf32, #tpu.memory_space<vmem>>, vector<2x3xf32>,
    return
  }
  func.func @transform_0(%arg0: i32) -> (i32, i32, i32) {
    %c0_i32 = arith.constant 0 : i32
    %c0_i32_0 = arith.constant 0 : i32
    %c0_i32_1 = arith.constant 0 : i32
    %c0_i32_2 = arith.constant 0 : i32
    return %c0_i32, %c0_i32_0, %c0_i32_1 : i32, i32, i32
  }
  func.func @transform_1(%arg0: i32) -> (i32, i32) {
    %c0_i32 = arith.constant 0 : i32
    %c0_i32_0 = arith.constant 0 : i32
    %c0_i32_1 = arith.constant 0 : i32
    return %c0_i32, %c0_i32_0 : i32, i32
  }
  func.func @transform_2(%arg0: i32) -> (i32, i32) {
    %c0_i32 = arith.constant 0 : i32
    %c0_i32_0 = arith.constant 0 : i32
    %c0_i32_1 = arith.constant 0 : i32
    return %c0_i32, %c0_i32_0 : i32, i32
  }
  func.func @transform_3(%arg0: i32) -> (i32, i32, i32) {
    %c0_i32 = arith.constant 0 : i32
    %c0_i32_0 = arith.constant 0 : i32
    %c0_i32_1 = arith.constant 0 : i32
    %c0_i32_2 = arith.constant 0 : i32
    return %c0_i32, %c0_i32_0, %c0_i32_1 : i32, i32, i32
  }
  func.func @transform_4(%arg0: i32) -> (i32, i32) {
    %c0_i32 = arith.constant 0 : i32
    %c0_i32_0 = arith.constant 0 : i32
    %c0_i32_1 = arith.constant 0 : i32
    return %c0_i32, %c0_i32_0 : i32, i32
  }
  func.func @transform_5(%arg0: i32) -> (i32, i32, i32) {
    %c0_i32 = arith.constant 0 : i32
    %c0_i32_0 = arith.constant 0 : i32
    %c0_i32_1 = arith.constant 0 : i32
    %c0_i32_2 = arith.constant 0 : i32
    return %c0_i32, %c0_i32_0, %c0_i32_1 : i32, i32, i32
  }
  func.func @transform_6(%arg0: i32) -> (i32, i32) {
    %c0_i32 = arith.constant 0 : i32
    %c0_i32_0 = arith.constant 0 : i32
    %c0_i32_1 = arith.constant 0 : i32
    return %c0_i32, %c0_i32_0 : i32, i32
  }
  func.func @transform_7(%arg0: i32) -> (i32, i32) {
    %c0_i32 = arith.constant 0 : i32
    %c0_i32_0 = arith.constant 0 : i32
    %c0_i32_1 = arith.constant 0 : i32
    return %c0_i32, %c0_i32_0 : i32, i32
  }
  func.func @transform_8(%arg0: i32) -> (i32, i32) {
    %c0_i32 = arith.constant 0 : i32
    %c0_i32_0 = arith.constant 0 : i32
    %c0_i32_1 = arith.constant 0 : i32
    return %c0_i32, %c0_i32_0 : i32, i32
  }
  func.func @transform_9(%arg0: i32) -> (i32, i32) {
    %c0_i32 = arith.constant 0 : i32
    %c0_i32_0 = arith.constant 0 : i32
    %c0_i32_1 = arith.constant 0 : i32
    return %c0_i32, %c0_i32_0 : i32, i32
  }
  func.func @transform_10(%arg0: i32) -> (i32, i32) {
    %c0_i32 = arith.constant 0 : i32
    %c0_i32_0 = arith.constant 0 : i32
    %c0_i32_1 = arith.constant 0 : i32
    return %c0_i32, %c0_i32_0 : i32, i32
  }
  func.func @transform_11(%arg0: i32) -> (i32, i32) {
    %c0_i32 = arith.constant 0 : i32
    %c0_i32_0 = arith.constant 0 : i32
    %c0_i32_1 = arith.constant 0 : i32
    return %c0_i32, %c0_i32_0 : i32, i32
  }
}

</mosaic_0001>

<llo_original>
// kernel: lenet_forward_pallas.1
$region0: #{lenet_forward_pallas.1}
  #allocation0 [shape = 'u32[]', space=smem, size = 0x4, offset = 0x4, fixed_abs, tag = 'smem constant byte address 0x4 - core index']
  #allocation1 [shape = 'u32[144,128]{1,0:T(1,128)}', space=vmem, size = 0x12000, scoped, tag = 'internal scratch']
  %s0 = inlined_call_operand.vmem [shape: f32[9,210,9], index: 0, kind: input, shape index: {}]
  %s1 = inlined_call_operand.vmem [shape: f32[9,20], index: 1, kind: input, shape index: {}]
  %s2 = inlined_call_operand.vmem [shape: f32[1,5], index: 2, kind: input, shape index: {}]
  %s3 = inlined_call_operand.vmem [shape: f32[9,5,60], index: 3, kind: input, shape index: {}]
  %s4 = inlined_call_operand.vmem [shape: f32[1,15], index: 4, kind: input, shape index: {}]
  %s5 = inlined_call_operand.vmem [shape: f32[15,105,120], index: 5, kind: input, shape index: {}]
  %s6 = inlined_call_operand.vmem [shape: f32[1,120], index: 6, kind: input, shape index: {}]
  %s7 = inlined_call_operand.vmem [shape: f32[120,84], index: 7, kind: input, shape index: {}]
  %s8 = inlined_call_operand.vmem [shape: f32[1,84], index: 8, kind: input, shape index: {}]
  %s9 = inlined_call_operand.vmem [shape: f32[84,3], index: 9, kind: input, shape index: {}]
  %s10 = inlined_call_operand.vmem [shape: f32[1,3], index: 10, kind: input, shape index: {}]
  %s11 = inlined_call_operand.hbm [shape: f32[2,3], index: 11, kind: output, shape index: {}]
  %s12 = sld [smem:[#allocation0]]
  $region54: #{lenet_forward_pallas.1} parent=0
    _
  %s14 = ssub.s32 1, %s12
  %s15 = scalar_select 0, %s14, %s12
  $region1: #{lenet_forward_pallas.1} parent=0
    #allocation2 [shape = 'u8[1024]{0}', space=vmem, size = 0x400, scoped, tag = 'output window, operand 0, single buffered']
    #allocation3 [shape = 's32[1]{0}', space=sflag, size = 0x4, scoped, tag = 'scoped memory for lenet_forward_pallas.1']
    %16 = vsyncpa [#allocation3], 0
    // Predicated region
    $region2: #{lenet_forward_pallas.1} parent=1 // pred_check
      _
    $region3: #{lenet_forward_pallas.1} parent=1 // pred_check_branch
      %18 = sbr.rel (0) target = $region5
    $region4: #{lenet_forward_pallas.1} parent=1 // pred_region
      _
    $region5: #{lenet_forward_pallas.1} parent=1 // pred_fallthru
      _
    // Predicated region
    $region6: #{lenet_forward_pallas.1} parent=1 // pred_check
      _
    $region7: #{lenet_forward_pallas.1} parent=1 // pred_check_branch
      %20 = sbr.rel (0) target = $region9
    $region8: #{lenet_forward_pallas.1} parent=1 // pred_region
      _
    $region9: #{lenet_forward_pallas.1} parent=1 // pred_fallthru
      _
    // Predicated region
    $region10: #{lenet_forward_pallas.1} parent=1 // pred_check
      _
    $region11: #{lenet_forward_pallas.1} parent=1 // pred_check_branch
      %22 = sbr.rel (0) target = $region13
    $region12: #{lenet_forward_pallas.1} parent=1 // pred_region
      _
    $region13: #{lenet_forward_pallas.1} parent=1 // pred_fallthru
      _
    // Predicated region
    $region14: #{lenet_forward_pallas.1} parent=1 // pred_check
      _
    $region15: #{lenet_forward_pallas.1} parent=1 // pred_check_branch
      %24 = sbr.rel (0) target = $region17
    $region16: #{lenet_forward_pallas.1} parent=1 // pred_region
      _
    $region17: #{lenet_forward_pallas.1} parent=1 // pred_fallthru
      _
    // Predicated region
    $region18: #{lenet_forward_pallas.1} parent=1 // pred_check
      _
    $region19: #{lenet_forward_pallas.1} parent=1 // pred_check_branch
      %26 = sbr.rel (0) target = $region21
    $region20: #{lenet_forward_pallas.1} parent=1 // pred_region
      _
    $region21: #{lenet_forward_pallas.1} parent=1 // pred_fallthru
      _
    // Predicated region
    $region22: #{lenet_forward_pallas.1} parent=1 // pred_check
      _
    $region23: #{lenet_forward_pallas.1} parent=1 // pred_check_branch
      %28 = sbr.rel (0) target = $region25
    $region24: #{lenet_forward_pallas.1} parent=1 // pred_region
      _
    $region25: #{lenet_forward_pallas.1} parent=1 // pred_fallthru
      _
    // Predicated region
    $region26: #{lenet_forward_pallas.1} parent=1 // pred_check
      _
    $region27: #{lenet_forward_pallas.1} parent=1 // pred_check_branch
      %30 = sbr.rel (0) target = $region29
    $region28: #{lenet_forward_pallas.1} parent=1 // pred_region
      _
    $region29: #{lenet_forward_pallas.1} parent=1 // pred_fallthru
      _
    // Predicated region
    $region30: #{lenet_forward_pallas.1} parent=1 // pred_check
      _
    $region31: #{lenet_forward_pallas.1} parent=1 // pred_check_branch
      %32 = sbr.rel (0) target = $region33
    $region32: #{lenet_forward_pallas.1} parent=1 // pred_region
      _
    $region33: #{lenet_forward_pallas.1} parent=1 // pred_fallthru
      _
    // Predicated region
    $region34: #{lenet_forward_pallas.1} parent=1 // pred_check
      _
    $region35: #{lenet_forward_pallas.1} parent=1 // pred_check_branch
      %34 = sbr.rel (0) target = $region37
    $region36: #{lenet_forward_pallas.1} parent=1 // pred_region
      _
    $region37: #{lenet_forward_pallas.1} parent=1 // pred_fallthru
      _
    // Predicated region
    $region38: #{lenet_forward_pallas.1} parent=1 // pred_check
      _
    $region39: #{lenet_forward_pallas.1} parent=1 // pred_check_branch
      %36 = sbr.rel (0) target = $region41
    $region40: #{lenet_forward_pallas.1} parent=1 // pred_region
      _
    $region41: #{lenet_forward_pallas.1} parent=1 // pred_fallthru
      _
    // Predicated region
    $region42: #{lenet_forward_pallas.1} parent=1 // pred_check
      _
    $region43: #{lenet_forward_pallas.1} parent=1 // pred_check_branch
      %38 = sbr.rel (0) target = $region45
    $region44: #{lenet_forward_pallas.1} parent=1 // pred_region
      _
    $region45: #{lenet_forward_pallas.1} parent=1 // pred_fallthru
      _
    %v39 = vld [vmem:[%s2] sm:$0x1]
    %v40 = vld [vmem:[%s0] sm:$0xff]
    %v41 = vld [vmem:[%s0 + $0x8] sm:$0xff]
    %v42 = vld [vmem:[%s0 + $0x10] sm:$0xff]
    %v43 = vld [vmem:[%s0 + $0x18] sm:$0xff]
    %v44 = vld [vmem:[%s0 + $0x20] sm:$0xff]
    %v45 = vld [vmem:[%s0 + $0x28] sm:$0xff]
    %v46 = vld [vmem:[%s0 + $0x30] sm:$0xff]
    %v47 = vld [vmem:[%s0 + $0x38] sm:$0xff]
    %v48 = vld [vmem:[%s0 + $0x40] sm:$0xff]
    %v49 = vld [vmem:[%s0 + $0x48] sm:$0xff]
    %v50 = vld [vmem:[%s0 + $0x50] sm:$0xff]
    %v51 = vld [vmem:[%s0 + $0x58] sm:$0xff]
    %v52 = vld [vmem:[%s0 + $0x60] sm:$0xff]
    %v53 = vld [vmem:[%s0 + $0x68] sm:$0xff]
    %v54 = vld [vmem:[%s0 + $0x70] sm:$0xff]
    %v55 = vld [vmem:[%s0 + $0x78] sm:$0xff]
    %v56 = vld [vmem:[%s0 + $0x80] sm:$0xff]
    %v57 = vld [vmem:[%s0 + $0x88] sm:$0xff]
    %v58 = vld [vmem:[%s0 + $0x90] sm:$0xff]
    %v59 = vld [vmem:[%s0 + $0x98] sm:$0xff]
    %v60 = vld [vmem:[%s0 + $0xa0] sm:$0xff]
    %v61 = vld [vmem:[%s0 + $0xa8] sm:$0xff]
    %v62 = vld [vmem:[%s0 + $0xb0] sm:$0xff]
    %v63 = vld [vmem:[%s0 + $0xb8] sm:$0xff]
    %v64 = vld [vmem:[%s0 + $0xc0] sm:$0xff]
    %v65 = vld [vmem:[%s0 + $0xc8] sm:$0xff]
    %v66 = vld [vmem:[%s0 + $0xd0] sm:$0x3]
    %v67 = vld [vmem:[%s1] sm:$0xff]
    %v68 = vld [vmem:[%s1 + $0x8] sm:$0x1]
    %vm69 = vcmask 72704
    %v71 = vsel %vm69, %v40, 0
    %v74 = vsel %vm69, %v41, 0
    %v77 = vsel %vm69, %v42, 0
    %v80 = vsel %vm69, %v43, 0
    %v83 = vsel %vm69, %v44, 0
    %v86 = vsel %vm69, %v45, 0
    %v89 = vsel %vm69, %v46, 0
    %v92 = vsel %vm69, %v47, 0
    %v95 = vsel %vm69, %v48, 0
    %v98 = vsel %vm69, %v49, 0
    %v101 = vsel %vm69, %v50, 0
    %v104 = vsel %vm69, %v51, 0
    %v107 = vsel %vm69, %v52, 0
    %v110 = vsel %vm69, %v53, 0
    %v113 = vsel %vm69, %v54, 0
    %v116 = vsel %vm69, %v55, 0
    %v119 = vsel %vm69, %v56, 0
    %v122 = vsel %vm69, %v57, 0
    %v125 = vsel %vm69, %v58, 0
    %v128 = vsel %vm69, %v59, 0
    %v131 = vsel %vm69, %v60, 0
    %v134 = vsel %vm69, %v61, 0
    %v137 = vsel %vm69, %v62, 0
    %v140 = vsel %vm69, %v63, 0
    %v143 = vsel %vm69, %v64, 0
    %v146 = vsel %vm69, %v65, 0
    %v149 = vsel %vm69, %v66, 0
    %vm151 = vcmask 1040384
    %v153 = vsel %vm151, %v68, 0
    %155 = vmatprep.subr.mxu0 0.0
    %156 = vmatpush1.msra.mxu0 %v67
    %157 = vmatprep.subr.mxu0 0.0
    %158 = vmatpush1.msra.mxu0 %v153
    %159 = vmatprep.subr.mxu0 0.0
    %160 = vmatpush1.msra.mxu0 0.0
    %161 = vmatprep.subr.mxu0 0.0
    %162 = vmatpush1.msra.mxu0 0.0
    %163 = vmatprep.subr.mxu0 0.0
    %164 = vmatpush1.msra.mxu0 0.0
    %165 = vmatprep.subr.mxu0 0.0
    %166 = vmatpush1.msra.mxu0 0.0
    %167 = vmatprep.subr.mxu0 0.0
    %168 = vmatpush1.msra.mxu0 0.0
    %169 = vmatprep.subr.mxu0 0.0
    %170 = vmatpush1.msra.mxu0 0.0
    %171 = vmatprep.subr.mxu0 0.0
    %172 = vmatpush1.msra.mxu0 0.0
    %173 = vmatprep.subr.mxu0 0.0
    %174 = vmatpush1.msra.mxu0 0.0
    %175 = vmatprep.subr.mxu0 0.0
    %176 = vmatpush1.msra.mxu0 0.0
    %177 = vmatprep.subr.mxu0 0.0
    %178 = vmatpush1.msra.mxu0 0.0
    %179 = vmatprep.subr.mxu0 0.0
    %180 = vmatpush1.msra.mxu0 0.0
    %181 = vmatprep.subr.mxu0 0.0
    %182 = vmatpush1.msra.mxu0 0.0
    %183 = vmatprep.subr.mxu0 0.0
    %184 = vmatpush1.msra.mxu0 0.0
    %185 = vmatprep.subr.mxu0 0.0
    %186 = vmatpush1.msra.mxu0 0.0
    %187 = vmatprep.subr.mxu0 0.0
    %188 = vmatpush1.msra.mxu0 0.0
    %189 = vmatprep.subr.mxu0 0.0
    %190 = vmatpush1.msra.mxu0 0.0
    %191 = vmatprep.subr.mxu0 0.0
    %192 = vmatpush1.msra.mxu0 0.0
    %193 = vmatprep.subr.mxu0 0.0
    %194 = vmatpush1.msra.mxu0 0.0
    %195 = vmatprep.subr.mxu0 0.0
    %196 = vmatpush1.msra.mxu0 0.0
    %197 = vmatprep.subr.mxu0 0.0
    %198 = vmatpush1.msra.mxu0 0.0
    %199 = vmatprep.subr.mxu0 0.0
    %200 = vmatpush1.msra.mxu0 0.0
    %201 = vmatprep.subr.mxu0 0.0
    %202 = vmatpush1.msra.mxu0 0.0
    %203 = vmatprep.subr.mxu0 0.0
    %204 = vmatpush1.msra.mxu0 0.0
    %205 = vmatprep.subr.mxu0 0.0
    %206 = vmatpush1.msra.mxu0 0.0
    %207 = vmatprep.subr.mxu0 0.0
    %208 = vmatpush1.msra.mxu0 0.0
    %209 = vmatprep.subr.mxu0 0.0
    %210 = vmatpush1.msra.mxu0 0.0
    %211 = vmatprep.subr.mxu0 0.0
    %212 = vmatpush1.msra.mxu0 0.0
    %213 = vmatprep.subr.mxu0 0.0
    %214 = vmatpush1.msra.mxu0 0.0
    %215 = vmatprep.subr.mxu0 0.0
    %216 = vmatpush1.msra.mxu0 0.0
    %217 = vmatprep.subr.mxu0 0.0
    %218 = vmatpush1.msra.mxu0 0.0
    %219 = vmatprep.mubr.f32.mxu0 0.0
    %220 = vmatmul.mubr.f32.gmra.mrb[0].mxu0 %v71
    %v221 = vpop.f32.mrb[0].mxu0
    %v222 = vadd.f32 0.0, %v221
    %v223 = vpop.f32.mrb[0].mxu0
    %224 = vmatprep.mubr.f32.mxu0 0.0
    %225 = vmatmul.mubr.f32.gmra.mrb[0].mxu0 %v74
    %v226 = vpop.f32.mrb[0].mxu0
    %v227 = vadd.f32 0.0, %v226
    %v228 = vpop.f32.mrb[0].mxu0
    %229 = vmatprep.mubr.f32.mxu0 0.0
    %230 = vmatmul.mubr.f32.gmra.mrb[0].mxu0 %v77
    %v231 = vpop.f32.mrb[0].mxu0
    %v232 = vadd.f32 0.0, %v231
    %v233 = vpop.f32.mrb[0].mxu0
    %234 = vmatprep.mubr.f32.mxu0 0.0
    %235 = vmatmul.mubr.f32.gmra.mrb[0].mxu0 %v80
    %v236 = vpop.f32.mrb[0].mxu0
    %v237 = vadd.f32 0.0, %v236
    %v238 = vpop.f32.mrb[0].mxu0
    %239 = vmatprep.mubr.f32.mxu0 0.0
    %240 = vmatmul.mubr.f32.gmra.mrb[0].mxu0 %v83
    %v241 = vpop.f32.mrb[0].mxu0
    %v242 = vadd.f32 0.0, %v241
    %v243 = vpop.f32.mrb[0].mxu0
    %244 = vmatprep.mubr.f32.mxu0 0.0
    %245 = vmatmul.mubr.f32.gmra.mrb[0].mxu0 %v86
    %v246 = vpop.f32.mrb[0].mxu0
    %v247 = vadd.f32 0.0, %v246
    %v248 = vpop.f32.mrb[0].mxu0
    %249 = vmatprep.mubr.f32.mxu0 0.0
    %250 = vmatmul.mubr.f32.gmra.mrb[0].mxu0 %v89
    %v251 = vpop.f32.mrb[0].mxu0
    %v252 = vadd.f32 0.0, %v251
    %v253 = vpop.f32.mrb[0].mxu0
    %254 = vmatprep.mubr.f32.mxu0 0.0
    %255 = vmatmul.mubr.f32.gmra.mrb[0].mxu0 %v92
    %v256 = vpop.f32.mrb[0].mxu0
    %v257 = vadd.f32 0.0, %v256
    %v258 = vpop.f32.mrb[0].mxu0
    %259 = vmatprep.mubr.f32.mxu0 0.0
    %260 = vmatmul.mubr.f32.gmra.mrb[0].mxu0 %v95
    %v261 = vpop.f32.mrb[0].mxu0
    %v262 = vadd.f32 0.0, %v261
    %v263 = vpop.f32.mrb[0].mxu0
    %264 = vmatprep.mubr.f32.mxu0 0.0
    %265 = vmatmul.mubr.f32.gmra.mrb[0].mxu0 %v98
    %v266 = vpop.f32.mrb[0].mxu0
    %v267 = vadd.f32 0.0, %v266
    %v268 = vpop.f32.mrb[0].mxu0
    %269 = vmatprep.mubr.f32.mxu0 0.0
    %270 = vmatmul.mubr.f32.gmra.mrb[0].mxu0 %v101
    %v271 = vpop.f32.mrb[0].mxu0
    %v272 = vadd.f32 0.0, %v271
    %v273 = vpop.f32.mrb[0].mxu0
    %274 = vmatprep.mubr.f32.mxu0 0.0
    %275 = vmatmul.mubr.f32.gmra.mrb[0].mxu0 %v104
    %v276 = vpop.f32.mrb[0].mxu0
    %v277 = vadd.f32 0.0, %v276
    %v278 = vpop.f32.mrb[0].mxu0
    %279 = vmatprep.mubr.f32.mxu0 0.0
    %280 = vmatmul.mubr.f32.gmra.mrb[0].mxu0 %v107
    %v281 = vpop.f32.mrb[0].mxu0
    %v282 = vadd.f32 0.0, %v281
    %v283 = vpop.f32.mrb[0].mxu0
    %284 = vmatprep.mubr.f32.mxu0 0.0
    %285 = vmatmul.mubr.f32.gmra.mrb[0].mxu0 %v110
    %v286 = vpop.f32.mrb[0].mxu0
    %v287 = vadd.f32 0.0, %v286
    %v288 = vpop.f32.mrb[0].mxu0
    %289 = vmatprep.mubr.f32.mxu0 0.0
    %290 = vmatmul.mubr.f32.gmra.mrb[0].mxu0 %v113
    %v291 = vpop.f32.mrb[0].mxu0
    %v292 = vadd.f32 0.0, %v291
    %v293 = vpop.f32.mrb[0].mxu0
    %294 = vmatprep.mubr.f32.mxu0 0.0
    %295 = vmatmul.mubr.f32.gmra.mrb[0].mxu0 %v116
    %v296 = vpop.f32.mrb[0].mxu0
    %v297 = vadd.f32 0.0, %v296
    %v298 = vpop.f32.mrb[0].mxu0
    %299 = vmatprep.mubr.f32.mxu0 0.0
    %300 = vmatmul.mubr.f32.gmra.mrb[0].mxu0 %v119
    %v301 = vpop.f32.mrb[0].mxu0
    %v302 = vadd.f32 0.0, %v301
    %v303 = vpop.f32.mrb[0].mxu0
    %304 = vmatprep.mubr.f32.mxu0 0.0
    %305 = vmatmul.mubr.f32.gmra.mrb[0].mxu0 %v122
    %v306 = vpop.f32.mrb[0].mxu0
    %v307 = vadd.f32 0.0, %v306
    %v308 = vpop.f32.mrb[0].mxu0
    %309 = vmatprep.mubr.f32.mxu0 0.0
    %310 = vmatmul.mubr.f32.gmra.mrb[0].mxu0 %v125
    %v311 = vpop.f32.mrb[0].mxu0
    %v312 = vadd.f32 0.0, %v311
    %v313 = vpop.f32.mrb[0].mxu0
    %314 = vmatprep.mubr.f32.mxu0 0.0
    %315 = vmatmul.mubr.f32.gmra.mrb[0].mxu0 %v128
    %v316 = vpop.f32.mrb[0].mxu0
    %v317 = vadd.f32 0.0, %v316
    %v318 = vpop.f32.mrb[0].mxu0
    %319 = vmatprep.mubr.f32.mxu0 0.0
    %320 = vmatmul.mubr.f32.gmra.mrb[0].mxu0 %v131
    %v321 = vpop.f32.mrb[0].mxu0
    %v322 = vadd.f32 0.0, %v321
    %v323 = vpop.f32.mrb[0].mxu0
    %324 = vmatprep.mubr.f32.mxu0 0.0
    %325 = vmatmul.mubr.f32.gmra.mrb[0].mxu0 %v134
    %v326 = vpop.f32.mrb[0].mxu0
    %v327 = vadd.f32 0.0, %v326
    %v328 = vpop.f32.mrb[0].mxu0
    %329 = vmatprep.mubr.f32.mxu0 0.0
    %330 = vmatmul.mubr.f32.gmra.mrb[0].mxu0 %v137
    %v331 = vpop.f32.mrb[0].mxu0
    %v332 = vadd.f32 0.0, %v331
    %v333 = vpop.f32.mrb[0].mxu0
    %334 = vmatprep.mubr.f32.mxu0 0.0
    %335 = vmatmul.mubr.f32.gmra.mrb[0].mxu0 %v140
    %v336 = vpop.f32.mrb[0].mxu0
    %v337 = vadd.f32 0.0, %v336
    %v338 = vpop.f32.mrb[0].mxu0
    %339 = vmatprep.mubr.f32.mxu0 0.0
    %340 = vmatmul.mubr.f32.gmra.mrb[0].mxu0 %v143
    %v341 = vpop.f32.mrb[0].mxu0
    %v342 = vadd.f32 0.0, %v341
    %v343 = vpop.f32.mrb[0].mxu0
    %344 = vmatprep.mubr.f32.mxu0 0.0
    %345 = vmatmul.mubr.f32.gmra.mrb[0].mxu0 %v146
    %v346 = vpop.f32.mrb[0].mxu0
    %v347 = vadd.f32 0.0, %v346
    %v348 = vpop.f32.mrb[0].mxu0
    %349 = vmatprep.mubr.f32.mxu0 0.0
    %350 = vmatmul.mubr.f32.gmra.mrb[0].mxu0 %v149
    %v351 = vpop.f32.mrb[0].mxu0
    %v352 = vadd.f32 0.0, %v351
    %v353 = vpop.f32.mrb[0].mxu0
    %354 = vdwg.mxu0
    %382 = vrot.lane.b32.xlu0 %v222, 123
    %v383 = vpop.permute.xlu0 %382
    %384 = vrot.lane.b32.xlu0 %v227, 123
    %v385 = vpop.permute.xlu0 %384
    %386 = vrot.lane.b32.xlu0 %v232, 123
    %v387 = vpop.permute.xlu0 %386
    %388 = vrot.lane.b32.xlu0 %v237, 123
    %v389 = vpop.permute.xlu0 %388
    %390 = vrot.lane.b32.xlu0 %v242, 123
    %v391 = vpop.permute.xlu0 %390
    %392 = vrot.lane.b32.xlu0 %v247, 123
    %v393 = vpop.permute.xlu0 %392
    %394 = vrot.lane.b32.xlu0 %v252, 123
    %v395 = vpop.permute.xlu0 %394
    %396 = vrot.lane.b32.xlu0 %v257, 123
    %v397 = vpop.permute.xlu0 %396
    %398 = vrot.lane.b32.xlu0 %v262, 123
    %v399 = vpop.permute.xlu0 %398
    %400 = vrot.lane.b32.xlu0 %v267, 123
    %v401 = vpop.permute.xlu0 %400
    %402 = vrot.lane.b32.xlu0 %v272, 123
    %v403 = vpop.permute.xlu0 %402
    %404 = vrot.lane.b32.xlu0 %v277, 123
    %v405 = vpop.permute.xlu0 %404
    %406 = vrot.lane.b32.xlu0 %v282, 123
    %v407 = vpop.permute.xlu0 %406
    %408 = vrot.lane.b32.xlu0 %v287, 123
    %v409 = vpop.permute.xlu0 %408
    %410 = vrot.lane.b32.xlu0 %v292, 123
    %v411 = vpop.permute.xlu0 %410
    %412 = vrot.lane.b32.xlu0 %v297, 123
    %v413 = vpop.permute.xlu0 %412
    %414 = vrot.lane.b32.xlu0 %v302, 123
    %v415 = vpop.permute.xlu0 %414
    %416 = vrot.lane.b32.xlu0 %v307, 123
    %v417 = vpop.permute.xlu0 %416
    %418 = vrot.lane.b32.xlu0 %v312, 123
    %v419 = vpop.permute.xlu0 %418
    %420 = vrot.lane.b32.xlu0 %v317, 123
    %v421 = vpop.permute.xlu0 %420
    %422 = vrot.lane.b32.xlu0 %v322, 123
    %v423 = vpop.permute.xlu0 %422
    %424 = vrot.lane.b32.xlu0 %v327, 123
    %v425 = vpop.permute.xlu0 %424
    %426 = vrot.lane.b32.xlu0 %v332, 123
    %v427 = vpop.permute.xlu0 %426
    %428 = vrot.lane.b32.xlu0 %v337, 123
    %v429 = vpop.permute.xlu0 %428
    %430 = vrot.lane.b32.xlu0 %v342, 123
    %v431 = vpop.permute.xlu0 %430
    %432 = vrot.lane.b32.xlu0 %v347, 123
    %v433 = vpop.permute.xlu0 %432
    %434 = vrot.lane.b32.xlu0 %v352, 123
    %v435 = vpop.permute.xlu0 %434
    %v463 = vmax.f32 %v222, %v383
    %v464 = vmax.f32 %v227, %v385
    %v465 = vmax.f32 %v232, %v387
    %v466 = vmax.f32 %v237, %v389
    %v467 = vmax.f32 %v242, %v391
    %v468 = vmax.f32 %v247, %v393
    %v469 = vmax.f32 %v252, %v395
    %v470 = vmax.f32 %v257, %v397
    %v471 = vmax.f32 %v262, %v399
    %v472 = vmax.f32 %v267, %v401
    %v473 = vmax.f32 %v272, %v403
    %v474 = vmax.f32 %v277, %v405
    %v475 = vmax.f32 %v282, %v407
    %v476 = vmax.f32 %v287, %v409
    %v477 = vmax.f32 %v292, %v411
    %v478 = vmax.f32 %v297, %v413
    %v479 = vmax.f32 %v302, %v415
    %v480 = vmax.f32 %v307, %v417
    %v481 = vmax.f32 %v312, %v419
    %v482 = vmax.f32 %v317, %v421
    %v483 = vmax.f32 %v322, %v423
    %v484 = vmax.f32 %v327, %v425
    %v485 = vmax.f32 %v332, %v427
    %v486 = vmax.f32 %v337, %v429
    %v487 = vmax.f32 %v342, %v431
    %v488 = vmax.f32 %v347, %v433
    %v489 = vmax.f32 %v352, %v435
    %517 = vrot.lane.b32.xlu0 %v463, 118
    %v518 = vpop.permute.xlu0 %517
    %519 = vrot.lane.b32.xlu0 %v464, 118
    %v520 = vpop.permute.xlu0 %519
    %521 = vrot.lane.b32.xlu0 %v465, 118
    %v522 = vpop.permute.xlu0 %521
    %523 = vrot.lane.b32.xlu0 %v466, 118
    %v524 = vpop.permute.xlu0 %523
    %525 = vrot.lane.b32.xlu0 %v467, 118
    %v526 = vpop.permute.xlu0 %525
    %527 = vrot.lane.b32.xlu0 %v468, 118
    %v528 = vpop.permute.xlu0 %527
    %529 = vrot.lane.b32.xlu0 %v469, 118
    %v530 = vpop.permute.xlu0 %529
    %531 = vrot.lane.b32.xlu0 %v470, 118
    %v532 = vpop.permute.xlu0 %531
    %533 = vrot.lane.b32.xlu0 %v471, 118
    %v534 = vpop.permute.xlu0 %533
    %535 = vrot.lane.b32.xlu0 %v472, 118
    %v536 = vpop.permute.xlu0 %535
    %537 = vrot.lane.b32.xlu0 %v473, 118
    %v538 = vpop.permute.xlu0 %537
    %539 = vrot.lane.b32.xlu0 %v474, 118
    %v540 = vpop.permute.xlu0 %539
    %541 = vrot.lane.b32.xlu0 %v475, 118
    %v542 = vpop.permute.xlu0 %541
    %543 = vrot.lane.b32.xlu0 %v476, 118
    %v544 = vpop.permute.xlu0 %543
    %545 = vrot.lane.b32.xlu0 %v477, 118
    %v546 = vpop.permute.xlu0 %545
    %547 = vrot.lane.b32.xlu0 %v478, 118
    %v548 = vpop.permute.xlu0 %547
    %549 = vrot.lane.b32.xlu0 %v479, 118
    %v550 = vpop.permute.xlu0 %549
    %551 = vrot.lane.b32.xlu0 %v480, 118
    %v552 = vpop.permute.xlu0 %551
    %553 = vrot.lane.b32.xlu0 %v481, 118
    %v554 = vpop.permute.xlu0 %553
    %555 = vrot.lane.b32.xlu0 %v482, 118
    %v556 = vpop.permute.xlu0 %555
    %557 = vrot.lane.b32.xlu0 %v483, 118
    %v558 = vpop.permute.xlu0 %557
    %559 = vrot.lane.b32.xlu0 %v484, 118
    %v560 = vpop.permute.xlu0 %559
    %561 = vrot.lane.b32.xlu0 %v485, 118
    %v562 = vpop.permute.xlu0 %561
    %563 = vrot.lane.b32.xlu0 %v486, 118
    %v564 = vpop.permute.xlu0 %563
    %565 = vrot.lane.b32.xlu0 %v487, 118
    %v566 = vpop.permute.xlu0 %565
    %567 = vrot.lane.b32.xlu0 %v488, 118
    %v568 = vpop.permute.xlu0 %567
    %569 = vrot.lane.b32.xlu0 %v489, 118
    %v570 = vpop.permute.xlu0 %569
    %v598 = vmax.f32 %v463, %v518
    %v599 = vmax.f32 %v464, %v520
    %v600 = vmax.f32 %v465, %v522
    %v601 = vmax.f32 %v466, %v524
    %v602 = vmax.f32 %v467, %v526
    %v603 = vmax.f32 %v468, %v528
    %v604 = vmax.f32 %v469, %v530
    %v605 = vmax.f32 %v470, %v532
    %v606 = vmax.f32 %v471, %v534
    %v607 = vmax.f32 %v472, %v536
    %v608 = vmax.f32 %v473, %v538
    %v609 = vmax.f32 %v474, %v540
    %v610 = vmax.f32 %v475, %v542
    %v611 = vmax.f32 %v476, %v544
    %v612 = vmax.f32 %v477, %v546
    %v613 = vmax.f32 %v478, %v548
    %v614 = vmax.f32 %v479, %v550
    %v615 = vmax.f32 %v480, %v552
    %v616 = vmax.f32 %v481, %v554
    %v617 = vmax.f32 %v482, %v556
    %v618 = vmax.f32 %v483, %v558
    %v619 = vmax.f32 %v484, %v560
    %v620 = vmax.f32 %v485, %v562
    %v621 = vmax.f32 %v486, %v564
    %v622 = vmax.f32 %v487, %v566
    %v623 = vmax.f32 %v488, %v568
    %v624 = vmax.f32 %v489, %v570
    %v626 = vlaneseq
    %v627 = vshrl.u32 %v626, 7
    %v628 = vsub.s32 0, %v627
    %v629 = vrot.slane %v39, %v628
    %v631 = vadd.f32 %v598, %v629
    %v632 = vadd.f32 %v599, %v629
    %v633 = vadd.f32 %v600, %v629
    %v634 = vadd.f32 %v601, %v629
    %v635 = vadd.f32 %v602, %v629
    %v636 = vadd.f32 %v603, %v629
    %v637 = vadd.f32 %v604, %v629
    %v638 = vadd.f32 %v605, %v629
    %v639 = vadd.f32 %v606, %v629
    %v640 = vadd.f32 %v607, %v629
    %v641 = vadd.f32 %v608, %v629
    %v642 = vadd.f32 %v609, %v629
    %v643 = vadd.f32 %v610, %v629
    %v644 = vadd.f32 %v611, %v629
    %v645 = vadd.f32 %v612, %v629
    %v646 = vadd.f32 %v613, %v629
    %v647 = vadd.f32 %v614, %v629
    %v648 = vadd.f32 %v615, %v629
    %v649 = vadd.f32 %v616, %v629
    %v650 = vadd.f32 %v617, %v629
    %v651 = vadd.f32 %v618, %v629
    %v652 = vadd.f32 %v619, %v629
    %v653 = vadd.f32 %v620, %v629
    %v654 = vadd.f32 %v621, %v629
    %v655 = vadd.f32 %v622, %v629
    %v656 = vadd.f32 %v623, %v629
    %v657 = vadd.f32 %v624, %v629
    %v658 = vmax.f32 %v631, 0.0
    %v659 = vmax.f32 %v632, 0.0
    %v660 = vmax.f32 %v633, 0.0
    %v661 = vmax.f32 %v634, 0.0
    %v662 = vmax.f32 %v635, 0.0
    %v663 = vmax.f32 %v636, 0.0
    %v664 = vmax.f32 %v637, 0.0
    %v665 = vmax.f32 %v638, 0.0
    %v666 = vmax.f32 %v639, 0.0
    %v667 = vmax.f32 %v640, 0.0
    %v668 = vmax.f32 %v641, 0.0
    %v669 = vmax.f32 %v642, 0.0
    %v670 = vmax.f32 %v643, 0.0
    %v671 = vmax.f32 %v644, 0.0
    %v672 = vmax.f32 %v645, 0.0
    %v673 = vmax.f32 %v646, 0.0
    %v674 = vmax.f32 %v647, 0.0
    %v675 = vmax.f32 %v648, 0.0
    %v676 = vmax.f32 %v649, 0.0
    %v677 = vmax.f32 %v650, 0.0
    %v678 = vmax.f32 %v651, 0.0
    %v679 = vmax.f32 %v652, 0.0
    %v680 = vmax.f32 %v653, 0.0
    %v681 = vmax.f32 %v654, 0.0
    %v682 = vmax.f32 %v655, 0.0
    %v683 = vmax.f32 %v656, 0.0
    %v684 = vmax.f32 %v657, 0.0
    %v685 = vld [vmem:[%s3] sm:$0x1f]
    %s686 = scalar_lea.vmem %s0, 216
    %v687 = vld [vmem:[%s686] sm:$0xff]
    %v688 = vld [vmem:[%s686 + $0x8] sm:$0xff]
    %v689 = vld [vmem:[%s686 + $0x10] sm:$0xff]
    %v690 = vld [vmem:[%s686 + $0x18] sm:$0xff]
    %v691 = vld [vmem:[%s686 + $0x20] sm:$0xff]
    %v692 = vld [vmem:[%s686 + $0x28] sm:$0xff]
    %v693 = vld [vmem:[%s686 + $0x30] sm:$0xff]
    %v694 = vld [vmem:[%s686 + $0x38] sm:$0xff]
    %v695 = vld [vmem:[%s686 + $0x40] sm:$0xff]
    %v696 = vld [vmem:[%s686 + $0x48] sm:$0xff]
    %v697 = vld [vmem:[%s686 + $0x50] sm:$0xff]
    %v698 = vld [vmem:[%s686 + $0x58] sm:$0xff]
    %v699 = vld [vmem:[%s686 + $0x60] sm:$0xff]
    %v700 = vld [vmem:[%s686 + $0x68] sm:$0xff]
    %v701 = vld [vmem:[%s686 + $0x70] sm:$0xff]
    %v702 = vld [vmem:[%s686 + $0x78] sm:$0xff]
    %v703 = vld [vmem:[%s686 + $0x80] sm:$0xff]
    %v704 = vld [vmem:[%s686 + $0x88] sm:$0xff]
    %v705 = vld [vmem:[%s686 + $0x90] sm:$0xff]
    %v706 = vld [vmem:[%s686 + $0x98] sm:$0xff]
    %v707 = vld [vmem:[%s686 + $0xa0] sm:$0xff]
    %v708 = vld [vmem:[%s686 + $0xa8] sm:$0xff]
    %v709 = vld [vmem:[%s686 + $0xb0] sm:$0xff]
    %v710 = vld [vmem:[%s686 + $0xb8] sm:$0xff]
    %v711 = vld [vmem:[%s686 + $0xc0] sm:$0xff]
    %v712 = vld [vmem:[%s686 + $0xc8] sm:$0xff]
    %v713 = vld [vmem:[%s686 + $0xd0] sm:$0x3]
    %v715 = vsel %vm69, %v687, 0
    %v718 = vsel %vm69, %v688, 0
    %v721 = vsel %vm69, %v689, 0
    %v724 = vsel %vm69, %v690, 0
    %v727 = vsel %vm69, %v691, 0
    %v730 = vsel %vm69, %v692, 0
    %v733 = vsel %vm69, %v693, 0
    %v736 = vsel %vm69, %v694, 0
    %v739 = vsel %vm69, %v695, 0
    %v742 = vsel %vm69, %v696, 0
    %v745 = vsel %vm69, %v697, 0
    %v748 = vsel %vm69, %v698, 0
    %v751 = vsel %vm69, %v699, 0
    %v754 = vsel %vm69, %v700, 0
    %v757 = vsel %vm69, %v701, 0
    %v760 = vsel %vm69, %v702, 0
    %v763 = vsel %vm69, %v703, 0
    %v766 = vsel %vm69, %v704, 0
    %v769 = vsel %vm69, %v705, 0
    %v772 = vsel %vm69, %v706, 0
    %v775 = vsel %vm69, %v707, 0
    %v778 = vsel %vm69, %v708, 0
    %v781 = vsel %vm69, %v709, 0
    %v784 = vsel %vm69, %v710, 0
    %v787 = vsel %vm69, %v711, 0
    %v790 = vsel %vm69, %v712, 0
    %v793 = vsel %vm69, %v713, 0
    %795 = vmatprep.subr.mxu0 0.0
    %796 = vmatpush1.msra.mxu0 %v67
    %797 = vmatprep.subr.mxu0 0.0
    %798 = vmatpush1.msra.mxu0 %v153
    %799 = vmatprep.subr.mxu0 0.0
    %800 = vmatpush1.msra.mxu0 0.0
    %801 = vmatprep.subr.mxu0 0.0
    %802 = vmatpush1.msra.mxu0 0.0
    %803 = vmatprep.subr.mxu0 0.0
    %804 = vmatpush1.msra.mxu0 0.0
    %805 = vmatprep.subr.mxu0 0.0
    %806 = vmatpush1.msra.mxu0 0.0
    %807 = vmatprep.subr.mxu0 0.0
    %808 = vmatpush1.msra.mxu0 0.0
    %809 = vmatprep.subr.mxu0 0.0
    %810 = vmatpush1.msra.mxu0 0.0
    %811 = vmatprep.subr.mxu0 0.0
    %812 = vmatpush1.msra.mxu0 0.0
    %813 = vmatprep.subr.mxu0 0.0
    %814 = vmatpush1.msra.mxu0 0.0
    %815 = vmatprep.subr.mxu0 0.0
    %816 = vmatpush1.msra.mxu0 0.0
    %817 = vmatprep.subr.mxu0 0.0
    %818 = vmatpush1.msra.mxu0 0.0
    %819 = vmatprep.subr.mxu0 0.0
    %820 = vmatpush1.msra.mxu0 0.0
    %821 = vmatprep.subr.mxu0 0.0
    %822 = vmatpush1.msra.mxu0 0.0
    %823 = vmatprep.subr.mxu0 0.0
    %824 = vmatpush1.msra.mxu0 0.0
    %825 = vmatprep.subr.mxu0 0.0
    %826 = vmatpush1.msra.mxu0 0.0
    %827 = vmatprep.subr.mxu0 0.0
    %828 = vmatpush1.msra.mxu0 0.0
    %829 = vmatprep.subr.mxu0 0.0
    %830 = vmatpush1.msra.mxu0 0.0
    %831 = vmatprep.subr.mxu0 0.0
    %832 = vmatpush1.msra.mxu0 0.0
    %833 = vmatprep.subr.mxu0 0.0
    %834 = vmatpush1.msra.mxu0 0.0
    %835 = vmatprep.subr.mxu0 0.0
    %836 = vmatpush1.msra.mxu0 0.0
    %837 = vmatprep.subr.mxu0 0.0
    %838 = vmatpush1.msra.mxu0 0.0
    %839 = vmatprep.subr.mxu0 0.0
    %840 = vmatpush1.msra.mxu0 0.0
    %841 = vmatprep.subr.mxu0 0.0
    %842 = vmatpush1.msra.mxu0 0.0
    %843 = vmatprep.subr.mxu0 0.0
    %844 = vmatpush1.msra.mxu0 0.0
    %845 = vmatprep.subr.mxu0 0.0
    %846 = vmatpush1.msra.mxu0 0.0
    %847 = vmatprep.subr.mxu0 0.0
    %848 = vmatpush1.msra.mxu0 0.0
    %849 = vmatprep.subr.mxu0 0.0
    %850 = vmatpush1.msra.mxu0 0.0
    %851 = vmatprep.subr.mxu0 0.0
    %852 = vmatpush1.msra.mxu0 0.0
    %853 = vmatprep.subr.mxu0 0.0
    %854 = vmatpush1.msra.mxu0 0.0
    %855 = vmatprep.subr.mxu0 0.0
    %856 = vmatpush1.msra.mxu0 0.0
    %857 = vmatprep.subr.mxu0 0.0
    %858 = vmatpush1.msra.mxu0 0.0
    %859 = vmatprep.mubr.f32.mxu0 0.0
    %860 = vmatmul.mubr.f32.gmra.mrb[0].mxu0 %v715
    %v861 = vpop.f32.mrb[0].mxu0
    %v862 = vadd.f32 0.0, %v861
    %v863 = vpop.f32.mrb[0].mxu0
    %864 = vmatprep.mubr.f32.mxu0 0.0
    %865 = vmatmul.mubr.f32.gmra.mrb[0].mxu0 %v718
    %v866 = vpop.f32.mrb[0].mxu0
    %v867 = vadd.f32 0.0, %v866
    %v868 = vpop.f32.mrb[0].mxu0
    %869 = vmatprep.mubr.f32.mxu0 0.0
    %870 = vmatmul.mubr.f32.gmra.mrb[0].mxu0 %v721
    %v871 = vpop.f32.mrb[0].mxu0
    %v872 = vadd.f32 0.0, %v871
    %v873 = vpop.f32.mrb[0].mxu0
    %874 = vmatprep.mubr.f32.mxu0 0.0
    %875 = vmatmul.mubr.f32.gmra.mrb[0].mxu0 %v724
    %v876 = vpop.f32.mrb[0].mxu0
    %v877 = vadd.f32 0.0, %v876
    %v878 = vpop.f32.mrb[0].mxu0
    %879 = vmatprep.mubr.f32.mxu0 0.0
    %880 = vmatmul.mubr.f32.gmra.mrb[0].mxu0 %v727
    %v881 = vpop.f32.mrb[0].mxu0
    %v882 = vadd.f32 0.0, %v881
    %v883 = vpop.f32.mrb[0].mxu0
    %884 = vmatprep.mubr.f32.mxu0 0.0
    %885 = vmatmul.mubr.f32.gmra.mrb[0].mxu0 %v730
    %v886 = vpop.f32.mrb[0].mxu0
    %v887 = vadd.f32 0.0, %v886
    %v888 = vpop.f32.mrb[0].mxu0
    %889 = vmatprep.mubr.f32.mxu0 0.0
    %890 = vmatmul.mubr.f32.gmra.mrb[0].mxu0 %v733
    %v891 = vpop.f32.mrb[0].mxu0
    %v892 = vadd.f32 0.0, %v891
    %v893 = vpop.f32.mrb[0].mxu0
    %894 = vmatprep.mubr.f32.mxu0 0.0
    %895 = vmatmul.mubr.f32.gmra.mrb[0].mxu0 %v736
    %v896 = vpop.f32.mrb[0].mxu0
    %v897 = vadd.f32 0.0, %v896
    %v898 = vpop.f32.mrb[0].mxu0
    %899 = vmatprep.mubr.f32.mxu0 0.0
    %900 = vmatmul.mubr.f32.gmra.mrb[0].mxu0 %v739
    %v901 = vpop.f32.mrb[0].mxu0
    %v902 = vadd.f32 0.0, %v901
    %v903 = vpop.f32.mrb[0].mxu0
    %904 = vmatprep.mubr.f32.mxu0 0.0
    %905 = vmatmul.mubr.f32.gmra.mrb[0].mxu0 %v742
    %v906 = vpop.f32.mrb[0].mxu0
    %v907 = vadd.f32 0.0, %v906
    %v908 = vpop.f32.mrb[0].mxu0
    %909 = vmatprep.mubr.f32.mxu0 0.0
    %910 = vmatmul.mubr.f32.gmra.mrb[0].mxu0 %v745
    %v911 = vpop.f32.mrb[0].mxu0
    %v912 = vadd.f32 0.0, %v911
    %v913 = vpop.f32.mrb[0].mxu0
    %914 = vmatprep.mubr.f32.mxu0 0.0
    %915 = vmatmul.mubr.f32.gmra.mrb[0].mxu0 %v748
    %v916 = vpop.f32.mrb[0].mxu0
    %v917 = vadd.f32 0.0, %v916
    %v918 = vpop.f32.mrb[0].mxu0
    %919 = vmatprep.mubr.f32.mxu0 0.0
    %920 = vmatmul.mubr.f32.gmra.mrb[0].mxu0 %v751
    %v921 = vpop.f32.mrb[0].mxu0
    %v922 = vadd.f32 0.0, %v921
    %v923 = vpop.f32.mrb[0].mxu0
    %924 = vmatprep.mubr.f32.mxu0 0.0
    %925 = vmatmul.mubr.f32.gmra.mrb[0].mxu0 %v754
    %v926 = vpop.f32.mrb[0].mxu0
    %v927 = vadd.f32 0.0, %v926
    %v928 = vpop.f32.mrb[0].mxu0
    %929 = vmatprep.mubr.f32.mxu0 0.0
    %930 = vmatmul.mubr.f32.gmra.mrb[0].mxu0 %v757
    %v931 = vpop.f32.mrb[0].mxu0
    %v932 = vadd.f32 0.0, %v931
    %v933 = vpop.f32.mrb[0].mxu0
    %934 = vmatprep.mubr.f32.mxu0 0.0
    %935 = vmatmul.mubr.f32.gmra.mrb[0].mxu0 %v760
    %v936 = vpop.f32.mrb[0].mxu0
    %v937 = vadd.f32 0.0, %v936
    %v938 = vpop.f32.mrb[0].mxu0
    %939 = vmatprep.mubr.f32.mxu0 0.0
    %940 = vmatmul.mubr.f32.gmra.mrb[0].mxu0 %v763
    %v941 = vpop.f32.mrb[0].mxu0
    %v942 = vadd.f32 0.0, %v941
    %v943 = vpop.f32.mrb[0].mxu0
    %944 = vmatprep.mubr.f32.mxu0 0.0
    %945 = vmatmul.mubr.f32.gmra.mrb[0].mxu0 %v766
    %v946 = vpop.f32.mrb[0].mxu0
    %v947 = vadd.f32 0.0, %v946
    %v948 = vpop.f32.mrb[0].mxu0
    %949 = vmatprep.mubr.f32.mxu0 0.0
    %950 = vmatmul.mubr.f32.gmra.mrb[0].mxu0 %v769
    %v951 = vpop.f32.mrb[0].mxu0
    %v952 = vadd.f32 0.0, %v951
    %v953 = vpop.f32.mrb[0].mxu0
    %954 = vmatprep.mubr.f32.mxu0 0.0
    %955 = vmatmul.mubr.f32.gmra.mrb[0].mxu0 %v772
    %v956 = vpop.f32.mrb[0].mxu0
    %v957 = vadd.f32 0.0, %v956
    %v958 = vpop.f32.mrb[0].mxu0
    %959 = vmatprep.mubr.f32.mxu0 0.0
    %960 = vmatmul.mubr.f32.gmra.mrb[0].mxu0 %v775
    %v961 = vpop.f32.mrb[0].mxu0
    %v962 = vadd.f32 0.0, %v961
    %v963 = vpop.f32.mrb[0].mxu0
    %964 = vmatprep.mubr.f32.mxu0 0.0
    %965 = vmatmul.mubr.f32.gmra.mrb[0].mxu0 %v778
    %v966 = vpop.f32.mrb[0].mxu0
    %v967 = vadd.f32 0.0, %v966
    %v968 = vpop.f32.mrb[0].mxu0
    %969 = vmatprep.mubr.f32.mxu0 0.0
    %970 = vmatmul.mubr.f32.gmra.mrb[0].mxu0 %v781
    %v971 = vpop.f32.mrb[0].mxu0
    %v972 = vadd.f32 0.0, %v971
    %v973 = vpop.f32.mrb[0].mxu0
    %974 = vmatprep.mubr.f32.mxu0 0.0
    %975 = vmatmul.mubr.f32.gmra.mrb[0].mxu0 %v784
    %v976 = vpop.f32.mrb[0].mxu0
    %v977 = vadd.f32 0.0, %v976
    %v978 = vpop.f32.mrb[0].mxu0
    %979 = vmatprep.mubr.f32.mxu0 0.0
    %980 = vmatmul.mubr.f32.gmra.mrb[0].mxu0 %v787
    %v981 = vpop.f32.mrb[0].mxu0
    %v982 = vadd.f32 0.0, %v981
    %v983 = vpop.f32.mrb[0].mxu0
    %984 = vmatprep.mubr.f32.mxu0 0.0
    %985 = vmatmul.mubr.f32.gmra.mrb[0].mxu0 %v790
    %v986 = vpop.f32.mrb[0].mxu0
    %v987 = vadd.f32 0.0, %v986
    %v988 = vpop.f32.mrb[0].mxu0
    %989 = vmatprep.mubr.f32.mxu0 0.0
    %990 = vmatmul.mubr.f32.gmra.mrb[0].mxu0 %v793
    %v991 = vpop.f32.mrb[0].mxu0
    %v992 = vadd.f32 0.0, %v991
    %v993 = vpop.f32.mrb[0].mxu0
    %994 = vdwg.mxu0
    %1022 = vrot.lane.b32.xlu0 %v862, 123
    %v1023 = vpop.permute.xlu0 %1022
    %1024 = vrot.lane.b32.xlu0 %v867, 123
    %v1025 = vpop.permute.xlu0 %1024
    %1026 = vrot.lane.b32.xlu0 %v872, 123
    %v1027 = vpop.permute.xlu0 %1026
    %1028 = vrot.lane.b32.xlu0 %v877, 123
    %v1029 = vpop.permute.xlu0 %1028
    %1030 = vrot.lane.b32.xlu0 %v882, 123
    %v1031 = vpop.permute.xlu0 %1030
    %1032 = vrot.lane.b32.xlu0 %v887, 123
    %v1033 = vpop.permute.xlu0 %1032
    %1034 = vrot.lane.b32.xlu0 %v892, 123
    %v1035 = vpop.permute.xlu0 %1034
    %1036 = vrot.lane.b32.xlu0 %v897, 123
    %v1037 = vpop.permute.xlu0 %1036
    %1038 = vrot.lane.b32.xlu0 %v902, 123
    %v1039 = vpop.permute.xlu0 %1038
    %1040 = vrot.lane.b32.xlu0 %v907, 123
    %v1041 = vpop.permute.xlu0 %1040
    %1042 = vrot.lane.b32.xlu0 %v912, 123
    %v1043 = vpop.permute.xlu0 %1042
    %1044 = vrot.lane.b32.xlu0 %v917, 123
    %v1045 = vpop.permute.xlu0 %1044
    %1046 = vrot.lane.b32.xlu0 %v922, 123
    %v1047 = vpop.permute.xlu0 %1046
    %1048 = vrot.lane.b32.xlu0 %v927, 123
    %v1049 = vpop.permute.xlu0 %1048
    %1050 = vrot.lane.b32.xlu0 %v932, 123
    %v1051 = vpop.permute.xlu0 %1050
    %1052 = vrot.lane.b32.xlu0 %v937, 123
    %v1053 = vpop.permute.xlu0 %1052
    %1054 = vrot.lane.b32.xlu0 %v942, 123
    %v1055 = vpop.permute.xlu0 %1054
    %1056 = vrot.lane.b32.xlu0 %v947, 123
    %v1057 = vpop.permute.xlu0 %1056
    %1058 = vrot.lane.b32.xlu0 %v952, 123
    %v1059 = vpop.permute.xlu0 %1058
    %1060 = vrot.lane.b32.xlu0 %v957, 123
    %v1061 = vpop.permute.xlu0 %1060
    %1062 = vrot.lane.b32.xlu0 %v962, 123
    %v1063 = vpop.permute.xlu0 %1062
    %1064 = vrot.lane.b32.xlu0 %v967, 123
    %v1065 = vpop.permute.xlu0 %1064
    %1066 = vrot.lane.b32.xlu0 %v972, 123
    %v1067 = vpop.permute.xlu0 %1066
    %1068 = vrot.lane.b32.xlu0 %v977, 123
    %v1069 = vpop.permute.xlu0 %1068
    %1070 = vrot.lane.b32.xlu0 %v982, 123
    %v1071 = vpop.permute.xlu0 %1070
    %1072 = vrot.lane.b32.xlu0 %v987, 123
    %v1073 = vpop.permute.xlu0 %1072
    %1074 = vrot.lane.b32.xlu0 %v992, 123
    %v1075 = vpop.permute.xlu0 %1074
    %v1103 = vmax.f32 %v862, %v1023
    %v1104 = vmax.f32 %v867, %v1025
    %v1105 = vmax.f32 %v872, %v1027
    %v1106 = vmax.f32 %v877, %v1029
    %v1107 = vmax.f32 %v882, %v1031
    %v1108 = vmax.f32 %v887, %v1033
    %v1109 = vmax.f32 %v892, %v1035
    %v1110 = vmax.f32 %v897, %v1037
    %v1111 = vmax.f32 %v902, %v1039
    %v1112 = vmax.f32 %v907, %v1041
    %v1113 = vmax.f32 %v912, %v1043
    %v1114 = vmax.f32 %v917, %v1045
    %v1115 = vmax.f32 %v922, %v1047
    %v1116 = vmax.f32 %v927, %v1049
    %v1117 = vmax.f32 %v932, %v1051
    %v1118 = vmax.f32 %v937, %v1053
    %v1119 = vmax.f32 %v942, %v1055
    %v1120 = vmax.f32 %v947, %v1057
    %v1121 = vmax.f32 %v952, %v1059
    %v1122 = vmax.f32 %v957, %v1061
    %v1123 = vmax.f32 %v962, %v1063
    %v1124 = vmax.f32 %v967, %v1065
    %v1125 = vmax.f32 %v972, %v1067
    %v1126 = vmax.f32 %v977, %v1069
    %v1127 = vmax.f32 %v982, %v1071
    %v1128 = vmax.f32 %v987, %v1073
    %v1129 = vmax.f32 %v992, %v1075
    %1157 = vrot.lane.b32.xlu0 %v1103, 118
    %v1158 = vpop.permute.xlu0 %1157
    %1159 = vrot.lane.b32.xlu0 %v1104, 118
    %v1160 = vpop.permute.xlu0 %1159
    %1161 = vrot.lane.b32.xlu0 %v1105, 118
    %v1162 = vpop.permute.xlu0 %1161
    %1163 = vrot.lane.b32.xlu0 %v1106, 118
    %v1164 = vpop.permute.xlu0 %1163
    %1165 = vrot.lane.b32.xlu0 %v1107, 118
    %v1166 = vpop.permute.xlu0 %1165
    %1167 = vrot.lane.b32.xlu0 %v1108, 118
    %v1168 = vpop.permute.xlu0 %1167
    %1169 = vrot.lane.b32.xlu0 %v1109, 118
    %v1170 = vpop.permute.xlu0 %1169
    %1171 = vrot.lane.b32.xlu0 %v1110, 118
    %v1172 = vpop.permute.xlu0 %1171
    %1173 = vrot.lane.b32.xlu0 %v1111, 118
    %v1174 = vpop.permute.xlu0 %1173
    %1175 = vrot.lane.b32.xlu0 %v1112, 118
    %v1176 = vpop.permute.xlu0 %1175
    %1177 = vrot.lane.b32.xlu0 %v1113, 118
    %v1178 = vpop.permute.xlu0 %1177
    %1179 = vrot.lane.b32.xlu0 %v1114, 118
    %v1180 = vpop.permute.xlu0 %1179
    %1181 = vrot.lane.b32.xlu0 %v1115, 118
    %v1182 = vpop.permute.xlu0 %1181
    %1183 = vrot.lane.b32.xlu0 %v1116, 118
    %v1184 = vpop.permute.xlu0 %1183
    %1185 = vrot.lane.b32.xlu0 %v1117, 118
    %v1186 = vpop.permute.xlu0 %1185
    %1187 = vrot.lane.b32.xlu0 %v1118, 118
    %v1188 = vpop.permute.xlu0 %1187
    %1189 = vrot.lane.b32.xlu0 %v1119, 118
    %v1190 = vpop.permute.xlu0 %1189
    %1191 = vrot.lane.b32.xlu0 %v1120, 118
    %v1192 = vpop.permute.xlu0 %1191
    %1193 = vrot.lane.b32.xlu0 %v1121, 118
    %v1194 = vpop.permute.xlu0 %1193
    %1195 = vrot.lane.b32.xlu0 %v1122, 118
    %v1196 = vpop.permute.xlu0 %1195
    %1197 = vrot.lane.b32.xlu0 %v1123, 118
    %v1198 = vpop.permute.xlu0 %1197
    %1199 = vrot.lane.b32.xlu0 %v1124, 118
    %v1200 = vpop.permute.xlu0 %1199
    %1201 = vrot.lane.b32.xlu0 %v1125, 118
    %v1202 = vpop.permute.xlu0 %1201
    %1203 = vrot.lane.b32.xlu0 %v1126, 118
    %v1204 = vpop.permute.xlu0 %1203
    %1205 = vrot.lane.b32.xlu0 %v1127, 118
    %v1206 = vpop.permute.xlu0 %1205
    %1207 = vrot.lane.b32.xlu0 %v1128, 118
    %v1208 = vpop.permute.xlu0 %1207
    %1209 = vrot.lane.b32.xlu0 %v1129, 118
    %v1210 = vpop.permute.xlu0 %1209
    %v1238 = vmax.f32 %v1103, %v1158
    %v1239 = vmax.f32 %v1104, %v1160
    %v1240 = vmax.f32 %v1105, %v1162
    %v1241 = vmax.f32 %v1106, %v1164
    %v1242 = vmax.f32 %v1107, %v1166
    %v1243 = vmax.f32 %v1108, %v1168
    %v1244 = vmax.f32 %v1109, %v1170
    %v1245 = vmax.f32 %v1110, %v1172
    %v1246 = vmax.f32 %v1111, %v1174
    %v1247 = vmax.f32 %v1112, %v1176
    %v1248 = vmax.f32 %v1113, %v1178
    %v1249 = vmax.f32 %v1114, %v1180
    %v1250 = vmax.f32 %v1115, %v1182
    %v1251 = vmax.f32 %v1116, %v1184
    %v1252 = vmax.f32 %v1117, %v1186
    %v1253 = vmax.f32 %v1118, %v1188
    %v1254 = vmax.f32 %v1119, %v1190
    %v1255 = vmax.f32 %v1120, %v1192
    %v1256 = vmax.f32 %v1121, %v1194
    %v1257 = vmax.f32 %v1122, %v1196
    %v1258 = vmax.f32 %v1123, %v1198
    %v1259 = vmax.f32 %v1124, %v1200
    %v1260 = vmax.f32 %v1125, %v1202
    %v1261 = vmax.f32 %v1126, %v1204
    %v1262 = vmax.f32 %v1127, %v1206
    %v1263 = vmax.f32 %v1128, %v1208
    %v1264 = vmax.f32 %v1129, %v1210
    %v1265 = vadd.f32 %v1238, %v629
    %v1266 = vadd.f32 %v1239, %v629
    %v1267 = vadd.f32 %v1240, %v629
    %v1268 = vadd.f32 %v1241, %v629
    %v1269 = vadd.f32 %v1242, %v629
    %v1270 = vadd.f32 %v1243, %v629
    %v1271 = vadd.f32 %v1244, %v629
    %v1272 = vadd.f32 %v1245, %v629
    %v1273 = vadd.f32 %v1246, %v629
    %v1274 = vadd.f32 %v1247, %v629
    %v1275 = vadd.f32 %v1248, %v629
    %v1276 = vadd.f32 %v1249, %v629
    %v1277 = vadd.f32 %v1250, %v629
    %v1278 = vadd.f32 %v1251, %v629
    %v1279 = vadd.f32 %v1252, %v629
    %v1280 = vadd.f32 %v1253, %v629
    %v1281 = vadd.f32 %v1254, %v629
    %v1282 = vadd.f32 %v1255, %v629
    %v1283 = vadd.f32 %v1256, %v629
    %v1284 = vadd.f32 %v1257, %v629
    %v1285 = vadd.f32 %v1258, %v629
    %v1286 = vadd.f32 %v1259, %v629
    %v1287 = vadd.f32 %v1260, %v629
    %v1288 = vadd.f32 %v1261, %v629
    %v1289 = vadd.f32 %v1262, %v629
    %v1290 = vadd.f32 %v1263, %v629
    %v1291 = vadd.f32 %v1264, %v629
    %v1292 = vmax.f32 %v1265, 0.0
    %v1293 = vmax.f32 %v1266, 0.0
    %v1294 = vmax.f32 %v1267, 0.0
    %v1295 = vmax.f32 %v1268, 0.0
    %v1296 = vmax.f32 %v1269, 0.0
    %v1297 = vmax.f32 %v1270, 0.0
    %v1298 = vmax.f32 %v1271, 0.0
    %v1299 = vmax.f32 %v1272, 0.0
    %v1300 = vmax.f32 %v1273, 0.0
    %v1301 = vmax.f32 %v1274, 0.0
    %v1302 = vmax.f32 %v1275, 0.0
    %v1303 = vmax.f32 %v1276, 0.0
    %v1304 = vmax.f32 %v1277, 0.0
    %v1305 = vmax.f32 %v1278, 0.0
    %v1306 = vmax.f32 %v1279, 0.0
    %v1307 = vmax.f32 %v1280, 0.0
    %v1308 = vmax.f32 %v1281, 0.0
    %v1309 = vmax.f32 %v1282, 0.0
    %v1310 = vmax.f32 %v1283, 0.0
    %v1311 = vmax.f32 %v1284, 0.0
    %v1312 = vmax.f32 %v1285, 0.0
    %v1313 = vmax.f32 %v1286, 0.0
    %v1314 = vmax.f32 %v1287, 0.0
    %v1315 = vmax.f32 %v1288, 0.0
    %v1316 = vmax.f32 %v1289, 0.0
    %v1317 = vmax.f32 %v1290, 0.0
    %v1318 = vmax.f32 %v1291, 0.0
    %s1319 = scalar_lea.vmem %s3, 8
    %v1320 = vld [vmem:[%s1319] sm:$0x1f]
    %vm1321 = vcmask 39936
    %v1323 = vsel %vm1321, %v1292, 0
    %v1326 = vsel %vm1321, %v1293, 0
    %v1329 = vsel %vm1321, %v1294, 0
    %v1332 = vsel %vm1321, %v1295, 0
    %v1335 = vsel %vm1321, %v1296, 0
    %v1338 = vsel %vm1321, %v1297, 0
    %v1341 = vsel %vm1321, %v1298, 0
    %v1344 = vsel %vm1321, %v1299, 0
    %v1347 = vsel %vm1321, %v1300, 0
    %v1350 = vsel %vm1321, %v1301, 0
    %v1353 = vsel %vm1321, %v1302, 0
    %v1356 = vsel %vm1321, %v1303, 0
    %v1359 = vsel %vm1321, %v1304, 0
    %v1362 = vsel %vm1321, %v1305, 0
    %v1365 = vsel %vm1321, %v1306, 0
    %v1368 = vsel %vm1321, %v1307, 0
    %v1371 = vsel %vm1321, %v1308, 0
    %v1374 = vsel %vm1321, %v1309, 0
    %v1377 = vsel %vm1321, %v1310, 0
    %v1380 = vsel %vm1321, %v1311, 0
    %v1383 = vsel %vm1321, %v1312, 0
    %v1386 = vsel %vm1321, %v1313, 0
    %v1389 = vsel %vm1321, %v1314, 0
    %v1392 = vsel %vm1321, %v1315, 0
    %v1395 = vsel %vm1321, %v1316, 0
    %v1398 = vsel %vm1321, %v1317, 0
    %v1401 = vsel %vm1321, %v1318, 0
    %vm1403 = vcmask 1044480
    %v1405 = vsel %vm1403, %v1320, 0
    %1407 = vmatprep.subr.mxu0 0.0
    %1408 = vmatpush1.msra.mxu0 %v1405
    %1409 = vmatprep.subr.mxu0 0.0
    %1410 = vmatpush1.msra.mxu0 0.0
    %1411 = vmatprep.subr.mxu0 0.0
    %1412 = vmatpush1.msra.mxu0 0.0
    %1413 = vmatprep.subr.mxu0 0.0
    %1414 = vmatpush1.msra.mxu0 0.0
    %1415 = vmatprep.subr.mxu0 0.0
    %1416 = vmatpush1.msra.mxu0 0.0
    %1417 = vmatprep.subr.mxu0 0.0
    %1418 = vmatpush1.msra.mxu0 0.0
    %1419 = vmatprep.subr.mxu0 0.0
    %1420 = vmatpush1.msra.mxu0 0.0
    %1421 = vmatprep.subr.mxu0 0.0
    %1422 = vmatpush1.msra.mxu0 0.0
    %1423 = vmatprep.subr.mxu0 0.0
    %1424 = vmatpush1.msra.mxu0 0.0
    %1425 = vmatprep.subr.mxu0 0.0
    %1426 = vmatpush1.msra.mxu0 0.0
    %1427 = vmatprep.subr.mxu0 0.0
    %1428 = vmatpush1.msra.mxu0 0.0
    %1429 = vmatprep.subr.mxu0 0.0
    %1430 = vmatpush1.msra.mxu0 0.0
    %1431 = vmatprep.subr.mxu0 0.0
    %1432 = vmatpush1.msra.mxu0 0.0
    %1433 = vmatprep.subr.mxu0 0.0
    %1434 = vmatpush1.msra.mxu0 0.0
    %1435 = vmatprep.subr.mxu0 0.0
    %1436 = vmatpush1.msra.mxu0 0.0
    %1437 = vmatprep.subr.mxu0 0.0
    %1438 = vmatpush1.msra.mxu0 0.0
    %1439 = vmatprep.subr.mxu0 0.0
    %1440 = vmatpush1.msra.mxu0 0.0
    %1441 = vmatprep.subr.mxu0 0.0
    %1442 = vmatpush1.msra.mxu0 0.0
    %1443 = vmatprep.subr.mxu0 0.0
    %1444 = vmatpush1.msra.mxu0 0.0
    %1445 = vmatprep.subr.mxu0 0.0
    %1446 = vmatpush1.msra.mxu0 0.0
    %1447 = vmatprep.subr.mxu0 0.0
    %1448 = vmatpush1.msra.mxu0 0.0
    %1449 = vmatprep.subr.mxu0 0.0
    %1450 = vmatpush1.msra.mxu0 0.0
    %1451 = vmatprep.subr.mxu0 0.0
    %1452 = vmatpush1.msra.mxu0 0.0
    %1453 = vmatprep.subr.mxu0 0.0
    %1454 = vmatpush1.msra.mxu0 0.0
    %1455 = vmatprep.subr.mxu0 0.0
    %1456 = vmatpush1.msra.mxu0 0.0
    %1457 = vmatprep.subr.mxu0 0.0
    %1458 = vmatpush1.msra.mxu0 0.0
    %1459 = vmatprep.subr.mxu0 0.0
    %1460 = vmatpush1.msra.mxu0 0.0
    %1461 = vmatprep.subr.mxu0 0.0
    %1462 = vmatpush1.msra.mxu0 0.0
    %1463 = vmatprep.subr.mxu0 0.0
    %1464 = vmatpush1.msra.mxu0 0.0
    %1465 = vmatprep.subr.mxu0 0.0
    %1466 = vmatpush1.msra.mxu0 0.0
    %1467 = vmatprep.subr.mxu0 0.0
    %1468 = vmatpush1.msra.mxu0 0.0
    %1469 = vmatprep.subr.mxu0 0.0
    %1470 = vmatpush1.msra.mxu0 0.0
    %1471 = vmatprep.mubr.f32.mxu0 0.0
    %1472 = vmatmul.mubr.f32.gmra.mrb[0].mxu0 %v1323
    %v1473 = vpop.f32.mrb[0].mxu0
    %v1474 = vadd.f32 0.0, %v1473
    %v1475 = vpop.f32.mrb[0].mxu0
    %1476 = vmatprep.mubr.f32.mxu0 0.0
    %1477 = vmatmul.mubr.f32.gmra.mrb[0].mxu0 %v1326
    %v1478 = vpop.f32.mrb[0].mxu0
    %v1479 = vadd.f32 0.0, %v1478
    %v1480 = vpop.f32.mrb[0].mxu0
    %1481 = vmatprep.mubr.f32.mxu0 0.0
    %1482 = vmatmul.mubr.f32.gmra.mrb[0].mxu0 %v1329
    %v1483 = vpop.f32.mrb[0].mxu0
    %v1484 = vadd.f32 0.0, %v1483
    %v1485 = vpop.f32.mrb[0].mxu0
    %1486 = vmatprep.mubr.f32.mxu0 0.0
    %1487 = vmatmul.mubr.f32.gmra.mrb[0].mxu0 %v1332
    %v1488 = vpop.f32.mrb[0].mxu0
    %v1489 = vadd.f32 0.0, %v1488
    %v1490 = vpop.f32.mrb[0].mxu0
    %1491 = vmatprep.mubr.f32.mxu0 0.0
    %1492 = vmatmul.mubr.f32.gmra.mrb[0].mxu0 %v1335
    %v1493 = vpop.f32.mrb[0].mxu0
    %v1494 = vadd.f32 0.0, %v1493
    %v1495 = vpop.f32.mrb[0].mxu0
    %1496 = vmatprep.mubr.f32.mxu0 0.0
    %1497 = vmatmul.mubr.f32.gmra.mrb[0].mxu0 %v1338
    %v1498 = vpop.f32.mrb[0].mxu0
    %v1499 = vadd.f32 0.0, %v1498
    %v1500 = vpop.f32.mrb[0].mxu0
    %1501 = vmatprep.mubr.f32.mxu0 0.0
    %1502 = vmatmul.mubr.f32.gmra.mrb[0].mxu0 %v1341
    %v1503 = vpop.f32.mrb[0].mxu0
    %v1504 = vadd.f32 0.0, %v1503
    %v1505 = vpop.f32.mrb[0].mxu0
    %1506 = vmatprep.mubr.f32.mxu0 0.0
    %1507 = vmatmul.mubr.f32.gmra.mrb[0].mxu0 %v1344
    %v1508 = vpop.f32.mrb[0].mxu0
    %v1509 = vadd.f32 0.0, %v1508
    %v1510 = vpop.f32.mrb[0].mxu0
    %1511 = vmatprep.mubr.f32.mxu0 0.0
    %1512 = vmatmul.mubr.f32.gmra.mrb[0].mxu0 %v1347
    %v1513 = vpop.f32.mrb[0].mxu0
    %v1514 = vadd.f32 0.0, %v1513
    %v1515 = vpop.f32.mrb[0].mxu0
    %1516 = vmatprep.mubr.f32.mxu0 0.0
    %1517 = vmatmul.mubr.f32.gmra.mrb[0].mxu0 %v1350
    %v1518 = vpop.f32.mrb[0].mxu0
    %v1519 = vadd.f32 0.0, %v1518
    %v1520 = vpop.f32.mrb[0].mxu0
    %1521 = vmatprep.mubr.f32.mxu0 0.0
    %1522 = vmatmul.mubr.f32.gmra.mrb[0].mxu0 %v1353
    %v1523 = vpop.f32.mrb[0].mxu0
    %v1524 = vadd.f32 0.0, %v1523
    %v1525 = vpop.f32.mrb[0].mxu0
    %1526 = vmatprep.mubr.f32.mxu0 0.0
    %1527 = vmatmul.mubr.f32.gmra.mrb[0].mxu0 %v1356
    %v1528 = vpop.f32.mrb[0].mxu0
    %v1529 = vadd.f32 0.0, %v1528
    %v1530 = vpop.f32.mrb[0].mxu0
    %1531 = vmatprep.mubr.f32.mxu0 0.0
    %1532 = vmatmul.mubr.f32.gmra.mrb[0].mxu0 %v1359
    %v1533 = vpop.f32.mrb[0].mxu0
    %v1534 = vadd.f32 0.0, %v1533
    %v1535 = vpop.f32.mrb[0].mxu0
    %1536 = vmatprep.mubr.f32.mxu0 0.0
    %1537 = vmatmul.mubr.f32.gmra.mrb[0].mxu0 %v1362
    %v1538 = vpop.f32.mrb[0].mxu0
    %v1539 = vadd.f32 0.0, %v1538
    %v1540 = vpop.f32.mrb[0].mxu0
    %1541 = vmatprep.mubr.f32.mxu0 0.0
    %1542 = vmatmul.mubr.f32.gmra.mrb[0].mxu0 %v1365
    %v1543 = vpop.f32.mrb[0].mxu0
    %v1544 = vadd.f32 0.0, %v1543
    %v1545 = vpop.f32.mrb[0].mxu0
    %1546 = vmatprep.mubr.f32.mxu0 0.0
    %1547 = vmatmul.mubr.f32.gmra.mrb[0].mxu0 %v1368
    %v1548 = vpop.f32.mrb[0].mxu0
    %v1549 = vadd.f32 0.0, %v1548
    %v1550 = vpop.f32.mrb[0].mxu0
    %1551 = vmatprep.mubr.f32.mxu0 0.0
    %1552 = vmatmul.mubr.f32.gmra.mrb[0].mxu0 %v1371
    %v1553 = vpop.f32.mrb[0].mxu0
    %v1554 = vadd.f32 0.0, %v1553
    %v1555 = vpop.f32.mrb[0].mxu0
    %1556 = vmatprep.mubr.f32.mxu0 0.0
    %1557 = vmatmul.mubr.f32.gmra.mrb[0].mxu0 %v1374
    %v1558 = vpop.f32.mrb[0].mxu0
    %v1559 = vadd.f32 0.0, %v1558
    %v1560 = vpop.f32.mrb[0].mxu0
    %1561 = vmatprep.mubr.f32.mxu0 0.0
    %1562 = vmatmul.mubr.f32.gmra.mrb[0].mxu0 %v1377
    %v1563 = vpop.f32.mrb[0].mxu0
    %v1564 = vadd.f32 0.0, %v1563
    %v1565 = vpop.f32.mrb[0].mxu0
    %1566 = vmatprep.mubr.f32.mxu0 0.0
    %1567 = vmatmul.mubr.f32.gmra.mrb[0].mxu0 %v1380
    %v1568 = vpop.f32.mrb[0].mxu0
    %v1569 = vadd.f32 0.0, %v1568
    %v1570 = vpop.f32.mrb[0].mxu0
    %1571 = vmatprep.mubr.f32.mxu0 0.0
    %1572 = vmatmul.mubr.f32.gmra.mrb[0].mxu0 %v1383
    %v1573 = vpop.f32.mrb[0].mxu0
    %v1574 = vadd.f32 0.0, %v1573
    %v1575 = vpop.f32.mrb[0].mxu0
    %1576 = vmatprep.mubr.f32.mxu0 0.0
    %1577 = vmatmul.mubr.f32.gmra.mrb[0].mxu0 %v1386
    %v1578 = vpop.f32.mrb[0].mxu0
    %v1579 = vadd.f32 0.0, %v1578
    %v1580 = vpop.f32.mrb[0].mxu0
    %1581 = vmatprep.mubr.f32.mxu0 0.0
    %1582 = vmatmul.mubr.f32.gmra.mrb[0].mxu0 %v1389
    %v1583 = vpop.f32.mrb[0].mxu0
    %v1584 = vadd.f32 0.0, %v1583
    %v1585 = vpop.f32.mrb[0].mxu0
    %1586 = vmatprep.mubr.f32.mxu0 0.0
    %1587 = vmatmul.mubr.f32.gmra.mrb[0].mxu0 %v1392
    %v1588 = vpop.f32.mrb[0].mxu0
    %v1589 = vadd.f32 0.0, %v1588
    %v1590 = vpop.f32.mrb[0].mxu0
    %1591 = vmatprep.mubr.f32.mxu0 0.0
    %1592 = vmatmul.mubr.f32.gmra.mrb[0].mxu0 %v1395
    %v1593 = vpop.f32.mrb[0].mxu0
    %v1594 = vadd.f32 0.0, %v1593
    %v1595 = vpop.f32.mrb[0].mxu0
    %1596 = vmatprep.mubr.f32.mxu0 0.0
    %1597 = vmatmul.mubr.f32.gmra.mrb[0].mxu0 %v1398
    %v1598 = vpop.f32.mrb[0].mxu0
    %v1599 = vadd.f32 0.0, %v1598
    %v1600 = vpop.f32.mrb[0].mxu0
    %1601 = vmatprep.mubr.f32.mxu0 0.0
    %1602 = vmatmul.mubr.f32.gmra.mrb[0].mxu0 %v1401
    %v1603 = vpop.f32.mrb[0].mxu0
    %v1604 = vadd.f32 0.0, %v1603
    %v1605 = vpop.f32.mrb[0].mxu0
    %1606 = vdwg.mxu0
    %v1608 = vsel %vm1321, %v658, 0
    %v1611 = vsel %vm1321, %v659, 0
    %v1614 = vsel %vm1321, %v660, 0
    %v1617 = vsel %vm1321, %v661, 0
    %v1620 = vsel %vm1321, %v662, 0
    %v1623 = vsel %vm1321, %v663, 0
    %v1626 = vsel %vm1321, %v664, 0
    %v1629 = vsel %vm1321, %v665, 0
    %v1632 = vsel %vm1321, %v666, 0
    %v1635 = vsel %vm1321, %v667, 0
    %v1638 = vsel %vm1321, %v668, 0
    %v1641 = vsel %vm1321, %v669, 0
    %v1644 = vsel %vm1321, %v670, 0
    %v1647 = vsel %vm1321, %v671, 0
    %v1650 = vsel %vm1321, %v672, 0
    %v1653 = vsel %vm1321, %v673, 0
    %v1656 = vsel %vm1321, %v674, 0
    %v1659 = vsel %vm1321, %v675, 0
    %v1662 = vsel %vm1321, %v676, 0
    %v1665 = vsel %vm1321, %v677, 0
    %v1668 = vsel %vm1321, %v678, 0
    %v1671 = vsel %vm1321, %v679, 0
    %v1674 = vsel %vm1321, %v680, 0
    %v1677 = vsel %vm1321, %v681, 0
    %v1680 = vsel %vm1321, %v682, 0
    %v1683 = vsel %vm1321, %v683, 0
    %v1686 = vsel %vm1321, %v684, 0
    %v1689 = vsel %vm1403, %v685, 0
    %1691 = vmatprep.subr.mxu0 0.0
    %1692 = vmatpush1.msra.mxu0 %v1689
    %1693 = vmatprep.subr.mxu0 0.0
    %1694 = vmatpush1.msra.mxu0 0.0
    %1695 = vmatprep.subr.mxu0 0.0
    %1696 = vmatpush1.msra.mxu0 0.0
    %1697 = vmatprep.subr.mxu0 0.0
    %1698 = vmatpush1.msra.mxu0 0.0
    %1699 = vmatprep.subr.mxu0 0.0
    %1700 = vmatpush1.msra.mxu0 0.0
    %1701 = vmatprep.subr.mxu0 0.0
    %1702 = vmatpush1.msra.mxu0 0.0
    %1703 = vmatprep.subr.mxu0 0.0
    %1704 = vmatpush1.msra.mxu0 0.0
    %1705 = vmatprep.subr.mxu0 0.0
    %1706 = vmatpush1.msra.mxu0 0.0
    %1707 = vmatprep.subr.mxu0 0.0
    %1708 = vmatpush1.msra.mxu0 0.0
    %1709 = vmatprep.subr.mxu0 0.0
    %1710 = vmatpush1.msra.mxu0 0.0
    %1711 = vmatprep.subr.mxu0 0.0
    %1712 = vmatpush1.msra.mxu0 0.0
    %1713 = vmatprep.subr.mxu0 0.0
    %1714 = vmatpush1.msra.mxu0 0.0
    %1715 = vmatprep.subr.mxu0 0.0
    %1716 = vmatpush1.msra.mxu0 0.0
    %1717 = vmatprep.subr.mxu0 0.0
    %1718 = vmatpush1.msra.mxu0 0.0
    %1719 = vmatprep.subr.mxu0 0.0
    %1720 = vmatpush1.msra.mxu0 0.0
    %1721 = vmatprep.subr.mxu0 0.0
    %1722 = vmatpush1.msra.mxu0 0.0
    %1723 = vmatprep.subr.mxu0 0.0
    %1724 = vmatpush1.msra.mxu0 0.0
    %1725 = vmatprep.subr.mxu0 0.0
    %1726 = vmatpush1.msra.mxu0 0.0
    %1727 = vmatprep.subr.mxu0 0.0
    %1728 = vmatpush1.msra.mxu0 0.0
    %1729 = vmatprep.subr.mxu0 0.0
    %1730 = vmatpush1.msra.mxu0 0.0
    %1731 = vmatprep.subr.mxu0 0.0
    %1732 = vmatpush1.msra.mxu0 0.0
    %1733 = vmatprep.subr.mxu0 0.0
    %1734 = vmatpush1.msra.mxu0 0.0
    %1735 = vmatprep.subr.mxu0 0.0
    %1736 = vmatpush1.msra.mxu0 0.0
    %1737 = vmatprep.subr.mxu0 0.0
    %1738 = vmatpush1.msra.mxu0 0.0
    %1739 = vmatprep.subr.mxu0 0.0
    %1740 = vmatpush1.msra.mxu0 0.0
    %1741 = vmatprep.subr.mxu0 0.0
    %1742 = vmatpush1.msra.mxu0 0.0
    %1743 = vmatprep.subr.mxu0 0.0
    %1744 = vmatpush1.msra.mxu0 0.0
    %1745 = vmatprep.subr.mxu0 0.0
    %1746 = vmatpush1.msra.mxu0 0.0
    %1747 = vmatprep.subr.mxu0 0.0
    %1748 = vmatpush1.msra.mxu0 0.0
    %1749 = vmatprep.subr.mxu0 0.0
    %1750 = vmatpush1.msra.mxu0 0.0
    %1751 = vmatprep.subr.mxu0 0.0
    %1752 = vmatpush1.msra.mxu0 0.0
    %1753 = vmatprep.subr.mxu0 0.0
    %1754 = vmatpush1.msra.mxu0 0.0
    %1755 = vmatprep.mubr.f32.mxu0 0.0
    %1756 = vmatmul.mubr.f32.gmra.mrb[0].mxu0 %v1608
    %v1757 = vpop.f32.mrb[0].mxu0
    %v1758 = vadd.f32 %v1474, %v1757
    %v1759 = vpop.f32.mrb[0].mxu0
    %1760 = vmatprep.mubr.f32.mxu0 0.0
    %1761 = vmatmul.mubr.f32.gmra.mrb[0].mxu0 %v1611
    %v1762 = vpop.f32.mrb[0].mxu0
    %v1763 = vadd.f32 %v1479, %v1762
    %v1764 = vpop.f32.mrb[0].mxu0
    %1765 = vmatprep.mubr.f32.mxu0 0.0
    %1766 = vmatmul.mubr.f32.gmra.mrb[0].mxu0 %v1614
    %v1767 = vpop.f32.mrb[0].mxu0
    %v1768 = vadd.f32 %v1484, %v1767
    %v1769 = vpop.f32.mrb[0].mxu0
    %1770 = vmatprep.mubr.f32.mxu0 0.0
    %1771 = vmatmul.mubr.f32.gmra.mrb[0].mxu0 %v1617
    %v1772 = vpop.f32.mrb[0].mxu0
    %v1773 = vadd.f32 %v1489, %v1772
    %v1774 = vpop.f32.mrb[0].mxu0
    %1775 = vmatprep.mubr.f32.mxu0 0.0
    %1776 = vmatmul.mubr.f32.gmra.mrb[0].mxu0 %v1620
    %v1777 = vpop.f32.mrb[0].mxu0
    %v1778 = vadd.f32 %v1494, %v1777
    %v1779 = vpop.f32.mrb[0].mxu0
    %1780 = vmatprep.mubr.f32.mxu0 0.0
    %1781 = vmatmul.mubr.f32.gmra.mrb[0].mxu0 %v1623
    %v1782 = vpop.f32.mrb[0].mxu0
    %v1783 = vadd.f32 %v1499, %v1782
    %v1784 = vpop.f32.mrb[0].mxu0
    %1785 = vmatprep.mubr.f32.mxu0 0.0
    %1786 = vmatmul.mubr.f32.gmra.mrb[0].mxu0 %v1626
    %v1787 = vpop.f32.mrb[0].mxu0
    %v1788 = vadd.f32 %v1504, %v1787
    %v1789 = vpop.f32.mrb[0].mxu0
    %1790 = vmatprep.mubr.f32.mxu0 0.0
    %1791 = vmatmul.mubr.f32.gmra.mrb[0].mxu0 %v1629
    %v1792 = vpop.f32.mrb[0].mxu0
    %v1793 = vadd.f32 %v1509, %v1792
    %v1794 = vpop.f32.mrb[0].mxu0
    %1795 = vmatprep.mubr.f32.mxu0 0.0
    %1796 = vmatmul.mubr.f32.gmra.mrb[0].mxu0 %v1632
    %v1797 = vpop.f32.mrb[0].mxu0
    %v1798 = vadd.f32 %v1514, %v1797
    %v1799 = vpop.f32.mrb[0].mxu0
    %1800 = vmatprep.mubr.f32.mxu0 0.0
    %1801 = vmatmul.mubr.f32.gmra.mrb[0].mxu0 %v1635
    %v1802 = vpop.f32.mrb[0].mxu0
    %v1803 = vadd.f32 %v1519, %v1802
    %v1804 = vpop.f32.mrb[0].mxu0
    %1805 = vmatprep.mubr.f32.mxu0 0.0
    %1806 = vmatmul.mubr.f32.gmra.mrb[0].mxu0 %v1638
    %v1807 = vpop.f32.mrb[0].mxu0
    %v1808 = vadd.f32 %v1524, %v1807
    %v1809 = vpop.f32.mrb[0].mxu0
    %1810 = vmatprep.mubr.f32.mxu0 0.0
    %1811 = vmatmul.mubr.f32.gmra.mrb[0].mxu0 %v1641
    %v1812 = vpop.f32.mrb[0].mxu0
    %v1813 = vadd.f32 %v1529, %v1812
    %v1814 = vpop.f32.mrb[0].mxu0
    %1815 = vmatprep.mubr.f32.mxu0 0.0
    %1816 = vmatmul.mubr.f32.gmra.mrb[0].mxu0 %v1644
    %v1817 = vpop.f32.mrb[0].mxu0
    %v1818 = vadd.f32 %v1534, %v1817
    %v1819 = vpop.f32.mrb[0].mxu0
    %1820 = vmatprep.mubr.f32.mxu0 0.0
    %1821 = vmatmul.mubr.f32.gmra.mrb[0].mxu0 %v1647
    %v1822 = vpop.f32.mrb[0].mxu0
    %v1823 = vadd.f32 %v1539, %v1822
    %v1824 = vpop.f32.mrb[0].mxu0
    %1825 = vmatprep.mubr.f32.mxu0 0.0
    %1826 = vmatmul.mubr.f32.gmra.mrb[0].mxu0 %v1650
    %v1827 = vpop.f32.mrb[0].mxu0
    %v1828 = vadd.f32 %v1544, %v1827
    %v1829 = vpop.f32.mrb[0].mxu0
    %1830 = vmatprep.mubr.f32.mxu0 0.0
    %1831 = vmatmul.mubr.f32.gmra.mrb[0].mxu0 %v1653
    %v1832 = vpop.f32.mrb[0].mxu0
    %v1833 = vadd.f32 %v1549, %v1832
    %v1834 = vpop.f32.mrb[0].mxu0
    %1835 = vmatprep.mubr.f32.mxu0 0.0
    %1836 = vmatmul.mubr.f32.gmra.mrb[0].mxu0 %v1656
    %v1837 = vpop.f32.mrb[0].mxu0
    %v1838 = vadd.f32 %v1554, %v1837
    %v1839 = vpop.f32.mrb[0].mxu0
    %1840 = vmatprep.mubr.f32.mxu0 0.0
    %1841 = vmatmul.mubr.f32.gmra.mrb[0].mxu0 %v1659
    %v1842 = vpop.f32.mrb[0].mxu0
    %v1843 = vadd.f32 %v1559, %v1842
    %v1844 = vpop.f32.mrb[0].mxu0
    %1845 = vmatprep.mubr.f32.mxu0 0.0
    %1846 = vmatmul.mubr.f32.gmra.mrb[0].mxu0 %v1662
    %v1847 = vpop.f32.mrb[0].mxu0
    %v1848 = vadd.f32 %v1564, %v1847
    %v1849 = vpop.f32.mrb[0].mxu0
    %1850 = vmatprep.mubr.f32.mxu0 0.0
    %1851 = vmatmul.mubr.f32.gmra.mrb[0].mxu0 %v1665
    %v1852 = vpop.f32.mrb[0].mxu0
    %v1853 = vadd.f32 %v1569, %v1852
    %v1854 = vpop.f32.mrb[0].mxu0
    %1855 = vmatprep.mubr.f32.mxu0 0.0
    %1856 = vmatmul.mubr.f32.gmra.mrb[0].mxu0 %v1668
    %v1857 = vpop.f32.mrb[0].mxu0
    %v1858 = vadd.f32 %v1574, %v1857
    %v1859 = vpop.f32.mrb[0].mxu0
    %1860 = vmatprep.mubr.f32.mxu0 0.0
    %1861 = vmatmul.mubr.f32.gmra.mrb[0].mxu0 %v1671
    %v1862 = vpop.f32.mrb[0].mxu0
    %v1863 = vadd.f32 %v1579, %v1862
    %v1864 = vpop.f32.mrb[0].mxu0
    %1865 = vmatprep.mubr.f32.mxu0 0.0
    %1866 = vmatmul.mubr.f32.gmra.mrb[0].mxu0 %v1674
    %v1867 = vpop.f32.mrb[0].mxu0
    %v1868 = vadd.f32 %v1584, %v1867
    %v1869 = vpop.f32.mrb[0].mxu0
    %1870 = vmatprep.mubr.f32.mxu0 0.0
    %1871 = vmatmul.mubr.f32.gmra.mrb[0].mxu0 %v1677
    %v1872 = vpop.f32.mrb[0].mxu0
    %v1873 = vadd.f32 %v1589, %v1872
    %v1874 = vpop.f32.mrb[0].mxu0
    %1875 = vmatprep.mubr.f32.mxu0 0.0
    %1876 = vmatmul.mubr.f32.gmra.mrb[0].mxu0 %v1680
    %v1877 = vpop.f32.mrb[0].mxu0
    %v1878 = vadd.f32 %v1594, %v1877
    %v1879 = vpop.f32.mrb[0].mxu0
    %1880 = vmatprep.mubr.f32.mxu0 0.0
    %1881 = vmatmul.mubr.f32.gmra.mrb[0].mxu0 %v1683
    %v1882 = vpop.f32.mrb[0].mxu0
    %v1883 = vadd.f32 %v1599, %v1882
    %v1884 = vpop.f32.mrb[0].mxu0
    %1885 = vmatprep.mubr.f32.mxu0 0.0
    %1886 = vmatmul.mubr.f32.gmra.mrb[0].mxu0 %v1686
    %v1887 = vpop.f32.mrb[0].mxu0
    %v1888 = vadd.f32 %v1604, %v1887
    %v1889 = vpop.f32.mrb[0].mxu0
    %1890 = vdwg.mxu0
    %s1891 = scalar_lea.vmem %s0, 432
    %v1892 = vld [vmem:[%s1891] sm:$0xff]
    %v1893 = vld [vmem:[%s1891 + $0x8] sm:$0xff]
    %v1894 = vld [vmem:[%s1891 + $0x10] sm:$0xff]
    %v1895 = vld [vmem:[%s1891 + $0x18] sm:$0xff]
    %v1896 = vld [vmem:[%s1891 + $0x20] sm:$0xff]
    %v1897 = vld [vmem:[%s1891 + $0x28] sm:$0xff]
    %v1898 = vld [vmem:[%s1891 + $0x30] sm:$0xff]
    %v1899 = vld [vmem:[%s1891 + $0x38] sm:$0xff]
    %v1900 = vld [vmem:[%s1891 + $0x40] sm:$0xff]
    %v1901 = vld [vmem:[%s1891 + $0x48] sm:$0xff]
    %v1902 = vld [vmem:[%s1891 + $0x50] sm:$0xff]
    %v1903 = vld [vmem:[%s1891 + $0x58] sm:$0xff]
    %v1904 = vld [vmem:[%s1891 + $0x60] sm:$0xff]
    %v1905 = vld [vmem:[%s1891 + $0x68] sm:$0xff]
    %v1906 = vld [vmem:[%s1891 + $0x70] sm:$0xff]
    %v1907 = vld [vmem:[%s1891 + $0x78] sm:$0xff]
    %v1908 = vld [vmem:[%s1891 + $0x80] sm:$0xff]
    %v1909 = vld [vmem:[%s1891 + $0x88] sm:$0xff]
    %v1910 = vld [vmem:[%s1891 + $0x90] sm:$0xff]
    %v1911 = vld [vmem:[%s1891 + $0x98] sm:$0xff]
    %v1912 = vld [vmem:[%s1891 + $0xa0] sm:$0xff]
    %v1913 = vld [vmem:[%s1891 + $0xa8] sm:$0xff]
    %v1914 = vld [vmem:[%s1891 + $0xb0] sm:$0xff]
    %v1915 = vld [vmem:[%s1891 + $0xb8] sm:$0xff]
    %v1916 = vld [vmem:[%s1891 + $0xc0] sm:$0xff]
    %v1917 = vld [vmem:[%s1891 + $0xc8] sm:$0xff]
    %v1918 = vld [vmem:[%s1891 + $0xd0] sm:$0x3]
    %v1920 = vsel %vm69, %v1892, 0
    %v1923 = vsel %vm69, %v1893, 0
    %v1926 = vsel %vm69, %v1894, 0
    %v1929 = vsel %vm69, %v1895, 0
    %v1932 = vsel %vm69, %v1896, 0
    %v1935 = vsel %vm69, %v1897, 0
    %v1938 = vsel %vm69, %v1898, 0
    %v1941 = vsel %vm69, %v1899, 0
    %v1944 = vsel %vm69, %v1900, 0
    %v1947 = vsel %vm69, %v1901, 0
    %v1950 = vsel %vm69, %v1902, 0
    %v1953 = vsel %vm69, %v1903, 0
    %v1956 = vsel %vm69, %v1904, 0
    %v1959 = vsel %vm69, %v1905, 0
    %v1962 = vsel %vm69, %v1906, 0
    %v1965 = vsel %vm69, %v1907, 0
    %v1968 = vsel %vm69, %v1908, 0
    %v1971 = vsel %vm69, %v1909, 0
    %v1974 = vsel %vm69, %v1910, 0
    %v1977 = vsel %vm69, %v1911, 0
    %v1980 = vsel %vm69, %v1912, 0
    %v1983 = vsel %vm69, %v1913, 0
    %v1986 = vsel %vm69, %v1914, 0
    %v1989 = vsel %vm69, %v1915, 0
    %v1992 = vsel %vm69, %v1916, 0
    %v1995 = vsel %vm69, %v1917, 0
    %v1998 = vsel %vm69, %v1918, 0
    %2000 = vmatprep.subr.mxu0 0.0
    %2001 = vmatpush1.msra.mxu0 %v67
    %2002 = vmatprep.subr.mxu0 0.0
    %2003 = vmatpush1.msra.mxu0 %v153
    %2004 = vmatprep.subr.mxu0 0.0
    %2005 = vmatpush1.msra.mxu0 0.0
    %2006 = vmatprep.subr.mxu0 0.0
    %2007 = vmatpush1.msra.mxu0 0.0
    %2008 = vmatprep.subr.mxu0 0.0
    %2009 = vmatpush1.msra.mxu0 0.0
    %2010 = vmatprep.subr.mxu0 0.0
    %2011 = vmatpush1.msra.mxu0 0.0
    %2012 = vmatprep.subr.mxu0 0.0
    %2013 = vmatpush1.msra.mxu0 0.0
    %2014 = vmatprep.subr.mxu0 0.0
    %2015 = vmatpush1.msra.mxu0 0.0
    %2016 = vmatprep.subr.mxu0 0.0
    %2017 = vmatpush1.msra.mxu0 0.0
    %2018 = vmatprep.subr.mxu0 0.0
    %2019 = vmatpush1.msra.mxu0 0.0
    %2020 = vmatprep.subr.mxu0 0.0
    %2021 = vmatpush1.msra.mxu0 0.0
    %2022 = vmatprep.subr.mxu0 0.0
    %2023 = vmatpush1.msra.mxu0 0.0
    %2024 = vmatprep.subr.mxu0 0.0
    %2025 = vmatpush1.msra.mxu0 0.0
    %2026 = vmatprep.subr.mxu0 0.0
    %2027 = vmatpush1.msra.mxu0 0.0
    %2028 = vmatprep.subr.mxu0 0.0
    %2029 = vmatpush1.msra.mxu0 0.0
    %2030 = vmatprep.subr.mxu0 0.0
    %2031 = vmatpush1.msra.mxu0 0.0
    %2032 = vmatprep.subr.mxu0 0.0
    %2033 = vmatpush1.msra.mxu0 0.0
    %2034 = vmatprep.subr.mxu0 0.0
    %2035 = vmatpush1.msra.mxu0 0.0
    %2036 = vmatprep.subr.mxu0 0.0
    %2037 = vmatpush1.msra.mxu0 0.0
    %2038 = vmatprep.subr.mxu0 0.0
    %2039 = vmatpush1.msra.mxu0 0.0
    %2040 = vmatprep.subr.mxu0 0.0
    %2041 = vmatpush1.msra.mxu0 0.0
    %2042 = vmatprep.subr.mxu0 0.0
    %2043 = vmatpush1.msra.mxu0 0.0
    %2044 = vmatprep.subr.mxu0 0.0
    %2045 = vmatpush1.msra.mxu0 0.0
    %2046 = vmatprep.subr.mxu0 0.0
    %2047 = vmatpush1.msra.mxu0 0.0
    %2048 = vmatprep.subr.mxu0 0.0
    %2049 = vmatpush1.msra.mxu0 0.0
    %2050 = vmatprep.subr.mxu0 0.0
    %2051 = vmatpush1.msra.mxu0 0.0
    %2052 = vmatprep.subr.mxu0 0.0
    %2053 = vmatpush1.msra.mxu0 0.0
    %2054 = vmatprep.subr.mxu0 0.0
    %2055 = vmatpush1.msra.mxu0 0.0
    %2056 = vmatprep.subr.mxu0 0.0
    %2057 = vmatpush1.msra.mxu0 0.0
    %2058 = vmatprep.subr.mxu0 0.0
    %2059 = vmatpush1.msra.mxu0 0.0
    %2060 = vmatprep.subr.mxu0 0.0
    %2061 = vmatpush1.msra.mxu0 0.0
    %2062 = vmatprep.subr.mxu0 0.0
    %2063 = vmatpush1.msra.mxu0 0.0
    %2064 = vmatprep.mubr.f32.mxu0 0.0
    %2065 = vmatmul.mubr.f32.gmra.mrb[0].mxu0 %v1920
    %v2066 = vpop.f32.mrb[0].mxu0
    %v2067 = vadd.f32 0.0, %v2066
    %v2068 = vpop.f32.mrb[0].mxu0
    %2069 = vmatprep.mubr.f32.mxu0 0.0
    %2070 = vmatmul.mubr.f32.gmra.mrb[0].mxu0 %v1923
    %v2071 = vpop.f32.mrb[0].mxu0
    %v2072 = vadd.f32 0.0, %v2071
    %v2073 = vpop.f32.mrb[0].mxu0
    %2074 = vmatprep.mubr.f32.mxu0 0.0
    %2075 = vmatmul.mubr.f32.gmra.mrb[0].mxu0 %v1926
    %v2076 = vpop.f32.mrb[0].mxu0
    %v2077 = vadd.f32 0.0, %v2076
    %v2078 = vpop.f32.mrb[0].mxu0
    %2079 = vmatprep.mubr.f32.mxu0 0.0
    %2080 = vmatmul.mubr.f32.gmra.mrb[0].mxu0 %v1929
    %v2081 = vpop.f32.mrb[0].mxu0
    %v2082 = vadd.f32 0.0, %v2081
    %v2083 = vpop.f32.mrb[0].mxu0
    %2084 = vmatprep.mubr.f32.mxu0 0.0
    %2085 = vmatmul.mubr.f32.gmra.mrb[0].mxu0 %v1932
    %v2086 = vpop.f32.mrb[0].mxu0
    %v2087 = vadd.f32 0.0, %v2086
    %v2088 = vpop.f32.mrb[0].mxu0
    %2089 = vmatprep.mubr.f32.mxu0 0.0
    %2090 = vmatmul.mubr.f32.gmra.mrb[0].mxu0 %v1935
    %v2091 = vpop.f32.mrb[0].mxu0
    %v2092 = vadd.f32 0.0, %v2091
    %v2093 = vpop.f32.mrb[0].mxu0
    %2094 = vmatprep.mubr.f32.mxu0 0.0
    %2095 = vmatmul.mubr.f32.gmra.mrb[0].mxu0 %v1938
    %v2096 = vpop.f32.mrb[0].mxu0
    %v2097 = vadd.f32 0.0, %v2096
    %v2098 = vpop.f32.mrb[0].mxu0
    %2099 = vmatprep.mubr.f32.mxu0 0.0
    %2100 = vmatmul.mubr.f32.gmra.mrb[0].mxu0 %v1941
    %v2101 = vpop.f32.mrb[0].mxu0
    %v2102 = vadd.f32 0.0, %v2101
    %v2103 = vpop.f32.mrb[0].mxu0
    %2104 = vmatprep.mubr.f32.mxu0 0.0
    %2105 = vmatmul.mubr.f32.gmra.mrb[0].mxu0 %v1944
    %v2106 = vpop.f32.mrb[0].mxu0
    %v2107 = vadd.f32 0.0, %v2106
    %v2108 = vpop.f32.mrb[0].mxu0
    %2109 = vmatprep.mubr.f32.mxu0 0.0
    %2110 = vmatmul.mubr.f32.gmra.mrb[0].mxu0 %v1947
    %v2111 = vpop.f32.mrb[0].mxu0
    %v2112 = vadd.f32 0.0, %v2111
    %v2113 = vpop.f32.mrb[0].mxu0
    %2114 = vmatprep.mubr.f32.mxu0 0.0
    %2115 = vmatmul.mubr.f32.gmra.mrb[0].mxu0 %v1950
    %v2116 = vpop.f32.mrb[0].mxu0
    %v2117 = vadd.f32 0.0, %v2116
    %v2118 = vpop.f32.mrb[0].mxu0
    %2119 = vmatprep.mubr.f32.mxu0 0.0
    %2120 = vmatmul.mubr.f32.gmra.mrb[0].mxu0 %v1953
    %v2121 = vpop.f32.mrb[0].mxu0
    %v2122 = vadd.f32 0.0, %v2121
    %v2123 = vpop.f32.mrb[0].mxu0
    %2124 = vmatprep.mubr.f32.mxu0 0.0
    %2125 = vmatmul.mubr.f32.gmra.mrb[0].mxu0 %v1956
    %v2126 = vpop.f32.mrb[0].mxu0
    %v2127 = vadd.f32 0.0, %v2126
    %v2128 = vpop.f32.mrb[0].mxu0
    %2129 = vmatprep.mubr.f32.mxu0 0.0
    %2130 = vmatmul.mubr.f32.gmra.mrb[0].mxu0 %v1959
    %v2131 = vpop.f32.mrb[0].mxu0
    %v2132 = vadd.f32 0.0, %v2131
    %v2133 = vpop.f32.mrb[0].mxu0
    %2134 = vmatprep.mubr.f32.mxu0 0.0
    %2135 = vmatmul.mubr.f32.gmra.mrb[0].mxu0 %v1962
    %v2136 = vpop.f32.mrb[0].mxu0
    %v2137 = vadd.f32 0.0, %v2136
    %v2138 = vpop.f32.mrb[0].mxu0
    %2139 = vmatprep.mubr.f32.mxu0 0.0
    %2140 = vmatmul.mubr.f32.gmra.mrb[0].mxu0 %v1965
    %v2141 = vpop.f32.mrb[0].mxu0
    %v2142 = vadd.f32 0.0, %v2141
    %v2143 = vpop.f32.mrb[0].mxu0
    %2144 = vmatprep.mubr.f32.mxu0 0.0
    %2145 = vmatmul.mubr.f32.gmra.mrb[0].mxu0 %v1968
    %v2146 = vpop.f32.mrb[0].mxu0
    %v2147 = vadd.f32 0.0, %v2146
    %v2148 = vpop.f32.mrb[0].mxu0
    %2149 = vmatprep.mubr.f32.mxu0 0.0
    %2150 = vmatmul.mubr.f32.gmra.mrb[0].mxu0 %v1971
    %v2151 = vpop.f32.mrb[0].mxu0
    %v2152 = vadd.f32 0.0, %v2151
    %v2153 = vpop.f32.mrb[0].mxu0
    %2154 = vmatprep.mubr.f32.mxu0 0.0
    %2155 = vmatmul.mubr.f32.gmra.mrb[0].mxu0 %v1974
    %v2156 = vpop.f32.mrb[0].mxu0
    %v2157 = vadd.f32 0.0, %v2156
    %v2158 = vpop.f32.mrb[0].mxu0
    %2159 = vmatprep.mubr.f32.mxu0 0.0
    %2160 = vmatmul.mubr.f32.gmra.mrb[0].mxu0 %v1977
    %v2161 = vpop.f32.mrb[0].mxu0
    %v2162 = vadd.f32 0.0, %v2161
    %v2163 = vpop.f32.mrb[0].mxu0
    %2164 = vmatprep.mubr.f32.mxu0 0.0
    %2165 = vmatmul.mubr.f32.gmra.mrb[0].mxu0 %v1980
    %v2166 = vpop.f32.mrb[0].mxu0
    %v2167 = vadd.f32 0.0, %v2166
    %v2168 = vpop.f32.mrb[0].mxu0
    %2169 = vmatprep.mubr.f32.mxu0 0.0
    %2170 = vmatmul.mubr.f32.gmra.mrb[0].mxu0 %v1983
    %v2171 = vpop.f32.mrb[0].mxu0
    %v2172 = vadd.f32 0.0, %v2171
    %v2173 = vpop.f32.mrb[0].mxu0
    %2174 = vmatprep.mubr.f32.mxu0 0.0
    %2175 = vmatmul.mubr.f32.gmra.mrb[0].mxu0 %v1986
    %v2176 = vpop.f32.mrb[0].mxu0
    %v2177 = vadd.f32 0.0, %v2176
    %v2178 = vpop.f32.mrb[0].mxu0
    %2179 = vmatprep.mubr.f32.mxu0 0.0
    %2180 = vmatmul.mubr.f32.gmra.mrb[0].mxu0 %v1989
    %v2181 = vpop.f32.mrb[0].mxu0
    %v2182 = vadd.f32 0.0, %v2181
    %v2183 = vpop.f32.mrb[0].mxu0
    %2184 = vmatprep.mubr.f32.mxu0 0.0
    %2185 = vmatmul.mubr.f32.gmra.mrb[0].mxu0 %v1992
    %v2186 = vpop.f32.mrb[0].mxu0
    %v2187 = vadd.f32 0.0, %v2186
    %v2188 = vpop.f32.mrb[0].mxu0
    %2189 = vmatprep.mubr.f32.mxu0 0.0
    %2190 = vmatmul.mubr.f32.gmra.mrb[0].mxu0 %v1995
    %v2191 = vpop.f32.mrb[0].mxu0
    %v2192 = vadd.f32 0.0, %v2191
    %v2193 = vpop.f32.mrb[0].mxu0
    %2194 = vmatprep.mubr.f32.mxu0 0.0
    %2195 = vmatmul.mubr.f32.gmra.mrb[0].mxu0 %v1998
    %v2196 = vpop.f32.mrb[0].mxu0
    %v2197 = vadd.f32 0.0, %v2196
    %v2198 = vpop.f32.mrb[0].mxu0
    %2199 = vdwg.mxu0
    %2227 = vrot.lane.b32.xlu0 %v2067, 123
    %v2228 = vpop.permute.xlu0 %2227
    %2229 = vrot.lane.b32.xlu0 %v2072, 123
    %v2230 = vpop.permute.xlu0 %2229
    %2231 = vrot.lane.b32.xlu0 %v2077, 123
    %v2232 = vpop.permute.xlu0 %2231
    %2233 = vrot.lane.b32.xlu0 %v2082, 123
    %v2234 = vpop.permute.xlu0 %2233
    %2235 = vrot.lane.b32.xlu0 %v2087, 123
    %v2236 = vpop.permute.xlu0 %2235
    %2237 = vrot.lane.b32.xlu0 %v2092, 123
    %v2238 = vpop.permute.xlu0 %2237
    %2239 = vrot.lane.b32.xlu0 %v2097, 123
    %v2240 = vpop.permute.xlu0 %2239
    %2241 = vrot.lane.b32.xlu0 %v2102, 123
    %v2242 = vpop.permute.xlu0 %2241
    %2243 = vrot.lane.b32.xlu0 %v2107, 123
    %v2244 = vpop.permute.xlu0 %2243
    %2245 = vrot.lane.b32.xlu0 %v2112, 123
    %v2246 = vpop.permute.xlu0 %2245
    %2247 = vrot.lane.b32.xlu0 %v2117, 123
    %v2248 = vpop.permute.xlu0 %2247
    %2249 = vrot.lane.b32.xlu0 %v2122, 123
    %v2250 = vpop.permute.xlu0 %2249
    %2251 = vrot.lane.b32.xlu0 %v2127, 123
    %v2252 = vpop.permute.xlu0 %2251
    %2253 = vrot.lane.b32.xlu0 %v2132, 123
    %v2254 = vpop.permute.xlu0 %2253
    %2255 = vrot.lane.b32.xlu0 %v2137, 123
    %v2256 = vpop.permute.xlu0 %2255
    %2257 = vrot.lane.b32.xlu0 %v2142, 123
    %v2258 = vpop.permute.xlu0 %2257
    %2259 = vrot.lane.b32.xlu0 %v2147, 123
    %v2260 = vpop.permute.xlu0 %2259
    %2261 = vrot.lane.b32.xlu0 %v2152, 123
    %v2262 = vpop.permute.xlu0 %2261
    %2263 = vrot.lane.b32.xlu0 %v2157, 123
    %v2264 = vpop.permute.xlu0 %2263
    %2265 = vrot.lane.b32.xlu0 %v2162, 123
    %v2266 = vpop.permute.xlu0 %2265
    %2267 = vrot.lane.b32.xlu0 %v2167, 123
    %v2268 = vpop.permute.xlu0 %2267
    %2269 = vrot.lane.b32.xlu0 %v2172, 123
    %v2270 = vpop.permute.xlu0 %2269
    %2271 = vrot.lane.b32.xlu0 %v2177, 123
    %v2272 = vpop.permute.xlu0 %2271
    %2273 = vrot.lane.b32.xlu0 %v2182, 123
    %v2274 = vpop.permute.xlu0 %2273
    %2275 = vrot.lane.b32.xlu0 %v2187, 123
    %v2276 = vpop.permute.xlu0 %2275
    %2277 = vrot.lane.b32.xlu0 %v2192, 123
    %v2278 = vpop.permute.xlu0 %2277
    %2279 = vrot.lane.b32.xlu0 %v2197, 123
    %v2280 = vpop.permute.xlu0 %2279
    %v2308 = vmax.f32 %v2067, %v2228
    %v2309 = vmax.f32 %v2072, %v2230
    %v2310 = vmax.f32 %v2077, %v2232
    %v2311 = vmax.f32 %v2082, %v2234
    %v2312 = vmax.f32 %v2087, %v2236
    %v2313 = vmax.f32 %v2092, %v2238
    %v2314 = vmax.f32 %v2097, %v2240
    %v2315 = vmax.f32 %v2102, %v2242
    %v2316 = vmax.f32 %v2107, %v2244
    %v2317 = vmax.f32 %v2112, %v2246
    %v2318 = vmax.f32 %v2117, %v2248
    %v2319 = vmax.f32 %v2122, %v2250
    %v2320 = vmax.f32 %v2127, %v2252
    %v2321 = vmax.f32 %v2132, %v2254
    %v2322 = vmax.f32 %v2137, %v2256
    %v2323 = vmax.f32 %v2142, %v2258
    %v2324 = vmax.f32 %v2147, %v2260
    %v2325 = vmax.f32 %v2152, %v2262
    %v2326 = vmax.f32 %v2157, %v2264
    %v2327 = vmax.f32 %v2162, %v2266
    %v2328 = vmax.f32 %v2167, %v2268
    %v2329 = vmax.f32 %v2172, %v2270
    %v2330 = vmax.f32 %v2177, %v2272
    %v2331 = vmax.f32 %v2182, %v2274
    %v2332 = vmax.f32 %v2187, %v2276
    %v2333 = vmax.f32 %v2192, %v2278
    %v2334 = vmax.f32 %v2197, %v2280
    %2362 = vrot.lane.b32.xlu0 %v2308, 118
    %v2363 = vpop.permute.xlu0 %2362
    %2364 = vrot.lane.b32.xlu0 %v2309, 118
    %v2365 = vpop.permute.xlu0 %2364
    %2366 = vrot.lane.b32.xlu0 %v2310, 118
    %v2367 = vpop.permute.xlu0 %2366
    %2368 = vrot.lane.b32.xlu0 %v2311, 118
    %v2369 = vpop.permute.xlu0 %2368
    %2370 = vrot.lane.b32.xlu0 %v2312, 118
    %v2371 = vpop.permute.xlu0 %2370
    %2372 = vrot.lane.b32.xlu0 %v2313, 118
    %v2373 = vpop.permute.xlu0 %2372
    %2374 = vrot.lane.b32.xlu0 %v2314, 118
    %v2375 = vpop.permute.xlu0 %2374
    %2376 = vrot.lane.b32.xlu0 %v2315, 118
    %v2377 = vpop.permute.xlu0 %2376
    %2378 = vrot.lane.b32.xlu0 %v2316, 118
    %v2379 = vpop.permute.xlu0 %2378
    %2380 = vrot.lane.b32.xlu0 %v2317, 118
    %v2381 = vpop.permute.xlu0 %2380
    %2382 = vrot.lane.b32.xlu0 %v2318, 118
    %v2383 = vpop.permute.xlu0 %2382
    %2384 = vrot.lane.b32.xlu0 %v2319, 118
    %v2385 = vpop.permute.xlu0 %2384
    %2386 = vrot.lane.b32.xlu0 %v2320, 118
    %v2387 = vpop.permute.xlu0 %2386
    %2388 = vrot.lane.b32.xlu0 %v2321, 118
    %v2389 = vpop.permute.xlu0 %2388
    %2390 = vrot.lane.b32.xlu0 %v2322, 118
    %v2391 = vpop.permute.xlu0 %2390
    %2392 = vrot.lane.b32.xlu0 %v2323, 118
    %v2393 = vpop.permute.xlu0 %2392
    %2394 = vrot.lane.b32.xlu0 %v2324, 118
    %v2395 = vpop.permute.xlu0 %2394
    %2396 = vrot.lane.b32.xlu0 %v2325, 118
    %v2397 = vpop.permute.xlu0 %2396
    %2398 = vrot.lane.b32.xlu0 %v2326, 118
    %v2399 = vpop.permute.xlu0 %2398
    %2400 = vrot.lane.b32.xlu0 %v2327, 118
    %v2401 = vpop.permute.xlu0 %2400
    %2402 = vrot.lane.b32.xlu0 %v2328, 118
    %v2403 = vpop.permute.xlu0 %2402
    %2404 = vrot.lane.b32.xlu0 %v2329, 118
    %v2405 = vpop.permute.xlu0 %2404
    %2406 = vrot.lane.b32.xlu0 %v2330, 118
    %v2407 = vpop.permute.xlu0 %2406
    %2408 = vrot.lane.b32.xlu0 %v2331, 118
    %v2409 = vpop.permute.xlu0 %2408
    %2410 = vrot.lane.b32.xlu0 %v2332, 118
    %v2411 = vpop.permute.xlu0 %2410
    %2412 = vrot.lane.b32.xlu0 %v2333, 118
    %v2413 = vpop.permute.xlu0 %2412
    %2414 = vrot.lane.b32.xlu0 %v2334, 118
    %v2415 = vpop.permute.xlu0 %2414
    %v2443 = vmax.f32 %v2308, %v2363
    %v2444 = vmax.f32 %v2309, %v2365
    %v2445 = vmax.f32 %v2310, %v2367
    %v2446 = vmax.f32 %v2311, %v2369
    %v2447 = vmax.f32 %v2312, %v2371
    %v2448 = vmax.f32 %v2313, %v2373
    %v2449 = vmax.f32 %v2314, %v2375
    %v2450 = vmax.f32 %v2315, %v2377
    %v2451 = vmax.f32 %v2316, %v2379
    %v2452 = vmax.f32 %v2317, %v2381
    %v2453 = vmax.f32 %v2318, %v2383
    %v2454 = vmax.f32 %v2319, %v2385
    %v2455 = vmax.f32 %v2320, %v2387
    %v2456 = vmax.f32 %v2321, %v2389
    %v2457 = vmax.f32 %v2322, %v2391
    %v2458 = vmax.f32 %v2323, %v2393
    %v2459 = vmax.f32 %v2324, %v2395
    %v2460 = vmax.f32 %v2325, %v2397
    %v2461 = vmax.f32 %v2326, %v2399
    %v2462 = vmax.f32 %v2327, %v2401
    %v2463 = vmax.f32 %v2328, %v2403
    %v2464 = vmax.f32 %v2329, %v2405
    %v2465 = vmax.f32 %v2330, %v2407
    %v2466 = vmax.f32 %v2331, %v2409
    %v2467 = vmax.f32 %v2332, %v2411
    %v2468 = vmax.f32 %v2333, %v2413
    %v2469 = vmax.f32 %v2334, %v2415
    %v2470 = vadd.f32 %v2443, %v629
    %v2471 = vadd.f32 %v2444, %v629
    %v2472 = vadd.f32 %v2445, %v629
    %v2473 = vadd.f32 %v2446, %v629
    %v2474 = vadd.f32 %v2447, %v629
    %v2475 = vadd.f32 %v2448, %v629
    %v2476 = vadd.f32 %v2449, %v629
    %v2477 = vadd.f32 %v2450, %v629
    %v2478 = vadd.f32 %v2451, %v629
    %v2479 = vadd.f32 %v2452, %v629
    %v2480 = vadd.f32 %v2453, %v629
    %v2481 = vadd.f32 %v2454, %v629
    %v2482 = vadd.f32 %v2455, %v629
    %v2483 = vadd.f32 %v2456, %v629
    %v2484 = vadd.f32 %v2457, %v629
    %v2485 = vadd.f32 %v2458, %v629
    %v2486 = vadd.f32 %v2459, %v629
    %v2487 = vadd.f32 %v2460, %v629
    %v2488 = vadd.f32 %v2461, %v629
    %v2489 = vadd.f32 %v2462, %v629
    %v2490 = vadd.f32 %v2463, %v629
    %v2491 = vadd.f32 %v2464, %v629
    %v2492 = vadd.f32 %v2465, %v629
    %v2493 = vadd.f32 %v2466, %v629
    %v2494 = vadd.f32 %v2467, %v629
    %v2495 = vadd.f32 %v2468, %v629
    %v2496 = vadd.f32 %v2469, %v629
    %v2497 = vmax.f32 %v2470, 0.0
    %v2498 = vmax.f32 %v2471, 0.0
    %v2499 = vmax.f32 %v2472, 0.0
    %v2500 = vmax.f32 %v2473, 0.0
    %v2501 = vmax.f32 %v2474, 0.0
    %v2502 = vmax.f32 %v2475, 0.0
    %v2503 = vmax.f32 %v2476, 0.0
    %v2504 = vmax.f32 %v2477, 0.0
    %v2505 = vmax.f32 %v2478, 0.0
    %v2506 = vmax.f32 %v2479, 0.0
    %v2507 = vmax.f32 %v2480, 0.0
    %v2508 = vmax.f32 %v2481, 0.0
    %v2509 = vmax.f32 %v2482, 0.0
    %v2510 = vmax.f32 %v2483, 0.0
    %v2511 = vmax.f32 %v2484, 0.0
    %v2512 = vmax.f32 %v2485, 0.0
    %v2513 = vmax.f32 %v2486, 0.0
    %v2514 = vmax.f32 %v2487, 0.0
    %v2515 = vmax.f32 %v2488, 0.0
    %v2516 = vmax.f32 %v2489, 0.0
    %v2517 = vmax.f32 %v2490, 0.0
    %v2518 = vmax.f32 %v2491, 0.0
    %v2519 = vmax.f32 %v2492, 0.0
    %v2520 = vmax.f32 %v2493, 0.0
    %v2521 = vmax.f32 %v2494, 0.0
    %v2522 = vmax.f32 %v2495, 0.0
    %v2523 = vmax.f32 %v2496, 0.0
    %s2524 = scalar_lea.vmem %s3, 16
    %v2525 = vld [vmem:[%s2524] sm:$0x1f]
    %v2527 = vsel %vm1321, %v2497, 0
    %v2530 = vsel %vm1321, %v2498, 0
    %v2533 = vsel %vm1321, %v2499, 0
    %v2536 = vsel %vm1321, %v2500, 0
    %v2539 = vsel %vm1321, %v2501, 0
    %v2542 = vsel %vm1321, %v2502, 0
    %v2545 = vsel %vm1321, %v2503, 0
    %v2548 = vsel %vm1321, %v2504, 0
    %v2551 = vsel %vm1321, %v2505, 0
    %v2554 = vsel %vm1321, %v2506, 0
    %v2557 = vsel %vm1321, %v2507, 0
    %v2560 = vsel %vm1321, %v2508, 0
    %v2563 = vsel %vm1321, %v2509, 0
    %v2566 = vsel %vm1321, %v2510, 0
    %v2569 = vsel %vm1321, %v2511, 0
    %v2572 = vsel %vm1321, %v2512, 0
    %v2575 = vsel %vm1321, %v2513, 0
    %v2578 = vsel %vm1321, %v2514, 0
    %v2581 = vsel %vm1321, %v2515, 0
    %v2584 = vsel %vm1321, %v2516, 0
    %v2587 = vsel %vm1321, %v2517, 0
    %v2590 = vsel %vm1321, %v2518, 0
    %v2593 = vsel %vm1321, %v2519, 0
    %v2596 = vsel %vm1321, %v2520, 0
    %v2599 = vsel %vm1321, %v2521, 0
    %v2602 = vsel %vm1321, %v2522, 0
    %v2605 = vsel %vm1321, %v2523, 0
    %v2608 = vsel %vm1403, %v2525, 0
    %2610 = vmatprep.subr.mxu0 0.0
    %2611 = vmatpush1.msra.mxu0 %v2608
    %2612 = vmatprep.subr.mxu0 0.0
    %2613 = vmatpush1.msra.mxu0 0.0
    %2614 = vmatprep.subr.mxu0 0.0
    %2615 = vmatpush1.msra.mxu0 0.0
    %2616 = vmatprep.subr.mxu0 0.0
    %2617 = vmatpush1.msra.mxu0 0.0
    %2618 = vmatprep.subr.mxu0 0.0
    %2619 = vmatpush1.msra.mxu0 0.0
    %2620 = vmatprep.subr.mxu0 0.0
    %2621 = vmatpush1.msra.mxu0 0.0
    %2622 = vmatprep.subr.mxu0 0.0
    %2623 = vmatpush1.msra.mxu0 0.0
    %2624 = vmatprep.subr.mxu0 0.0
    %2625 = vmatpush1.msra.mxu0 0.0
    %2626 = vmatprep.subr.mxu0 0.0
    %2627 = vmatpush1.msra.mxu0 0.0
    %2628 = vmatprep.subr.mxu0 0.0
    %2629 = vmatpush1.msra.mxu0 0.0
    %2630 = vmatprep.subr.mxu0 0.0
    %2631 = vmatpush1.msra.mxu0 0.0
    %2632 = vmatprep.subr.mxu0 0.0
    %2633 = vmatpush1.msra.mxu0 0.0
    %2634 = vmatprep.subr.mxu0 0.0
    %2635 = vmatpush1.msra.mxu0 0.0
    %2636 = vmatprep.subr.mxu0 0.0
    %2637 = vmatpush1.msra.mxu0 0.0
    %2638 = vmatprep.subr.mxu0 0.0
    %2639 = vmatpush1.msra.mxu0 0.0
    %2640 = vmatprep.subr.mxu0 0.0
    %2641 = vmatpush1.msra.mxu0 0.0
    %2642 = vmatprep.subr.mxu0 0.0
    %2643 = vmatpush1.msra.mxu0 0.0
    %2644 = vmatprep.subr.mxu0 0.0
    %2645 = vmatpush1.msra.mxu0 0.0
    %2646 = vmatprep.subr.mxu0 0.0
    %2647 = vmatpush1.msra.mxu0 0.0
    %2648 = vmatprep.subr.mxu0 0.0
    %2649 = vmatpush1.msra.mxu0 0.0
    %2650 = vmatprep.subr.mxu0 0.0
    %2651 = vmatpush1.msra.mxu0 0.0
    %2652 = vmatprep.subr.mxu0 0.0
    %2653 = vmatpush1.msra.mxu0 0.0
    %2654 = vmatprep.subr.mxu0 0.0
    %2655 = vmatpush1.msra.mxu0 0.0
    %2656 = vmatprep.subr.mxu0 0.0
    %2657 = vmatpush1.msra.mxu0 0.0
    %2658 = vmatprep.subr.mxu0 0.0
    %2659 = vmatpush1.msra.mxu0 0.0
    %2660 = vmatprep.subr.mxu0 0.0
    %2661 = vmatpush1.msra.mxu0 0.0
    %2662 = vmatprep.subr.mxu0 0.0
    %2663 = vmatpush1.msra.mxu0 0.0
    %2664 = vmatprep.subr.mxu0 0.0
    %2665 = vmatpush1.msra.mxu0 0.0
    %2666 = vmatprep.subr.mxu0 0.0
    %2667 = vmatpush1.msra.mxu0 0.0
    %2668 = vmatprep.subr.mxu0 0.0
    %2669 = vmatpush1.msra.mxu0 0.0
    %2670 = vmatprep.subr.mxu0 0.0
    %2671 = vmatpush1.msra.mxu0 0.0
    %2672 = vmatprep.subr.mxu0 0.0
    %2673 = vmatpush1.msra.mxu0 0.0
    %2674 = vmatprep.mubr.f32.mxu0 0.0
    %2675 = vmatmul.mubr.f32.gmra.mrb[0].mxu0 %v2527
    %v2676 = vpop.f32.mrb[0].mxu0
    %v2677 = vadd.f32 0.0, %v2676
    %v2678 = vpop.f32.mrb[0].mxu0
    %2679 = vmatprep.mubr.f32.mxu0 0.0
    %2680 = vmatmul.mubr.f32.gmra.mrb[0].mxu0 %v2530
    %v2681 = vpop.f32.mrb[0].mxu0
    %v2682 = vadd.f32 0.0, %v2681
    %v2683 = vpop.f32.mrb[0].mxu0
    %2684 = vmatprep.mubr.f32.mxu0 0.0
    %2685 = vmatmul.mubr.f32.gmra.mrb[0].mxu0 %v2533
    %v2686 = vpop.f32.mrb[0].mxu0
    %v2687 = vadd.f32 0.0, %v2686
    %v2688 = vpop.f32.mrb[0].mxu0
    %2689 = vmatprep.mubr.f32.mxu0 0.0
    %2690 = vmatmul.mubr.f32.gmra.mrb[0].mxu0 %v2536
    %v2691 = vpop.f32.mrb[0].mxu0
    %v2692 = vadd.f32 0.0, %v2691
    %v2693 = vpop.f32.mrb[0].mxu0
    %2694 = vmatprep.mubr.f32.mxu0 0.0
    %2695 = vmatmul.mubr.f32.gmra.mrb[0].mxu0 %v2539
    %v2696 = vpop.f32.mrb[0].mxu0
    %v2697 = vadd.f32 0.0, %v2696
    %v2698 = vpop.f32.mrb[0].mxu0
    %2699 = vmatprep.mubr.f32.mxu0 0.0
    %2700 = vmatmul.mubr.f32.gmra.mrb[0].mxu0 %v2542
    %v2701 = vpop.f32.mrb[0].mxu0
    %v2702 = vadd.f32 0.0, %v2701
    %v2703 = vpop.f32.mrb[0].mxu0
    %2704 = vmatprep.mubr.f32.mxu0 0.0
    %2705 = vmatmul.mubr.f32.gmra.mrb[0].mxu0 %v2545
    %v2706 = vpop.f32.mrb[0].mxu0
    %v2707 = vadd.f32 0.0, %v2706
    %v2708 = vpop.f32.mrb[0].mxu0
    %2709 = vmatprep.mubr.f32.mxu0 0.0
    %2710 = vmatmul.mubr.f32.gmra.mrb[0].mxu0 %v2548
    %v2711 = vpop.f32.mrb[0].mxu0
    %v2712 = vadd.f32 0.0, %v2711
    %v2713 = vpop.f32.mrb[0].mxu0
    %2714 = vmatprep.mubr.f32.mxu0 0.0
    %2715 = vmatmul.mubr.f32.gmra.mrb[0].mxu0 %v2551
    %v2716 = vpop.f32.mrb[0].mxu0
    %v2717 = vadd.f32 0.0, %v2716
    %v2718 = vpop.f32.mrb[0].mxu0
    %2719 = vmatprep.mubr.f32.mxu0 0.0
    %2720 = vmatmul.mubr.f32.gmra.mrb[0].mxu0 %v2554
    %v2721 = vpop.f32.mrb[0].mxu0
    %v2722 = vadd.f32 0.0, %v2721
    %v2723 = vpop.f32.mrb[0].mxu0
    %2724 = vmatprep.mubr.f32.mxu0 0.0
    %2725 = vmatmul.mubr.f32.gmra.mrb[0].mxu0 %v2557
    %v2726 = vpop.f32.mrb[0].mxu0
    %v2727 = vadd.f32 0.0, %v2726
    %v2728 = vpop.f32.mrb[0].mxu0
    %2729 = vmatprep.mubr.f32.mxu0 0.0
    %2730 = vmatmul.mubr.f32.gmra.mrb[0].mxu0 %v2560
    %v2731 = vpop.f32.mrb[0].mxu0
    %v2732 = vadd.f32 0.0, %v2731
    %v2733 = vpop.f32.mrb[0].mxu0
    %2734 = vmatprep.mubr.f32.mxu0 0.0
    %2735 = vmatmul.mubr.f32.gmra.mrb[0].mxu0 %v2563
    %v2736 = vpop.f32.mrb[0].mxu0
    %v2737 = vadd.f32 0.0, %v2736
    %v2738 = vpop.f32.mrb[0].mxu0
    %2739 = vmatprep.mubr.f32.mxu0 0.0
    %2740 = vmatmul.mubr.f32.gmra.mrb[0].mxu0 %v2566
    %v2741 = vpop.f32.mrb[0].mxu0
    %v2742 = vadd.f32 0.0, %v2741
    %v2743 = vpop.f32.mrb[0].mxu0
    %2744 = vmatprep.mubr.f32.mxu0 0.0
    %2745 = vmatmul.mubr.f32.gmra.mrb[0].mxu0 %v2569
    %v2746 = vpop.f32.mrb[0].mxu0
    %v2747 = vadd.f32 0.0, %v2746
    %v2748 = vpop.f32.mrb[0].mxu0
    %2749 = vmatprep.mubr.f32.mxu0 0.0
    %2750 = vmatmul.mubr.f32.gmra.mrb[0].mxu0 %v2572
    %v2751 = vpop.f32.mrb[0].mxu0
    %v2752 = vadd.f32 0.0, %v2751
    %v2753 = vpop.f32.mrb[0].mxu0
    %2754 = vmatprep.mubr.f32.mxu0 0.0
    %2755 = vmatmul.mubr.f32.gmra.mrb[0].mxu0 %v2575
    %v2756 = vpop.f32.mrb[0].mxu0
    %v2757 = vadd.f32 0.0, %v2756
    %v2758 = vpop.f32.mrb[0].mxu0
    %2759 = vmatprep.mubr.f32.mxu0 0.0
    %2760 = vmatmul.mubr.f32.gmra.mrb[0].mxu0 %v2578
    %v2761 = vpop.f32.mrb[0].mxu0
    %v2762 = vadd.f32 0.0, %v2761
    %v2763 = vpop.f32.mrb[0].mxu0
    %2764 = vmatprep.mubr.f32.mxu0 0.0
    %2765 = vmatmul.mubr.f32.gmra.mrb[0].mxu0 %v2581
    %v2766 = vpop.f32.mrb[0].mxu0
    %v2767 = vadd.f32 0.0, %v2766
    %v2768 = vpop.f32.mrb[0].mxu0
    %2769 = vmatprep.mubr.f32.mxu0 0.0
    %2770 = vmatmul.mubr.f32.gmra.mrb[0].mxu0 %v2584
    %v2771 = vpop.f32.mrb[0].mxu0
    %v2772 = vadd.f32 0.0, %v2771
    %v2773 = vpop.f32.mrb[0].mxu0
    %2774 = vmatprep.mubr.f32.mxu0 0.0
    %2775 = vmatmul.mubr.f32.gmra.mrb[0].mxu0 %v2587
    %v2776 = vpop.f32.mrb[0].mxu0
    %v2777 = vadd.f32 0.0, %v2776
    %v2778 = vpop.f32.mrb[0].mxu0
    %2779 = vmatprep.mubr.f32.mxu0 0.0
    %2780 = vmatmul.mubr.f32.gmra.mrb[0].mxu0 %v2590
    %v2781 = vpop.f32.mrb[0].mxu0
    %v2782 = vadd.f32 0.0, %v2781
    %v2783 = vpop.f32.mrb[0].mxu0
    %2784 = vmatprep.mubr.f32.mxu0 0.0
    %2785 = vmatmul.mubr.f32.gmra.mrb[0].mxu0 %v2593
    %v2786 = vpop.f32.mrb[0].mxu0
    %v2787 = vadd.f32 0.0, %v2786
    %v2788 = vpop.f32.mrb[0].mxu0
    %2789 = vmatprep.mubr.f32.mxu0 0.0
    %2790 = vmatmul.mubr.f32.gmra.mrb[0].mxu0 %v2596
    %v2791 = vpop.f32.mrb[0].mxu0
    %v2792 = vadd.f32 0.0, %v2791
    %v2793 = vpop.f32.mrb[0].mxu0
    %2794 = vmatprep.mubr.f32.mxu0 0.0
    %2795 = vmatmul.mubr.f32.gmra.mrb[0].mxu0 %v2599
    %v2796 = vpop.f32.mrb[0].mxu0
    %v2797 = vadd.f32 0.0, %v2796
    %v2798 = vpop.f32.mrb[0].mxu0
    %2799 = vmatprep.mubr.f32.mxu0 0.0
    %2800 = vmatmul.mubr.f32.gmra.mrb[0].mxu0 %v2602
    %v2801 = vpop.f32.mrb[0].mxu0
    %v2802 = vadd.f32 0.0, %v2801
    %v2803 = vpop.f32.mrb[0].mxu0
    %2804 = vmatprep.mubr.f32.mxu0 0.0
    %2805 = vmatmul.mubr.f32.gmra.mrb[0].mxu0 %v2605
    %v2806 = vpop.f32.mrb[0].mxu0
    %v2807 = vadd.f32 0.0, %v2806
    %v2808 = vpop.f32.mrb[0].mxu0
    %2809 = vdwg.mxu0
    %v2810 = vadd.f32 %v1758, %v2677
    %v2811 = vadd.f32 %v1763, %v2682
    %v2812 = vadd.f32 %v1768, %v2687
    %v2813 = vadd.f32 %v1773, %v2692
    %v2814 = vadd.f32 %v1778, %v2697
    %v2815 = vadd.f32 %v1783, %v2702
    %v2816 = vadd.f32 %v1788, %v2707
    %v2817 = vadd.f32 %v1793, %v2712
    %v2818 = vadd.f32 %v1798, %v2717
    %v2819 = vadd.f32 %v1803, %v2722
    %v2820 = vadd.f32 %v1808, %v2727
    %v2821 = vadd.f32 %v1813, %v2732
    %v2822 = vadd.f32 %v1818, %v2737
    %v2823 = vadd.f32 %v1823, %v2742
    %v2824 = vadd.f32 %v1828, %v2747
    %v2825 = vadd.f32 %v1833, %v2752
    %v2826 = vadd.f32 %v1838, %v2757
    %v2827 = vadd.f32 %v1843, %v2762
    %v2828 = vadd.f32 %v1848, %v2767
    %v2829 = vadd.f32 %v1853, %v2772
    %v2830 = vadd.f32 %v1858, %v2777
    %v2831 = vadd.f32 %v1863, %v2782
    %v2832 = vadd.f32 %v1868, %v2787
    %v2833 = vadd.f32 %v1873, %v2792
    %v2834 = vadd.f32 %v1878, %v2797
    %v2835 = vadd.f32 %v1883, %v2802
    %v2836 = vadd.f32 %v1888, %v2807
    %s2837 = scalar_lea.vmem %s0, 648
    %v2838 = vld [vmem:[%s2837] sm:$0xff]
    %v2839 = vld [vmem:[%s2837 + $0x8] sm:$0xff]
    %v2840 = vld [vmem:[%s2837 + $0x10] sm:$0xff]
    %v2841 = vld [vmem:[%s2837 + $0x18] sm:$0xff]
    %v2842 = vld [vmem:[%s2837 + $0x20] sm:$0xff]
    %v2843 = vld [vmem:[%s2837 + $0x28] sm:$0xff]
    %v2844 = vld [vmem:[%s2837 + $0x30] sm:$0xff]
    %v2845 = vld [vmem:[%s2837 + $0x38] sm:$0xff]
    %v2846 = vld [vmem:[%s2837 + $0x40] sm:$0xff]
    %v2847 = vld [vmem:[%s2837 + $0x48] sm:$0xff]
    %v2848 = vld [vmem:[%s2837 + $0x50] sm:$0xff]
    %v2849 = vld [vmem:[%s2837 + $0x58] sm:$0xff]
    %v2850 = vld [vmem:[%s2837 + $0x60] sm:$0xff]
    %v2851 = vld [vmem:[%s2837 + $0x68] sm:$0xff]
    %v2852 = vld [vmem:[%s2837 + $0x70] sm:$0xff]
    %v2853 = vld [vmem:[%s2837 + $0x78] sm:$0xff]
    %v2854 = vld [vmem:[%s2837 + $0x80] sm:$0xff]
    %v2855 = vld [vmem:[%s2837 + $0x88] sm:$0xff]
    %v2856 = vld [vmem:[%s2837 + $0x90] sm:$0xff]
    %v2857 = vld [vmem:[%s2837 + $0x98] sm:$0xff]
    %v2858 = vld [vmem:[%s2837 + $0xa0] sm:$0xff]
    %v2859 = vld [vmem:[%s2837 + $0xa8] sm:$0xff]
    %v2860 = vld [vmem:[%s2837 + $0xb0] sm:$0xff]
    %v2861 = vld [vmem:[%s2837 + $0xb8] sm:$0xff]
    %v2862 = vld [vmem:[%s2837 + $0xc0] sm:$0xff]
    %v2863 = vld [vmem:[%s2837 + $0xc8] sm:$0xff]
    %v2864 = vld [vmem:[%s2837 + $0xd0] sm:$0x3]
    %v2866 = vsel %vm69, %v2838, 0
    %v2869 = vsel %vm69, %v2839, 0
    %v2872 = vsel %vm69, %v2840, 0
    %v2875 = vsel %vm69, %v2841, 0
    %v2878 = vsel %vm69, %v2842, 0
    %v2881 = vsel %vm69, %v2843, 0
    %v2884 = vsel %vm69, %v2844, 0
    %v2887 = vsel %vm69, %v2845, 0
    %v2890 = vsel %vm69, %v2846, 0
    %v2893 = vsel %vm69, %v2847, 0
    %v2896 = vsel %vm69, %v2848, 0
    %v2899 = vsel %vm69, %v2849, 0
    %v2902 = vsel %vm69, %v2850, 0
    %v2905 = vsel %vm69, %v2851, 0
    %v2908 = vsel %vm69, %v2852, 0
    %v2911 = vsel %vm69, %v2853, 0
    %v2914 = vsel %vm69, %v2854, 0
    %v2917 = vsel %vm69, %v2855, 0
    %v2920 = vsel %vm69, %v2856, 0
    %v2923 = vsel %vm69, %v2857, 0
    %v2926 = vsel %vm69, %v2858, 0
    %v2929 = vsel %vm69, %v2859, 0
    %v2932 = vsel %vm69, %v2860, 0
    %v2935 = vsel %vm69, %v2861, 0
    %v2938 = vsel %vm69, %v2862, 0
    %v2941 = vsel %vm69, %v2863, 0
    %v2944 = vsel %vm69, %v2864, 0
    %2946 = vmatprep.subr.mxu0 0.0
    %2947 = vmatpush1.msra.mxu0 %v67
    %2948 = vmatprep.subr.mxu0 0.0
    %2949 = vmatpush1.msra.mxu0 %v153
    %2950 = vmatprep.subr.mxu0 0.0
    %2951 = vmatpush1.msra.mxu0 0.0
    %2952 = vmatprep.subr.mxu0 0.0
    %2953 = vmatpush1.msra.mxu0 0.0
    %2954 = vmatprep.subr.mxu0 0.0
    %2955 = vmatpush1.msra.mxu0 0.0
    %2956 = vmatprep.subr.mxu0 0.0
    %2957 = vmatpush1.msra.mxu0 0.0
    %2958 = vmatprep.subr.mxu0 0.0
    %2959 = vmatpush1.msra.mxu0 0.0
    %2960 = vmatprep.subr.mxu0 0.0
    %2961 = vmatpush1.msra.mxu0 0.0
    %2962 = vmatprep.subr.mxu0 0.0
    %2963 = vmatpush1.msra.mxu0 0.0
    %2964 = vmatprep.subr.mxu0 0.0
    %2965 = vmatpush1.msra.mxu0 0.0
    %2966 = vmatprep.subr.mxu0 0.0
    %2967 = vmatpush1.msra.mxu0 0.0
    %2968 = vmatprep.subr.mxu0 0.0
    %2969 = vmatpush1.msra.mxu0 0.0
    %2970 = vmatprep.subr.mxu0 0.0
    %2971 = vmatpush1.msra.mxu0 0.0
    %2972 = vmatprep.subr.mxu0 0.0
    %2973 = vmatpush1.msra.mxu0 0.0
    %2974 = vmatprep.subr.mxu0 0.0
    %2975 = vmatpush1.msra.mxu0 0.0
    %2976 = vmatprep.subr.mxu0 0.0
    %2977 = vmatpush1.msra.mxu0 0.0
    %2978 = vmatprep.subr.mxu0 0.0
    %2979 = vmatpush1.msra.mxu0 0.0
    %2980 = vmatprep.subr.mxu0 0.0
    %2981 = vmatpush1.msra.mxu0 0.0
    %2982 = vmatprep.subr.mxu0 0.0
    %2983 = vmatpush1.msra.mxu0 0.0
    %2984 = vmatprep.subr.mxu0 0.0
    %2985 = vmatpush1.msra.mxu0 0.0
    %2986 = vmatprep.subr.mxu0 0.0
    %2987 = vmatpush1.msra.mxu0 0.0
    %2988 = vmatprep.subr.mxu0 0.0
    %2989 = vmatpush1.msra.mxu0 0.0
    %2990 = vmatprep.subr.mxu0 0.0
    %2991 = vmatpush1.msra.mxu0 0.0
    %2992 = vmatprep.subr.mxu0 0.0
    %2993 = vmatpush1.msra.mxu0 0.0
    %2994 = vmatprep.subr.mxu0 0.0
    %2995 = vmatpush1.msra.mxu0 0.0
    %2996 = vmatprep.subr.mxu0 0.0
    %2997 = vmatpush1.msra.mxu0 0.0
    %2998 = vmatprep.subr.mxu0 0.0
    %2999 = vmatpush1.msra.mxu0 0.0
    %3000 = vmatprep.subr.mxu0 0.0
    %3001 = vmatpush1.msra.mxu0 0.0
    %3002 = vmatprep.subr.mxu0 0.0
    %3003 = vmatpush1.msra.mxu0 0.0
    %3004 = vmatprep.subr.mxu0 0.0
    %3005 = vmatpush1.msra.mxu0 0.0
    %3006 = vmatprep.subr.mxu0 0.0
    %3007 = vmatpush1.msra.mxu0 0.0
    %3008 = vmatprep.subr.mxu0 0.0
    %3009 = vmatpush1.msra.mxu0 0.0
    %3010 = vmatprep.mubr.f32.mxu0 0.0
    %3011 = vmatmul.mubr.f32.gmra.mrb[0].mxu0 %v2866
    %v3012 = vpop.f32.mrb[0].mxu0
    %v3013 = vadd.f32 0.0, %v3012
    %v3014 = vpop.f32.mrb[0].mxu0
    %3015 = vmatprep.mubr.f32.mxu0 0.0
    %3016 = vmatmul.mubr.f32.gmra.mrb[0].mxu0 %v2869
    %v3017 = vpop.f32.mrb[0].mxu0
    %v3018 = vadd.f32 0.0, %v3017
    %v3019 = vpop.f32.mrb[0].mxu0
    %3020 = vmatprep.mubr.f32.mxu0 0.0
    %3021 = vmatmul.mubr.f32.gmra.mrb[0].mxu0 %v2872
    %v3022 = vpop.f32.mrb[0].mxu0
    %v3023 = vadd.f32 0.0, %v3022
    %v3024 = vpop.f32.mrb[0].mxu0
    %3025 = vmatprep.mubr.f32.mxu0 0.0
    %3026 = vmatmul.mubr.f32.gmra.mrb[0].mxu0 %v2875
    %v3027 = vpop.f32.mrb[0].mxu0
    %v3028 = vadd.f32 0.0, %v3027
    %v3029 = vpop.f32.mrb[0].mxu0
    %3030 = vmatprep.mubr.f32.mxu0 0.0
    %3031 = vmatmul.mubr.f32.gmra.mrb[0].mxu0 %v2878
    %v3032 = vpop.f32.mrb[0].mxu0
    %v3033 = vadd.f32 0.0, %v3032
    %v3034 = vpop.f32.mrb[0].mxu0
    %3035 = vmatprep.mubr.f32.mxu0 0.0
    %3036 = vmatmul.mubr.f32.gmra.mrb[0].mxu0 %v2881
    %v3037 = vpop.f32.mrb[0].mxu0
    %v3038 = vadd.f32 0.0, %v3037
    %v3039 = vpop.f32.mrb[0].mxu0
    %3040 = vmatprep.mubr.f32.mxu0 0.0
    %3041 = vmatmul.mubr.f32.gmra.mrb[0].mxu0 %v2884
    %v3042 = vpop.f32.mrb[0].mxu0
    %v3043 = vadd.f32 0.0, %v3042
    %v3044 = vpop.f32.mrb[0].mxu0
    %3045 = vmatprep.mubr.f32.mxu0 0.0
    %3046 = vmatmul.mubr.f32.gmra.mrb[0].mxu0 %v2887
    %v3047 = vpop.f32.mrb[0].mxu0
    %v3048 = vadd.f32 0.0, %v3047
    %v3049 = vpop.f32.mrb[0].mxu0
    %3050 = vmatprep.mubr.f32.mxu0 0.0
    %3051 = vmatmul.mubr.f32.gmra.mrb[0].mxu0 %v2890
    %v3052 = vpop.f32.mrb[0].mxu0
    %v3053 = vadd.f32 0.0, %v3052
    %v3054 = vpop.f32.mrb[0].mxu0
    %3055 = vmatprep.mubr.f32.mxu0 0.0
    %3056 = vmatmul.mubr.f32.gmra.mrb[0].mxu0 %v2893
    %v3057 = vpop.f32.mrb[0].mxu0
    %v3058 = vadd.f32 0.0, %v3057
    %v3059 = vpop.f32.mrb[0].mxu0
    %3060 = vmatprep.mubr.f32.mxu0 0.0
    %3061 = vmatmul.mubr.f32.gmra.mrb[0].mxu0 %v2896
    %v3062 = vpop.f32.mrb[0].mxu0
    %v3063 = vadd.f32 0.0, %v3062
    %v3064 = vpop.f32.mrb[0].mxu0
    %3065 = vmatprep.mubr.f32.mxu0 0.0
    %3066 = vmatmul.mubr.f32.gmra.mrb[0].mxu0 %v2899
    %v3067 = vpop.f32.mrb[0].mxu0
    %v3068 = vadd.f32 0.0, %v3067
    %v3069 = vpop.f32.mrb[0].mxu0
    %3070 = vmatprep.mubr.f32.mxu0 0.0
    %3071 = vmatmul.mubr.f32.gmra.mrb[0].mxu0 %v2902
    %v3072 = vpop.f32.mrb[0].mxu0
    %v3073 = vadd.f32 0.0, %v3072
    %v3074 = vpop.f32.mrb[0].mxu0
    %3075 = vmatprep.mubr.f32.mxu0 0.0
    %3076 = vmatmul.mubr.f32.gmra.mrb[0].mxu0 %v2905
    %v3077 = vpop.f32.mrb[0].mxu0
    %v3078 = vadd.f32 0.0, %v3077
    %v3079 = vpop.f32.mrb[0].mxu0
    %3080 = vmatprep.mubr.f32.mxu0 0.0
    %3081 = vmatmul.mubr.f32.gmra.mrb[0].mxu0 %v2908
    %v3082 = vpop.f32.mrb[0].mxu0
    %v3083 = vadd.f32 0.0, %v3082
    %v3084 = vpop.f32.mrb[0].mxu0
    %3085 = vmatprep.mubr.f32.mxu0 0.0
    %3086 = vmatmul.mubr.f32.gmra.mrb[0].mxu0 %v2911
    %v3087 = vpop.f32.mrb[0].mxu0
    %v3088 = vadd.f32 0.0, %v3087
    %v3089 = vpop.f32.mrb[0].mxu0
    %3090 = vmatprep.mubr.f32.mxu0 0.0
    %3091 = vmatmul.mubr.f32.gmra.mrb[0].mxu0 %v2914
    %v3092 = vpop.f32.mrb[0].mxu0
    %v3093 = vadd.f32 0.0, %v3092
    %v3094 = vpop.f32.mrb[0].mxu0
    %3095 = vmatprep.mubr.f32.mxu0 0.0
    %3096 = vmatmul.mubr.f32.gmra.mrb[0].mxu0 %v2917
    %v3097 = vpop.f32.mrb[0].mxu0
    %v3098 = vadd.f32 0.0, %v3097
    %v3099 = vpop.f32.mrb[0].mxu0
    %3100 = vmatprep.mubr.f32.mxu0 0.0
    %3101 = vmatmul.mubr.f32.gmra.mrb[0].mxu0 %v2920
    %v3102 = vpop.f32.mrb[0].mxu0
    %v3103 = vadd.f32 0.0, %v3102
    %v3104 = vpop.f32.mrb[0].mxu0
    %3105 = vmatprep.mubr.f32.mxu0 0.0
    %3106 = vmatmul.mubr.f32.gmra.mrb[0].mxu0 %v2923
    %v3107 = vpop.f32.mrb[0].mxu0
    %v3108 = vadd.f32 0.0, %v3107
    %v3109 = vpop.f32.mrb[0].mxu0
    %3110 = vmatprep.mubr.f32.mxu0 0.0
    %3111 = vmatmul.mubr.f32.gmra.mrb[0].mxu0 %v2926
    %v3112 = vpop.f32.mrb[0].mxu0
    %v3113 = vadd.f32 0.0, %v3112
    %v3114 = vpop.f32.mrb[0].mxu0
    %3115 = vmatprep.mubr.f32.mxu0 0.0
    %3116 = vmatmul.mubr.f32.gmra.mrb[0].mxu0 %v2929
    %v3117 = vpop.f32.mrb[0].mxu0
    %v3118 = vadd.f32 0.0, %v3117
    %v3119 = vpop.f32.mrb[0].mxu0
    %3120 = vmatprep.mubr.f32.mxu0 0.0
    %3121 = vmatmul.mubr.f32.gmra.mrb[0].mxu0 %v2932
    %v3122 = vpop.f32.mrb[0].mxu0
    %v3123 = vadd.f32 0.0, %v3122
    %v3124 = vpop.f32.mrb[0].mxu0
    %3125 = vmatprep.mubr.f32.mxu0 0.0
    %3126 = vmatmul.mubr.f32.gmra.mrb[0].mxu0 %v2935
    %v3127 = vpop.f32.mrb[0].mxu0
    %v3128 = vadd.f32 0.0, %v3127
    %v3129 = vpop.f32.mrb[0].mxu0
    %3130 = vmatprep.mubr.f32.mxu0 0.0
    %3131 = vmatmul.mubr.f32.gmra.mrb[0].mxu0 %v2938
    %v3132 = vpop.f32.mrb[0].mxu0
    %v3133 = vadd.f32 0.0, %v3132
    %v3134 = vpop.f32.mrb[0].mxu0
    %3135 = vmatprep.mubr.f32.mxu0 0.0
    %3136 = vmatmul.mubr.f32.gmra.mrb[0].mxu0 %v2941
    %v3137 = vpop.f32.mrb[0].mxu0
    %v3138 = vadd.f32 0.0, %v3137
    %v3139 = vpop.f32.mrb[0].mxu0
    %3140 = vmatprep.mubr.f32.mxu0 0.0
    %3141 = vmatmul.mubr.f32.gmra.mrb[0].mxu0 %v2944
    %v3142 = vpop.f32.mrb[0].mxu0
    %v3143 = vadd.f32 0.0, %v3142
    %v3144 = vpop.f32.mrb[0].mxu0
    %3145 = vdwg.mxu0
    %3173 = vrot.lane.b32.xlu0 %v3013, 123
    %v3174 = vpop.permute.xlu0 %3173
    %3175 = vrot.lane.b32.xlu0 %v3018, 123
    %v3176 = vpop.permute.xlu0 %3175
    %3177 = vrot.lane.b32.xlu0 %v3023, 123
    %v3178 = vpop.permute.xlu0 %3177
    %3179 = vrot.lane.b32.xlu0 %v3028, 123
    %v3180 = vpop.permute.xlu0 %3179
    %3181 = vrot.lane.b32.xlu0 %v3033, 123
    %v3182 = vpop.permute.xlu0 %3181
    %3183 = vrot.lane.b32.xlu0 %v3038, 123
    %v3184 = vpop.permute.xlu0 %3183
    %3185 = vrot.lane.b32.xlu0 %v3043, 123
    %v3186 = vpop.permute.xlu0 %3185
    %3187 = vrot.lane.b32.xlu0 %v3048, 123
    %v3188 = vpop.permute.xlu0 %3187
    %3189 = vrot.lane.b32.xlu0 %v3053, 123
    %v3190 = vpop.permute.xlu0 %3189
    %3191 = vrot.lane.b32.xlu0 %v3058, 123
    %v3192 = vpop.permute.xlu0 %3191
    %3193 = vrot.lane.b32.xlu0 %v3063, 123
    %v3194 = vpop.permute.xlu0 %3193
    %3195 = vrot.lane.b32.xlu0 %v3068, 123
    %v3196 = vpop.permute.xlu0 %3195
    %3197 = vrot.lane.b32.xlu0 %v3073, 123
    %v3198 = vpop.permute.xlu0 %3197
    %3199 = vrot.lane.b32.xlu0 %v3078, 123
    %v3200 = vpop.permute.xlu0 %3199
    %3201 = vrot.lane.b32.xlu0 %v3083, 123
    %v3202 = vpop.permute.xlu0 %3201
    %3203 = vrot.lane.b32.xlu0 %v3088, 123
    %v3204 = vpop.permute.xlu0 %3203
    %3205 = vrot.lane.b32.xlu0 %v3093, 123
    %v3206 = vpop.permute.xlu0 %3205
    %3207 = vrot.lane.b32.xlu0 %v3098, 123
    %v3208 = vpop.permute.xlu0 %3207
    %3209 = vrot.lane.b32.xlu0 %v3103, 123
    %v3210 = vpop.permute.xlu0 %3209
    %3211 = vrot.lane.b32.xlu0 %v3108, 123
    %v3212 = vpop.permute.xlu0 %3211
    %3213 = vrot.lane.b32.xlu0 %v3113, 123
    %v3214 = vpop.permute.xlu0 %3213
    %3215 = vrot.lane.b32.xlu0 %v3118, 123
    %v3216 = vpop.permute.xlu0 %3215
    %3217 = vrot.lane.b32.xlu0 %v3123, 123
    %v3218 = vpop.permute.xlu0 %3217
    %3219 = vrot.lane.b32.xlu0 %v3128, 123
    %v3220 = vpop.permute.xlu0 %3219
    %3221 = vrot.lane.b32.xlu0 %v3133, 123
    %v3222 = vpop.permute.xlu0 %3221
    %3223 = vrot.lane.b32.xlu0 %v3138, 123
    %v3224 = vpop.permute.xlu0 %3223
    %3225 = vrot.lane.b32.xlu0 %v3143, 123
    %v3226 = vpop.permute.xlu0 %3225
    %v3254 = vmax.f32 %v3013, %v3174
    %v3255 = vmax.f32 %v3018, %v3176
    %v3256 = vmax.f32 %v3023, %v3178
    %v3257 = vmax.f32 %v3028, %v3180
    %v3258 = vmax.f32 %v3033, %v3182
    %v3259 = vmax.f32 %v3038, %v3184
    %v3260 = vmax.f32 %v3043, %v3186
    %v3261 = vmax.f32 %v3048, %v3188
    %v3262 = vmax.f32 %v3053, %v3190
    %v3263 = vmax.f32 %v3058, %v3192
    %v3264 = vmax.f32 %v3063, %v3194
    %v3265 = vmax.f32 %v3068, %v3196
    %v3266 = vmax.f32 %v3073, %v3198
    %v3267 = vmax.f32 %v3078, %v3200
    %v3268 = vmax.f32 %v3083, %v3202
    %v3269 = vmax.f32 %v3088, %v3204
    %v3270 = vmax.f32 %v3093, %v3206
    %v3271 = vmax.f32 %v3098, %v3208
    %v3272 = vmax.f32 %v3103, %v3210
    %v3273 = vmax.f32 %v3108, %v3212
    %v3274 = vmax.f32 %v3113, %v3214
    %v3275 = vmax.f32 %v3118, %v3216
    %v3276 = vmax.f32 %v3123, %v3218
    %v3277 = vmax.f32 %v3128, %v3220
    %v3278 = vmax.f32 %v3133, %v3222
    %v3279 = vmax.f32 %v3138, %v3224
    %v3280 = vmax.f32 %v3143, %v3226
    %3308 = vrot.lane.b32.xlu0 %v3254, 118
    %v3309 = vpop.permute.xlu0 %3308
    %3310 = vrot.lane.b32.xlu0 %v3255, 118
    %v3311 = vpop.permute.xlu0 %3310
    %3312 = vrot.lane.b32.xlu0 %v3256, 118
    %v3313 = vpop.permute.xlu0 %3312
    %3314 = vrot.lane.b32.xlu0 %v3257, 118
    %v3315 = vpop.permute.xlu0 %3314
    %3316 = vrot.lane.b32.xlu0 %v3258, 118
    %v3317 = vpop.permute.xlu0 %3316
    %3318 = vrot.lane.b32.xlu0 %v3259, 118
    %v3319 = vpop.permute.xlu0 %3318
    %3320 = vrot.lane.b32.xlu0 %v3260, 118
    %v3321 = vpop.permute.xlu0 %3320
    %3322 = vrot.lane.b32.xlu0 %v3261, 118
    %v3323 = vpop.permute.xlu0 %3322
    %3324 = vrot.lane.b32.xlu0 %v3262, 118
    %v3325 = vpop.permute.xlu0 %3324
    %3326 = vrot.lane.b32.xlu0 %v3263, 118
    %v3327 = vpop.permute.xlu0 %3326
    %3328 = vrot.lane.b32.xlu0 %v3264, 118
    %v3329 = vpop.permute.xlu0 %3328
    %3330 = vrot.lane.b32.xlu0 %v3265, 118
    %v3331 = vpop.permute.xlu0 %3330
    %3332 = vrot.lane.b32.xlu0 %v3266, 118
    %v3333 = vpop.permute.xlu0 %3332
    %3334 = vrot.lane.b32.xlu0 %v3267, 118
    %v3335 = vpop.permute.xlu0 %3334
    %3336 = vrot.lane.b32.xlu0 %v3268, 118
    %v3337 = vpop.permute.xlu0 %3336
    %3338 = vrot.lane.b32.xlu0 %v3269, 118
    %v3339 = vpop.permute.xlu0 %3338
    %3340 = vrot.lane.b32.xlu0 %v3270, 118
    %v3341 = vpop.permute.xlu0 %3340
    %3342 = vrot.lane.b32.xlu0 %v3271, 118
    %v3343 = vpop.permute.xlu0 %3342
    %3344 = vrot.lane.b32.xlu0 %v3272, 118
    %v3345 = vpop.permute.xlu0 %3344
    %3346 = vrot.lane.b32.xlu0 %v3273, 118
    %v3347 = vpop.permute.xlu0 %3346
    %3348 = vrot.lane.b32.xlu0 %v3274, 118
    %v3349 = vpop.permute.xlu0 %3348
    %3350 = vrot.lane.b32.xlu0 %v3275, 118
    %v3351 = vpop.permute.xlu0 %3350
    %3352 = vrot.lane.b32.xlu0 %v3276, 118
    %v3353 = vpop.permute.xlu0 %3352
    %3354 = vrot.lane.b32.xlu0 %v3277, 118
    %v3355 = vpop.permute.xlu0 %3354
    %3356 = vrot.lane.b32.xlu0 %v3278, 118
    %v3357 = vpop.permute.xlu0 %3356
    %3358 = vrot.lane.b32.xlu0 %v3279, 118
    %v3359 = vpop.permute.xlu0 %3358
    %3360 = vrot.lane.b32.xlu0 %v3280, 118
    %v3361 = vpop.permute.xlu0 %3360
    %v3389 = vmax.f32 %v3254, %v3309
    %v3390 = vmax.f32 %v3255, %v3311
    %v3391 = vmax.f32 %v3256, %v3313
    %v3392 = vmax.f32 %v3257, %v3315
    %v3393 = vmax.f32 %v3258, %v3317
    %v3394 = vmax.f32 %v3259, %v3319
    %v3395 = vmax.f32 %v3260, %v3321
    %v3396 = vmax.f32 %v3261, %v3323
    %v3397 = vmax.f32 %v3262, %v3325
    %v3398 = vmax.f32 %v3263, %v3327
    %v3399 = vmax.f32 %v3264, %v3329
    %v3400 = vmax.f32 %v3265, %v3331
    %v3401 = vmax.f32 %v3266, %v3333
    %v3402 = vmax.f32 %v3267, %v3335
    %v3403 = vmax.f32 %v3268, %v3337
    %v3404 = vmax.f32 %v3269, %v3339
    %v3405 = vmax.f32 %v3270, %v3341
    %v3406 = vmax.f32 %v3271, %v3343
    %v3407 = vmax.f32 %v3272, %v3345
    %v3408 = vmax.f32 %v3273, %v3347
    %v3409 = vmax.f32 %v3274, %v3349
    %v3410 = vmax.f32 %v3275, %v3351
    %v3411 = vmax.f32 %v3276, %v3353
    %v3412 = vmax.f32 %v3277, %v3355
    %v3413 = vmax.f32 %v3278, %v3357
    %v3414 = vmax.f32 %v3279, %v3359
    %v3415 = vmax.f32 %v3280, %v3361
    %v3416 = vadd.f32 %v3389, %v629
    %v3417 = vadd.f32 %v3390, %v629
    %v3418 = vadd.f32 %v3391, %v629
    %v3419 = vadd.f32 %v3392, %v629
    %v3420 = vadd.f32 %v3393, %v629
    %v3421 = vadd.f32 %v3394, %v629
    %v3422 = vadd.f32 %v3395, %v629
    %v3423 = vadd.f32 %v3396, %v629
    %v3424 = vadd.f32 %v3397, %v629
    %v3425 = vadd.f32 %v3398, %v629
    %v3426 = vadd.f32 %v3399, %v629
    %v3427 = vadd.f32 %v3400, %v629
    %v3428 = vadd.f32 %v3401, %v629
    %v3429 = vadd.f32 %v3402, %v629
    %v3430 = vadd.f32 %v3403, %v629
    %v3431 = vadd.f32 %v3404, %v629
    %v3432 = vadd.f32 %v3405, %v629
    %v3433 = vadd.f32 %v3406, %v629
    %v3434 = vadd.f32 %v3407, %v629
    %v3435 = vadd.f32 %v3408, %v629
    %v3436 = vadd.f32 %v3409, %v629
    %v3437 = vadd.f32 %v3410, %v629
    %v3438 = vadd.f32 %v3411, %v629
    %v3439 = vadd.f32 %v3412, %v629
    %v3440 = vadd.f32 %v3413, %v629
    %v3441 = vadd.f32 %v3414, %v629
    %v3442 = vadd.f32 %v3415, %v629
    %v3443 = vmax.f32 %v3416, 0.0
    %v3444 = vmax.f32 %v3417, 0.0
    %v3445 = vmax.f32 %v3418, 0.0
    %v3446 = vmax.f32 %v3419, 0.0
    %v3447 = vmax.f32 %v3420, 0.0
    %v3448 = vmax.f32 %v3421, 0.0
    %v3449 = vmax.f32 %v3422, 0.0
    %v3450 = vmax.f32 %v3423, 0.0
    %v3451 = vmax.f32 %v3424, 0.0
    %v3452 = vmax.f32 %v3425, 0.0
    %v3453 = vmax.f32 %v3426, 0.0
    %v3454 = vmax.f32 %v3427, 0.0
    %v3455 = vmax.f32 %v3428, 0.0
    %v3456 = vmax.f32 %v3429, 0.0
    %v3457 = vmax.f32 %v3430, 0.0
    %v3458 = vmax.f32 %v3431, 0.0
    %v3459 = vmax.f32 %v3432, 0.0
    %v3460 = vmax.f32 %v3433, 0.0
    %v3461 = vmax.f32 %v3434, 0.0
    %v3462 = vmax.f32 %v3435, 0.0
    %v3463 = vmax.f32 %v3436, 0.0
    %v3464 = vmax.f32 %v3437, 0.0
    %v3465 = vmax.f32 %v3438, 0.0
    %v3466 = vmax.f32 %v3439, 0.0
    %v3467 = vmax.f32 %v3440, 0.0
    %v3468 = vmax.f32 %v3441, 0.0
    %v3469 = vmax.f32 %v3442, 0.0
    %s3470 = scalar_lea.vmem %s3, 24
    %v3471 = vld [vmem:[%s3470] sm:$0x1f]
    %v3473 = vsel %vm1321, %v3443, 0
    %v3476 = vsel %vm1321, %v3444, 0
    %v3479 = vsel %vm1321, %v3445, 0
    %v3482 = vsel %vm1321, %v3446, 0
    %v3485 = vsel %vm1321, %v3447, 0
    %v3488 = vsel %vm1321, %v3448, 0
    %v3491 = vsel %vm1321, %v3449, 0
    %v3494 = vsel %vm1321, %v3450, 0
    %v3497 = vsel %vm1321, %v3451, 0
    %v3500 = vsel %vm1321, %v3452, 0
    %v3503 = vsel %vm1321, %v3453, 0
    %v3506 = vsel %vm1321, %v3454, 0
    %v3509 = vsel %vm1321, %v3455, 0
    %v3512 = vsel %vm1321, %v3456, 0
    %v3515 = vsel %vm1321, %v3457, 0
    %v3518 = vsel %vm1321, %v3458, 0
    %v3521 = vsel %vm1321, %v3459, 0
    %v3524 = vsel %vm1321, %v3460, 0
    %v3527 = vsel %vm1321, %v3461, 0
    %v3530 = vsel %vm1321, %v3462, 0
    %v3533 = vsel %vm1321, %v3463, 0
    %v3536 = vsel %vm1321, %v3464, 0
    %v3539 = vsel %vm1321, %v3465, 0
    %v3542 = vsel %vm1321, %v3466, 0
    %v3545 = vsel %vm1321, %v3467, 0
    %v3548 = vsel %vm1321, %v3468, 0
    %v3551 = vsel %vm1321, %v3469, 0
    %v3554 = vsel %vm1403, %v3471, 0
    %3556 = vmatprep.subr.mxu0 0.0
    %3557 = vmatpush1.msra.mxu0 %v3554
    %3558 = vmatprep.subr.mxu0 0.0
    %3559 = vmatpush1.msra.mxu0 0.0
    %3560 = vmatprep.subr.mxu0 0.0
    %3561 = vmatpush1.msra.mxu0 0.0
    %3562 = vmatprep.subr.mxu0 0.0
    %3563 = vmatpush1.msra.mxu0 0.0
    %3564 = vmatprep.subr.mxu0 0.0
    %3565 = vmatpush1.msra.mxu0 0.0
    %3566 = vmatprep.subr.mxu0 0.0
    %3567 = vmatpush1.msra.mxu0 0.0
    %3568 = vmatprep.subr.mxu0 0.0
    %3569 = vmatpush1.msra.mxu0 0.0
    %3570 = vmatprep.subr.mxu0 0.0
    %3571 = vmatpush1.msra.mxu0 0.0
    %3572 = vmatprep.subr.mxu0 0.0
    %3573 = vmatpush1.msra.mxu0 0.0
    %3574 = vmatprep.subr.mxu0 0.0
    %3575 = vmatpush1.msra.mxu0 0.0
    %3576 = vmatprep.subr.mxu0 0.0
    %3577 = vmatpush1.msra.mxu0 0.0
    %3578 = vmatprep.subr.mxu0 0.0
    %3579 = vmatpush1.msra.mxu0 0.0
    %3580 = vmatprep.subr.mxu0 0.0
    %3581 = vmatpush1.msra.mxu0 0.0
    %3582 = vmatprep.subr.mxu0 0.0
    %3583 = vmatpush1.msra.mxu0 0.0
    %3584 = vmatprep.subr.mxu0 0.0
    %3585 = vmatpush1.msra.mxu0 0.0
    %3586 = vmatprep.subr.mxu0 0.0
    %3587 = vmatpush1.msra.mxu0 0.0
    %3588 = vmatprep.subr.mxu0 0.0
    %3589 = vmatpush1.msra.mxu0 0.0
    %3590 = vmatprep.subr.mxu0 0.0
    %3591 = vmatpush1.msra.mxu0 0.0
    %3592 = vmatprep.subr.mxu0 0.0
    %3593 = vmatpush1.msra.mxu0 0.0
    %3594 = vmatprep.subr.mxu0 0.0
    %3595 = vmatpush1.msra.mxu0 0.0
    %3596 = vmatprep.subr.mxu0 0.0
    %3597 = vmatpush1.msra.mxu0 0.0
    %3598 = vmatprep.subr.mxu0 0.0
    %3599 = vmatpush1.msra.mxu0 0.0
    %3600 = vmatprep.subr.mxu0 0.0
    %3601 = vmatpush1.msra.mxu0 0.0
    %3602 = vmatprep.subr.mxu0 0.0
    %3603 = vmatpush1.msra.mxu0 0.0
    %3604 = vmatprep.subr.mxu0 0.0
    %3605 = vmatpush1.msra.mxu0 0.0
    %3606 = vmatprep.subr.mxu0 0.0
    %3607 = vmatpush1.msra.mxu0 0.0
    %3608 = vmatprep.subr.mxu0 0.0
    %3609 = vmatpush1.msra.mxu0 0.0
    %3610 = vmatprep.subr.mxu0 0.0
    %3611 = vmatpush1.msra.mxu0 0.0
    %3612 = vmatprep.subr.mxu0 0.0
    %3613 = vmatpush1.msra.mxu0 0.0
    %3614 = vmatprep.subr.mxu0 0.0
    %3615 = vmatpush1.msra.mxu0 0.0
    %3616 = vmatprep.subr.mxu0 0.0
    %3617 = vmatpush1.msra.mxu0 0.0
    %3618 = vmatprep.subr.mxu0 0.0
    %3619 = vmatpush1.msra.mxu0 0.0
    %3620 = vmatprep.mubr.f32.mxu0 0.0
    %3621 = vmatmul.mubr.f32.gmra.mrb[0].mxu0 %v3473
    %v3622 = vpop.f32.mrb[0].mxu0
    %v3623 = vadd.f32 0.0, %v3622
    %v3624 = vpop.f32.mrb[0].mxu0
    %3625 = vmatprep.mubr.f32.mxu0 0.0
    %3626 = vmatmul.mubr.f32.gmra.mrb[0].mxu0 %v3476
    %v3627 = vpop.f32.mrb[0].mxu0
    %v3628 = vadd.f32 0.0, %v3627
    %v3629 = vpop.f32.mrb[0].mxu0
    %3630 = vmatprep.mubr.f32.mxu0 0.0
    %3631 = vmatmul.mubr.f32.gmra.mrb[0].mxu0 %v3479
    %v3632 = vpop.f32.mrb[0].mxu0
    %v3633 = vadd.f32 0.0, %v3632
    %v3634 = vpop.f32.mrb[0].mxu0
    %3635 = vmatprep.mubr.f32.mxu0 0.0
    %3636 = vmatmul.mubr.f32.gmra.mrb[0].mxu0 %v3482
    %v3637 = vpop.f32.mrb[0].mxu0
    %v3638 = vadd.f32 0.0, %v3637
    %v3639 = vpop.f32.mrb[0].mxu0
    %3640 = vmatprep.mubr.f32.mxu0 0.0
    %3641 = vmatmul.mubr.f32.gmra.mrb[0].mxu0 %v3485
    %v3642 = vpop.f32.mrb[0].mxu0
    %v3643 = vadd.f32 0.0, %v3642
    %v3644 = vpop.f32.mrb[0].mxu0
    %3645 = vmatprep.mubr.f32.mxu0 0.0
    %3646 = vmatmul.mubr.f32.gmra.mrb[0].mxu0 %v3488
    %v3647 = vpop.f32.mrb[0].mxu0
    %v3648 = vadd.f32 0.0, %v3647
    %v3649 = vpop.f32.mrb[0].mxu0
    %3650 = vmatprep.mubr.f32.mxu0 0.0
    %3651 = vmatmul.mubr.f32.gmra.mrb[0].mxu0 %v3491
    %v3652 = vpop.f32.mrb[0].mxu0
    %v3653 = vadd.f32 0.0, %v3652
    %v3654 = vpop.f32.mrb[0].mxu0
    %3655 = vmatprep.mubr.f32.mxu0 0.0
    %3656 = vmatmul.mubr.f32.gmra.mrb[0].mxu0 %v3494
    %v3657 = vpop.f32.mrb[0].mxu0
    %v3658 = vadd.f32 0.0, %v3657
    %v3659 = vpop.f32.mrb[0].mxu0
    %3660 = vmatprep.mubr.f32.mxu0 0.0
    %3661 = vmatmul.mubr.f32.gmra.mrb[0].mxu0 %v3497
    %v3662 = vpop.f32.mrb[0].mxu0
    %v3663 = vadd.f32 0.0, %v3662
    %v3664 = vpop.f32.mrb[0].mxu0
    %3665 = vmatprep.mubr.f32.mxu0 0.0
    %3666 = vmatmul.mubr.f32.gmra.mrb[0].mxu0 %v3500
    %v3667 = vpop.f32.mrb[0].mxu0
    %v3668 = vadd.f32 0.0, %v3667
    %v3669 = vpop.f32.mrb[0].mxu0
    %3670 = vmatprep.mubr.f32.mxu0 0.0
    %3671 = vmatmul.mubr.f32.gmra.mrb[0].mxu0 %v3503
    %v3672 = vpop.f32.mrb[0].mxu0
    %v3673 = vadd.f32 0.0, %v3672
    %v3674 = vpop.f32.mrb[0].mxu0
    %3675 = vmatprep.mubr.f32.mxu0 0.0
    %3676 = vmatmul.mubr.f32.gmra.mrb[0].mxu0 %v3506
    %v3677 = vpop.f32.mrb[0].mxu0
    %v3678 = vadd.f32 0.0, %v3677
    %v3679 = vpop.f32.mrb[0].mxu0
    %3680 = vmatprep.mubr.f32.mxu0 0.0
    %3681 = vmatmul.mubr.f32.gmra.mrb[0].mxu0 %v3509
    %v3682 = vpop.f32.mrb[0].mxu0
    %v3683 = vadd.f32 0.0, %v3682
    %v3684 = vpop.f32.mrb[0].mxu0
    %3685 = vmatprep.mubr.f32.mxu0 0.0
    %3686 = vmatmul.mubr.f32.gmra.mrb[0].mxu0 %v3512
    %v3687 = vpop.f32.mrb[0].mxu0
    %v3688 = vadd.f32 0.0, %v3687
    %v3689 = vpop.f32.mrb[0].mxu0
    %3690 = vmatprep.mubr.f32.mxu0 0.0
    %3691 = vmatmul.mubr.f32.gmra.mrb[0].mxu0 %v3515
    %v3692 = vpop.f32.mrb[0].mxu0
    %v3693 = vadd.f32 0.0, %v3692
    %v3694 = vpop.f32.mrb[0].mxu0
    %3695 = vmatprep.mubr.f32.mxu0 0.0
    %3696 = vmatmul.mubr.f32.gmra.mrb[0].mxu0 %v3518
    %v3697 = vpop.f32.mrb[0].mxu0
    %v3698 = vadd.f32 0.0, %v3697
    %v3699 = vpop.f32.mrb[0].mxu0
    %3700 = vmatprep.mubr.f32.mxu0 0.0
    %3701 = vmatmul.mubr.f32.gmra.mrb[0].mxu0 %v3521
    %v3702 = vpop.f32.mrb[0].mxu0
    %v3703 = vadd.f32 0.0, %v3702
    %v3704 = vpop.f32.mrb[0].mxu0
    %3705 = vmatprep.mubr.f32.mxu0 0.0
    %3706 = vmatmul.mubr.f32.gmra.mrb[0].mxu0 %v3524
    %v3707 = vpop.f32.mrb[0].mxu0
    %v3708 = vadd.f32 0.0, %v3707
    %v3709 = vpop.f32.mrb[0].mxu0
    %3710 = vmatprep.mubr.f32.mxu0 0.0
    %3711 = vmatmul.mubr.f32.gmra.mrb[0].mxu0 %v3527
    %v3712 = vpop.f32.mrb[0].mxu0
    %v3713 = vadd.f32 0.0, %v3712
    %v3714 = vpop.f32.mrb[0].mxu0
    %3715 = vmatprep.mubr.f32.mxu0 0.0
    %3716 = vmatmul.mubr.f32.gmra.mrb[0].mxu0 %v3530
    %v3717 = vpop.f32.mrb[0].mxu0
    %v3718 = vadd.f32 0.0, %v3717
    %v3719 = vpop.f32.mrb[0].mxu0
    %3720 = vmatprep.mubr.f32.mxu0 0.0
    %3721 = vmatmul.mubr.f32.gmra.mrb[0].mxu0 %v3533
    %v3722 = vpop.f32.mrb[0].mxu0
    %v3723 = vadd.f32 0.0, %v3722
    %v3724 = vpop.f32.mrb[0].mxu0
    %3725 = vmatprep.mubr.f32.mxu0 0.0
    %3726 = vmatmul.mubr.f32.gmra.mrb[0].mxu0 %v3536
    %v3727 = vpop.f32.mrb[0].mxu0
    %v3728 = vadd.f32 0.0, %v3727
    %v3729 = vpop.f32.mrb[0].mxu0
    %3730 = vmatprep.mubr.f32.mxu0 0.0
    %3731 = vmatmul.mubr.f32.gmra.mrb[0].mxu0 %v3539
    %v3732 = vpop.f32.mrb[0].mxu0
    %v3733 = vadd.f32 0.0, %v3732
    %v3734 = vpop.f32.mrb[0].mxu0
    %3735 = vmatprep.mubr.f32.mxu0 0.0
    %3736 = vmatmul.mubr.f32.gmra.mrb[0].mxu0 %v3542
    %v3737 = vpop.f32.mrb[0].mxu0
    %v3738 = vadd.f32 0.0, %v3737
    %v3739 = vpop.f32.mrb[0].mxu0
    %3740 = vmatprep.mubr.f32.mxu0 0.0
    %3741 = vmatmul.mubr.f32.gmra.mrb[0].mxu0 %v3545
    %v3742 = vpop.f32.mrb[0].mxu0
    %v3743 = vadd.f32 0.0, %v3742
    %v3744 = vpop.f32.mrb[0].mxu0
    %3745 = vmatprep.mubr.f32.mxu0 0.0
    %3746 = vmatmul.mubr.f32.gmra.mrb[0].mxu0 %v3548
    %v3747 = vpop.f32.mrb[0].mxu0
    %v3748 = vadd.f32 0.0, %v3747
    %v3749 = vpop.f32.mrb[0].mxu0
    %3750 = vmatprep.mubr.f32.mxu0 0.0
    %3751 = vmatmul.mubr.f32.gmra.mrb[0].mxu0 %v3551
    %v3752 = vpop.f32.mrb[0].mxu0
    %v3753 = vadd.f32 0.0, %v3752
    %v3754 = vpop.f32.mrb[0].mxu0
    %3755 = vdwg.mxu0
    %v3756 = vadd.f32 %v2810, %v3623
    %v3757 = vadd.f32 %v2811, %v3628
    %v3758 = vadd.f32 %v2812, %v3633
    %v3759 = vadd.f32 %v2813, %v3638
    %v3760 = vadd.f32 %v2814, %v3643
    %v3761 = vadd.f32 %v2815, %v3648
    %v3762 = vadd.f32 %v2816, %v3653
    %v3763 = vadd.f32 %v2817, %v3658
    %v3764 = vadd.f32 %v2818, %v3663
    %v3765 = vadd.f32 %v2819, %v3668
    %v3766 = vadd.f32 %v2820, %v3673
    %v3767 = vadd.f32 %v2821, %v3678
    %v3768 = vadd.f32 %v2822, %v3683
    %v3769 = vadd.f32 %v2823, %v3688
    %v3770 = vadd.f32 %v2824, %v3693
    %v3771 = vadd.f32 %v2825, %v3698
    %v3772 = vadd.f32 %v2826, %v3703
    %v3773 = vadd.f32 %v2827, %v3708
    %v3774 = vadd.f32 %v2828, %v3713
    %v3775 = vadd.f32 %v2829, %v3718
    %v3776 = vadd.f32 %v2830, %v3723
    %v3777 = vadd.f32 %v2831, %v3728
    %v3778 = vadd.f32 %v2832, %v3733
    %v3779 = vadd.f32 %v2833, %v3738
    %v3780 = vadd.f32 %v2834, %v3743
    %v3781 = vadd.f32 %v2835, %v3748
    %v3782 = vadd.f32 %v2836, %v3753
    %s3783 = scalar_lea.vmem %s0, 864
    %v3784 = vld [vmem:[%s3783] sm:$0xff]
    %v3785 = vld [vmem:[%s3783 + $0x8] sm:$0xff]
    %v3786 = vld [vmem:[%s3783 + $0x10] sm:$0xff]
    %v3787 = vld [vmem:[%s3783 + $0x18] sm:$0xff]
    %v3788 = vld [vmem:[%s3783 + $0x20] sm:$0xff]
    %v3789 = vld [vmem:[%s3783 + $0x28] sm:$0xff]
    %v3790 = vld [vmem:[%s3783 + $0x30] sm:$0xff]
    %v3791 = vld [vmem:[%s3783 + $0x38] sm:$0xff]
    %v3792 = vld [vmem:[%s3783 + $0x40] sm:$0xff]
    %v3793 = vld [vmem:[%s3783 + $0x48] sm:$0xff]
    %v3794 = vld [vmem:[%s3783 + $0x50] sm:$0xff]
    %v3795 = vld [vmem:[%s3783 + $0x58] sm:$0xff]
    %v3796 = vld [vmem:[%s3783 + $0x60] sm:$0xff]
    %v3797 = vld [vmem:[%s3783 + $0x68] sm:$0xff]
    %v3798 = vld [vmem:[%s3783 + $0x70] sm:$0xff]
    %v3799 = vld [vmem:[%s3783 + $0x78] sm:$0xff]
    %v3800 = vld [vmem:[%s3783 + $0x80] sm:$0xff]
    %v3801 = vld [vmem:[%s3783 + $0x88] sm:$0xff]
    %v3802 = vld [vmem:[%s3783 + $0x90] sm:$0xff]
    %v3803 = vld [vmem:[%s3783 + $0x98] sm:$0xff]
    %v3804 = vld [vmem:[%s3783 + $0xa0] sm:$0xff]
    %v3805 = vld [vmem:[%s3783 + $0xa8] sm:$0xff]
    %v3806 = vld [vmem:[%s3783 + $0xb0] sm:$0xff]
    %v3807 = vld [vmem:[%s3783 + $0xb8] sm:$0xff]
    %v3808 = vld [vmem:[%s3783 + $0xc0] sm:$0xff]
    %v3809 = vld [vmem:[%s3783 + $0xc8] sm:$0xff]
    %v3810 = vld [vmem:[%s3783 + $0xd0] sm:$0x3]
    %v3812 = vsel %vm69, %v3784, 0
    %v3815 = vsel %vm69, %v3785, 0
    %v3818 = vsel %vm69, %v3786, 0
    %v3821 = vsel %vm69, %v3787, 0
    %v3824 = vsel %vm69, %v3788, 0
    %v3827 = vsel %vm69, %v3789, 0
    %v3830 = vsel %vm69, %v3790, 0
    %v3833 = vsel %vm69, %v3791, 0
    %v3836 = vsel %vm69, %v3792, 0
    %v3839 = vsel %vm69, %v3793, 0
    %v3842 = vsel %vm69, %v3794, 0
    %v3845 = vsel %vm69, %v3795, 0
    %v3848 = vsel %vm69, %v3796, 0
    %v3851 = vsel %vm69, %v3797, 0
    %v3854 = vsel %vm69, %v3798, 0
    %v3857 = vsel %vm69, %v3799, 0
    %v3860 = vsel %vm69, %v3800, 0
    %v3863 = vsel %vm69, %v3801, 0
    %v3866 = vsel %vm69, %v3802, 0
    %v3869 = vsel %vm69, %v3803, 0
    %v3872 = vsel %vm69, %v3804, 0
    %v3875 = vsel %vm69, %v3805, 0
    %v3878 = vsel %vm69, %v3806, 0
    %v3881 = vsel %vm69, %v3807, 0
    %v3884 = vsel %vm69, %v3808, 0
    %v3887 = vsel %vm69, %v3809, 0
    %v3890 = vsel %vm69, %v3810, 0
    %3892 = vmatprep.subr.mxu0 0.0
    %3893 = vmatpush1.msra.mxu0 %v67
    %3894 = vmatprep.subr.mxu0 0.0
    %3895 = vmatpush1.msra.mxu0 %v153
    %3896 = vmatprep.subr.mxu0 0.0
    %3897 = vmatpush1.msra.mxu0 0.0
    %3898 = vmatprep.subr.mxu0 0.0
    %3899 = vmatpush1.msra.mxu0 0.0
    %3900 = vmatprep.subr.mxu0 0.0
    %3901 = vmatpush1.msra.mxu0 0.0
    %3902 = vmatprep.subr.mxu0 0.0
    %3903 = vmatpush1.msra.mxu0 0.0
    %3904 = vmatprep.subr.mxu0 0.0
    %3905 = vmatpush1.msra.mxu0 0.0
    %3906 = vmatprep.subr.mxu0 0.0
    %3907 = vmatpush1.msra.mxu0 0.0
    %3908 = vmatprep.subr.mxu0 0.0
    %3909 = vmatpush1.msra.mxu0 0.0
    %3910 = vmatprep.subr.mxu0 0.0
    %3911 = vmatpush1.msra.mxu0 0.0
    %3912 = vmatprep.subr.mxu0 0.0
    %3913 = vmatpush1.msra.mxu0 0.0
    %3914 = vmatprep.subr.mxu0 0.0
    %3915 = vmatpush1.msra.mxu0 0.0
    %3916 = vmatprep.subr.mxu0 0.0
    %3917 = vmatpush1.msra.mxu0 0.0
    %3918 = vmatprep.subr.mxu0 0.0
    %3919 = vmatpush1.msra.mxu0 0.0
    %3920 = vmatprep.subr.mxu0 0.0
    %3921 = vmatpush1.msra.mxu0 0.0
    %3922 = vmatprep.subr.mxu0 0.0
    %3923 = vmatpush1.msra.mxu0 0.0
    %3924 = vmatprep.subr.mxu0 0.0
    %3925 = vmatpush1.msra.mxu0 0.0
    %3926 = vmatprep.subr.mxu0 0.0
    %3927 = vmatpush1.msra.mxu0 0.0
    %3928 = vmatprep.subr.mxu0 0.0
    %3929 = vmatpush1.msra.mxu0 0.0
    %3930 = vmatprep.subr.mxu0 0.0
    %3931 = vmatpush1.msra.mxu0 0.0
    %3932 = vmatprep.subr.mxu0 0.0
    %3933 = vmatpush1.msra.mxu0 0.0
    %3934 = vmatprep.subr.mxu0 0.0
    %3935 = vmatpush1.msra.mxu0 0.0
    %3936 = vmatprep.subr.mxu0 0.0
    %3937 = vmatpush1.msra.mxu0 0.0
    %3938 = vmatprep.subr.mxu0 0.0
    %3939 = vmatpush1.msra.mxu0 0.0
    %3940 = vmatprep.subr.mxu0 0.0
    %3941 = vmatpush1.msra.mxu0 0.0
    %3942 = vmatprep.subr.mxu0 0.0
    %3943 = vmatpush1.msra.mxu0 0.0
    %3944 = vmatprep.subr.mxu0 0.0
    %3945 = vmatpush1.msra.mxu0 0.0
    %3946 = vmatprep.subr.mxu0 0.0
    %3947 = vmatpush1.msra.mxu0 0.0
    %3948 = vmatprep.subr.mxu0 0.0
    %3949 = vmatpush1.msra.mxu0 0.0
    %3950 = vmatprep.subr.mxu0 0.0
    %3951 = vmatpush1.msra.mxu0 0.0
    %3952 = vmatprep.subr.mxu0 0.0
    %3953 = vmatpush1.msra.mxu0 0.0
    %3954 = vmatprep.subr.mxu0 0.0
    %3955 = vmatpush1.msra.mxu0 0.0
    %3956 = vmatprep.mubr.f32.mxu0 0.0
    %3957 = vmatmul.mubr.f32.gmra.mrb[0].mxu0 %v3812
    %v3958 = vpop.f32.mrb[0].mxu0
    %v3959 = vadd.f32 0.0, %v3958
    %v3960 = vpop.f32.mrb[0].mxu0
    %3961 = vmatprep.mubr.f32.mxu0 0.0
    %3962 = vmatmul.mubr.f32.gmra.mrb[0].mxu0 %v3815
    %v3963 = vpop.f32.mrb[0].mxu0
    %v3964 = vadd.f32 0.0, %v3963
    %v3965 = vpop.f32.mrb[0].mxu0
    %3966 = vmatprep.mubr.f32.mxu0 0.0
    %3967 = vmatmul.mubr.f32.gmra.mrb[0].mxu0 %v3818
    %v3968 = vpop.f32.mrb[0].mxu0
    %v3969 = vadd.f32 0.0, %v3968
    %v3970 = vpop.f32.mrb[0].mxu0
    %3971 = vmatprep.mubr.f32.mxu0 0.0
    %3972 = vmatmul.mubr.f32.gmra.mrb[0].mxu0 %v3821
    %v3973 = vpop.f32.mrb[0].mxu0
    %v3974 = vadd.f32 0.0, %v3973
    %v3975 = vpop.f32.mrb[0].mxu0
    %3976 = vmatprep.mubr.f32.mxu0 0.0
    %3977 = vmatmul.mubr.f32.gmra.mrb[0].mxu0 %v3824
    %v3978 = vpop.f32.mrb[0].mxu0
    %v3979 = vadd.f32 0.0, %v3978
    %v3980 = vpop.f32.mrb[0].mxu0
    %3981 = vmatprep.mubr.f32.mxu0 0.0
    %3982 = vmatmul.mubr.f32.gmra.mrb[0].mxu0 %v3827
    %v3983 = vpop.f32.mrb[0].mxu0
    %v3984 = vadd.f32 0.0, %v3983
    %v3985 = vpop.f32.mrb[0].mxu0
    %3986 = vmatprep.mubr.f32.mxu0 0.0
    %3987 = vmatmul.mubr.f32.gmra.mrb[0].mxu0 %v3830
    %v3988 = vpop.f32.mrb[0].mxu0
    %v3989 = vadd.f32 0.0, %v3988
    %v3990 = vpop.f32.mrb[0].mxu0
    %3991 = vmatprep.mubr.f32.mxu0 0.0
    %3992 = vmatmul.mubr.f32.gmra.mrb[0].mxu0 %v3833
    %v3993 = vpop.f32.mrb[0].mxu0
    %v3994 = vadd.f32 0.0, %v3993
    %v3995 = vpop.f32.mrb[0].mxu0
    %3996 = vmatprep.mubr.f32.mxu0 0.0
    %3997 = vmatmul.mubr.f32.gmra.mrb[0].mxu0 %v3836
    %v3998 = vpop.f32.mrb[0].mxu0
    %v3999 = vadd.f32 0.0, %v3998
    %v4000 = vpop.f32.mrb[0].mxu0
    %4001 = vmatprep.mubr.f32.mxu0 0.0
    %4002 = vmatmul.mubr.f32.gmra.mrb[0].mxu0 %v3839
    %v4003 = vpop.f32.mrb[0].mxu0
    %v4004 = vadd.f32 0.0, %v4003
    %v4005 = vpop.f32.mrb[0].mxu0
    %4006 = vmatprep.mubr.f32.mxu0 0.0
    %4007 = vmatmul.mubr.f32.gmra.mrb[0].mxu0 %v3842
    %v4008 = vpop.f32.mrb[0].mxu0
    %v4009 = vadd.f32 0.0, %v4008
    %v4010 = vpop.f32.mrb[0].mxu0
    %4011 = vmatprep.mubr.f32.mxu0 0.0
    %4012 = vmatmul.mubr.f32.gmra.mrb[0].mxu0 %v3845
    %v4013 = vpop.f32.mrb[0].mxu0
    %v4014 = vadd.f32 0.0, %v4013
    %v4015 = vpop.f32.mrb[0].mxu0
    %4016 = vmatprep.mubr.f32.mxu0 0.0
    %4017 = vmatmul.mubr.f32.gmra.mrb[0].mxu0 %v3848
    %v4018 = vpop.f32.mrb[0].mxu0
    %v4019 = vadd.f32 0.0, %v4018
    %v4020 = vpop.f32.mrb[0].mxu0
    %4021 = vmatprep.mubr.f32.mxu0 0.0
    %4022 = vmatmul.mubr.f32.gmra.mrb[0].mxu0 %v3851
    %v4023 = vpop.f32.mrb[0].mxu0
    %v4024 = vadd.f32 0.0, %v4023
    %v4025 = vpop.f32.mrb[0].mxu0
    %4026 = vmatprep.mubr.f32.mxu0 0.0
    %4027 = vmatmul.mubr.f32.gmra.mrb[0].mxu0 %v3854
    %v4028 = vpop.f32.mrb[0].mxu0
    %v4029 = vadd.f32 0.0, %v4028
    %v4030 = vpop.f32.mrb[0].mxu0
    %4031 = vmatprep.mubr.f32.mxu0 0.0
    %4032 = vmatmul.mubr.f32.gmra.mrb[0].mxu0 %v3857
    %v4033 = vpop.f32.mrb[0].mxu0
    %v4034 = vadd.f32 0.0, %v4033
    %v4035 = vpop.f32.mrb[0].mxu0
    %4036 = vmatprep.mubr.f32.mxu0 0.0
    %4037 = vmatmul.mubr.f32.gmra.mrb[0].mxu0 %v3860
    %v4038 = vpop.f32.mrb[0].mxu0
    %v4039 = vadd.f32 0.0, %v4038
    %v4040 = vpop.f32.mrb[0].mxu0
    %4041 = vmatprep.mubr.f32.mxu0 0.0
    %4042 = vmatmul.mubr.f32.gmra.mrb[0].mxu0 %v3863
    %v4043 = vpop.f32.mrb[0].mxu0
    %v4044 = vadd.f32 0.0, %v4043
    %v4045 = vpop.f32.mrb[0].mxu0
    %4046 = vmatprep.mubr.f32.mxu0 0.0
    %4047 = vmatmul.mubr.f32.gmra.mrb[0].mxu0 %v3866
    %v4048 = vpop.f32.mrb[0].mxu0
    %v4049 = vadd.f32 0.0, %v4048
    %v4050 = vpop.f32.mrb[0].mxu0
    %4051 = vmatprep.mubr.f32.mxu0 0.0
    %4052 = vmatmul.mubr.f32.gmra.mrb[0].mxu0 %v3869
    %v4053 = vpop.f32.mrb[0].mxu0
    %v4054 = vadd.f32 0.0, %v4053
    %v4055 = vpop.f32.mrb[0].mxu0
    %4056 = vmatprep.mubr.f32.mxu0 0.0
    %4057 = vmatmul.mubr.f32.gmra.mrb[0].mxu0 %v3872
    %v4058 = vpop.f32.mrb[0].mxu0
    %v4059 = vadd.f32 0.0, %v4058
    %v4060 = vpop.f32.mrb[0].mxu0
    %4061 = vmatprep.mubr.f32.mxu0 0.0
    %4062 = vmatmul.mubr.f32.gmra.mrb[0].mxu0 %v3875
    %v4063 = vpop.f32.mrb[0].mxu0
    %v4064 = vadd.f32 0.0, %v4063
    %v4065 = vpop.f32.mrb[0].mxu0
    %4066 = vmatprep.mubr.f32.mxu0 0.0
    %4067 = vmatmul.mubr.f32.gmra.mrb[0].mxu0 %v3878
    %v4068 = vpop.f32.mrb[0].mxu0
    %v4069 = vadd.f32 0.0, %v4068
    %v4070 = vpop.f32.mrb[0].mxu0
    %4071 = vmatprep.mubr.f32.mxu0 0.0
    %4072 = vmatmul.mubr.f32.gmra.mrb[0].mxu0 %v3881
    %v4073 = vpop.f32.mrb[0].mxu0
    %v4074 = vadd.f32 0.0, %v4073
    %v4075 = vpop.f32.mrb[0].mxu0
    %4076 = vmatprep.mubr.f32.mxu0 0.0
    %4077 = vmatmul.mubr.f32.gmra.mrb[0].mxu0 %v3884
    %v4078 = vpop.f32.mrb[0].mxu0
    %v4079 = vadd.f32 0.0, %v4078
    %v4080 = vpop.f32.mrb[0].mxu0
    %4081 = vmatprep.mubr.f32.mxu0 0.0
    %4082 = vmatmul.mubr.f32.gmra.mrb[0].mxu0 %v3887
    %v4083 = vpop.f32.mrb[0].mxu0
    %v4084 = vadd.f32 0.0, %v4083
    %v4085 = vpop.f32.mrb[0].mxu0
    %4086 = vmatprep.mubr.f32.mxu0 0.0
    %4087 = vmatmul.mubr.f32.gmra.mrb[0].mxu0 %v3890
    %v4088 = vpop.f32.mrb[0].mxu0
    %v4089 = vadd.f32 0.0, %v4088
    %v4090 = vpop.f32.mrb[0].mxu0
    %4091 = vdwg.mxu0
    %4119 = vrot.lane.b32.xlu0 %v3959, 123
    %v4120 = vpop.permute.xlu0 %4119
    %4121 = vrot.lane.b32.xlu0 %v3964, 123
    %v4122 = vpop.permute.xlu0 %4121
    %4123 = vrot.lane.b32.xlu0 %v3969, 123
    %v4124 = vpop.permute.xlu0 %4123
    %4125 = vrot.lane.b32.xlu0 %v3974, 123
    %v4126 = vpop.permute.xlu0 %4125
    %4127 = vrot.lane.b32.xlu0 %v3979, 123
    %v4128 = vpop.permute.xlu0 %4127
    %4129 = vrot.lane.b32.xlu0 %v3984, 123
    %v4130 = vpop.permute.xlu0 %4129
    %4131 = vrot.lane.b32.xlu0 %v3989, 123
    %v4132 = vpop.permute.xlu0 %4131
    %4133 = vrot.lane.b32.xlu0 %v3994, 123
    %v4134 = vpop.permute.xlu0 %4133
    %4135 = vrot.lane.b32.xlu0 %v3999, 123
    %v4136 = vpop.permute.xlu0 %4135
    %4137 = vrot.lane.b32.xlu0 %v4004, 123
    %v4138 = vpop.permute.xlu0 %4137
    %4139 = vrot.lane.b32.xlu0 %v4009, 123
    %v4140 = vpop.permute.xlu0 %4139
    %4141 = vrot.lane.b32.xlu0 %v4014, 123
    %v4142 = vpop.permute.xlu0 %4141
    %4143 = vrot.lane.b32.xlu0 %v4019, 123
    %v4144 = vpop.permute.xlu0 %4143
    %4145 = vrot.lane.b32.xlu0 %v4024, 123
    %v4146 = vpop.permute.xlu0 %4145
    %4147 = vrot.lane.b32.xlu0 %v4029, 123
    %v4148 = vpop.permute.xlu0 %4147
    %4149 = vrot.lane.b32.xlu0 %v4034, 123
    %v4150 = vpop.permute.xlu0 %4149
    %4151 = vrot.lane.b32.xlu0 %v4039, 123
    %v4152 = vpop.permute.xlu0 %4151
    %4153 = vrot.lane.b32.xlu0 %v4044, 123
    %v4154 = vpop.permute.xlu0 %4153
    %4155 = vrot.lane.b32.xlu0 %v4049, 123
    %v4156 = vpop.permute.xlu0 %4155
    %4157 = vrot.lane.b32.xlu0 %v4054, 123
    %v4158 = vpop.permute.xlu0 %4157
    %4159 = vrot.lane.b32.xlu0 %v4059, 123
    %v4160 = vpop.permute.xlu0 %4159
    %4161 = vrot.lane.b32.xlu0 %v4064, 123
    %v4162 = vpop.permute.xlu0 %4161
    %4163 = vrot.lane.b32.xlu0 %v4069, 123
    %v4164 = vpop.permute.xlu0 %4163
    %4165 = vrot.lane.b32.xlu0 %v4074, 123
    %v4166 = vpop.permute.xlu0 %4165
    %4167 = vrot.lane.b32.xlu0 %v4079, 123
    %v4168 = vpop.permute.xlu0 %4167
    %4169 = vrot.lane.b32.xlu0 %v4084, 123
    %v4170 = vpop.permute.xlu0 %4169
    %4171 = vrot.lane.b32.xlu0 %v4089, 123
    %v4172 = vpop.permute.xlu0 %4171
    %v4200 = vmax.f32 %v3959, %v4120
    %v4201 = vmax.f32 %v3964, %v4122
    %v4202 = vmax.f32 %v3969, %v4124
    %v4203 = vmax.f32 %v3974, %v4126
    %v4204 = vmax.f32 %v3979, %v4128
    %v4205 = vmax.f32 %v3984, %v4130
    %v4206 = vmax.f32 %v3989, %v4132
    %v4207 = vmax.f32 %v3994, %v4134
    %v4208 = vmax.f32 %v3999, %v4136
    %v4209 = vmax.f32 %v4004, %v4138
    %v4210 = vmax.f32 %v4009, %v4140
    %v4211 = vmax.f32 %v4014, %v4142
    %v4212 = vmax.f32 %v4019, %v4144
    %v4213 = vmax.f32 %v4024, %v4146
    %v4214 = vmax.f32 %v4029, %v4148
    %v4215 = vmax.f32 %v4034, %v4150
    %v4216 = vmax.f32 %v4039, %v4152
    %v4217 = vmax.f32 %v4044, %v4154
    %v4218 = vmax.f32 %v4049, %v4156
    %v4219 = vmax.f32 %v4054, %v4158
    %v4220 = vmax.f32 %v4059, %v4160
    %v4221 = vmax.f32 %v4064, %v4162
    %v4222 = vmax.f32 %v4069, %v4164
    %v4223 = vmax.f32 %v4074, %v4166
    %v4224 = vmax.f32 %v4079, %v4168
    %v4225 = vmax.f32 %v4084, %v4170
    %v4226 = vmax.f32 %v4089, %v4172
    %4254 = vrot.lane.b32.xlu0 %v4200, 118
    %v4255 = vpop.permute.xlu0 %4254
    %4256 = vrot.lane.b32.xlu0 %v4201, 118
    %v4257 = vpop.permute.xlu0 %4256
    %4258 = vrot.lane.b32.xlu0 %v4202, 118
    %v4259 = vpop.permute.xlu0 %4258
    %4260 = vrot.lane.b32.xlu0 %v4203, 118
    %v4261 = vpop.permute.xlu0 %4260
    %4262 = vrot.lane.b32.xlu0 %v4204, 118
    %v4263 = vpop.permute.xlu0 %4262
    %4264 = vrot.lane.b32.xlu0 %v4205, 118
    %v4265 = vpop.permute.xlu0 %4264
    %4266 = vrot.lane.b32.xlu0 %v4206, 118
    %v4267 = vpop.permute.xlu0 %4266
    %4268 = vrot.lane.b32.xlu0 %v4207, 118
    %v4269 = vpop.permute.xlu0 %4268
    %4270 = vrot.lane.b32.xlu0 %v4208, 118
    %v4271 = vpop.permute.xlu0 %4270
    %4272 = vrot.lane.b32.xlu0 %v4209, 118
    %v4273 = vpop.permute.xlu0 %4272
    %4274 = vrot.lane.b32.xlu0 %v4210, 118
    %v4275 = vpop.permute.xlu0 %4274
    %4276 = vrot.lane.b32.xlu0 %v4211, 118
    %v4277 = vpop.permute.xlu0 %4276
    %4278 = vrot.lane.b32.xlu0 %v4212, 118
    %v4279 = vpop.permute.xlu0 %4278
    %4280 = vrot.lane.b32.xlu0 %v4213, 118
    %v4281 = vpop.permute.xlu0 %4280
    %4282 = vrot.lane.b32.xlu0 %v4214, 118
    %v4283 = vpop.permute.xlu0 %4282
    %4284 = vrot.lane.b32.xlu0 %v4215, 118
    %v4285 = vpop.permute.xlu0 %4284
    %4286 = vrot.lane.b32.xlu0 %v4216, 118
    %v4287 = vpop.permute.xlu0 %4286
    %4288 = vrot.lane.b32.xlu0 %v4217, 118
    %v4289 = vpop.permute.xlu0 %4288
    %4290 = vrot.lane.b32.xlu0 %v4218, 118
    %v4291 = vpop.permute.xlu0 %4290
    %4292 = vrot.lane.b32.xlu0 %v4219, 118
    %v4293 = vpop.permute.xlu0 %4292
    %4294 = vrot.lane.b32.xlu0 %v4220, 118
    %v4295 = vpop.permute.xlu0 %4294
    %4296 = vrot.lane.b32.xlu0 %v4221, 118
    %v4297 = vpop.permute.xlu0 %4296
    %4298 = vrot.lane.b32.xlu0 %v4222, 118
    %v4299 = vpop.permute.xlu0 %4298
    %4300 = vrot.lane.b32.xlu0 %v4223, 118
    %v4301 = vpop.permute.xlu0 %4300
    %4302 = vrot.lane.b32.xlu0 %v4224, 118
    %v4303 = vpop.permute.xlu0 %4302
    %4304 = vrot.lane.b32.xlu0 %v4225, 118
    %v4305 = vpop.permute.xlu0 %4304
    %4306 = vrot.lane.b32.xlu0 %v4226, 118
    %v4307 = vpop.permute.xlu0 %4306
    %v4335 = vmax.f32 %v4200, %v4255
    %v4336 = vmax.f32 %v4201, %v4257
    %v4337 = vmax.f32 %v4202, %v4259
    %v4338 = vmax.f32 %v4203, %v4261
    %v4339 = vmax.f32 %v4204, %v4263
    %v4340 = vmax.f32 %v4205, %v4265
    %v4341 = vmax.f32 %v4206, %v4267
    %v4342 = vmax.f32 %v4207, %v4269
    %v4343 = vmax.f32 %v4208, %v4271
    %v4344 = vmax.f32 %v4209, %v4273
    %v4345 = vmax.f32 %v4210, %v4275
    %v4346 = vmax.f32 %v4211, %v4277
    %v4347 = vmax.f32 %v4212, %v4279
    %v4348 = vmax.f32 %v4213, %v4281
    %v4349 = vmax.f32 %v4214, %v4283
    %v4350 = vmax.f32 %v4215, %v4285
    %v4351 = vmax.f32 %v4216, %v4287
    %v4352 = vmax.f32 %v4217, %v4289
    %v4353 = vmax.f32 %v4218, %v4291
    %v4354 = vmax.f32 %v4219, %v4293
    %v4355 = vmax.f32 %v4220, %v4295
    %v4356 = vmax.f32 %v4221, %v4297
    %v4357 = vmax.f32 %v4222, %v4299
    %v4358 = vmax.f32 %v4223, %v4301
    %v4359 = vmax.f32 %v4224, %v4303
    %v4360 = vmax.f32 %v4225, %v4305
    %v4361 = vmax.f32 %v4226, %v4307
    %v4362 = vadd.f32 %v4335, %v629
    %v4363 = vadd.f32 %v4336, %v629
    %v4364 = vadd.f32 %v4337, %v629
    %v4365 = vadd.f32 %v4338, %v629
    %v4366 = vadd.f32 %v4339, %v629
    %v4367 = vadd.f32 %v4340, %v629
    %v4368 = vadd.f32 %v4341, %v629
    %v4369 = vadd.f32 %v4342, %v629
    %v4370 = vadd.f32 %v4343, %v629
    %v4371 = vadd.f32 %v4344, %v629
    %v4372 = vadd.f32 %v4345, %v629
    %v4373 = vadd.f32 %v4346, %v629
    %v4374 = vadd.f32 %v4347, %v629
    %v4375 = vadd.f32 %v4348, %v629
    %v4376 = vadd.f32 %v4349, %v629
    %v4377 = vadd.f32 %v4350, %v629
    %v4378 = vadd.f32 %v4351, %v629
    %v4379 = vadd.f32 %v4352, %v629
    %v4380 = vadd.f32 %v4353, %v629
    %v4381 = vadd.f32 %v4354, %v629
    %v4382 = vadd.f32 %v4355, %v629
    %v4383 = vadd.f32 %v4356, %v629
    %v4384 = vadd.f32 %v4357, %v629
    %v4385 = vadd.f32 %v4358, %v629
    %v4386 = vadd.f32 %v4359, %v629
    %v4387 = vadd.f32 %v4360, %v629
    %v4388 = vadd.f32 %v4361, %v629
    %v4389 = vmax.f32 %v4362, 0.0
    %v4390 = vmax.f32 %v4363, 0.0
    %v4391 = vmax.f32 %v4364, 0.0
    %v4392 = vmax.f32 %v4365, 0.0
    %v4393 = vmax.f32 %v4366, 0.0
    %v4394 = vmax.f32 %v4367, 0.0
    %v4395 = vmax.f32 %v4368, 0.0
    %v4396 = vmax.f32 %v4369, 0.0
    %v4397 = vmax.f32 %v4370, 0.0
    %v4398 = vmax.f32 %v4371, 0.0
    %v4399 = vmax.f32 %v4372, 0.0
    %v4400 = vmax.f32 %v4373, 0.0
    %v4401 = vmax.f32 %v4374, 0.0
    %v4402 = vmax.f32 %v4375, 0.0
    %v4403 = vmax.f32 %v4376, 0.0
    %v4404 = vmax.f32 %v4377, 0.0
    %v4405 = vmax.f32 %v4378, 0.0
    %v4406 = vmax.f32 %v4379, 0.0
    %v4407 = vmax.f32 %v4380, 0.0
    %v4408 = vmax.f32 %v4381, 0.0
    %v4409 = vmax.f32 %v4382, 0.0
    %v4410 = vmax.f32 %v4383, 0.0
    %v4411 = vmax.f32 %v4384, 0.0
    %v4412 = vmax.f32 %v4385, 0.0
    %v4413 = vmax.f32 %v4386, 0.0
    %v4414 = vmax.f32 %v4387, 0.0
    %v4415 = vmax.f32 %v4388, 0.0
    %s4416 = scalar_lea.vmem %s3, 32
    %v4417 = vld [vmem:[%s4416] sm:$0x1f]
    %v4419 = vsel %vm1321, %v4389, 0
    %v4422 = vsel %vm1321, %v4390, 0
    %v4425 = vsel %vm1321, %v4391, 0
    %v4428 = vsel %vm1321, %v4392, 0
    %v4431 = vsel %vm1321, %v4393, 0
    %v4434 = vsel %vm1321, %v4394, 0
    %v4437 = vsel %vm1321, %v4395, 0
    %v4440 = vsel %vm1321, %v4396, 0
    %v4443 = vsel %vm1321, %v4397, 0
    %v4446 = vsel %vm1321, %v4398, 0
    %v4449 = vsel %vm1321, %v4399, 0
    %v4452 = vsel %vm1321, %v4400, 0
    %v4455 = vsel %vm1321, %v4401, 0
    %v4458 = vsel %vm1321, %v4402, 0
    %v4461 = vsel %vm1321, %v4403, 0
    %v4464 = vsel %vm1321, %v4404, 0
    %v4467 = vsel %vm1321, %v4405, 0
    %v4470 = vsel %vm1321, %v4406, 0
    %v4473 = vsel %vm1321, %v4407, 0
    %v4476 = vsel %vm1321, %v4408, 0
    %v4479 = vsel %vm1321, %v4409, 0
    %v4482 = vsel %vm1321, %v4410, 0
    %v4485 = vsel %vm1321, %v4411, 0
    %v4488 = vsel %vm1321, %v4412, 0
    %v4491 = vsel %vm1321, %v4413, 0
    %v4494 = vsel %vm1321, %v4414, 0
    %v4497 = vsel %vm1321, %v4415, 0
    %v4500 = vsel %vm1403, %v4417, 0
    %4502 = vmatprep.subr.mxu0 0.0
    %4503 = vmatpush1.msra.mxu0 %v4500
    %4504 = vmatprep.subr.mxu0 0.0
    %4505 = vmatpush1.msra.mxu0 0.0
    %4506 = vmatprep.subr.mxu0 0.0
    %4507 = vmatpush1.msra.mxu0 0.0
    %4508 = vmatprep.subr.mxu0 0.0
    %4509 = vmatpush1.msra.mxu0 0.0
    %4510 = vmatprep.subr.mxu0 0.0
    %4511 = vmatpush1.msra.mxu0 0.0
    %4512 = vmatprep.subr.mxu0 0.0
    %4513 = vmatpush1.msra.mxu0 0.0
    %4514 = vmatprep.subr.mxu0 0.0
    %4515 = vmatpush1.msra.mxu0 0.0
    %4516 = vmatprep.subr.mxu0 0.0
    %4517 = vmatpush1.msra.mxu0 0.0
    %4518 = vmatprep.subr.mxu0 0.0
    %4519 = vmatpush1.msra.mxu0 0.0
    %4520 = vmatprep.subr.mxu0 0.0
    %4521 = vmatpush1.msra.mxu0 0.0
    %4522 = vmatprep.subr.mxu0 0.0
    %4523 = vmatpush1.msra.mxu0 0.0
    %4524 = vmatprep.subr.mxu0 0.0
    %4525 = vmatpush1.msra.mxu0 0.0
    %4526 = vmatprep.subr.mxu0 0.0
    %4527 = vmatpush1.msra.mxu0 0.0
    %4528 = vmatprep.subr.mxu0 0.0
    %4529 = vmatpush1.msra.mxu0 0.0
    %4530 = vmatprep.subr.mxu0 0.0
    %4531 = vmatpush1.msra.mxu0 0.0
    %4532 = vmatprep.subr.mxu0 0.0
    %4533 = vmatpush1.msra.mxu0 0.0
    %4534 = vmatprep.subr.mxu0 0.0
    %4535 = vmatpush1.msra.mxu0 0.0
    %4536 = vmatprep.subr.mxu0 0.0
    %4537 = vmatpush1.msra.mxu0 0.0
    %4538 = vmatprep.subr.mxu0 0.0
    %4539 = vmatpush1.msra.mxu0 0.0
    %4540 = vmatprep.subr.mxu0 0.0
    %4541 = vmatpush1.msra.mxu0 0.0
    %4542 = vmatprep.subr.mxu0 0.0
    %4543 = vmatpush1.msra.mxu0 0.0
    %4544 = vmatprep.subr.mxu0 0.0
    %4545 = vmatpush1.msra.mxu0 0.0
    %4546 = vmatprep.subr.mxu0 0.0
    %4547 = vmatpush1.msra.mxu0 0.0
    %4548 = vmatprep.subr.mxu0 0.0
    %4549 = vmatpush1.msra.mxu0 0.0
    %4550 = vmatprep.subr.mxu0 0.0
    %4551 = vmatpush1.msra.mxu0 0.0
    %4552 = vmatprep.subr.mxu0 0.0
    %4553 = vmatpush1.msra.mxu0 0.0
    %4554 = vmatprep.subr.mxu0 0.0
    %4555 = vmatpush1.msra.mxu0 0.0
    %4556 = vmatprep.subr.mxu0 0.0
    %4557 = vmatpush1.msra.mxu0 0.0
    %4558 = vmatprep.subr.mxu0 0.0
    %4559 = vmatpush1.msra.mxu0 0.0
    %4560 = vmatprep.subr.mxu0 0.0
    %4561 = vmatpush1.msra.mxu0 0.0
    %4562 = vmatprep.subr.mxu0 0.0
    %4563 = vmatpush1.msra.mxu0 0.0
    %4564 = vmatprep.subr.mxu0 0.0
    %4565 = vmatpush1.msra.mxu0 0.0
    %4566 = vmatprep.mubr.f32.mxu0 0.0
    %4567 = vmatmul.mubr.f32.gmra.mrb[0].mxu0 %v4419
    %v4568 = vpop.f32.mrb[0].mxu0
    %v4569 = vadd.f32 0.0, %v4568
    %v4570 = vpop.f32.mrb[0].mxu0
    %4571 = vmatprep.mubr.f32.mxu0 0.0
    %4572 = vmatmul.mubr.f32.gmra.mrb[0].mxu0 %v4422
    %v4573 = vpop.f32.mrb[0].mxu0
    %v4574 = vadd.f32 0.0, %v4573
    %v4575 = vpop.f32.mrb[0].mxu0
    %4576 = vmatprep.mubr.f32.mxu0 0.0
    %4577 = vmatmul.mubr.f32.gmra.mrb[0].mxu0 %v4425
    %v4578 = vpop.f32.mrb[0].mxu0
    %v4579 = vadd.f32 0.0, %v4578
    %v4580 = vpop.f32.mrb[0].mxu0
    %4581 = vmatprep.mubr.f32.mxu0 0.0
    %4582 = vmatmul.mubr.f32.gmra.mrb[0].mxu0 %v4428
    %v4583 = vpop.f32.mrb[0].mxu0
    %v4584 = vadd.f32 0.0, %v4583
    %v4585 = vpop.f32.mrb[0].mxu0
    %4586 = vmatprep.mubr.f32.mxu0 0.0
    %4587 = vmatmul.mubr.f32.gmra.mrb[0].mxu0 %v4431
    %v4588 = vpop.f32.mrb[0].mxu0
    %v4589 = vadd.f32 0.0, %v4588
    %v4590 = vpop.f32.mrb[0].mxu0
    %4591 = vmatprep.mubr.f32.mxu0 0.0
    %4592 = vmatmul.mubr.f32.gmra.mrb[0].mxu0 %v4434
    %v4593 = vpop.f32.mrb[0].mxu0
    %v4594 = vadd.f32 0.0, %v4593
    %v4595 = vpop.f32.mrb[0].mxu0
    %4596 = vmatprep.mubr.f32.mxu0 0.0
    %4597 = vmatmul.mubr.f32.gmra.mrb[0].mxu0 %v4437
    %v4598 = vpop.f32.mrb[0].mxu0
    %v4599 = vadd.f32 0.0, %v4598
    %v4600 = vpop.f32.mrb[0].mxu0
    %4601 = vmatprep.mubr.f32.mxu0 0.0
    %4602 = vmatmul.mubr.f32.gmra.mrb[0].mxu0 %v4440
    %v4603 = vpop.f32.mrb[0].mxu0
    %v4604 = vadd.f32 0.0, %v4603
    %v4605 = vpop.f32.mrb[0].mxu0
    %4606 = vmatprep.mubr.f32.mxu0 0.0
    %4607 = vmatmul.mubr.f32.gmra.mrb[0].mxu0 %v4443
    %v4608 = vpop.f32.mrb[0].mxu0
    %v4609 = vadd.f32 0.0, %v4608
    %v4610 = vpop.f32.mrb[0].mxu0
    %4611 = vmatprep.mubr.f32.mxu0 0.0
    %4612 = vmatmul.mubr.f32.gmra.mrb[0].mxu0 %v4446
    %v4613 = vpop.f32.mrb[0].mxu0
    %v4614 = vadd.f32 0.0, %v4613
    %v4615 = vpop.f32.mrb[0].mxu0
    %4616 = vmatprep.mubr.f32.mxu0 0.0
    %4617 = vmatmul.mubr.f32.gmra.mrb[0].mxu0 %v4449
    %v4618 = vpop.f32.mrb[0].mxu0
    %v4619 = vadd.f32 0.0, %v4618
    %v4620 = vpop.f32.mrb[0].mxu0
    %4621 = vmatprep.mubr.f32.mxu0 0.0
    %4622 = vmatmul.mubr.f32.gmra.mrb[0].mxu0 %v4452
    %v4623 = vpop.f32.mrb[0].mxu0
    %v4624 = vadd.f32 0.0, %v4623
    %v4625 = vpop.f32.mrb[0].mxu0
    %4626 = vmatprep.mubr.f32.mxu0 0.0
    %4627 = vmatmul.mubr.f32.gmra.mrb[0].mxu0 %v4455
    %v4628 = vpop.f32.mrb[0].mxu0
    %v4629 = vadd.f32 0.0, %v4628
    %v4630 = vpop.f32.mrb[0].mxu0
    %4631 = vmatprep.mubr.f32.mxu0 0.0
    %4632 = vmatmul.mubr.f32.gmra.mrb[0].mxu0 %v4458
    %v4633 = vpop.f32.mrb[0].mxu0
    %v4634 = vadd.f32 0.0, %v4633
    %v4635 = vpop.f32.mrb[0].mxu0
    %4636 = vmatprep.mubr.f32.mxu0 0.0
    %4637 = vmatmul.mubr.f32.gmra.mrb[0].mxu0 %v4461
    %v4638 = vpop.f32.mrb[0].mxu0
    %v4639 = vadd.f32 0.0, %v4638
    %v4640 = vpop.f32.mrb[0].mxu0
    %4641 = vmatprep.mubr.f32.mxu0 0.0
    %4642 = vmatmul.mubr.f32.gmra.mrb[0].mxu0 %v4464
    %v4643 = vpop.f32.mrb[0].mxu0
    %v4644 = vadd.f32 0.0, %v4643
    %v4645 = vpop.f32.mrb[0].mxu0
    %4646 = vmatprep.mubr.f32.mxu0 0.0
    %4647 = vmatmul.mubr.f32.gmra.mrb[0].mxu0 %v4467
    %v4648 = vpop.f32.mrb[0].mxu0
    %v4649 = vadd.f32 0.0, %v4648
    %v4650 = vpop.f32.mrb[0].mxu0
    %4651 = vmatprep.mubr.f32.mxu0 0.0
    %4652 = vmatmul.mubr.f32.gmra.mrb[0].mxu0 %v4470
    %v4653 = vpop.f32.mrb[0].mxu0
    %v4654 = vadd.f32 0.0, %v4653
    %v4655 = vpop.f32.mrb[0].mxu0
    %4656 = vmatprep.mubr.f32.mxu0 0.0
    %4657 = vmatmul.mubr.f32.gmra.mrb[0].mxu0 %v4473
    %v4658 = vpop.f32.mrb[0].mxu0
    %v4659 = vadd.f32 0.0, %v4658
    %v4660 = vpop.f32.mrb[0].mxu0
    %4661 = vmatprep.mubr.f32.mxu0 0.0
    %4662 = vmatmul.mubr.f32.gmra.mrb[0].mxu0 %v4476
    %v4663 = vpop.f32.mrb[0].mxu0
    %v4664 = vadd.f32 0.0, %v4663
    %v4665 = vpop.f32.mrb[0].mxu0
    %4666 = vmatprep.mubr.f32.mxu0 0.0
    %4667 = vmatmul.mubr.f32.gmra.mrb[0].mxu0 %v4479
    %v4668 = vpop.f32.mrb[0].mxu0
    %v4669 = vadd.f32 0.0, %v4668
    %v4670 = vpop.f32.mrb[0].mxu0
    %4671 = vmatprep.mubr.f32.mxu0 0.0
    %4672 = vmatmul.mubr.f32.gmra.mrb[0].mxu0 %v4482
    %v4673 = vpop.f32.mrb[0].mxu0
    %v4674 = vadd.f32 0.0, %v4673
    %v4675 = vpop.f32.mrb[0].mxu0
    %4676 = vmatprep.mubr.f32.mxu0 0.0
    %4677 = vmatmul.mubr.f32.gmra.mrb[0].mxu0 %v4485
    %v4678 = vpop.f32.mrb[0].mxu0
    %v4679 = vadd.f32 0.0, %v4678
    %v4680 = vpop.f32.mrb[0].mxu0
    %4681 = vmatprep.mubr.f32.mxu0 0.0
    %4682 = vmatmul.mubr.f32.gmra.mrb[0].mxu0 %v4488
    %v4683 = vpop.f32.mrb[0].mxu0
    %v4684 = vadd.f32 0.0, %v4683
    %v4685 = vpop.f32.mrb[0].mxu0
    %4686 = vmatprep.mubr.f32.mxu0 0.0
    %4687 = vmatmul.mubr.f32.gmra.mrb[0].mxu0 %v4491
    %v4688 = vpop.f32.mrb[0].mxu0
    %v4689 = vadd.f32 0.0, %v4688
    %v4690 = vpop.f32.mrb[0].mxu0
    %4691 = vmatprep.mubr.f32.mxu0 0.0
    %4692 = vmatmul.mubr.f32.gmra.mrb[0].mxu0 %v4494
    %v4693 = vpop.f32.mrb[0].mxu0
    %v4694 = vadd.f32 0.0, %v4693
    %v4695 = vpop.f32.mrb[0].mxu0
    %4696 = vmatprep.mubr.f32.mxu0 0.0
    %4697 = vmatmul.mubr.f32.gmra.mrb[0].mxu0 %v4497
    %v4698 = vpop.f32.mrb[0].mxu0
    %v4699 = vadd.f32 0.0, %v4698
    %v4700 = vpop.f32.mrb[0].mxu0
    %4701 = vdwg.mxu0
    %v4702 = vadd.f32 %v3756, %v4569
    %v4703 = vadd.f32 %v3757, %v4574
    %v4704 = vadd.f32 %v3758, %v4579
    %v4705 = vadd.f32 %v3759, %v4584
    %v4706 = vadd.f32 %v3760, %v4589
    %v4707 = vadd.f32 %v3761, %v4594
    %v4708 = vadd.f32 %v3762, %v4599
    %v4709 = vadd.f32 %v3763, %v4604
    %v4710 = vadd.f32 %v3764, %v4609
    %v4711 = vadd.f32 %v3765, %v4614
    %v4712 = vadd.f32 %v3766, %v4619
    %v4713 = vadd.f32 %v3767, %v4624
    %v4714 = vadd.f32 %v3768, %v4629
    %v4715 = vadd.f32 %v3769, %v4634
    %v4716 = vadd.f32 %v3770, %v4639
    %v4717 = vadd.f32 %v3771, %v4644
    %v4718 = vadd.f32 %v3772, %v4649
    %v4719 = vadd.f32 %v3773, %v4654
    %v4720 = vadd.f32 %v3774, %v4659
    %v4721 = vadd.f32 %v3775, %v4664
    %v4722 = vadd.f32 %v3776, %v4669
    %v4723 = vadd.f32 %v3777, %v4674
    %v4724 = vadd.f32 %v3778, %v4679
    %v4725 = vadd.f32 %v3779, %v4684
    %v4726 = vadd.f32 %v3780, %v4689
    %v4727 = vadd.f32 %v3781, %v4694
    %v4728 = vadd.f32 %v3782, %v4699
    %s4729 = scalar_lea.vmem %s0, 1080
    %v4730 = vld [vmem:[%s4729] sm:$0xff]
    %v4731 = vld [vmem:[%s4729 + $0x8] sm:$0xff]
    %v4732 = vld [vmem:[%s4729 + $0x10] sm:$0xff]
    %v4733 = vld [vmem:[%s4729 + $0x18] sm:$0xff]
    %v4734 = vld [vmem:[%s4729 + $0x20] sm:$0xff]
    %v4735 = vld [vmem:[%s4729 + $0x28] sm:$0xff]
    %v4736 = vld [vmem:[%s4729 + $0x30] sm:$0xff]
    %v4737 = vld [vmem:[%s4729 + $0x38] sm:$0xff]
    %v4738 = vld [vmem:[%s4729 + $0x40] sm:$0xff]
    %v4739 = vld [vmem:[%s4729 + $0x48] sm:$0xff]
    %v4740 = vld [vmem:[%s4729 + $0x50] sm:$0xff]
    %v4741 = vld [vmem:[%s4729 + $0x58] sm:$0xff]
    %v4742 = vld [vmem:[%s4729 + $0x60] sm:$0xff]
    %v4743 = vld [vmem:[%s4729 + $0x68] sm:$0xff]
    %v4744 = vld [vmem:[%s4729 + $0x70] sm:$0xff]
    %v4745 = vld [vmem:[%s4729 + $0x78] sm:$0xff]
    %v4746 = vld [vmem:[%s4729 + $0x80] sm:$0xff]
    %v4747 = vld [vmem:[%s4729 + $0x88] sm:$0xff]
    %v4748 = vld [vmem:[%s4729 + $0x90] sm:$0xff]
    %v4749 = vld [vmem:[%s4729 + $0x98] sm:$0xff]
    %v4750 = vld [vmem:[%s4729 + $0xa0] sm:$0xff]
    %v4751 = vld [vmem:[%s4729 + $0xa8] sm:$0xff]
    %v4752 = vld [vmem:[%s4729 + $0xb0] sm:$0xff]
    %v4753 = vld [vmem:[%s4729 + $0xb8] sm:$0xff]
    %v4754 = vld [vmem:[%s4729 + $0xc0] sm:$0xff]
    %v4755 = vld [vmem:[%s4729 + $0xc8] sm:$0xff]
    %v4756 = vld [vmem:[%s4729 + $0xd0] sm:$0x3]
    %v4758 = vsel %vm69, %v4730, 0
    %v4761 = vsel %vm69, %v4731, 0
    %v4764 = vsel %vm69, %v4732, 0
    %v4767 = vsel %vm69, %v4733, 0
    %v4770 = vsel %vm69, %v4734, 0
    %v4773 = vsel %vm69, %v4735, 0
    %v4776 = vsel %vm69, %v4736, 0
    %v4779 = vsel %vm69, %v4737, 0
    %v4782 = vsel %vm69, %v4738, 0
    %v4785 = vsel %vm69, %v4739, 0
    %v4788 = vsel %vm69, %v4740, 0
    %v4791 = vsel %vm69, %v4741, 0
    %v4794 = vsel %vm69, %v4742, 0
    %v4797 = vsel %vm69, %v4743, 0
    %v4800 = vsel %vm69, %v4744, 0
    %v4803 = vsel %vm69, %v4745, 0
    %v4806 = vsel %vm69, %v4746, 0
    %v4809 = vsel %vm69, %v4747, 0
    %v4812 = vsel %vm69, %v4748, 0
    %v4815 = vsel %vm69, %v4749, 0
    %v4818 = vsel %vm69, %v4750, 0
    %v4821 = vsel %vm69, %v4751, 0
    %v4824 = vsel %vm69, %v4752, 0
    %v4827 = vsel %vm69, %v4753, 0
    %v4830 = vsel %vm69, %v4754, 0
    %v4833 = vsel %vm69, %v4755, 0
    %v4836 = vsel %vm69, %v4756, 0
    %4838 = vmatprep.subr.mxu0 0.0
    %4839 = vmatpush1.msra.mxu0 %v67
    %4840 = vmatprep.subr.mxu0 0.0
    %4841 = vmatpush1.msra.mxu0 %v153
    %4842 = vmatprep.subr.mxu0 0.0
    %4843 = vmatpush1.msra.mxu0 0.0
    %4844 = vmatprep.subr.mxu0 0.0
    %4845 = vmatpush1.msra.mxu0 0.0
    %4846 = vmatprep.subr.mxu0 0.0
    %4847 = vmatpush1.msra.mxu0 0.0
    %4848 = vmatprep.subr.mxu0 0.0
    %4849 = vmatpush1.msra.mxu0 0.0
    %4850 = vmatprep.subr.mxu0 0.0
    %4851 = vmatpush1.msra.mxu0 0.0
    %4852 = vmatprep.subr.mxu0 0.0
    %4853 = vmatpush1.msra.mxu0 0.0
    %4854 = vmatprep.subr.mxu0 0.0
    %4855 = vmatpush1.msra.mxu0 0.0
    %4856 = vmatprep.subr.mxu0 0.0
    %4857 = vmatpush1.msra.mxu0 0.0
    %4858 = vmatprep.subr.mxu0 0.0
    %4859 = vmatpush1.msra.mxu0 0.0
    %4860 = vmatprep.subr.mxu0 0.0
    %4861 = vmatpush1.msra.mxu0 0.0
    %4862 = vmatprep.subr.mxu0 0.0
    %4863 = vmatpush1.msra.mxu0 0.0
    %4864 = vmatprep.subr.mxu0 0.0
    %4865 = vmatpush1.msra.mxu0 0.0
    %4866 = vmatprep.subr.mxu0 0.0
    %4867 = vmatpush1.msra.mxu0 0.0
    %4868 = vmatprep.subr.mxu0 0.0
    %4869 = vmatpush1.msra.mxu0 0.0
    %4870 = vmatprep.subr.mxu0 0.0
    %4871 = vmatpush1.msra.mxu0 0.0
    %4872 = vmatprep.subr.mxu0 0.0
    %4873 = vmatpush1.msra.mxu0 0.0
    %4874 = vmatprep.subr.mxu0 0.0
    %4875 = vmatpush1.msra.mxu0 0.0
    %4876 = vmatprep.subr.mxu0 0.0
    %4877 = vmatpush1.msra.mxu0 0.0
    %4878 = vmatprep.subr.mxu0 0.0
    %4879 = vmatpush1.msra.mxu0 0.0
    %4880 = vmatprep.subr.mxu0 0.0
    %4881 = vmatpush1.msra.mxu0 0.0
    %4882 = vmatprep.subr.mxu0 0.0
    %4883 = vmatpush1.msra.mxu0 0.0
    %4884 = vmatprep.subr.mxu0 0.0
    %4885 = vmatpush1.msra.mxu0 0.0
    %4886 = vmatprep.subr.mxu0 0.0
    %4887 = vmatpush1.msra.mxu0 0.0
    %4888 = vmatprep.subr.mxu0 0.0
    %4889 = vmatpush1.msra.mxu0 0.0
    %4890 = vmatprep.subr.mxu0 0.0
    %4891 = vmatpush1.msra.mxu0 0.0
    %4892 = vmatprep.subr.mxu0 0.0
    %4893 = vmatpush1.msra.mxu0 0.0
    %4894 = vmatprep.subr.mxu0 0.0
    %4895 = vmatpush1.msra.mxu0 0.0
    %4896 = vmatprep.subr.mxu0 0.0
    %4897 = vmatpush1.msra.mxu0 0.0
    %4898 = vmatprep.subr.mxu0 0.0
    %4899 = vmatpush1.msra.mxu0 0.0
    %4900 = vmatprep.subr.mxu0 0.0
    %4901 = vmatpush1.msra.mxu0 0.0
    %4902 = vmatprep.mubr.f32.mxu0 0.0
    %4903 = vmatmul.mubr.f32.gmra.mrb[0].mxu0 %v4758
    %v4904 = vpop.f32.mrb[0].mxu0
    %v4905 = vadd.f32 0.0, %v4904
    %v4906 = vpop.f32.mrb[0].mxu0
    %4907 = vmatprep.mubr.f32.mxu0 0.0
    %4908 = vmatmul.mubr.f32.gmra.mrb[0].mxu0 %v4761
    %v4909 = vpop.f32.mrb[0].mxu0
    %v4910 = vadd.f32 0.0, %v4909
    %v4911 = vpop.f32.mrb[0].mxu0
    %4912 = vmatprep.mubr.f32.mxu0 0.0
    %4913 = vmatmul.mubr.f32.gmra.mrb[0].mxu0 %v4764
    %v4914 = vpop.f32.mrb[0].mxu0
    %v4915 = vadd.f32 0.0, %v4914
    %v4916 = vpop.f32.mrb[0].mxu0
    %4917 = vmatprep.mubr.f32.mxu0 0.0
    %4918 = vmatmul.mubr.f32.gmra.mrb[0].mxu0 %v4767
    %v4919 = vpop.f32.mrb[0].mxu0
    %v4920 = vadd.f32 0.0, %v4919
    %v4921 = vpop.f32.mrb[0].mxu0
    %4922 = vmatprep.mubr.f32.mxu0 0.0
    %4923 = vmatmul.mubr.f32.gmra.mrb[0].mxu0 %v4770
    %v4924 = vpop.f32.mrb[0].mxu0
    %v4925 = vadd.f32 0.0, %v4924
    %v4926 = vpop.f32.mrb[0].mxu0
    %4927 = vmatprep.mubr.f32.mxu0 0.0
    %4928 = vmatmul.mubr.f32.gmra.mrb[0].mxu0 %v4773
    %v4929 = vpop.f32.mrb[0].mxu0
    %v4930 = vadd.f32 0.0, %v4929
    %v4931 = vpop.f32.mrb[0].mxu0
    %4932 = vmatprep.mubr.f32.mxu0 0.0
    %4933 = vmatmul.mubr.f32.gmra.mrb[0].mxu0 %v4776
    %v4934 = vpop.f32.mrb[0].mxu0
    %v4935 = vadd.f32 0.0, %v4934
    %v4936 = vpop.f32.mrb[0].mxu0
    %4937 = vmatprep.mubr.f32.mxu0 0.0
    %4938 = vmatmul.mubr.f32.gmra.mrb[0].mxu0 %v4779
    %v4939 = vpop.f32.mrb[0].mxu0
    %v4940 = vadd.f32 0.0, %v4939
    %v4941 = vpop.f32.mrb[0].mxu0
    %4942 = vmatprep.mubr.f32.mxu0 0.0
    %4943 = vmatmul.mubr.f32.gmra.mrb[0].mxu0 %v4782
    %v4944 = vpop.f32.mrb[0].mxu0
    %v4945 = vadd.f32 0.0, %v4944
    %v4946 = vpop.f32.mrb[0].mxu0
    %4947 = vmatprep.mubr.f32.mxu0 0.0
    %4948 = vmatmul.mubr.f32.gmra.mrb[0].mxu0 %v4785
    %v4949 = vpop.f32.mrb[0].mxu0
    %v4950 = vadd.f32 0.0, %v4949
    %v4951 = vpop.f32.mrb[0].mxu0
    %4952 = vmatprep.mubr.f32.mxu0 0.0
    %4953 = vmatmul.mubr.f32.gmra.mrb[0].mxu0 %v4788
    %v4954 = vpop.f32.mrb[0].mxu0
    %v4955 = vadd.f32 0.0, %v4954
    %v4956 = vpop.f32.mrb[0].mxu0
    %4957 = vmatprep.mubr.f32.mxu0 0.0
    %4958 = vmatmul.mubr.f32.gmra.mrb[0].mxu0 %v4791
    %v4959 = vpop.f32.mrb[0].mxu0
    %v4960 = vadd.f32 0.0, %v4959
    %v4961 = vpop.f32.mrb[0].mxu0
    %4962 = vmatprep.mubr.f32.mxu0 0.0
    %4963 = vmatmul.mubr.f32.gmra.mrb[0].mxu0 %v4794
    %v4964 = vpop.f32.mrb[0].mxu0
    %v4965 = vadd.f32 0.0, %v4964
    %v4966 = vpop.f32.mrb[0].mxu0
    %4967 = vmatprep.mubr.f32.mxu0 0.0
    %4968 = vmatmul.mubr.f32.gmra.mrb[0].mxu0 %v4797
    %v4969 = vpop.f32.mrb[0].mxu0
    %v4970 = vadd.f32 0.0, %v4969
    %v4971 = vpop.f32.mrb[0].mxu0
    %4972 = vmatprep.mubr.f32.mxu0 0.0
    %4973 = vmatmul.mubr.f32.gmra.mrb[0].mxu0 %v4800
    %v4974 = vpop.f32.mrb[0].mxu0
    %v4975 = vadd.f32 0.0, %v4974
    %v4976 = vpop.f32.mrb[0].mxu0
    %4977 = vmatprep.mubr.f32.mxu0 0.0
    %4978 = vmatmul.mubr.f32.gmra.mrb[0].mxu0 %v4803
    %v4979 = vpop.f32.mrb[0].mxu0
    %v4980 = vadd.f32 0.0, %v4979
    %v4981 = vpop.f32.mrb[0].mxu0
    %4982 = vmatprep.mubr.f32.mxu0 0.0
    %4983 = vmatmul.mubr.f32.gmra.mrb[0].mxu0 %v4806
    %v4984 = vpop.f32.mrb[0].mxu0
    %v4985 = vadd.f32 0.0, %v4984
    %v4986 = vpop.f32.mrb[0].mxu0
    %4987 = vmatprep.mubr.f32.mxu0 0.0
    %4988 = vmatmul.mubr.f32.gmra.mrb[0].mxu0 %v4809
    %v4989 = vpop.f32.mrb[0].mxu0
    %v4990 = vadd.f32 0.0, %v4989
    %v4991 = vpop.f32.mrb[0].mxu0
    %4992 = vmatprep.mubr.f32.mxu0 0.0
    %4993 = vmatmul.mubr.f32.gmra.mrb[0].mxu0 %v4812
    %v4994 = vpop.f32.mrb[0].mxu0
    %v4995 = vadd.f32 0.0, %v4994
    %v4996 = vpop.f32.mrb[0].mxu0
    %4997 = vmatprep.mubr.f32.mxu0 0.0
    %4998 = vmatmul.mubr.f32.gmra.mrb[0].mxu0 %v4815
    %v4999 = vpop.f32.mrb[0].mxu0
    %v5000 = vadd.f32 0.0, %v4999
    %v5001 = vpop.f32.mrb[0].mxu0
    %5002 = vmatprep.mubr.f32.mxu0 0.0
    %5003 = vmatmul.mubr.f32.gmra.mrb[0].mxu0 %v4818
    %v5004 = vpop.f32.mrb[0].mxu0
    %v5005 = vadd.f32 0.0, %v5004
    %v5006 = vpop.f32.mrb[0].mxu0
    %5007 = vmatprep.mubr.f32.mxu0 0.0
    %5008 = vmatmul.mubr.f32.gmra.mrb[0].mxu0 %v4821
    %v5009 = vpop.f32.mrb[0].mxu0
    %v5010 = vadd.f32 0.0, %v5009
    %v5011 = vpop.f32.mrb[0].mxu0
    %5012 = vmatprep.mubr.f32.mxu0 0.0
    %5013 = vmatmul.mubr.f32.gmra.mrb[0].mxu0 %v4824
    %v5014 = vpop.f32.mrb[0].mxu0
    %v5015 = vadd.f32 0.0, %v5014
    %v5016 = vpop.f32.mrb[0].mxu0
    %5017 = vmatprep.mubr.f32.mxu0 0.0
    %5018 = vmatmul.mubr.f32.gmra.mrb[0].mxu0 %v4827
    %v5019 = vpop.f32.mrb[0].mxu0
    %v5020 = vadd.f32 0.0, %v5019
    %v5021 = vpop.f32.mrb[0].mxu0
    %5022 = vmatprep.mubr.f32.mxu0 0.0
    %5023 = vmatmul.mubr.f32.gmra.mrb[0].mxu0 %v4830
    %v5024 = vpop.f32.mrb[0].mxu0
    %v5025 = vadd.f32 0.0, %v5024
    %v5026 = vpop.f32.mrb[0].mxu0
    %5027 = vmatprep.mubr.f32.mxu0 0.0
    %5028 = vmatmul.mubr.f32.gmra.mrb[0].mxu0 %v4833
    %v5029 = vpop.f32.mrb[0].mxu0
    %v5030 = vadd.f32 0.0, %v5029
    %v5031 = vpop.f32.mrb[0].mxu0
    %5032 = vmatprep.mubr.f32.mxu0 0.0
    %5033 = vmatmul.mubr.f32.gmra.mrb[0].mxu0 %v4836
    %v5034 = vpop.f32.mrb[0].mxu0
    %v5035 = vadd.f32 0.0, %v5034
    %v5036 = vpop.f32.mrb[0].mxu0
    %5037 = vdwg.mxu0
    %5065 = vrot.lane.b32.xlu0 %v4905, 123
    %v5066 = vpop.permute.xlu0 %5065
    %5067 = vrot.lane.b32.xlu0 %v4910, 123
    %v5068 = vpop.permute.xlu0 %5067
    %5069 = vrot.lane.b32.xlu0 %v4915, 123
    %v5070 = vpop.permute.xlu0 %5069
    %5071 = vrot.lane.b32.xlu0 %v4920, 123
    %v5072 = vpop.permute.xlu0 %5071
    %5073 = vrot.lane.b32.xlu0 %v4925, 123
    %v5074 = vpop.permute.xlu0 %5073
    %5075 = vrot.lane.b32.xlu0 %v4930, 123
    %v5076 = vpop.permute.xlu0 %5075
    %5077 = vrot.lane.b32.xlu0 %v4935, 123
    %v5078 = vpop.permute.xlu0 %5077
    %5079 = vrot.lane.b32.xlu0 %v4940, 123
    %v5080 = vpop.permute.xlu0 %5079
    %5081 = vrot.lane.b32.xlu0 %v4945, 123
    %v5082 = vpop.permute.xlu0 %5081
    %5083 = vrot.lane.b32.xlu0 %v4950, 123
    %v5084 = vpop.permute.xlu0 %5083
    %5085 = vrot.lane.b32.xlu0 %v4955, 123
    %v5086 = vpop.permute.xlu0 %5085
    %5087 = vrot.lane.b32.xlu0 %v4960, 123
    %v5088 = vpop.permute.xlu0 %5087
    %5089 = vrot.lane.b32.xlu0 %v4965, 123
    %v5090 = vpop.permute.xlu0 %5089
    %5091 = vrot.lane.b32.xlu0 %v4970, 123
    %v5092 = vpop.permute.xlu0 %5091
    %5093 = vrot.lane.b32.xlu0 %v4975, 123
    %v5094 = vpop.permute.xlu0 %5093
    %5095 = vrot.lane.b32.xlu0 %v4980, 123
    %v5096 = vpop.permute.xlu0 %5095
    %5097 = vrot.lane.b32.xlu0 %v4985, 123
    %v5098 = vpop.permute.xlu0 %5097
    %5099 = vrot.lane.b32.xlu0 %v4990, 123
    %v5100 = vpop.permute.xlu0 %5099
    %5101 = vrot.lane.b32.xlu0 %v4995, 123
    %v5102 = vpop.permute.xlu0 %5101
    %5103 = vrot.lane.b32.xlu0 %v5000, 123
    %v5104 = vpop.permute.xlu0 %5103
    %5105 = vrot.lane.b32.xlu0 %v5005, 123
    %v5106 = vpop.permute.xlu0 %5105
    %5107 = vrot.lane.b32.xlu0 %v5010, 123
    %v5108 = vpop.permute.xlu0 %5107
    %5109 = vrot.lane.b32.xlu0 %v5015, 123
    %v5110 = vpop.permute.xlu0 %5109
    %5111 = vrot.lane.b32.xlu0 %v5020, 123
    %v5112 = vpop.permute.xlu0 %5111
    %5113 = vrot.lane.b32.xlu0 %v5025, 123
    %v5114 = vpop.permute.xlu0 %5113
    %5115 = vrot.lane.b32.xlu0 %v5030, 123
    %v5116 = vpop.permute.xlu0 %5115
    %5117 = vrot.lane.b32.xlu0 %v5035, 123
    %v5118 = vpop.permute.xlu0 %5117
    %v5146 = vmax.f32 %v4905, %v5066
    %v5147 = vmax.f32 %v4910, %v5068
    %v5148 = vmax.f32 %v4915, %v5070
    %v5149 = vmax.f32 %v4920, %v5072
    %v5150 = vmax.f32 %v4925, %v5074
    %v5151 = vmax.f32 %v4930, %v5076
    %v5152 = vmax.f32 %v4935, %v5078
    %v5153 = vmax.f32 %v4940, %v5080
    %v5154 = vmax.f32 %v4945, %v5082
    %v5155 = vmax.f32 %v4950, %v5084
    %v5156 = vmax.f32 %v4955, %v5086
    %v5157 = vmax.f32 %v4960, %v5088
    %v5158 = vmax.f32 %v4965, %v5090
    %v5159 = vmax.f32 %v4970, %v5092
    %v5160 = vmax.f32 %v4975, %v5094
    %v5161 = vmax.f32 %v4980, %v5096
    %v5162 = vmax.f32 %v4985, %v5098
    %v5163 = vmax.f32 %v4990, %v5100
    %v5164 = vmax.f32 %v4995, %v5102
    %v5165 = vmax.f32 %v5000, %v5104
    %v5166 = vmax.f32 %v5005, %v5106
    %v5167 = vmax.f32 %v5010, %v5108
    %v5168 = vmax.f32 %v5015, %v5110
    %v5169 = vmax.f32 %v5020, %v5112
    %v5170 = vmax.f32 %v5025, %v5114
    %v5171 = vmax.f32 %v5030, %v5116
    %v5172 = vmax.f32 %v5035, %v5118
    %5200 = vrot.lane.b32.xlu0 %v5146, 118
    %v5201 = vpop.permute.xlu0 %5200
    %5202 = vrot.lane.b32.xlu0 %v5147, 118
    %v5203 = vpop.permute.xlu0 %5202
    %5204 = vrot.lane.b32.xlu0 %v5148, 118
    %v5205 = vpop.permute.xlu0 %5204
    %5206 = vrot.lane.b32.xlu0 %v5149, 118
    %v5207 = vpop.permute.xlu0 %5206
    %5208 = vrot.lane.b32.xlu0 %v5150, 118
    %v5209 = vpop.permute.xlu0 %5208
    %5210 = vrot.lane.b32.xlu0 %v5151, 118
    %v5211 = vpop.permute.xlu0 %5210
    %5212 = vrot.lane.b32.xlu0 %v5152, 118
    %v5213 = vpop.permute.xlu0 %5212
    %5214 = vrot.lane.b32.xlu0 %v5153, 118
    %v5215 = vpop.permute.xlu0 %5214
    %5216 = vrot.lane.b32.xlu0 %v5154, 118
    %v5217 = vpop.permute.xlu0 %5216
    %5218 = vrot.lane.b32.xlu0 %v5155, 118
    %v5219 = vpop.permute.xlu0 %5218
    %5220 = vrot.lane.b32.xlu0 %v5156, 118
    %v5221 = vpop.permute.xlu0 %5220
    %5222 = vrot.lane.b32.xlu0 %v5157, 118
    %v5223 = vpop.permute.xlu0 %5222
    %5224 = vrot.lane.b32.xlu0 %v5158, 118
    %v5225 = vpop.permute.xlu0 %5224
    %5226 = vrot.lane.b32.xlu0 %v5159, 118
    %v5227 = vpop.permute.xlu0 %5226
    %5228 = vrot.lane.b32.xlu0 %v5160, 118
    %v5229 = vpop.permute.xlu0 %5228
    %5230 = vrot.lane.b32.xlu0 %v5161, 118
    %v5231 = vpop.permute.xlu0 %5230
    %5232 = vrot.lane.b32.xlu0 %v5162, 118
    %v5233 = vpop.permute.xlu0 %5232
    %5234 = vrot.lane.b32.xlu0 %v5163, 118
    %v5235 = vpop.permute.xlu0 %5234
    %5236 = vrot.lane.b32.xlu0 %v5164, 118
    %v5237 = vpop.permute.xlu0 %5236
    %5238 = vrot.lane.b32.xlu0 %v5165, 118
    %v5239 = vpop.permute.xlu0 %5238
    %5240 = vrot.lane.b32.xlu0 %v5166, 118
    %v5241 = vpop.permute.xlu0 %5240
    %5242 = vrot.lane.b32.xlu0 %v5167, 118
    %v5243 = vpop.permute.xlu0 %5242
    %5244 = vrot.lane.b32.xlu0 %v5168, 118
    %v5245 = vpop.permute.xlu0 %5244
    %5246 = vrot.lane.b32.xlu0 %v5169, 118
    %v5247 = vpop.permute.xlu0 %5246
    %5248 = vrot.lane.b32.xlu0 %v5170, 118
    %v5249 = vpop.permute.xlu0 %5248
    %5250 = vrot.lane.b32.xlu0 %v5171, 118
    %v5251 = vpop.permute.xlu0 %5250
    %5252 = vrot.lane.b32.xlu0 %v5172, 118
    %v5253 = vpop.permute.xlu0 %5252
    %v5281 = vmax.f32 %v5146, %v5201
    %v5282 = vmax.f32 %v5147, %v5203
    %v5283 = vmax.f32 %v5148, %v5205
    %v5284 = vmax.f32 %v5149, %v5207
    %v5285 = vmax.f32 %v5150, %v5209
    %v5286 = vmax.f32 %v5151, %v5211
    %v5287 = vmax.f32 %v5152, %v5213
    %v5288 = vmax.f32 %v5153, %v5215
    %v5289 = vmax.f32 %v5154, %v5217
    %v5290 = vmax.f32 %v5155, %v5219
    %v5291 = vmax.f32 %v5156, %v5221
    %v5292 = vmax.f32 %v5157, %v5223
    %v5293 = vmax.f32 %v5158, %v5225
    %v5294 = vmax.f32 %v5159, %v5227
    %v5295 = vmax.f32 %v5160, %v5229
    %v5296 = vmax.f32 %v5161, %v5231
    %v5297 = vmax.f32 %v5162, %v5233
    %v5298 = vmax.f32 %v5163, %v5235
    %v5299 = vmax.f32 %v5164, %v5237
    %v5300 = vmax.f32 %v5165, %v5239
    %v5301 = vmax.f32 %v5166, %v5241
    %v5302 = vmax.f32 %v5167, %v5243
    %v5303 = vmax.f32 %v5168, %v5245
    %v5304 = vmax.f32 %v5169, %v5247
    %v5305 = vmax.f32 %v5170, %v5249
    %v5306 = vmax.f32 %v5171, %v5251
    %v5307 = vmax.f32 %v5172, %v5253
    %v5308 = vadd.f32 %v5281, %v629
    %v5309 = vadd.f32 %v5282, %v629
    %v5310 = vadd.f32 %v5283, %v629
    %v5311 = vadd.f32 %v5284, %v629
    %v5312 = vadd.f32 %v5285, %v629
    %v5313 = vadd.f32 %v5286, %v629
    %v5314 = vadd.f32 %v5287, %v629
    %v5315 = vadd.f32 %v5288, %v629
    %v5316 = vadd.f32 %v5289, %v629
    %v5317 = vadd.f32 %v5290, %v629
    %v5318 = vadd.f32 %v5291, %v629
    %v5319 = vadd.f32 %v5292, %v629
    %v5320 = vadd.f32 %v5293, %v629
    %v5321 = vadd.f32 %v5294, %v629
    %v5322 = vadd.f32 %v5295, %v629
    %v5323 = vadd.f32 %v5296, %v629
    %v5324 = vadd.f32 %v5297, %v629
    %v5325 = vadd.f32 %v5298, %v629
    %v5326 = vadd.f32 %v5299, %v629
    %v5327 = vadd.f32 %v5300, %v629
    %v5328 = vadd.f32 %v5301, %v629
    %v5329 = vadd.f32 %v5302, %v629
    %v5330 = vadd.f32 %v5303, %v629
    %v5331 = vadd.f32 %v5304, %v629
    %v5332 = vadd.f32 %v5305, %v629
    %v5333 = vadd.f32 %v5306, %v629
    %v5334 = vadd.f32 %v5307, %v629
    %v5335 = vmax.f32 %v5308, 0.0
    %v5336 = vmax.f32 %v5309, 0.0
    %v5337 = vmax.f32 %v5310, 0.0
    %v5338 = vmax.f32 %v5311, 0.0
    %v5339 = vmax.f32 %v5312, 0.0
    %v5340 = vmax.f32 %v5313, 0.0
    %v5341 = vmax.f32 %v5314, 0.0
    %v5342 = vmax.f32 %v5315, 0.0
    %v5343 = vmax.f32 %v5316, 0.0
    %v5344 = vmax.f32 %v5317, 0.0
    %v5345 = vmax.f32 %v5318, 0.0
    %v5346 = vmax.f32 %v5319, 0.0
    %v5347 = vmax.f32 %v5320, 0.0
    %v5348 = vmax.f32 %v5321, 0.0
    %v5349 = vmax.f32 %v5322, 0.0
    %v5350 = vmax.f32 %v5323, 0.0
    %v5351 = vmax.f32 %v5324, 0.0
    %v5352 = vmax.f32 %v5325, 0.0
    %v5353 = vmax.f32 %v5326, 0.0
    %v5354 = vmax.f32 %v5327, 0.0
    %v5355 = vmax.f32 %v5328, 0.0
    %v5356 = vmax.f32 %v5329, 0.0
    %v5357 = vmax.f32 %v5330, 0.0
    %v5358 = vmax.f32 %v5331, 0.0
    %v5359 = vmax.f32 %v5332, 0.0
    %v5360 = vmax.f32 %v5333, 0.0
    %v5361 = vmax.f32 %v5334, 0.0
    %s5362 = scalar_lea.vmem %s3, 40
    %v5363 = vld [vmem:[%s5362] sm:$0x1f]
    %v5365 = vsel %vm1321, %v5335, 0
    %v5368 = vsel %vm1321, %v5336, 0
    %v5371 = vsel %vm1321, %v5337, 0
    %v5374 = vsel %vm1321, %v5338, 0
    %v5377 = vsel %vm1321, %v5339, 0
    %v5380 = vsel %vm1321, %v5340, 0
    %v5383 = vsel %vm1321, %v5341, 0
    %v5386 = vsel %vm1321, %v5342, 0
    %v5389 = vsel %vm1321, %v5343, 0
    %v5392 = vsel %vm1321, %v5344, 0
    %v5395 = vsel %vm1321, %v5345, 0
    %v5398 = vsel %vm1321, %v5346, 0
    %v5401 = vsel %vm1321, %v5347, 0
    %v5404 = vsel %vm1321, %v5348, 0
    %v5407 = vsel %vm1321, %v5349, 0
    %v5410 = vsel %vm1321, %v5350, 0
    %v5413 = vsel %vm1321, %v5351, 0
    %v5416 = vsel %vm1321, %v5352, 0
    %v5419 = vsel %vm1321, %v5353, 0
    %v5422 = vsel %vm1321, %v5354, 0
    %v5425 = vsel %vm1321, %v5355, 0
    %v5428 = vsel %vm1321, %v5356, 0
    %v5431 = vsel %vm1321, %v5357, 0
    %v5434 = vsel %vm1321, %v5358, 0
    %v5437 = vsel %vm1321, %v5359, 0
    %v5440 = vsel %vm1321, %v5360, 0
    %v5443 = vsel %vm1321, %v5361, 0
    %v5446 = vsel %vm1403, %v5363, 0
    %5448 = vmatprep.subr.mxu0 0.0
    %5449 = vmatpush1.msra.mxu0 %v5446
    %5450 = vmatprep.subr.mxu0 0.0
    %5451 = vmatpush1.msra.mxu0 0.0
    %5452 = vmatprep.subr.mxu0 0.0
    %5453 = vmatpush1.msra.mxu0 0.0
    %5454 = vmatprep.subr.mxu0 0.0
    %5455 = vmatpush1.msra.mxu0 0.0
    %5456 = vmatprep.subr.mxu0 0.0
    %5457 = vmatpush1.msra.mxu0 0.0
    %5458 = vmatprep.subr.mxu0 0.0
    %5459 = vmatpush1.msra.mxu0 0.0
    %5460 = vmatprep.subr.mxu0 0.0
    %5461 = vmatpush1.msra.mxu0 0.0
    %5462 = vmatprep.subr.mxu0 0.0
    %5463 = vmatpush1.msra.mxu0 0.0
    %5464 = vmatprep.subr.mxu0 0.0
    %5465 = vmatpush1.msra.mxu0 0.0
    %5466 = vmatprep.subr.mxu0 0.0
    %5467 = vmatpush1.msra.mxu0 0.0
    %5468 = vmatprep.subr.mxu0 0.0
    %5469 = vmatpush1.msra.mxu0 0.0
    %5470 = vmatprep.subr.mxu0 0.0
    %5471 = vmatpush1.msra.mxu0 0.0
    %5472 = vmatprep.subr.mxu0 0.0
    %5473 = vmatpush1.msra.mxu0 0.0
    %5474 = vmatprep.subr.mxu0 0.0
    %5475 = vmatpush1.msra.mxu0 0.0
    %5476 = vmatprep.subr.mxu0 0.0
    %5477 = vmatpush1.msra.mxu0 0.0
    %5478 = vmatprep.subr.mxu0 0.0
    %5479 = vmatpush1.msra.mxu0 0.0
    %5480 = vmatprep.subr.mxu0 0.0
    %5481 = vmatpush1.msra.mxu0 0.0
    %5482 = vmatprep.subr.mxu0 0.0
    %5483 = vmatpush1.msra.mxu0 0.0
    %5484 = vmatprep.subr.mxu0 0.0
    %5485 = vmatpush1.msra.mxu0 0.0
    %5486 = vmatprep.subr.mxu0 0.0
    %5487 = vmatpush1.msra.mxu0 0.0
    %5488 = vmatprep.subr.mxu0 0.0
    %5489 = vmatpush1.msra.mxu0 0.0
    %5490 = vmatprep.subr.mxu0 0.0
    %5491 = vmatpush1.msra.mxu0 0.0
    %5492 = vmatprep.subr.mxu0 0.0
    %5493 = vmatpush1.msra.mxu0 0.0
    %5494 = vmatprep.subr.mxu0 0.0
    %5495 = vmatpush1.msra.mxu0 0.0
    %5496 = vmatprep.subr.mxu0 0.0
    %5497 = vmatpush1.msra.mxu0 0.0
    %5498 = vmatprep.subr.mxu0 0.0
    %5499 = vmatpush1.msra.mxu0 0.0
    %5500 = vmatprep.subr.mxu0 0.0
    %5501 = vmatpush1.msra.mxu0 0.0
    %5502 = vmatprep.subr.mxu0 0.0
    %5503 = vmatpush1.msra.mxu0 0.0
    %5504 = vmatprep.subr.mxu0 0.0
    %5505 = vmatpush1.msra.mxu0 0.0
    %5506 = vmatprep.subr.mxu0 0.0
    %5507 = vmatpush1.msra.mxu0 0.0
    %5508 = vmatprep.subr.mxu0 0.0
    %5509 = vmatpush1.msra.mxu0 0.0
    %5510 = vmatprep.subr.mxu0 0.0
    %5511 = vmatpush1.msra.mxu0 0.0
    %5512 = vmatprep.mubr.f32.mxu0 0.0
    %5513 = vmatmul.mubr.f32.gmra.mrb[0].mxu0 %v5365
    %v5514 = vpop.f32.mrb[0].mxu0
    %v5515 = vadd.f32 0.0, %v5514
    %v5516 = vpop.f32.mrb[0].mxu0
    %5517 = vmatprep.mubr.f32.mxu0 0.0
    %5518 = vmatmul.mubr.f32.gmra.mrb[0].mxu0 %v5368
    %v5519 = vpop.f32.mrb[0].mxu0
    %v5520 = vadd.f32 0.0, %v5519
    %v5521 = vpop.f32.mrb[0].mxu0
    %5522 = vmatprep.mubr.f32.mxu0 0.0
    %5523 = vmatmul.mubr.f32.gmra.mrb[0].mxu0 %v5371
    %v5524 = vpop.f32.mrb[0].mxu0
    %v5525 = vadd.f32 0.0, %v5524
    %v5526 = vpop.f32.mrb[0].mxu0
    %5527 = vmatprep.mubr.f32.mxu0 0.0
    %5528 = vmatmul.mubr.f32.gmra.mrb[0].mxu0 %v5374
    %v5529 = vpop.f32.mrb[0].mxu0
    %v5530 = vadd.f32 0.0, %v5529
    %v5531 = vpop.f32.mrb[0].mxu0
    %5532 = vmatprep.mubr.f32.mxu0 0.0
    %5533 = vmatmul.mubr.f32.gmra.mrb[0].mxu0 %v5377
    %v5534 = vpop.f32.mrb[0].mxu0
    %v5535 = vadd.f32 0.0, %v5534
    %v5536 = vpop.f32.mrb[0].mxu0
    %5537 = vmatprep.mubr.f32.mxu0 0.0
    %5538 = vmatmul.mubr.f32.gmra.mrb[0].mxu0 %v5380
    %v5539 = vpop.f32.mrb[0].mxu0
    %v5540 = vadd.f32 0.0, %v5539
    %v5541 = vpop.f32.mrb[0].mxu0
    %5542 = vmatprep.mubr.f32.mxu0 0.0
    %5543 = vmatmul.mubr.f32.gmra.mrb[0].mxu0 %v5383
    %v5544 = vpop.f32.mrb[0].mxu0
    %v5545 = vadd.f32 0.0, %v5544
    %v5546 = vpop.f32.mrb[0].mxu0
    %5547 = vmatprep.mubr.f32.mxu0 0.0
    %5548 = vmatmul.mubr.f32.gmra.mrb[0].mxu0 %v5386
    %v5549 = vpop.f32.mrb[0].mxu0
    %v5550 = vadd.f32 0.0, %v5549
    %v5551 = vpop.f32.mrb[0].mxu0
    %5552 = vmatprep.mubr.f32.mxu0 0.0
    %5553 = vmatmul.mubr.f32.gmra.mrb[0].mxu0 %v5389
    %v5554 = vpop.f32.mrb[0].mxu0
    %v5555 = vadd.f32 0.0, %v5554
    %v5556 = vpop.f32.mrb[0].mxu0
    %5557 = vmatprep.mubr.f32.mxu0 0.0
    %5558 = vmatmul.mubr.f32.gmra.mrb[0].mxu0 %v5392
    %v5559 = vpop.f32.mrb[0].mxu0
    %v5560 = vadd.f32 0.0, %v5559
    %v5561 = vpop.f32.mrb[0].mxu0
    %5562 = vmatprep.mubr.f32.mxu0 0.0
    %5563 = vmatmul.mubr.f32.gmra.mrb[0].mxu0 %v5395
    %v5564 = vpop.f32.mrb[0].mxu0
    %v5565 = vadd.f32 0.0, %v5564
    %v5566 = vpop.f32.mrb[0].mxu0
    %5567 = vmatprep.mubr.f32.mxu0 0.0
    %5568 = vmatmul.mubr.f32.gmra.mrb[0].mxu0 %v5398
    %v5569 = vpop.f32.mrb[0].mxu0
    %v5570 = vadd.f32 0.0, %v5569
    %v5571 = vpop.f32.mrb[0].mxu0
    %5572 = vmatprep.mubr.f32.mxu0 0.0
    %5573 = vmatmul.mubr.f32.gmra.mrb[0].mxu0 %v5401
    %v5574 = vpop.f32.mrb[0].mxu0
    %v5575 = vadd.f32 0.0, %v5574
    %v5576 = vpop.f32.mrb[0].mxu0
    %5577 = vmatprep.mubr.f32.mxu0 0.0
    %5578 = vmatmul.mubr.f32.gmra.mrb[0].mxu0 %v5404
    %v5579 = vpop.f32.mrb[0].mxu0
    %v5580 = vadd.f32 0.0, %v5579
    %v5581 = vpop.f32.mrb[0].mxu0
    %5582 = vmatprep.mubr.f32.mxu0 0.0
    %5583 = vmatmul.mubr.f32.gmra.mrb[0].mxu0 %v5407
    %v5584 = vpop.f32.mrb[0].mxu0
    %v5585 = vadd.f32 0.0, %v5584
    %v5586 = vpop.f32.mrb[0].mxu0
    %5587 = vmatprep.mubr.f32.mxu0 0.0
    %5588 = vmatmul.mubr.f32.gmra.mrb[0].mxu0 %v5410
    %v5589 = vpop.f32.mrb[0].mxu0
    %v5590 = vadd.f32 0.0, %v5589
    %v5591 = vpop.f32.mrb[0].mxu0
    %5592 = vmatprep.mubr.f32.mxu0 0.0
    %5593 = vmatmul.mubr.f32.gmra.mrb[0].mxu0 %v5413
    %v5594 = vpop.f32.mrb[0].mxu0
    %v5595 = vadd.f32 0.0, %v5594
    %v5596 = vpop.f32.mrb[0].mxu0
    %5597 = vmatprep.mubr.f32.mxu0 0.0
    %5598 = vmatmul.mubr.f32.gmra.mrb[0].mxu0 %v5416
    %v5599 = vpop.f32.mrb[0].mxu0
    %v5600 = vadd.f32 0.0, %v5599
    %v5601 = vpop.f32.mrb[0].mxu0
    %5602 = vmatprep.mubr.f32.mxu0 0.0
    %5603 = vmatmul.mubr.f32.gmra.mrb[0].mxu0 %v5419
    %v5604 = vpop.f32.mrb[0].mxu0
    %v5605 = vadd.f32 0.0, %v5604
    %v5606 = vpop.f32.mrb[0].mxu0
    %5607 = vmatprep.mubr.f32.mxu0 0.0
    %5608 = vmatmul.mubr.f32.gmra.mrb[0].mxu0 %v5422
    %v5609 = vpop.f32.mrb[0].mxu0
    %v5610 = vadd.f32 0.0, %v5609
    %v5611 = vpop.f32.mrb[0].mxu0
    %5612 = vmatprep.mubr.f32.mxu0 0.0
    %5613 = vmatmul.mubr.f32.gmra.mrb[0].mxu0 %v5425
    %v5614 = vpop.f32.mrb[0].mxu0
    %v5615 = vadd.f32 0.0, %v5614
    %v5616 = vpop.f32.mrb[0].mxu0
    %5617 = vmatprep.mubr.f32.mxu0 0.0
    %5618 = vmatmul.mubr.f32.gmra.mrb[0].mxu0 %v5428
    %v5619 = vpop.f32.mrb[0].mxu0
    %v5620 = vadd.f32 0.0, %v5619
    %v5621 = vpop.f32.mrb[0].mxu0
    %5622 = vmatprep.mubr.f32.mxu0 0.0
    %5623 = vmatmul.mubr.f32.gmra.mrb[0].mxu0 %v5431
    %v5624 = vpop.f32.mrb[0].mxu0
    %v5625 = vadd.f32 0.0, %v5624
    %v5626 = vpop.f32.mrb[0].mxu0
    %5627 = vmatprep.mubr.f32.mxu0 0.0
    %5628 = vmatmul.mubr.f32.gmra.mrb[0].mxu0 %v5434
    %v5629 = vpop.f32.mrb[0].mxu0
    %v5630 = vadd.f32 0.0, %v5629
    %v5631 = vpop.f32.mrb[0].mxu0
    %5632 = vmatprep.mubr.f32.mxu0 0.0
    %5633 = vmatmul.mubr.f32.gmra.mrb[0].mxu0 %v5437
    %v5634 = vpop.f32.mrb[0].mxu0
    %v5635 = vadd.f32 0.0, %v5634
    %v5636 = vpop.f32.mrb[0].mxu0
    %5637 = vmatprep.mubr.f32.mxu0 0.0
    %5638 = vmatmul.mubr.f32.gmra.mrb[0].mxu0 %v5440
    %v5639 = vpop.f32.mrb[0].mxu0
    %v5640 = vadd.f32 0.0, %v5639
    %v5641 = vpop.f32.mrb[0].mxu0
    %5642 = vmatprep.mubr.f32.mxu0 0.0
    %5643 = vmatmul.mubr.f32.gmra.mrb[0].mxu0 %v5443
    %v5644 = vpop.f32.mrb[0].mxu0
    %v5645 = vadd.f32 0.0, %v5644
    %v5646 = vpop.f32.mrb[0].mxu0
    %5647 = vdwg.mxu0
    %v5648 = vadd.f32 %v4702, %v5515
    %v5649 = vadd.f32 %v4703, %v5520
    %v5650 = vadd.f32 %v4704, %v5525
    %v5651 = vadd.f32 %v4705, %v5530
    %v5652 = vadd.f32 %v4706, %v5535
    %v5653 = vadd.f32 %v4707, %v5540
    %v5654 = vadd.f32 %v4708, %v5545
    %v5655 = vadd.f32 %v4709, %v5550
    %v5656 = vadd.f32 %v4710, %v5555
    %v5657 = vadd.f32 %v4711, %v5560
    %v5658 = vadd.f32 %v4712, %v5565
    %v5659 = vadd.f32 %v4713, %v5570
    %v5660 = vadd.f32 %v4714, %v5575
    %v5661 = vadd.f32 %v4715, %v5580
    %v5662 = vadd.f32 %v4716, %v5585
    %v5663 = vadd.f32 %v4717, %v5590
    %v5664 = vadd.f32 %v4718, %v5595
    %v5665 = vadd.f32 %v4719, %v5600
    %v5666 = vadd.f32 %v4720, %v5605
    %v5667 = vadd.f32 %v4721, %v5610
    %v5668 = vadd.f32 %v4722, %v5615
    %v5669 = vadd.f32 %v4723, %v5620
    %v5670 = vadd.f32 %v4724, %v5625
    %v5671 = vadd.f32 %v4725, %v5630
    %v5672 = vadd.f32 %v4726, %v5635
    %v5673 = vadd.f32 %v4727, %v5640
    %v5674 = vadd.f32 %v4728, %v5645
    %s5675 = scalar_lea.vmem %s0, 1296
    %v5676 = vld [vmem:[%s5675] sm:$0xff]
    %v5677 = vld [vmem:[%s5675 + $0x8] sm:$0xff]
    %v5678 = vld [vmem:[%s5675 + $0x10] sm:$0xff]
    %v5679 = vld [vmem:[%s5675 + $0x18] sm:$0xff]
    %v5680 = vld [vmem:[%s5675 + $0x20] sm:$0xff]
    %v5681 = vld [vmem:[%s5675 + $0x28] sm:$0xff]
    %v5682 = vld [vmem:[%s5675 + $0x30] sm:$0xff]
    %v5683 = vld [vmem:[%s5675 + $0x38] sm:$0xff]
    %v5684 = vld [vmem:[%s5675 + $0x40] sm:$0xff]
    %v5685 = vld [vmem:[%s5675 + $0x48] sm:$0xff]
    %v5686 = vld [vmem:[%s5675 + $0x50] sm:$0xff]
    %v5687 = vld [vmem:[%s5675 + $0x58] sm:$0xff]
    %v5688 = vld [vmem:[%s5675 + $0x60] sm:$0xff]
    %v5689 = vld [vmem:[%s5675 + $0x68] sm:$0xff]
    %v5690 = vld [vmem:[%s5675 + $0x70] sm:$0xff]
    %v5691 = vld [vmem:[%s5675 + $0x78] sm:$0xff]
    %v5692 = vld [vmem:[%s5675 + $0x80] sm:$0xff]
    %v5693 = vld [vmem:[%s5675 + $0x88] sm:$0xff]
    %v5694 = vld [vmem:[%s5675 + $0x90] sm:$0xff]
    %v5695 = vld [vmem:[%s5675 + $0x98] sm:$0xff]
    %v5696 = vld [vmem:[%s5675 + $0xa0] sm:$0xff]
    %v5697 = vld [vmem:[%s5675 + $0xa8] sm:$0xff]
    %v5698 = vld [vmem:[%s5675 + $0xb0] sm:$0xff]
    %v5699 = vld [vmem:[%s5675 + $0xb8] sm:$0xff]
    %v5700 = vld [vmem:[%s5675 + $0xc0] sm:$0xff]
    %v5701 = vld [vmem:[%s5675 + $0xc8] sm:$0xff]
    %v5702 = vld [vmem:[%s5675 + $0xd0] sm:$0x3]
    %v5704 = vsel %vm69, %v5676, 0
    %v5707 = vsel %vm69, %v5677, 0
    %v5710 = vsel %vm69, %v5678, 0
    %v5713 = vsel %vm69, %v5679, 0
    %v5716 = vsel %vm69, %v5680, 0
    %v5719 = vsel %vm69, %v5681, 0
    %v5722 = vsel %vm69, %v5682, 0
    %v5725 = vsel %vm69, %v5683, 0
    %v5728 = vsel %vm69, %v5684, 0
    %v5731 = vsel %vm69, %v5685, 0
    %v5734 = vsel %vm69, %v5686, 0
    %v5737 = vsel %vm69, %v5687, 0
    %v5740 = vsel %vm69, %v5688, 0
    %v5743 = vsel %vm69, %v5689, 0
    %v5746 = vsel %vm69, %v5690, 0
    %v5749 = vsel %vm69, %v5691, 0
    %v5752 = vsel %vm69, %v5692, 0
    %v5755 = vsel %vm69, %v5693, 0
    %v5758 = vsel %vm69, %v5694, 0
    %v5761 = vsel %vm69, %v5695, 0
    %v5764 = vsel %vm69, %v5696, 0
    %v5767 = vsel %vm69, %v5697, 0
    %v5770 = vsel %vm69, %v5698, 0
    %v5773 = vsel %vm69, %v5699, 0
    %v5776 = vsel %vm69, %v5700, 0
    %v5779 = vsel %vm69, %v5701, 0
    %v5782 = vsel %vm69, %v5702, 0
    %5784 = vmatprep.subr.mxu0 0.0
    %5785 = vmatpush1.msra.mxu0 %v67
    %5786 = vmatprep.subr.mxu0 0.0
    %5787 = vmatpush1.msra.mxu0 %v153
    %5788 = vmatprep.subr.mxu0 0.0
    %5789 = vmatpush1.msra.mxu0 0.0
    %5790 = vmatprep.subr.mxu0 0.0
    %5791 = vmatpush1.msra.mxu0 0.0
    %5792 = vmatprep.subr.mxu0 0.0
    %5793 = vmatpush1.msra.mxu0 0.0
    %5794 = vmatprep.subr.mxu0 0.0
    %5795 = vmatpush1.msra.mxu0 0.0
    %5796 = vmatprep.subr.mxu0 0.0
    %5797 = vmatpush1.msra.mxu0 0.0
    %5798 = vmatprep.subr.mxu0 0.0
    %5799 = vmatpush1.msra.mxu0 0.0
    %5800 = vmatprep.subr.mxu0 0.0
    %5801 = vmatpush1.msra.mxu0 0.0
    %5802 = vmatprep.subr.mxu0 0.0
    %5803 = vmatpush1.msra.mxu0 0.0
    %5804 = vmatprep.subr.mxu0 0.0
    %5805 = vmatpush1.msra.mxu0 0.0
    %5806 = vmatprep.subr.mxu0 0.0
    %5807 = vmatpush1.msra.mxu0 0.0
    %5808 = vmatprep.subr.mxu0 0.0
    %5809 = vmatpush1.msra.mxu0 0.0
    %5810 = vmatprep.subr.mxu0 0.0
    %5811 = vmatpush1.msra.mxu0 0.0
    %5812 = vmatprep.subr.mxu0 0.0
    %5813 = vmatpush1.msra.mxu0 0.0
    %5814 = vmatprep.subr.mxu0 0.0
    %5815 = vmatpush1.msra.mxu0 0.0
    %5816 = vmatprep.subr.mxu0 0.0
    %5817 = vmatpush1.msra.mxu0 0.0
    %5818 = vmatprep.subr.mxu0 0.0
    %5819 = vmatpush1.msra.mxu0 0.0
    %5820 = vmatprep.subr.mxu0 0.0
    %5821 = vmatpush1.msra.mxu0 0.0
    %5822 = vmatprep.subr.mxu0 0.0
    %5823 = vmatpush1.msra.mxu0 0.0
    %5824 = vmatprep.subr.mxu0 0.0
    %5825 = vmatpush1.msra.mxu0 0.0
    %5826 = vmatprep.subr.mxu0 0.0
    %5827 = vmatpush1.msra.mxu0 0.0
    %5828 = vmatprep.subr.mxu0 0.0
    %5829 = vmatpush1.msra.mxu0 0.0
    %5830 = vmatprep.subr.mxu0 0.0
    %5831 = vmatpush1.msra.mxu0 0.0
    %5832 = vmatprep.subr.mxu0 0.0
    %5833 = vmatpush1.msra.mxu0 0.0
    %5834 = vmatprep.subr.mxu0 0.0
    %5835 = vmatpush1.msra.mxu0 0.0
    %5836 = vmatprep.subr.mxu0 0.0
    %5837 = vmatpush1.msra.mxu0 0.0
    %5838 = vmatprep.subr.mxu0 0.0
    %5839 = vmatpush1.msra.mxu0 0.0
    %5840 = vmatprep.subr.mxu0 0.0
    %5841 = vmatpush1.msra.mxu0 0.0
    %5842 = vmatprep.subr.mxu0 0.0
    %5843 = vmatpush1.msra.mxu0 0.0
    %5844 = vmatprep.subr.mxu0 0.0
    %5845 = vmatpush1.msra.mxu0 0.0
    %5846 = vmatprep.subr.mxu0 0.0
    %5847 = vmatpush1.msra.mxu0 0.0
    %5848 = vmatprep.mubr.f32.mxu0 0.0
    %5849 = vmatmul.mubr.f32.gmra.mrb[0].mxu0 %v5704
    %v5850 = vpop.f32.mrb[0].mxu0
    %v5851 = vadd.f32 0.0, %v5850
    %v5852 = vpop.f32.mrb[0].mxu0
    %5853 = vmatprep.mubr.f32.mxu0 0.0
    %5854 = vmatmul.mubr.f32.gmra.mrb[0].mxu0 %v5707
    %v5855 = vpop.f32.mrb[0].mxu0
    %v5856 = vadd.f32 0.0, %v5855
    %v5857 = vpop.f32.mrb[0].mxu0
    %5858 = vmatprep.mubr.f32.mxu0 0.0
    %5859 = vmatmul.mubr.f32.gmra.mrb[0].mxu0 %v5710
    %v5860 = vpop.f32.mrb[0].mxu0
    %v5861 = vadd.f32 0.0, %v5860
    %v5862 = vpop.f32.mrb[0].mxu0
    %5863 = vmatprep.mubr.f32.mxu0 0.0
    %5864 = vmatmul.mubr.f32.gmra.mrb[0].mxu0 %v5713
    %v5865 = vpop.f32.mrb[0].mxu0
    %v5866 = vadd.f32 0.0, %v5865
    %v5867 = vpop.f32.mrb[0].mxu0
    %5868 = vmatprep.mubr.f32.mxu0 0.0
    %5869 = vmatmul.mubr.f32.gmra.mrb[0].mxu0 %v5716
    %v5870 = vpop.f32.mrb[0].mxu0
    %v5871 = vadd.f32 0.0, %v5870
    %v5872 = vpop.f32.mrb[0].mxu0
    %5873 = vmatprep.mubr.f32.mxu0 0.0
    %5874 = vmatmul.mubr.f32.gmra.mrb[0].mxu0 %v5719
    %v5875 = vpop.f32.mrb[0].mxu0
    %v5876 = vadd.f32 0.0, %v5875
    %v5877 = vpop.f32.mrb[0].mxu0
    %5878 = vmatprep.mubr.f32.mxu0 0.0
    %5879 = vmatmul.mubr.f32.gmra.mrb[0].mxu0 %v5722
    %v5880 = vpop.f32.mrb[0].mxu0
    %v5881 = vadd.f32 0.0, %v5880
    %v5882 = vpop.f32.mrb[0].mxu0
    %5883 = vmatprep.mubr.f32.mxu0 0.0
    %5884 = vmatmul.mubr.f32.gmra.mrb[0].mxu0 %v5725
    %v5885 = vpop.f32.mrb[0].mxu0
    %v5886 = vadd.f32 0.0, %v5885
    %v5887 = vpop.f32.mrb[0].mxu0
    %5888 = vmatprep.mubr.f32.mxu0 0.0
    %5889 = vmatmul.mubr.f32.gmra.mrb[0].mxu0 %v5728
    %v5890 = vpop.f32.mrb[0].mxu0
    %v5891 = vadd.f32 0.0, %v5890
    %v5892 = vpop.f32.mrb[0].mxu0
    %5893 = vmatprep.mubr.f32.mxu0 0.0
    %5894 = vmatmul.mubr.f32.gmra.mrb[0].mxu0 %v5731
    %v5895 = vpop.f32.mrb[0].mxu0
    %v5896 = vadd.f32 0.0, %v5895
    %v5897 = vpop.f32.mrb[0].mxu0
    %5898 = vmatprep.mubr.f32.mxu0 0.0
    %5899 = vmatmul.mubr.f32.gmra.mrb[0].mxu0 %v5734
    %v5900 = vpop.f32.mrb[0].mxu0
    %v5901 = vadd.f32 0.0, %v5900
    %v5902 = vpop.f32.mrb[0].mxu0
    %5903 = vmatprep.mubr.f32.mxu0 0.0
    %5904 = vmatmul.mubr.f32.gmra.mrb[0].mxu0 %v5737
    %v5905 = vpop.f32.mrb[0].mxu0
    %v5906 = vadd.f32 0.0, %v5905
    %v5907 = vpop.f32.mrb[0].mxu0
    %5908 = vmatprep.mubr.f32.mxu0 0.0
    %5909 = vmatmul.mubr.f32.gmra.mrb[0].mxu0 %v5740
    %v5910 = vpop.f32.mrb[0].mxu0
    %v5911 = vadd.f32 0.0, %v5910
    %v5912 = vpop.f32.mrb[0].mxu0
    %5913 = vmatprep.mubr.f32.mxu0 0.0
    %5914 = vmatmul.mubr.f32.gmra.mrb[0].mxu0 %v5743
    %v5915 = vpop.f32.mrb[0].mxu0
    %v5916 = vadd.f32 0.0, %v5915
    %v5917 = vpop.f32.mrb[0].mxu0
    %5918 = vmatprep.mubr.f32.mxu0 0.0
    %5919 = vmatmul.mubr.f32.gmra.mrb[0].mxu0 %v5746
    %v5920 = vpop.f32.mrb[0].mxu0
    %v5921 = vadd.f32 0.0, %v5920
    %v5922 = vpop.f32.mrb[0].mxu0
    %5923 = vmatprep.mubr.f32.mxu0 0.0
    %5924 = vmatmul.mubr.f32.gmra.mrb[0].mxu0 %v5749
    %v5925 = vpop.f32.mrb[0].mxu0
    %v5926 = vadd.f32 0.0, %v5925
    %v5927 = vpop.f32.mrb[0].mxu0
    %5928 = vmatprep.mubr.f32.mxu0 0.0
    %5929 = vmatmul.mubr.f32.gmra.mrb[0].mxu0 %v5752
    %v5930 = vpop.f32.mrb[0].mxu0
    %v5931 = vadd.f32 0.0, %v5930
    %v5932 = vpop.f32.mrb[0].mxu0
    %5933 = vmatprep.mubr.f32.mxu0 0.0
    %5934 = vmatmul.mubr.f32.gmra.mrb[0].mxu0 %v5755
    %v5935 = vpop.f32.mrb[0].mxu0
    %v5936 = vadd.f32 0.0, %v5935
    %v5937 = vpop.f32.mrb[0].mxu0
    %5938 = vmatprep.mubr.f32.mxu0 0.0
    %5939 = vmatmul.mubr.f32.gmra.mrb[0].mxu0 %v5758
    %v5940 = vpop.f32.mrb[0].mxu0
    %v5941 = vadd.f32 0.0, %v5940
    %v5942 = vpop.f32.mrb[0].mxu0
    %5943 = vmatprep.mubr.f32.mxu0 0.0
    %5944 = vmatmul.mubr.f32.gmra.mrb[0].mxu0 %v5761
    %v5945 = vpop.f32.mrb[0].mxu0
    %v5946 = vadd.f32 0.0, %v5945
    %v5947 = vpop.f32.mrb[0].mxu0
    %5948 = vmatprep.mubr.f32.mxu0 0.0
    %5949 = vmatmul.mubr.f32.gmra.mrb[0].mxu0 %v5764
    %v5950 = vpop.f32.mrb[0].mxu0
    %v5951 = vadd.f32 0.0, %v5950
    %v5952 = vpop.f32.mrb[0].mxu0
    %5953 = vmatprep.mubr.f32.mxu0 0.0
    %5954 = vmatmul.mubr.f32.gmra.mrb[0].mxu0 %v5767
    %v5955 = vpop.f32.mrb[0].mxu0
    %v5956 = vadd.f32 0.0, %v5955
    %v5957 = vpop.f32.mrb[0].mxu0
    %5958 = vmatprep.mubr.f32.mxu0 0.0
    %5959 = vmatmul.mubr.f32.gmra.mrb[0].mxu0 %v5770
    %v5960 = vpop.f32.mrb[0].mxu0
    %v5961 = vadd.f32 0.0, %v5960
    %v5962 = vpop.f32.mrb[0].mxu0
    %5963 = vmatprep.mubr.f32.mxu0 0.0
    %5964 = vmatmul.mubr.f32.gmra.mrb[0].mxu0 %v5773
    %v5965 = vpop.f32.mrb[0].mxu0
    %v5966 = vadd.f32 0.0, %v5965
    %v5967 = vpop.f32.mrb[0].mxu0
    %5968 = vmatprep.mubr.f32.mxu0 0.0
    %5969 = vmatmul.mubr.f32.gmra.mrb[0].mxu0 %v5776
    %v5970 = vpop.f32.mrb[0].mxu0
    %v5971 = vadd.f32 0.0, %v5970
    %v5972 = vpop.f32.mrb[0].mxu0
    %5973 = vmatprep.mubr.f32.mxu0 0.0
    %5974 = vmatmul.mubr.f32.gmra.mrb[0].mxu0 %v5779
    %v5975 = vpop.f32.mrb[0].mxu0
    %v5976 = vadd.f32 0.0, %v5975
    %v5977 = vpop.f32.mrb[0].mxu0
    %5978 = vmatprep.mubr.f32.mxu0 0.0
    %5979 = vmatmul.mubr.f32.gmra.mrb[0].mxu0 %v5782
    %v5980 = vpop.f32.mrb[0].mxu0
    %v5981 = vadd.f32 0.0, %v5980
    %v5982 = vpop.f32.mrb[0].mxu0
    %5983 = vdwg.mxu0
    %6011 = vrot.lane.b32.xlu0 %v5851, 123
    %v6012 = vpop.permute.xlu0 %6011
    %6013 = vrot.lane.b32.xlu0 %v5856, 123
    %v6014 = vpop.permute.xlu0 %6013
    %6015 = vrot.lane.b32.xlu0 %v5861, 123
    %v6016 = vpop.permute.xlu0 %6015
    %6017 = vrot.lane.b32.xlu0 %v5866, 123
    %v6018 = vpop.permute.xlu0 %6017
    %6019 = vrot.lane.b32.xlu0 %v5871, 123
    %v6020 = vpop.permute.xlu0 %6019
    %6021 = vrot.lane.b32.xlu0 %v5876, 123
    %v6022 = vpop.permute.xlu0 %6021
    %6023 = vrot.lane.b32.xlu0 %v5881, 123
    %v6024 = vpop.permute.xlu0 %6023
    %6025 = vrot.lane.b32.xlu0 %v5886, 123
    %v6026 = vpop.permute.xlu0 %6025
    %6027 = vrot.lane.b32.xlu0 %v5891, 123
    %v6028 = vpop.permute.xlu0 %6027
    %6029 = vrot.lane.b32.xlu0 %v5896, 123
    %v6030 = vpop.permute.xlu0 %6029
    %6031 = vrot.lane.b32.xlu0 %v5901, 123
    %v6032 = vpop.permute.xlu0 %6031
    %6033 = vrot.lane.b32.xlu0 %v5906, 123
    %v6034 = vpop.permute.xlu0 %6033
    %6035 = vrot.lane.b32.xlu0 %v5911, 123
    %v6036 = vpop.permute.xlu0 %6035
    %6037 = vrot.lane.b32.xlu0 %v5916, 123
    %v6038 = vpop.permute.xlu0 %6037
    %6039 = vrot.lane.b32.xlu0 %v5921, 123
    %v6040 = vpop.permute.xlu0 %6039
    %6041 = vrot.lane.b32.xlu0 %v5926, 123
    %v6042 = vpop.permute.xlu0 %6041
    %6043 = vrot.lane.b32.xlu0 %v5931, 123
    %v6044 = vpop.permute.xlu0 %6043
    %6045 = vrot.lane.b32.xlu0 %v5936, 123
    %v6046 = vpop.permute.xlu0 %6045
    %6047 = vrot.lane.b32.xlu0 %v5941, 123
    %v6048 = vpop.permute.xlu0 %6047
    %6049 = vrot.lane.b32.xlu0 %v5946, 123
    %v6050 = vpop.permute.xlu0 %6049
    %6051 = vrot.lane.b32.xlu0 %v5951, 123
    %v6052 = vpop.permute.xlu0 %6051
    %6053 = vrot.lane.b32.xlu0 %v5956, 123
    %v6054 = vpop.permute.xlu0 %6053
    %6055 = vrot.lane.b32.xlu0 %v5961, 123
    %v6056 = vpop.permute.xlu0 %6055
    %6057 = vrot.lane.b32.xlu0 %v5966, 123
    %v6058 = vpop.permute.xlu0 %6057
    %6059 = vrot.lane.b32.xlu0 %v5971, 123
    %v6060 = vpop.permute.xlu0 %6059
    %6061 = vrot.lane.b32.xlu0 %v5976, 123
    %v6062 = vpop.permute.xlu0 %6061
    %6063 = vrot.lane.b32.xlu0 %v5981, 123
    %v6064 = vpop.permute.xlu0 %6063
    %v6092 = vmax.f32 %v5851, %v6012
    %v6093 = vmax.f32 %v5856, %v6014
    %v6094 = vmax.f32 %v5861, %v6016
    %v6095 = vmax.f32 %v5866, %v6018
    %v6096 = vmax.f32 %v5871, %v6020
    %v6097 = vmax.f32 %v5876, %v6022
    %v6098 = vmax.f32 %v5881, %v6024
    %v6099 = vmax.f32 %v5886, %v6026
    %v6100 = vmax.f32 %v5891, %v6028
    %v6101 = vmax.f32 %v5896, %v6030
    %v6102 = vmax.f32 %v5901, %v6032
    %v6103 = vmax.f32 %v5906, %v6034
    %v6104 = vmax.f32 %v5911, %v6036
    %v6105 = vmax.f32 %v5916, %v6038
    %v6106 = vmax.f32 %v5921, %v6040
    %v6107 = vmax.f32 %v5926, %v6042
    %v6108 = vmax.f32 %v5931, %v6044
    %v6109 = vmax.f32 %v5936, %v6046
    %v6110 = vmax.f32 %v5941, %v6048
    %v6111 = vmax.f32 %v5946, %v6050
    %v6112 = vmax.f32 %v5951, %v6052
    %v6113 = vmax.f32 %v5956, %v6054
    %v6114 = vmax.f32 %v5961, %v6056
    %v6115 = vmax.f32 %v5966, %v6058
    %v6116 = vmax.f32 %v5971, %v6060
    %v6117 = vmax.f32 %v5976, %v6062
    %v6118 = vmax.f32 %v5981, %v6064
    %6146 = vrot.lane.b32.xlu0 %v6092, 118
    %v6147 = vpop.permute.xlu0 %6146
    %6148 = vrot.lane.b32.xlu0 %v6093, 118
    %v6149 = vpop.permute.xlu0 %6148
    %6150 = vrot.lane.b32.xlu0 %v6094, 118
    %v6151 = vpop.permute.xlu0 %6150
    %6152 = vrot.lane.b32.xlu0 %v6095, 118
    %v6153 = vpop.permute.xlu0 %6152
    %6154 = vrot.lane.b32.xlu0 %v6096, 118
    %v6155 = vpop.permute.xlu0 %6154
    %6156 = vrot.lane.b32.xlu0 %v6097, 118
    %v6157 = vpop.permute.xlu0 %6156
    %6158 = vrot.lane.b32.xlu0 %v6098, 118
    %v6159 = vpop.permute.xlu0 %6158
    %6160 = vrot.lane.b32.xlu0 %v6099, 118
    %v6161 = vpop.permute.xlu0 %6160
    %6162 = vrot.lane.b32.xlu0 %v6100, 118
    %v6163 = vpop.permute.xlu0 %6162
    %6164 = vrot.lane.b32.xlu0 %v6101, 118
    %v6165 = vpop.permute.xlu0 %6164
    %6166 = vrot.lane.b32.xlu0 %v6102, 118
    %v6167 = vpop.permute.xlu0 %6166
    %6168 = vrot.lane.b32.xlu0 %v6103, 118
    %v6169 = vpop.permute.xlu0 %6168
    %6170 = vrot.lane.b32.xlu0 %v6104, 118
    %v6171 = vpop.permute.xlu0 %6170
    %6172 = vrot.lane.b32.xlu0 %v6105, 118
    %v6173 = vpop.permute.xlu0 %6172
    %6174 = vrot.lane.b32.xlu0 %v6106, 118
    %v6175 = vpop.permute.xlu0 %6174
    %6176 = vrot.lane.b32.xlu0 %v6107, 118
    %v6177 = vpop.permute.xlu0 %6176
    %6178 = vrot.lane.b32.xlu0 %v6108, 118
    %v6179 = vpop.permute.xlu0 %6178
    %6180 = vrot.lane.b32.xlu0 %v6109, 118
    %v6181 = vpop.permute.xlu0 %6180
    %6182 = vrot.lane.b32.xlu0 %v6110, 118
    %v6183 = vpop.permute.xlu0 %6182
    %6184 = vrot.lane.b32.xlu0 %v6111, 118
    %v6185 = vpop.permute.xlu0 %6184
    %6186 = vrot.lane.b32.xlu0 %v6112, 118
    %v6187 = vpop.permute.xlu0 %6186
    %6188 = vrot.lane.b32.xlu0 %v6113, 118
    %v6189 = vpop.permute.xlu0 %6188
    %6190 = vrot.lane.b32.xlu0 %v6114, 118
    %v6191 = vpop.permute.xlu0 %6190
    %6192 = vrot.lane.b32.xlu0 %v6115, 118
    %v6193 = vpop.permute.xlu0 %6192
    %6194 = vrot.lane.b32.xlu0 %v6116, 118
    %v6195 = vpop.permute.xlu0 %6194
    %6196 = vrot.lane.b32.xlu0 %v6117, 118
    %v6197 = vpop.permute.xlu0 %6196
    %6198 = vrot.lane.b32.xlu0 %v6118, 118
    %v6199 = vpop.permute.xlu0 %6198
    %v6227 = vmax.f32 %v6092, %v6147
    %v6228 = vmax.f32 %v6093, %v6149
    %v6229 = vmax.f32 %v6094, %v6151
    %v6230 = vmax.f32 %v6095, %v6153
    %v6231 = vmax.f32 %v6096, %v6155
    %v6232 = vmax.f32 %v6097, %v6157
    %v6233 = vmax.f32 %v6098, %v6159
    %v6234 = vmax.f32 %v6099, %v6161
    %v6235 = vmax.f32 %v6100, %v6163
    %v6236 = vmax.f32 %v6101, %v6165
    %v6237 = vmax.f32 %v6102, %v6167
    %v6238 = vmax.f32 %v6103, %v6169
    %v6239 = vmax.f32 %v6104, %v6171
    %v6240 = vmax.f32 %v6105, %v6173
    %v6241 = vmax.f32 %v6106, %v6175
    %v6242 = vmax.f32 %v6107, %v6177
    %v6243 = vmax.f32 %v6108, %v6179
    %v6244 = vmax.f32 %v6109, %v6181
    %v6245 = vmax.f32 %v6110, %v6183
    %v6246 = vmax.f32 %v6111, %v6185
    %v6247 = vmax.f32 %v6112, %v6187
    %v6248 = vmax.f32 %v6113, %v6189
    %v6249 = vmax.f32 %v6114, %v6191
    %v6250 = vmax.f32 %v6115, %v6193
    %v6251 = vmax.f32 %v6116, %v6195
    %v6252 = vmax.f32 %v6117, %v6197
    %v6253 = vmax.f32 %v6118, %v6199
    %v6254 = vadd.f32 %v6227, %v629
    %v6255 = vadd.f32 %v6228, %v629
    %v6256 = vadd.f32 %v6229, %v629
    %v6257 = vadd.f32 %v6230, %v629
    %v6258 = vadd.f32 %v6231, %v629
    %v6259 = vadd.f32 %v6232, %v629
    %v6260 = vadd.f32 %v6233, %v629
    %v6261 = vadd.f32 %v6234, %v629
    %v6262 = vadd.f32 %v6235, %v629
    %v6263 = vadd.f32 %v6236, %v629
    %v6264 = vadd.f32 %v6237, %v629
    %v6265 = vadd.f32 %v6238, %v629
    %v6266 = vadd.f32 %v6239, %v629
    %v6267 = vadd.f32 %v6240, %v629
    %v6268 = vadd.f32 %v6241, %v629
    %v6269 = vadd.f32 %v6242, %v629
    %v6270 = vadd.f32 %v6243, %v629
    %v6271 = vadd.f32 %v6244, %v629
    %v6272 = vadd.f32 %v6245, %v629
    %v6273 = vadd.f32 %v6246, %v629
    %v6274 = vadd.f32 %v6247, %v629
    %v6275 = vadd.f32 %v6248, %v629
    %v6276 = vadd.f32 %v6249, %v629
    %v6277 = vadd.f32 %v6250, %v629
    %v6278 = vadd.f32 %v6251, %v629
    %v6279 = vadd.f32 %v6252, %v629
    %v6280 = vadd.f32 %v6253, %v629
    %v6281 = vmax.f32 %v6254, 0.0
    %v6282 = vmax.f32 %v6255, 0.0
    %v6283 = vmax.f32 %v6256, 0.0
    %v6284 = vmax.f32 %v6257, 0.0
    %v6285 = vmax.f32 %v6258, 0.0
    %v6286 = vmax.f32 %v6259, 0.0
    %v6287 = vmax.f32 %v6260, 0.0
    %v6288 = vmax.f32 %v6261, 0.0
    %v6289 = vmax.f32 %v6262, 0.0
    %v6290 = vmax.f32 %v6263, 0.0
    %v6291 = vmax.f32 %v6264, 0.0
    %v6292 = vmax.f32 %v6265, 0.0
    %v6293 = vmax.f32 %v6266, 0.0
    %v6294 = vmax.f32 %v6267, 0.0
    %v6295 = vmax.f32 %v6268, 0.0
    %v6296 = vmax.f32 %v6269, 0.0
    %v6297 = vmax.f32 %v6270, 0.0
    %v6298 = vmax.f32 %v6271, 0.0
    %v6299 = vmax.f32 %v6272, 0.0
    %v6300 = vmax.f32 %v6273, 0.0
    %v6301 = vmax.f32 %v6274, 0.0
    %v6302 = vmax.f32 %v6275, 0.0
    %v6303 = vmax.f32 %v6276, 0.0
    %v6304 = vmax.f32 %v6277, 0.0
    %v6305 = vmax.f32 %v6278, 0.0
    %v6306 = vmax.f32 %v6279, 0.0
    %v6307 = vmax.f32 %v6280, 0.0
    %s6308 = scalar_lea.vmem %s3, 48
    %v6309 = vld [vmem:[%s6308] sm:$0x1f]
    %v6311 = vsel %vm1321, %v6281, 0
    %v6314 = vsel %vm1321, %v6282, 0
    %v6317 = vsel %vm1321, %v6283, 0
    %v6320 = vsel %vm1321, %v6284, 0
    %v6323 = vsel %vm1321, %v6285, 0
    %v6326 = vsel %vm1321, %v6286, 0
    %v6329 = vsel %vm1321, %v6287, 0
    %v6332 = vsel %vm1321, %v6288, 0
    %v6335 = vsel %vm1321, %v6289, 0
    %v6338 = vsel %vm1321, %v6290, 0
    %v6341 = vsel %vm1321, %v6291, 0
    %v6344 = vsel %vm1321, %v6292, 0
    %v6347 = vsel %vm1321, %v6293, 0
    %v6350 = vsel %vm1321, %v6294, 0
    %v6353 = vsel %vm1321, %v6295, 0
    %v6356 = vsel %vm1321, %v6296, 0
    %v6359 = vsel %vm1321, %v6297, 0
    %v6362 = vsel %vm1321, %v6298, 0
    %v6365 = vsel %vm1321, %v6299, 0
    %v6368 = vsel %vm1321, %v6300, 0
    %v6371 = vsel %vm1321, %v6301, 0
    %v6374 = vsel %vm1321, %v6302, 0
    %v6377 = vsel %vm1321, %v6303, 0
    %v6380 = vsel %vm1321, %v6304, 0
    %v6383 = vsel %vm1321, %v6305, 0
    %v6386 = vsel %vm1321, %v6306, 0
    %v6389 = vsel %vm1321, %v6307, 0
    %v6392 = vsel %vm1403, %v6309, 0
    %6394 = vmatprep.subr.mxu0 0.0
    %6395 = vmatpush1.msra.mxu0 %v6392
    %6396 = vmatprep.subr.mxu0 0.0
    %6397 = vmatpush1.msra.mxu0 0.0
    %6398 = vmatprep.subr.mxu0 0.0
    %6399 = vmatpush1.msra.mxu0 0.0
    %6400 = vmatprep.subr.mxu0 0.0
    %6401 = vmatpush1.msra.mxu0 0.0
    %6402 = vmatprep.subr.mxu0 0.0
    %6403 = vmatpush1.msra.mxu0 0.0
    %6404 = vmatprep.subr.mxu0 0.0
    %6405 = vmatpush1.msra.mxu0 0.0
    %6406 = vmatprep.subr.mxu0 0.0
    %6407 = vmatpush1.msra.mxu0 0.0
    %6408 = vmatprep.subr.mxu0 0.0
    %6409 = vmatpush1.msra.mxu0 0.0
    %6410 = vmatprep.subr.mxu0 0.0
    %6411 = vmatpush1.msra.mxu0 0.0
    %6412 = vmatprep.subr.mxu0 0.0
    %6413 = vmatpush1.msra.mxu0 0.0
    %6414 = vmatprep.subr.mxu0 0.0
    %6415 = vmatpush1.msra.mxu0 0.0
    %6416 = vmatprep.subr.mxu0 0.0
    %6417 = vmatpush1.msra.mxu0 0.0
    %6418 = vmatprep.subr.mxu0 0.0
    %6419 = vmatpush1.msra.mxu0 0.0
    %6420 = vmatprep.subr.mxu0 0.0
    %6421 = vmatpush1.msra.mxu0 0.0
    %6422 = vmatprep.subr.mxu0 0.0
    %6423 = vmatpush1.msra.mxu0 0.0
    %6424 = vmatprep.subr.mxu0 0.0
    %6425 = vmatpush1.msra.mxu0 0.0
    %6426 = vmatprep.subr.mxu0 0.0
    %6427 = vmatpush1.msra.mxu0 0.0
    %6428 = vmatprep.subr.mxu0 0.0
    %6429 = vmatpush1.msra.mxu0 0.0
    %6430 = vmatprep.subr.mxu0 0.0
    %6431 = vmatpush1.msra.mxu0 0.0
    %6432 = vmatprep.subr.mxu0 0.0
    %6433 = vmatpush1.msra.mxu0 0.0
    %6434 = vmatprep.subr.mxu0 0.0
    %6435 = vmatpush1.msra.mxu0 0.0
    %6436 = vmatprep.subr.mxu0 0.0
    %6437 = vmatpush1.msra.mxu0 0.0
    %6438 = vmatprep.subr.mxu0 0.0
    %6439 = vmatpush1.msra.mxu0 0.0
    %6440 = vmatprep.subr.mxu0 0.0
    %6441 = vmatpush1.msra.mxu0 0.0
    %6442 = vmatprep.subr.mxu0 0.0
    %6443 = vmatpush1.msra.mxu0 0.0
    %6444 = vmatprep.subr.mxu0 0.0
    %6445 = vmatpush1.msra.mxu0 0.0
    %6446 = vmatprep.subr.mxu0 0.0
    %6447 = vmatpush1.msra.mxu0 0.0
    %6448 = vmatprep.subr.mxu0 0.0
    %6449 = vmatpush1.msra.mxu0 0.0
    %6450 = vmatprep.subr.mxu0 0.0
    %6451 = vmatpush1.msra.mxu0 0.0
    %6452 = vmatprep.subr.mxu0 0.0
    %6453 = vmatpush1.msra.mxu0 0.0
    %6454 = vmatprep.subr.mxu0 0.0
    %6455 = vmatpush1.msra.mxu0 0.0
    %6456 = vmatprep.subr.mxu0 0.0
    %6457 = vmatpush1.msra.mxu0 0.0
    %6458 = vmatprep.mubr.f32.mxu0 0.0
    %6459 = vmatmul.mubr.f32.gmra.mrb[0].mxu0 %v6311
    %v6460 = vpop.f32.mrb[0].mxu0
    %v6461 = vadd.f32 0.0, %v6460
    %v6462 = vpop.f32.mrb[0].mxu0
    %6463 = vmatprep.mubr.f32.mxu0 0.0
    %6464 = vmatmul.mubr.f32.gmra.mrb[0].mxu0 %v6314
    %v6465 = vpop.f32.mrb[0].mxu0
    %v6466 = vadd.f32 0.0, %v6465
    %v6467 = vpop.f32.mrb[0].mxu0
    %6468 = vmatprep.mubr.f32.mxu0 0.0
    %6469 = vmatmul.mubr.f32.gmra.mrb[0].mxu0 %v6317
    %v6470 = vpop.f32.mrb[0].mxu0
    %v6471 = vadd.f32 0.0, %v6470
    %v6472 = vpop.f32.mrb[0].mxu0
    %6473 = vmatprep.mubr.f32.mxu0 0.0
    %6474 = vmatmul.mubr.f32.gmra.mrb[0].mxu0 %v6320
    %v6475 = vpop.f32.mrb[0].mxu0
    %v6476 = vadd.f32 0.0, %v6475
    %v6477 = vpop.f32.mrb[0].mxu0
    %6478 = vmatprep.mubr.f32.mxu0 0.0
    %6479 = vmatmul.mubr.f32.gmra.mrb[0].mxu0 %v6323
    %v6480 = vpop.f32.mrb[0].mxu0
    %v6481 = vadd.f32 0.0, %v6480
    %v6482 = vpop.f32.mrb[0].mxu0
    %6483 = vmatprep.mubr.f32.mxu0 0.0
    %6484 = vmatmul.mubr.f32.gmra.mrb[0].mxu0 %v6326
    %v6485 = vpop.f32.mrb[0].mxu0
    %v6486 = vadd.f32 0.0, %v6485
    %v6487 = vpop.f32.mrb[0].mxu0
    %6488 = vmatprep.mubr.f32.mxu0 0.0
    %6489 = vmatmul.mubr.f32.gmra.mrb[0].mxu0 %v6329
    %v6490 = vpop.f32.mrb[0].mxu0
    %v6491 = vadd.f32 0.0, %v6490
    %v6492 = vpop.f32.mrb[0].mxu0
    %6493 = vmatprep.mubr.f32.mxu0 0.0
    %6494 = vmatmul.mubr.f32.gmra.mrb[0].mxu0 %v6332
    %v6495 = vpop.f32.mrb[0].mxu0
    %v6496 = vadd.f32 0.0, %v6495
    %v6497 = vpop.f32.mrb[0].mxu0
    %6498 = vmatprep.mubr.f32.mxu0 0.0
    %6499 = vmatmul.mubr.f32.gmra.mrb[0].mxu0 %v6335
    %v6500 = vpop.f32.mrb[0].mxu0
    %v6501 = vadd.f32 0.0, %v6500
    %v6502 = vpop.f32.mrb[0].mxu0
    %6503 = vmatprep.mubr.f32.mxu0 0.0
    %6504 = vmatmul.mubr.f32.gmra.mrb[0].mxu0 %v6338
    %v6505 = vpop.f32.mrb[0].mxu0
    %v6506 = vadd.f32 0.0, %v6505
    %v6507 = vpop.f32.mrb[0].mxu0
    %6508 = vmatprep.mubr.f32.mxu0 0.0
    %6509 = vmatmul.mubr.f32.gmra.mrb[0].mxu0 %v6341
    %v6510 = vpop.f32.mrb[0].mxu0
    %v6511 = vadd.f32 0.0, %v6510
    %v6512 = vpop.f32.mrb[0].mxu0
    %6513 = vmatprep.mubr.f32.mxu0 0.0
    %6514 = vmatmul.mubr.f32.gmra.mrb[0].mxu0 %v6344
    %v6515 = vpop.f32.mrb[0].mxu0
    %v6516 = vadd.f32 0.0, %v6515
    %v6517 = vpop.f32.mrb[0].mxu0
    %6518 = vmatprep.mubr.f32.mxu0 0.0
    %6519 = vmatmul.mubr.f32.gmra.mrb[0].mxu0 %v6347
    %v6520 = vpop.f32.mrb[0].mxu0
    %v6521 = vadd.f32 0.0, %v6520
    %v6522 = vpop.f32.mrb[0].mxu0
    %6523 = vmatprep.mubr.f32.mxu0 0.0
    %6524 = vmatmul.mubr.f32.gmra.mrb[0].mxu0 %v6350
    %v6525 = vpop.f32.mrb[0].mxu0
    %v6526 = vadd.f32 0.0, %v6525
    %v6527 = vpop.f32.mrb[0].mxu0
    %6528 = vmatprep.mubr.f32.mxu0 0.0
    %6529 = vmatmul.mubr.f32.gmra.mrb[0].mxu0 %v6353
    %v6530 = vpop.f32.mrb[0].mxu0
    %v6531 = vadd.f32 0.0, %v6530
    %v6532 = vpop.f32.mrb[0].mxu0
    %6533 = vmatprep.mubr.f32.mxu0 0.0
    %6534 = vmatmul.mubr.f32.gmra.mrb[0].mxu0 %v6356
    %v6535 = vpop.f32.mrb[0].mxu0
    %v6536 = vadd.f32 0.0, %v6535
    %v6537 = vpop.f32.mrb[0].mxu0
    %6538 = vmatprep.mubr.f32.mxu0 0.0
    %6539 = vmatmul.mubr.f32.gmra.mrb[0].mxu0 %v6359
    %v6540 = vpop.f32.mrb[0].mxu0
    %v6541 = vadd.f32 0.0, %v6540
    %v6542 = vpop.f32.mrb[0].mxu0
    %6543 = vmatprep.mubr.f32.mxu0 0.0
    %6544 = vmatmul.mubr.f32.gmra.mrb[0].mxu0 %v6362
    %v6545 = vpop.f32.mrb[0].mxu0
    %v6546 = vadd.f32 0.0, %v6545
    %v6547 = vpop.f32.mrb[0].mxu0
    %6548 = vmatprep.mubr.f32.mxu0 0.0
    %6549 = vmatmul.mubr.f32.gmra.mrb[0].mxu0 %v6365
    %v6550 = vpop.f32.mrb[0].mxu0
    %v6551 = vadd.f32 0.0, %v6550
    %v6552 = vpop.f32.mrb[0].mxu0
    %6553 = vmatprep.mubr.f32.mxu0 0.0
    %6554 = vmatmul.mubr.f32.gmra.mrb[0].mxu0 %v6368
    %v6555 = vpop.f32.mrb[0].mxu0
    %v6556 = vadd.f32 0.0, %v6555
    %v6557 = vpop.f32.mrb[0].mxu0
    %6558 = vmatprep.mubr.f32.mxu0 0.0
    %6559 = vmatmul.mubr.f32.gmra.mrb[0].mxu0 %v6371
    %v6560 = vpop.f32.mrb[0].mxu0
    %v6561 = vadd.f32 0.0, %v6560
    %v6562 = vpop.f32.mrb[0].mxu0
    %6563 = vmatprep.mubr.f32.mxu0 0.0
    %6564 = vmatmul.mubr.f32.gmra.mrb[0].mxu0 %v6374
    %v6565 = vpop.f32.mrb[0].mxu0
    %v6566 = vadd.f32 0.0, %v6565
    %v6567 = vpop.f32.mrb[0].mxu0
    %6568 = vmatprep.mubr.f32.mxu0 0.0
    %6569 = vmatmul.mubr.f32.gmra.mrb[0].mxu0 %v6377
    %v6570 = vpop.f32.mrb[0].mxu0
    %v6571 = vadd.f32 0.0, %v6570
    %v6572 = vpop.f32.mrb[0].mxu0
    %6573 = vmatprep.mubr.f32.mxu0 0.0
    %6574 = vmatmul.mubr.f32.gmra.mrb[0].mxu0 %v6380
    %v6575 = vpop.f32.mrb[0].mxu0
    %v6576 = vadd.f32 0.0, %v6575
    %v6577 = vpop.f32.mrb[0].mxu0
    %6578 = vmatprep.mubr.f32.mxu0 0.0
    %6579 = vmatmul.mubr.f32.gmra.mrb[0].mxu0 %v6383
    %v6580 = vpop.f32.mrb[0].mxu0
    %v6581 = vadd.f32 0.0, %v6580
    %v6582 = vpop.f32.mrb[0].mxu0
    %6583 = vmatprep.mubr.f32.mxu0 0.0
    %6584 = vmatmul.mubr.f32.gmra.mrb[0].mxu0 %v6386
    %v6585 = vpop.f32.mrb[0].mxu0
    %v6586 = vadd.f32 0.0, %v6585
    %v6587 = vpop.f32.mrb[0].mxu0
    %6588 = vmatprep.mubr.f32.mxu0 0.0
    %6589 = vmatmul.mubr.f32.gmra.mrb[0].mxu0 %v6389
    %v6590 = vpop.f32.mrb[0].mxu0
    %v6591 = vadd.f32 0.0, %v6590
    %v6592 = vpop.f32.mrb[0].mxu0
    %6593 = vdwg.mxu0
    %v6594 = vadd.f32 %v5648, %v6461
    %v6595 = vadd.f32 %v5649, %v6466
    %v6596 = vadd.f32 %v5650, %v6471
    %v6597 = vadd.f32 %v5651, %v6476
    %v6598 = vadd.f32 %v5652, %v6481
    %v6599 = vadd.f32 %v5653, %v6486
    %v6600 = vadd.f32 %v5654, %v6491
    %v6601 = vadd.f32 %v5655, %v6496
    %v6602 = vadd.f32 %v5656, %v6501
    %v6603 = vadd.f32 %v5657, %v6506
    %v6604 = vadd.f32 %v5658, %v6511
    %v6605 = vadd.f32 %v5659, %v6516
    %v6606 = vadd.f32 %v5660, %v6521
    %v6607 = vadd.f32 %v5661, %v6526
    %v6608 = vadd.f32 %v5662, %v6531
    %v6609 = vadd.f32 %v5663, %v6536
    %v6610 = vadd.f32 %v5664, %v6541
    %v6611 = vadd.f32 %v5665, %v6546
    %v6612 = vadd.f32 %v5666, %v6551
    %v6613 = vadd.f32 %v5667, %v6556
    %v6614 = vadd.f32 %v5668, %v6561
    %v6615 = vadd.f32 %v5669, %v6566
    %v6616 = vadd.f32 %v5670, %v6571
    %v6617 = vadd.f32 %v5671, %v6576
    %v6618 = vadd.f32 %v5672, %v6581
    %v6619 = vadd.f32 %v5673, %v6586
    %v6620 = vadd.f32 %v5674, %v6591
    %s6621 = scalar_lea.vmem %s0, 1512
    %v6622 = vld [vmem:[%s6621] sm:$0xff]
    %v6623 = vld [vmem:[%s6621 + $0x8] sm:$0xff]
    %v6624 = vld [vmem:[%s6621 + $0x10] sm:$0xff]
    %v6625 = vld [vmem:[%s6621 + $0x18] sm:$0xff]
    %v6626 = vld [vmem:[%s6621 + $0x20] sm:$0xff]
    %v6627 = vld [vmem:[%s6621 + $0x28] sm:$0xff]
    %v6628 = vld [vmem:[%s6621 + $0x30] sm:$0xff]
    %v6629 = vld [vmem:[%s6621 + $0x38] sm:$0xff]
    %v6630 = vld [vmem:[%s6621 + $0x40] sm:$0xff]
    %v6631 = vld [vmem:[%s6621 + $0x48] sm:$0xff]
    %v6632 = vld [vmem:[%s6621 + $0x50] sm:$0xff]
    %v6633 = vld [vmem:[%s6621 + $0x58] sm:$0xff]
    %v6634 = vld [vmem:[%s6621 + $0x60] sm:$0xff]
    %v6635 = vld [vmem:[%s6621 + $0x68] sm:$0xff]
    %v6636 = vld [vmem:[%s6621 + $0x70] sm:$0xff]
    %v6637 = vld [vmem:[%s6621 + $0x78] sm:$0xff]
    %v6638 = vld [vmem:[%s6621 + $0x80] sm:$0xff]
    %v6639 = vld [vmem:[%s6621 + $0x88] sm:$0xff]
    %v6640 = vld [vmem:[%s6621 + $0x90] sm:$0xff]
    %v6641 = vld [vmem:[%s6621 + $0x98] sm:$0xff]
    %v6642 = vld [vmem:[%s6621 + $0xa0] sm:$0xff]
    %v6643 = vld [vmem:[%s6621 + $0xa8] sm:$0xff]
    %v6644 = vld [vmem:[%s6621 + $0xb0] sm:$0xff]
    %v6645 = vld [vmem:[%s6621 + $0xb8] sm:$0xff]
    %v6646 = vld [vmem:[%s6621 + $0xc0] sm:$0xff]
    %v6647 = vld [vmem:[%s6621 + $0xc8] sm:$0xff]
    %v6648 = vld [vmem:[%s6621 + $0xd0] sm:$0x3]
    %v6650 = vsel %vm69, %v6622, 0
    %v6653 = vsel %vm69, %v6623, 0
    %v6656 = vsel %vm69, %v6624, 0
    %v6659 = vsel %vm69, %v6625, 0
    %v6662 = vsel %vm69, %v6626, 0
    %v6665 = vsel %vm69, %v6627, 0
    %v6668 = vsel %vm69, %v6628, 0
    %v6671 = vsel %vm69, %v6629, 0
    %v6674 = vsel %vm69, %v6630, 0
    %v6677 = vsel %vm69, %v6631, 0
    %v6680 = vsel %vm69, %v6632, 0
    %v6683 = vsel %vm69, %v6633, 0
    %v6686 = vsel %vm69, %v6634, 0
    %v6689 = vsel %vm69, %v6635, 0
    %v6692 = vsel %vm69, %v6636, 0
    %v6695 = vsel %vm69, %v6637, 0
    %v6698 = vsel %vm69, %v6638, 0
    %v6701 = vsel %vm69, %v6639, 0
    %v6704 = vsel %vm69, %v6640, 0
    %v6707 = vsel %vm69, %v6641, 0
    %v6710 = vsel %vm69, %v6642, 0
    %v6713 = vsel %vm69, %v6643, 0
    %v6716 = vsel %vm69, %v6644, 0
    %v6719 = vsel %vm69, %v6645, 0
    %v6722 = vsel %vm69, %v6646, 0
    %v6725 = vsel %vm69, %v6647, 0
    %v6728 = vsel %vm69, %v6648, 0
    %6730 = vmatprep.subr.mxu0 0.0
    %6731 = vmatpush1.msra.mxu0 %v67
    %6732 = vmatprep.subr.mxu0 0.0
    %6733 = vmatpush1.msra.mxu0 %v153
    %6734 = vmatprep.subr.mxu0 0.0
    %6735 = vmatpush1.msra.mxu0 0.0
    %6736 = vmatprep.subr.mxu0 0.0
    %6737 = vmatpush1.msra.mxu0 0.0
    %6738 = vmatprep.subr.mxu0 0.0
    %6739 = vmatpush1.msra.mxu0 0.0
    %6740 = vmatprep.subr.mxu0 0.0
    %6741 = vmatpush1.msra.mxu0 0.0
    %6742 = vmatprep.subr.mxu0 0.0
    %6743 = vmatpush1.msra.mxu0 0.0
    %6744 = vmatprep.subr.mxu0 0.0
    %6745 = vmatpush1.msra.mxu0 0.0
    %6746 = vmatprep.subr.mxu0 0.0
    %6747 = vmatpush1.msra.mxu0 0.0
    %6748 = vmatprep.subr.mxu0 0.0
    %6749 = vmatpush1.msra.mxu0 0.0
    %6750 = vmatprep.subr.mxu0 0.0
    %6751 = vmatpush1.msra.mxu0 0.0
    %6752 = vmatprep.subr.mxu0 0.0
    %6753 = vmatpush1.msra.mxu0 0.0
    %6754 = vmatprep.subr.mxu0 0.0
    %6755 = vmatpush1.msra.mxu0 0.0
    %6756 = vmatprep.subr.mxu0 0.0
    %6757 = vmatpush1.msra.mxu0 0.0
    %6758 = vmatprep.subr.mxu0 0.0
    %6759 = vmatpush1.msra.mxu0 0.0
    %6760 = vmatprep.subr.mxu0 0.0
    %6761 = vmatpush1.msra.mxu0 0.0
    %6762 = vmatprep.subr.mxu0 0.0
    %6763 = vmatpush1.msra.mxu0 0.0
    %6764 = vmatprep.subr.mxu0 0.0
    %6765 = vmatpush1.msra.mxu0 0.0
    %6766 = vmatprep.subr.mxu0 0.0
    %6767 = vmatpush1.msra.mxu0 0.0
    %6768 = vmatprep.subr.mxu0 0.0
    %6769 = vmatpush1.msra.mxu0 0.0
    %6770 = vmatprep.subr.mxu0 0.0
    %6771 = vmatpush1.msra.mxu0 0.0
    %6772 = vmatprep.subr.mxu0 0.0
    %6773 = vmatpush1.msra.mxu0 0.0
    %6774 = vmatprep.subr.mxu0 0.0
    %6775 = vmatpush1.msra.mxu0 0.0
    %6776 = vmatprep.subr.mxu0 0.0
    %6777 = vmatpush1.msra.mxu0 0.0
    %6778 = vmatprep.subr.mxu0 0.0
    %6779 = vmatpush1.msra.mxu0 0.0
    %6780 = vmatprep.subr.mxu0 0.0
    %6781 = vmatpush1.msra.mxu0 0.0
    %6782 = vmatprep.subr.mxu0 0.0
    %6783 = vmatpush1.msra.mxu0 0.0
    %6784 = vmatprep.subr.mxu0 0.0
    %6785 = vmatpush1.msra.mxu0 0.0
    %6786 = vmatprep.subr.mxu0 0.0
    %6787 = vmatpush1.msra.mxu0 0.0
    %6788 = vmatprep.subr.mxu0 0.0
    %6789 = vmatpush1.msra.mxu0 0.0
    %6790 = vmatprep.subr.mxu0 0.0
    %6791 = vmatpush1.msra.mxu0 0.0
    %6792 = vmatprep.subr.mxu0 0.0
    %6793 = vmatpush1.msra.mxu0 0.0
    %6794 = vmatprep.mubr.f32.mxu0 0.0
    %6795 = vmatmul.mubr.f32.gmra.mrb[0].mxu0 %v6650
    %v6796 = vpop.f32.mrb[0].mxu0
    %v6797 = vadd.f32 0.0, %v6796
    %v6798 = vpop.f32.mrb[0].mxu0
    %6799 = vmatprep.mubr.f32.mxu0 0.0
    %6800 = vmatmul.mubr.f32.gmra.mrb[0].mxu0 %v6653
    %v6801 = vpop.f32.mrb[0].mxu0
    %v6802 = vadd.f32 0.0, %v6801
    %v6803 = vpop.f32.mrb[0].mxu0
    %6804 = vmatprep.mubr.f32.mxu0 0.0
    %6805 = vmatmul.mubr.f32.gmra.mrb[0].mxu0 %v6656
    %v6806 = vpop.f32.mrb[0].mxu0
    %v6807 = vadd.f32 0.0, %v6806
    %v6808 = vpop.f32.mrb[0].mxu0
    %6809 = vmatprep.mubr.f32.mxu0 0.0
    %6810 = vmatmul.mubr.f32.gmra.mrb[0].mxu0 %v6659
    %v6811 = vpop.f32.mrb[0].mxu0
    %v6812 = vadd.f32 0.0, %v6811
    %v6813 = vpop.f32.mrb[0].mxu0
    %6814 = vmatprep.mubr.f32.mxu0 0.0
    %6815 = vmatmul.mubr.f32.gmra.mrb[0].mxu0 %v6662
    %v6816 = vpop.f32.mrb[0].mxu0
    %v6817 = vadd.f32 0.0, %v6816
    %v6818 = vpop.f32.mrb[0].mxu0
    %6819 = vmatprep.mubr.f32.mxu0 0.0
    %6820 = vmatmul.mubr.f32.gmra.mrb[0].mxu0 %v6665
    %v6821 = vpop.f32.mrb[0].mxu0
    %v6822 = vadd.f32 0.0, %v6821
    %v6823 = vpop.f32.mrb[0].mxu0
    %6824 = vmatprep.mubr.f32.mxu0 0.0
    %6825 = vmatmul.mubr.f32.gmra.mrb[0].mxu0 %v6668
    %v6826 = vpop.f32.mrb[0].mxu0
    %v6827 = vadd.f32 0.0, %v6826
    %v6828 = vpop.f32.mrb[0].mxu0
    %6829 = vmatprep.mubr.f32.mxu0 0.0
    %6830 = vmatmul.mubr.f32.gmra.mrb[0].mxu0 %v6671
    %v6831 = vpop.f32.mrb[0].mxu0
    %v6832 = vadd.f32 0.0, %v6831
    %v6833 = vpop.f32.mrb[0].mxu0
    %6834 = vmatprep.mubr.f32.mxu0 0.0
    %6835 = vmatmul.mubr.f32.gmra.mrb[0].mxu0 %v6674
    %v6836 = vpop.f32.mrb[0].mxu0
    %v6837 = vadd.f32 0.0, %v6836
    %v6838 = vpop.f32.mrb[0].mxu0
    %6839 = vmatprep.mubr.f32.mxu0 0.0
    %6840 = vmatmul.mubr.f32.gmra.mrb[0].mxu0 %v6677
    %v6841 = vpop.f32.mrb[0].mxu0
    %v6842 = vadd.f32 0.0, %v6841
    %v6843 = vpop.f32.mrb[0].mxu0
    %6844 = vmatprep.mubr.f32.mxu0 0.0
    %6845 = vmatmul.mubr.f32.gmra.mrb[0].mxu0 %v6680
    %v6846 = vpop.f32.mrb[0].mxu0
    %v6847 = vadd.f32 0.0, %v6846
    %v6848 = vpop.f32.mrb[0].mxu0
    %6849 = vmatprep.mubr.f32.mxu0 0.0
    %6850 = vmatmul.mubr.f32.gmra.mrb[0].mxu0 %v6683
    %v6851 = vpop.f32.mrb[0].mxu0
    %v6852 = vadd.f32 0.0, %v6851
    %v6853 = vpop.f32.mrb[0].mxu0
    %6854 = vmatprep.mubr.f32.mxu0 0.0
    %6855 = vmatmul.mubr.f32.gmra.mrb[0].mxu0 %v6686
    %v6856 = vpop.f32.mrb[0].mxu0
    %v6857 = vadd.f32 0.0, %v6856
    %v6858 = vpop.f32.mrb[0].mxu0
    %6859 = vmatprep.mubr.f32.mxu0 0.0
    %6860 = vmatmul.mubr.f32.gmra.mrb[0].mxu0 %v6689
    %v6861 = vpop.f32.mrb[0].mxu0
    %v6862 = vadd.f32 0.0, %v6861
    %v6863 = vpop.f32.mrb[0].mxu0
    %6864 = vmatprep.mubr.f32.mxu0 0.0
    %6865 = vmatmul.mubr.f32.gmra.mrb[0].mxu0 %v6692
    %v6866 = vpop.f32.mrb[0].mxu0
    %v6867 = vadd.f32 0.0, %v6866
    %v6868 = vpop.f32.mrb[0].mxu0
    %6869 = vmatprep.mubr.f32.mxu0 0.0
    %6870 = vmatmul.mubr.f32.gmra.mrb[0].mxu0 %v6695
    %v6871 = vpop.f32.mrb[0].mxu0
    %v6872 = vadd.f32 0.0, %v6871
    %v6873 = vpop.f32.mrb[0].mxu0
    %6874 = vmatprep.mubr.f32.mxu0 0.0
    %6875 = vmatmul.mubr.f32.gmra.mrb[0].mxu0 %v6698
    %v6876 = vpop.f32.mrb[0].mxu0
    %v6877 = vadd.f32 0.0, %v6876
    %v6878 = vpop.f32.mrb[0].mxu0
    %6879 = vmatprep.mubr.f32.mxu0 0.0
    %6880 = vmatmul.mubr.f32.gmra.mrb[0].mxu0 %v6701
    %v6881 = vpop.f32.mrb[0].mxu0
    %v6882 = vadd.f32 0.0, %v6881
    %v6883 = vpop.f32.mrb[0].mxu0
    %6884 = vmatprep.mubr.f32.mxu0 0.0
    %6885 = vmatmul.mubr.f32.gmra.mrb[0].mxu0 %v6704
    %v6886 = vpop.f32.mrb[0].mxu0
    %v6887 = vadd.f32 0.0, %v6886
    %v6888 = vpop.f32.mrb[0].mxu0
    %6889 = vmatprep.mubr.f32.mxu0 0.0
    %6890 = vmatmul.mubr.f32.gmra.mrb[0].mxu0 %v6707
    %v6891 = vpop.f32.mrb[0].mxu0
    %v6892 = vadd.f32 0.0, %v6891
    %v6893 = vpop.f32.mrb[0].mxu0
    %6894 = vmatprep.mubr.f32.mxu0 0.0
    %6895 = vmatmul.mubr.f32.gmra.mrb[0].mxu0 %v6710
    %v6896 = vpop.f32.mrb[0].mxu0
    %v6897 = vadd.f32 0.0, %v6896
    %v6898 = vpop.f32.mrb[0].mxu0
    %6899 = vmatprep.mubr.f32.mxu0 0.0
    %6900 = vmatmul.mubr.f32.gmra.mrb[0].mxu0 %v6713
    %v6901 = vpop.f32.mrb[0].mxu0
    %v6902 = vadd.f32 0.0, %v6901
    %v6903 = vpop.f32.mrb[0].mxu0
    %6904 = vmatprep.mubr.f32.mxu0 0.0
    %6905 = vmatmul.mubr.f32.gmra.mrb[0].mxu0 %v6716
    %v6906 = vpop.f32.mrb[0].mxu0
    %v6907 = vadd.f32 0.0, %v6906
    %v6908 = vpop.f32.mrb[0].mxu0
    %6909 = vmatprep.mubr.f32.mxu0 0.0
    %6910 = vmatmul.mubr.f32.gmra.mrb[0].mxu0 %v6719
    %v6911 = vpop.f32.mrb[0].mxu0
    %v6912 = vadd.f32 0.0, %v6911
    %v6913 = vpop.f32.mrb[0].mxu0
    %6914 = vmatprep.mubr.f32.mxu0 0.0
    %6915 = vmatmul.mubr.f32.gmra.mrb[0].mxu0 %v6722
    %v6916 = vpop.f32.mrb[0].mxu0
    %v6917 = vadd.f32 0.0, %v6916
    %v6918 = vpop.f32.mrb[0].mxu0
    %6919 = vmatprep.mubr.f32.mxu0 0.0
    %6920 = vmatmul.mubr.f32.gmra.mrb[0].mxu0 %v6725
    %v6921 = vpop.f32.mrb[0].mxu0
    %v6922 = vadd.f32 0.0, %v6921
    %v6923 = vpop.f32.mrb[0].mxu0
    %6924 = vmatprep.mubr.f32.mxu0 0.0
    %6925 = vmatmul.mubr.f32.gmra.mrb[0].mxu0 %v6728
    %v6926 = vpop.f32.mrb[0].mxu0
    %v6927 = vadd.f32 0.0, %v6926
    %v6928 = vpop.f32.mrb[0].mxu0
    %6929 = vdwg.mxu0
    %6957 = vrot.lane.b32.xlu0 %v6797, 123
    %v6958 = vpop.permute.xlu0 %6957
    %6959 = vrot.lane.b32.xlu0 %v6802, 123
    %v6960 = vpop.permute.xlu0 %6959
    %6961 = vrot.lane.b32.xlu0 %v6807, 123
    %v6962 = vpop.permute.xlu0 %6961
    %6963 = vrot.lane.b32.xlu0 %v6812, 123
    %v6964 = vpop.permute.xlu0 %6963
    %6965 = vrot.lane.b32.xlu0 %v6817, 123
    %v6966 = vpop.permute.xlu0 %6965
    %6967 = vrot.lane.b32.xlu0 %v6822, 123
    %v6968 = vpop.permute.xlu0 %6967
    %6969 = vrot.lane.b32.xlu0 %v6827, 123
    %v6970 = vpop.permute.xlu0 %6969
    %6971 = vrot.lane.b32.xlu0 %v6832, 123
    %v6972 = vpop.permute.xlu0 %6971
    %6973 = vrot.lane.b32.xlu0 %v6837, 123
    %v6974 = vpop.permute.xlu0 %6973
    %6975 = vrot.lane.b32.xlu0 %v6842, 123
    %v6976 = vpop.permute.xlu0 %6975
    %6977 = vrot.lane.b32.xlu0 %v6847, 123
    %v6978 = vpop.permute.xlu0 %6977
    %6979 = vrot.lane.b32.xlu0 %v6852, 123
    %v6980 = vpop.permute.xlu0 %6979
    %6981 = vrot.lane.b32.xlu0 %v6857, 123
    %v6982 = vpop.permute.xlu0 %6981
    %6983 = vrot.lane.b32.xlu0 %v6862, 123
    %v6984 = vpop.permute.xlu0 %6983
    %6985 = vrot.lane.b32.xlu0 %v6867, 123
    %v6986 = vpop.permute.xlu0 %6985
    %6987 = vrot.lane.b32.xlu0 %v6872, 123
    %v6988 = vpop.permute.xlu0 %6987
    %6989 = vrot.lane.b32.xlu0 %v6877, 123
    %v6990 = vpop.permute.xlu0 %6989
    %6991 = vrot.lane.b32.xlu0 %v6882, 123
    %v6992 = vpop.permute.xlu0 %6991
    %6993 = vrot.lane.b32.xlu0 %v6887, 123
    %v6994 = vpop.permute.xlu0 %6993
    %6995 = vrot.lane.b32.xlu0 %v6892, 123
    %v6996 = vpop.permute.xlu0 %6995
    %6997 = vrot.lane.b32.xlu0 %v6897, 123
    %v6998 = vpop.permute.xlu0 %6997
    %6999 = vrot.lane.b32.xlu0 %v6902, 123
    %v7000 = vpop.permute.xlu0 %6999
    %7001 = vrot.lane.b32.xlu0 %v6907, 123
    %v7002 = vpop.permute.xlu0 %7001
    %7003 = vrot.lane.b32.xlu0 %v6912, 123
    %v7004 = vpop.permute.xlu0 %7003
    %7005 = vrot.lane.b32.xlu0 %v6917, 123
    %v7006 = vpop.permute.xlu0 %7005
    %7007 = vrot.lane.b32.xlu0 %v6922, 123
    %v7008 = vpop.permute.xlu0 %7007
    %7009 = vrot.lane.b32.xlu0 %v6927, 123
    %v7010 = vpop.permute.xlu0 %7009
    %v7038 = vmax.f32 %v6797, %v6958
    %v7039 = vmax.f32 %v6802, %v6960
    %v7040 = vmax.f32 %v6807, %v6962
    %v7041 = vmax.f32 %v6812, %v6964
    %v7042 = vmax.f32 %v6817, %v6966
    %v7043 = vmax.f32 %v6822, %v6968
    %v7044 = vmax.f32 %v6827, %v6970
    %v7045 = vmax.f32 %v6832, %v6972
    %v7046 = vmax.f32 %v6837, %v6974
    %v7047 = vmax.f32 %v6842, %v6976
    %v7048 = vmax.f32 %v6847, %v6978
    %v7049 = vmax.f32 %v6852, %v6980
    %v7050 = vmax.f32 %v6857, %v6982
    %v7051 = vmax.f32 %v6862, %v6984
    %v7052 = vmax.f32 %v6867, %v6986
    %v7053 = vmax.f32 %v6872, %v6988
    %v7054 = vmax.f32 %v6877, %v6990
    %v7055 = vmax.f32 %v6882, %v6992
    %v7056 = vmax.f32 %v6887, %v6994
    %v7057 = vmax.f32 %v6892, %v6996
    %v7058 = vmax.f32 %v6897, %v6998
    %v7059 = vmax.f32 %v6902, %v7000
    %v7060 = vmax.f32 %v6907, %v7002
    %v7061 = vmax.f32 %v6912, %v7004
    %v7062 = vmax.f32 %v6917, %v7006
    %v7063 = vmax.f32 %v6922, %v7008
    %v7064 = vmax.f32 %v6927, %v7010
    %7092 = vrot.lane.b32.xlu0 %v7038, 118
    %v7093 = vpop.permute.xlu0 %7092
    %7094 = vrot.lane.b32.xlu0 %v7039, 118
    %v7095 = vpop.permute.xlu0 %7094
    %7096 = vrot.lane.b32.xlu0 %v7040, 118
    %v7097 = vpop.permute.xlu0 %7096
    %7098 = vrot.lane.b32.xlu0 %v7041, 118
    %v7099 = vpop.permute.xlu0 %7098
    %7100 = vrot.lane.b32.xlu0 %v7042, 118
    %v7101 = vpop.permute.xlu0 %7100
    %7102 = vrot.lane.b32.xlu0 %v7043, 118
    %v7103 = vpop.permute.xlu0 %7102
    %7104 = vrot.lane.b32.xlu0 %v7044, 118
    %v7105 = vpop.permute.xlu0 %7104
    %7106 = vrot.lane.b32.xlu0 %v7045, 118
    %v7107 = vpop.permute.xlu0 %7106
    %7108 = vrot.lane.b32.xlu0 %v7046, 118
    %v7109 = vpop.permute.xlu0 %7108
    %7110 = vrot.lane.b32.xlu0 %v7047, 118
    %v7111 = vpop.permute.xlu0 %7110
    %7112 = vrot.lane.b32.xlu0 %v7048, 118
    %v7113 = vpop.permute.xlu0 %7112
    %7114 = vrot.lane.b32.xlu0 %v7049, 118
    %v7115 = vpop.permute.xlu0 %7114
    %7116 = vrot.lane.b32.xlu0 %v7050, 118
    %v7117 = vpop.permute.xlu0 %7116
    %7118 = vrot.lane.b32.xlu0 %v7051, 118
    %v7119 = vpop.permute.xlu0 %7118
    %7120 = vrot.lane.b32.xlu0 %v7052, 118
    %v7121 = vpop.permute.xlu0 %7120
    %7122 = vrot.lane.b32.xlu0 %v7053, 118
    %v7123 = vpop.permute.xlu0 %7122
    %7124 = vrot.lane.b32.xlu0 %v7054, 118
    %v7125 = vpop.permute.xlu0 %7124
    %7126 = vrot.lane.b32.xlu0 %v7055, 118
    %v7127 = vpop.permute.xlu0 %7126
    %7128 = vrot.lane.b32.xlu0 %v7056, 118
    %v7129 = vpop.permute.xlu0 %7128
    %7130 = vrot.lane.b32.xlu0 %v7057, 118
    %v7131 = vpop.permute.xlu0 %7130
    %7132 = vrot.lane.b32.xlu0 %v7058, 118
    %v7133 = vpop.permute.xlu0 %7132
    %7134 = vrot.lane.b32.xlu0 %v7059, 118
    %v7135 = vpop.permute.xlu0 %7134
    %7136 = vrot.lane.b32.xlu0 %v7060, 118
    %v7137 = vpop.permute.xlu0 %7136
    %7138 = vrot.lane.b32.xlu0 %v7061, 118
    %v7139 = vpop.permute.xlu0 %7138
    %7140 = vrot.lane.b32.xlu0 %v7062, 118
    %v7141 = vpop.permute.xlu0 %7140
    %7142 = vrot.lane.b32.xlu0 %v7063, 118
    %v7143 = vpop.permute.xlu0 %7142
    %7144 = vrot.lane.b32.xlu0 %v7064, 118
    %v7145 = vpop.permute.xlu0 %7144
    %v7173 = vmax.f32 %v7038, %v7093
    %v7174 = vmax.f32 %v7039, %v7095
    %v7175 = vmax.f32 %v7040, %v7097
    %v7176 = vmax.f32 %v7041, %v7099
    %v7177 = vmax.f32 %v7042, %v7101
    %v7178 = vmax.f32 %v7043, %v7103
    %v7179 = vmax.f32 %v7044, %v7105
    %v7180 = vmax.f32 %v7045, %v7107
    %v7181 = vmax.f32 %v7046, %v7109
    %v7182 = vmax.f32 %v7047, %v7111
    %v7183 = vmax.f32 %v7048, %v7113
    %v7184 = vmax.f32 %v7049, %v7115
    %v7185 = vmax.f32 %v7050, %v7117
    %v7186 = vmax.f32 %v7051, %v7119
    %v7187 = vmax.f32 %v7052, %v7121
    %v7188 = vmax.f32 %v7053, %v7123
    %v7189 = vmax.f32 %v7054, %v7125
    %v7190 = vmax.f32 %v7055, %v7127
    %v7191 = vmax.f32 %v7056, %v7129
    %v7192 = vmax.f32 %v7057, %v7131
    %v7193 = vmax.f32 %v7058, %v7133
    %v7194 = vmax.f32 %v7059, %v7135
    %v7195 = vmax.f32 %v7060, %v7137
    %v7196 = vmax.f32 %v7061, %v7139
    %v7197 = vmax.f32 %v7062, %v7141
    %v7198 = vmax.f32 %v7063, %v7143
    %v7199 = vmax.f32 %v7064, %v7145
    %v7200 = vadd.f32 %v7173, %v629
    %v7201 = vadd.f32 %v7174, %v629
    %v7202 = vadd.f32 %v7175, %v629
    %v7203 = vadd.f32 %v7176, %v629
    %v7204 = vadd.f32 %v7177, %v629
    %v7205 = vadd.f32 %v7178, %v629
    %v7206 = vadd.f32 %v7179, %v629
    %v7207 = vadd.f32 %v7180, %v629
    %v7208 = vadd.f32 %v7181, %v629
    %v7209 = vadd.f32 %v7182, %v629
    %v7210 = vadd.f32 %v7183, %v629
    %v7211 = vadd.f32 %v7184, %v629
    %v7212 = vadd.f32 %v7185, %v629
    %v7213 = vadd.f32 %v7186, %v629
    %v7214 = vadd.f32 %v7187, %v629
    %v7215 = vadd.f32 %v7188, %v629
    %v7216 = vadd.f32 %v7189, %v629
    %v7217 = vadd.f32 %v7190, %v629
    %v7218 = vadd.f32 %v7191, %v629
    %v7219 = vadd.f32 %v7192, %v629
    %v7220 = vadd.f32 %v7193, %v629
    %v7221 = vadd.f32 %v7194, %v629
    %v7222 = vadd.f32 %v7195, %v629
    %v7223 = vadd.f32 %v7196, %v629
    %v7224 = vadd.f32 %v7197, %v629
    %v7225 = vadd.f32 %v7198, %v629
    %v7226 = vadd.f32 %v7199, %v629
    %v7227 = vmax.f32 %v7200, 0.0
    %v7228 = vmax.f32 %v7201, 0.0
    %v7229 = vmax.f32 %v7202, 0.0
    %v7230 = vmax.f32 %v7203, 0.0
    %v7231 = vmax.f32 %v7204, 0.0
    %v7232 = vmax.f32 %v7205, 0.0
    %v7233 = vmax.f32 %v7206, 0.0
    %v7234 = vmax.f32 %v7207, 0.0
    %v7235 = vmax.f32 %v7208, 0.0
    %v7236 = vmax.f32 %v7209, 0.0
    %v7237 = vmax.f32 %v7210, 0.0
    %v7238 = vmax.f32 %v7211, 0.0
    %v7239 = vmax.f32 %v7212, 0.0
    %v7240 = vmax.f32 %v7213, 0.0
    %v7241 = vmax.f32 %v7214, 0.0
    %v7242 = vmax.f32 %v7215, 0.0
    %v7243 = vmax.f32 %v7216, 0.0
    %v7244 = vmax.f32 %v7217, 0.0
    %v7245 = vmax.f32 %v7218, 0.0
    %v7246 = vmax.f32 %v7219, 0.0
    %v7247 = vmax.f32 %v7220, 0.0
    %v7248 = vmax.f32 %v7221, 0.0
    %v7249 = vmax.f32 %v7222, 0.0
    %v7250 = vmax.f32 %v7223, 0.0
    %v7251 = vmax.f32 %v7224, 0.0
    %v7252 = vmax.f32 %v7225, 0.0
    %v7253 = vmax.f32 %v7226, 0.0
    %s7254 = scalar_lea.vmem %s3, 56
    %v7255 = vld [vmem:[%s7254] sm:$0x1f]
    %v7257 = vsel %vm1321, %v7227, 0
    %v7260 = vsel %vm1321, %v7228, 0
    %v7263 = vsel %vm1321, %v7229, 0
    %v7266 = vsel %vm1321, %v7230, 0
    %v7269 = vsel %vm1321, %v7231, 0
    %v7272 = vsel %vm1321, %v7232, 0
    %v7275 = vsel %vm1321, %v7233, 0
    %v7278 = vsel %vm1321, %v7234, 0
    %v7281 = vsel %vm1321, %v7235, 0
    %v7284 = vsel %vm1321, %v7236, 0
    %v7287 = vsel %vm1321, %v7237, 0
    %v7290 = vsel %vm1321, %v7238, 0
    %v7293 = vsel %vm1321, %v7239, 0
    %v7296 = vsel %vm1321, %v7240, 0
    %v7299 = vsel %vm1321, %v7241, 0
    %v7302 = vsel %vm1321, %v7242, 0
    %v7305 = vsel %vm1321, %v7243, 0
    %v7308 = vsel %vm1321, %v7244, 0
    %v7311 = vsel %vm1321, %v7245, 0
    %v7314 = vsel %vm1321, %v7246, 0
    %v7317 = vsel %vm1321, %v7247, 0
    %v7320 = vsel %vm1321, %v7248, 0
    %v7323 = vsel %vm1321, %v7249, 0
    %v7326 = vsel %vm1321, %v7250, 0
    %v7329 = vsel %vm1321, %v7251, 0
    %v7332 = vsel %vm1321, %v7252, 0
    %v7335 = vsel %vm1321, %v7253, 0
    %v7338 = vsel %vm1403, %v7255, 0
    %7340 = vmatprep.subr.mxu0 0.0
    %7341 = vmatpush1.msra.mxu0 %v7338
    %7342 = vmatprep.subr.mxu0 0.0
    %7343 = vmatpush1.msra.mxu0 0.0
    %7344 = vmatprep.subr.mxu0 0.0
    %7345 = vmatpush1.msra.mxu0 0.0
    %7346 = vmatprep.subr.mxu0 0.0
    %7347 = vmatpush1.msra.mxu0 0.0
    %7348 = vmatprep.subr.mxu0 0.0
    %7349 = vmatpush1.msra.mxu0 0.0
    %7350 = vmatprep.subr.mxu0 0.0
    %7351 = vmatpush1.msra.mxu0 0.0
    %7352 = vmatprep.subr.mxu0 0.0
    %7353 = vmatpush1.msra.mxu0 0.0
    %7354 = vmatprep.subr.mxu0 0.0
    %7355 = vmatpush1.msra.mxu0 0.0
    %7356 = vmatprep.subr.mxu0 0.0
    %7357 = vmatpush1.msra.mxu0 0.0
    %7358 = vmatprep.subr.mxu0 0.0
    %7359 = vmatpush1.msra.mxu0 0.0
    %7360 = vmatprep.subr.mxu0 0.0
    %7361 = vmatpush1.msra.mxu0 0.0
    %7362 = vmatprep.subr.mxu0 0.0
    %7363 = vmatpush1.msra.mxu0 0.0
    %7364 = vmatprep.subr.mxu0 0.0
    %7365 = vmatpush1.msra.mxu0 0.0
    %7366 = vmatprep.subr.mxu0 0.0
    %7367 = vmatpush1.msra.mxu0 0.0
    %7368 = vmatprep.subr.mxu0 0.0
    %7369 = vmatpush1.msra.mxu0 0.0
    %7370 = vmatprep.subr.mxu0 0.0
    %7371 = vmatpush1.msra.mxu0 0.0
    %7372 = vmatprep.subr.mxu0 0.0
    %7373 = vmatpush1.msra.mxu0 0.0
    %7374 = vmatprep.subr.mxu0 0.0
    %7375 = vmatpush1.msra.mxu0 0.0
    %7376 = vmatprep.subr.mxu0 0.0
    %7377 = vmatpush1.msra.mxu0 0.0
    %7378 = vmatprep.subr.mxu0 0.0
    %7379 = vmatpush1.msra.mxu0 0.0
    %7380 = vmatprep.subr.mxu0 0.0
    %7381 = vmatpush1.msra.mxu0 0.0
    %7382 = vmatprep.subr.mxu0 0.0
    %7383 = vmatpush1.msra.mxu0 0.0
    %7384 = vmatprep.subr.mxu0 0.0
    %7385 = vmatpush1.msra.mxu0 0.0
    %7386 = vmatprep.subr.mxu0 0.0
    %7387 = vmatpush1.msra.mxu0 0.0
    %7388 = vmatprep.subr.mxu0 0.0
    %7389 = vmatpush1.msra.mxu0 0.0
    %7390 = vmatprep.subr.mxu0 0.0
    %7391 = vmatpush1.msra.mxu0 0.0
    %7392 = vmatprep.subr.mxu0 0.0
    %7393 = vmatpush1.msra.mxu0 0.0
    %7394 = vmatprep.subr.mxu0 0.0
    %7395 = vmatpush1.msra.mxu0 0.0
    %7396 = vmatprep.subr.mxu0 0.0
    %7397 = vmatpush1.msra.mxu0 0.0
    %7398 = vmatprep.subr.mxu0 0.0
    %7399 = vmatpush1.msra.mxu0 0.0
    %7400 = vmatprep.subr.mxu0 0.0
    %7401 = vmatpush1.msra.mxu0 0.0
    %7402 = vmatprep.subr.mxu0 0.0
    %7403 = vmatpush1.msra.mxu0 0.0
    %7404 = vmatprep.mubr.f32.mxu0 0.0
    %7405 = vmatmul.mubr.f32.gmra.mrb[0].mxu0 %v7257
    %v7406 = vpop.f32.mrb[0].mxu0
    %v7407 = vadd.f32 0.0, %v7406
    %v7408 = vpop.f32.mrb[0].mxu0
    %7409 = vmatprep.mubr.f32.mxu0 0.0
    %7410 = vmatmul.mubr.f32.gmra.mrb[0].mxu0 %v7260
    %v7411 = vpop.f32.mrb[0].mxu0
    %v7412 = vadd.f32 0.0, %v7411
    %v7413 = vpop.f32.mrb[0].mxu0
    %7414 = vmatprep.mubr.f32.mxu0 0.0
    %7415 = vmatmul.mubr.f32.gmra.mrb[0].mxu0 %v7263
    %v7416 = vpop.f32.mrb[0].mxu0
    %v7417 = vadd.f32 0.0, %v7416
    %v7418 = vpop.f32.mrb[0].mxu0
    %7419 = vmatprep.mubr.f32.mxu0 0.0
    %7420 = vmatmul.mubr.f32.gmra.mrb[0].mxu0 %v7266
    %v7421 = vpop.f32.mrb[0].mxu0
    %v7422 = vadd.f32 0.0, %v7421
    %v7423 = vpop.f32.mrb[0].mxu0
    %7424 = vmatprep.mubr.f32.mxu0 0.0
    %7425 = vmatmul.mubr.f32.gmra.mrb[0].mxu0 %v7269
    %v7426 = vpop.f32.mrb[0].mxu0
    %v7427 = vadd.f32 0.0, %v7426
    %v7428 = vpop.f32.mrb[0].mxu0
    %7429 = vmatprep.mubr.f32.mxu0 0.0
    %7430 = vmatmul.mubr.f32.gmra.mrb[0].mxu0 %v7272
    %v7431 = vpop.f32.mrb[0].mxu0
    %v7432 = vadd.f32 0.0, %v7431
    %v7433 = vpop.f32.mrb[0].mxu0
    %7434 = vmatprep.mubr.f32.mxu0 0.0
    %7435 = vmatmul.mubr.f32.gmra.mrb[0].mxu0 %v7275
    %v7436 = vpop.f32.mrb[0].mxu0
    %v7437 = vadd.f32 0.0, %v7436
    %v7438 = vpop.f32.mrb[0].mxu0
    %7439 = vmatprep.mubr.f32.mxu0 0.0
    %7440 = vmatmul.mubr.f32.gmra.mrb[0].mxu0 %v7278
    %v7441 = vpop.f32.mrb[0].mxu0
    %v7442 = vadd.f32 0.0, %v7441
    %v7443 = vpop.f32.mrb[0].mxu0
    %7444 = vmatprep.mubr.f32.mxu0 0.0
    %7445 = vmatmul.mubr.f32.gmra.mrb[0].mxu0 %v7281
    %v7446 = vpop.f32.mrb[0].mxu0
    %v7447 = vadd.f32 0.0, %v7446
    %v7448 = vpop.f32.mrb[0].mxu0
    %7449 = vmatprep.mubr.f32.mxu0 0.0
    %7450 = vmatmul.mubr.f32.gmra.mrb[0].mxu0 %v7284
    %v7451 = vpop.f32.mrb[0].mxu0
    %v7452 = vadd.f32 0.0, %v7451
    %v7453 = vpop.f32.mrb[0].mxu0
    %7454 = vmatprep.mubr.f32.mxu0 0.0
    %7455 = vmatmul.mubr.f32.gmra.mrb[0].mxu0 %v7287
    %v7456 = vpop.f32.mrb[0].mxu0
    %v7457 = vadd.f32 0.0, %v7456
    %v7458 = vpop.f32.mrb[0].mxu0
    %7459 = vmatprep.mubr.f32.mxu0 0.0
    %7460 = vmatmul.mubr.f32.gmra.mrb[0].mxu0 %v7290
    %v7461 = vpop.f32.mrb[0].mxu0
    %v7462 = vadd.f32 0.0, %v7461
    %v7463 = vpop.f32.mrb[0].mxu0
    %7464 = vmatprep.mubr.f32.mxu0 0.0
    %7465 = vmatmul.mubr.f32.gmra.mrb[0].mxu0 %v7293
    %v7466 = vpop.f32.mrb[0].mxu0
    %v7467 = vadd.f32 0.0, %v7466
    %v7468 = vpop.f32.mrb[0].mxu0
    %7469 = vmatprep.mubr.f32.mxu0 0.0
    %7470 = vmatmul.mubr.f32.gmra.mrb[0].mxu0 %v7296
    %v7471 = vpop.f32.mrb[0].mxu0
    %v7472 = vadd.f32 0.0, %v7471
    %v7473 = vpop.f32.mrb[0].mxu0
    %7474 = vmatprep.mubr.f32.mxu0 0.0
    %7475 = vmatmul.mubr.f32.gmra.mrb[0].mxu0 %v7299
    %v7476 = vpop.f32.mrb[0].mxu0
    %v7477 = vadd.f32 0.0, %v7476
    %v7478 = vpop.f32.mrb[0].mxu0
    %7479 = vmatprep.mubr.f32.mxu0 0.0
    %7480 = vmatmul.mubr.f32.gmra.mrb[0].mxu0 %v7302
    %v7481 = vpop.f32.mrb[0].mxu0
    %v7482 = vadd.f32 0.0, %v7481
    %v7483 = vpop.f32.mrb[0].mxu0
    %7484 = vmatprep.mubr.f32.mxu0 0.0
    %7485 = vmatmul.mubr.f32.gmra.mrb[0].mxu0 %v7305
    %v7486 = vpop.f32.mrb[0].mxu0
    %v7487 = vadd.f32 0.0, %v7486
    %v7488 = vpop.f32.mrb[0].mxu0
    %7489 = vmatprep.mubr.f32.mxu0 0.0
    %7490 = vmatmul.mubr.f32.gmra.mrb[0].mxu0 %v7308
    %v7491 = vpop.f32.mrb[0].mxu0
    %v7492 = vadd.f32 0.0, %v7491
    %v7493 = vpop.f32.mrb[0].mxu0
    %7494 = vmatprep.mubr.f32.mxu0 0.0
    %7495 = vmatmul.mubr.f32.gmra.mrb[0].mxu0 %v7311
    %v7496 = vpop.f32.mrb[0].mxu0
    %v7497 = vadd.f32 0.0, %v7496
    %v7498 = vpop.f32.mrb[0].mxu0
    %7499 = vmatprep.mubr.f32.mxu0 0.0
    %7500 = vmatmul.mubr.f32.gmra.mrb[0].mxu0 %v7314
    %v7501 = vpop.f32.mrb[0].mxu0
    %v7502 = vadd.f32 0.0, %v7501
    %v7503 = vpop.f32.mrb[0].mxu0
    %7504 = vmatprep.mubr.f32.mxu0 0.0
    %7505 = vmatmul.mubr.f32.gmra.mrb[0].mxu0 %v7317
    %v7506 = vpop.f32.mrb[0].mxu0
    %v7507 = vadd.f32 0.0, %v7506
    %v7508 = vpop.f32.mrb[0].mxu0
    %7509 = vmatprep.mubr.f32.mxu0 0.0
    %7510 = vmatmul.mubr.f32.gmra.mrb[0].mxu0 %v7320
    %v7511 = vpop.f32.mrb[0].mxu0
    %v7512 = vadd.f32 0.0, %v7511
    %v7513 = vpop.f32.mrb[0].mxu0
    %7514 = vmatprep.mubr.f32.mxu0 0.0
    %7515 = vmatmul.mubr.f32.gmra.mrb[0].mxu0 %v7323
    %v7516 = vpop.f32.mrb[0].mxu0
    %v7517 = vadd.f32 0.0, %v7516
    %v7518 = vpop.f32.mrb[0].mxu0
    %7519 = vmatprep.mubr.f32.mxu0 0.0
    %7520 = vmatmul.mubr.f32.gmra.mrb[0].mxu0 %v7326
    %v7521 = vpop.f32.mrb[0].mxu0
    %v7522 = vadd.f32 0.0, %v7521
    %v7523 = vpop.f32.mrb[0].mxu0
    %7524 = vmatprep.mubr.f32.mxu0 0.0
    %7525 = vmatmul.mubr.f32.gmra.mrb[0].mxu0 %v7329
    %v7526 = vpop.f32.mrb[0].mxu0
    %v7527 = vadd.f32 0.0, %v7526
    %v7528 = vpop.f32.mrb[0].mxu0
    %7529 = vmatprep.mubr.f32.mxu0 0.0
    %7530 = vmatmul.mubr.f32.gmra.mrb[0].mxu0 %v7332
    %v7531 = vpop.f32.mrb[0].mxu0
    %v7532 = vadd.f32 0.0, %v7531
    %v7533 = vpop.f32.mrb[0].mxu0
    %7534 = vmatprep.mubr.f32.mxu0 0.0
    %7535 = vmatmul.mubr.f32.gmra.mrb[0].mxu0 %v7335
    %v7536 = vpop.f32.mrb[0].mxu0
    %v7537 = vadd.f32 0.0, %v7536
    %v7538 = vpop.f32.mrb[0].mxu0
    %7539 = vdwg.mxu0
    %v7540 = vadd.f32 %v6594, %v7407
    %v7541 = vadd.f32 %v6595, %v7412
    %v7542 = vadd.f32 %v6596, %v7417
    %v7543 = vadd.f32 %v6597, %v7422
    %v7544 = vadd.f32 %v6598, %v7427
    %v7545 = vadd.f32 %v6599, %v7432
    %v7546 = vadd.f32 %v6600, %v7437
    %v7547 = vadd.f32 %v6601, %v7442
    %v7548 = vadd.f32 %v6602, %v7447
    %v7549 = vadd.f32 %v6603, %v7452
    %v7550 = vadd.f32 %v6604, %v7457
    %v7551 = vadd.f32 %v6605, %v7462
    %v7552 = vadd.f32 %v6606, %v7467
    %v7553 = vadd.f32 %v6607, %v7472
    %v7554 = vadd.f32 %v6608, %v7477
    %v7555 = vadd.f32 %v6609, %v7482
    %v7556 = vadd.f32 %v6610, %v7487
    %v7557 = vadd.f32 %v6611, %v7492
    %v7558 = vadd.f32 %v6612, %v7497
    %v7559 = vadd.f32 %v6613, %v7502
    %v7560 = vadd.f32 %v6614, %v7507
    %v7561 = vadd.f32 %v6615, %v7512
    %v7562 = vadd.f32 %v6616, %v7517
    %v7563 = vadd.f32 %v6617, %v7522
    %v7564 = vadd.f32 %v6618, %v7527
    %v7565 = vadd.f32 %v6619, %v7532
    %v7566 = vadd.f32 %v6620, %v7537
    %s7567 = scalar_lea.vmem %s0, 1728
    %v7568 = vld [vmem:[%s7567] sm:$0xff]
    %v7569 = vld [vmem:[%s7567 + $0x8] sm:$0xff]
    %v7570 = vld [vmem:[%s7567 + $0x10] sm:$0xff]
    %v7571 = vld [vmem:[%s7567 + $0x18] sm:$0xff]
    %v7572 = vld [vmem:[%s7567 + $0x20] sm:$0xff]
    %v7573 = vld [vmem:[%s7567 + $0x28] sm:$0xff]
    %v7574 = vld [vmem:[%s7567 + $0x30] sm:$0xff]
    %v7575 = vld [vmem:[%s7567 + $0x38] sm:$0xff]
    %v7576 = vld [vmem:[%s7567 + $0x40] sm:$0xff]
    %v7577 = vld [vmem:[%s7567 + $0x48] sm:$0xff]
    %v7578 = vld [vmem:[%s7567 + $0x50] sm:$0xff]
    %v7579 = vld [vmem:[%s7567 + $0x58] sm:$0xff]
    %v7580 = vld [vmem:[%s7567 + $0x60] sm:$0xff]
    %v7581 = vld [vmem:[%s7567 + $0x68] sm:$0xff]
    %v7582 = vld [vmem:[%s7567 + $0x70] sm:$0xff]
    %v7583 = vld [vmem:[%s7567 + $0x78] sm:$0xff]
    %v7584 = vld [vmem:[%s7567 + $0x80] sm:$0xff]
    %v7585 = vld [vmem:[%s7567 + $0x88] sm:$0xff]
    %v7586 = vld [vmem:[%s7567 + $0x90] sm:$0xff]
    %v7587 = vld [vmem:[%s7567 + $0x98] sm:$0xff]
    %v7588 = vld [vmem:[%s7567 + $0xa0] sm:$0xff]
    %v7589 = vld [vmem:[%s7567 + $0xa8] sm:$0xff]
    %v7590 = vld [vmem:[%s7567 + $0xb0] sm:$0xff]
    %v7591 = vld [vmem:[%s7567 + $0xb8] sm:$0xff]
    %v7592 = vld [vmem:[%s7567 + $0xc0] sm:$0xff]
    %v7593 = vld [vmem:[%s7567 + $0xc8] sm:$0xff]
    %v7594 = vld [vmem:[%s7567 + $0xd0] sm:$0x3]
    %v7596 = vsel %vm69, %v7568, 0
    %v7599 = vsel %vm69, %v7569, 0
    %v7602 = vsel %vm69, %v7570, 0
    %v7605 = vsel %vm69, %v7571, 0
    %v7608 = vsel %vm69, %v7572, 0
    %v7611 = vsel %vm69, %v7573, 0
    %v7614 = vsel %vm69, %v7574, 0
    %v7617 = vsel %vm69, %v7575, 0
    %v7620 = vsel %vm69, %v7576, 0
    %v7623 = vsel %vm69, %v7577, 0
    %v7626 = vsel %vm69, %v7578, 0
    %v7629 = vsel %vm69, %v7579, 0
    %v7632 = vsel %vm69, %v7580, 0
    %v7635 = vsel %vm69, %v7581, 0
    %v7638 = vsel %vm69, %v7582, 0
    %v7641 = vsel %vm69, %v7583, 0
    %v7644 = vsel %vm69, %v7584, 0
    %v7647 = vsel %vm69, %v7585, 0
    %v7650 = vsel %vm69, %v7586, 0
    %v7653 = vsel %vm69, %v7587, 0
    %v7656 = vsel %vm69, %v7588, 0
    %v7659 = vsel %vm69, %v7589, 0
    %v7662 = vsel %vm69, %v7590, 0
    %v7665 = vsel %vm69, %v7591, 0
    %v7668 = vsel %vm69, %v7592, 0
    %v7671 = vsel %vm69, %v7593, 0
    %v7674 = vsel %vm69, %v7594, 0
    %7676 = vmatprep.subr.mxu0 0.0
    %7677 = vmatpush1.msra.mxu0 %v67
    %7678 = vmatprep.subr.mxu0 0.0
    %7679 = vmatpush1.msra.mxu0 %v153
    %7680 = vmatprep.subr.mxu0 0.0
    %7681 = vmatpush1.msra.mxu0 0.0
    %7682 = vmatprep.subr.mxu0 0.0
    %7683 = vmatpush1.msra.mxu0 0.0
    %7684 = vmatprep.subr.mxu0 0.0
    %7685 = vmatpush1.msra.mxu0 0.0
    %7686 = vmatprep.subr.mxu0 0.0
    %7687 = vmatpush1.msra.mxu0 0.0
    %7688 = vmatprep.subr.mxu0 0.0
    %7689 = vmatpush1.msra.mxu0 0.0
    %7690 = vmatprep.subr.mxu0 0.0
    %7691 = vmatpush1.msra.mxu0 0.0
    %7692 = vmatprep.subr.mxu0 0.0
    %7693 = vmatpush1.msra.mxu0 0.0
    %7694 = vmatprep.subr.mxu0 0.0
    %7695 = vmatpush1.msra.mxu0 0.0
    %7696 = vmatprep.subr.mxu0 0.0
    %7697 = vmatpush1.msra.mxu0 0.0
    %7698 = vmatprep.subr.mxu0 0.0
    %7699 = vmatpush1.msra.mxu0 0.0
    %7700 = vmatprep.subr.mxu0 0.0
    %7701 = vmatpush1.msra.mxu0 0.0
    %7702 = vmatprep.subr.mxu0 0.0
    %7703 = vmatpush1.msra.mxu0 0.0
    %7704 = vmatprep.subr.mxu0 0.0
    %7705 = vmatpush1.msra.mxu0 0.0
    %7706 = vmatprep.subr.mxu0 0.0
    %7707 = vmatpush1.msra.mxu0 0.0
    %7708 = vmatprep.subr.mxu0 0.0
    %7709 = vmatpush1.msra.mxu0 0.0
    %7710 = vmatprep.subr.mxu0 0.0
    %7711 = vmatpush1.msra.mxu0 0.0
    %7712 = vmatprep.subr.mxu0 0.0
    %7713 = vmatpush1.msra.mxu0 0.0
    %7714 = vmatprep.subr.mxu0 0.0
    %7715 = vmatpush1.msra.mxu0 0.0
    %7716 = vmatprep.subr.mxu0 0.0
    %7717 = vmatpush1.msra.mxu0 0.0
    %7718 = vmatprep.subr.mxu0 0.0
    %7719 = vmatpush1.msra.mxu0 0.0
    %7720 = vmatprep.subr.mxu0 0.0
    %7721 = vmatpush1.msra.mxu0 0.0
    %7722 = vmatprep.subr.mxu0 0.0
    %7723 = vmatpush1.msra.mxu0 0.0
    %7724 = vmatprep.subr.mxu0 0.0
    %7725 = vmatpush1.msra.mxu0 0.0
    %7726 = vmatprep.subr.mxu0 0.0
    %7727 = vmatpush1.msra.mxu0 0.0
    %7728 = vmatprep.subr.mxu0 0.0
    %7729 = vmatpush1.msra.mxu0 0.0
    %7730 = vmatprep.subr.mxu0 0.0
    %7731 = vmatpush1.msra.mxu0 0.0
    %7732 = vmatprep.subr.mxu0 0.0
    %7733 = vmatpush1.msra.mxu0 0.0
    %7734 = vmatprep.subr.mxu0 0.0
    %7735 = vmatpush1.msra.mxu0 0.0
    %7736 = vmatprep.subr.mxu0 0.0
    %7737 = vmatpush1.msra.mxu0 0.0
    %7738 = vmatprep.subr.mxu0 0.0
    %7739 = vmatpush1.msra.mxu0 0.0
    %7740 = vmatprep.mubr.f32.mxu0 0.0
    %7741 = vmatmul.mubr.f32.gmra.mrb[0].mxu0 %v7596
    %v7742 = vpop.f32.mrb[0].mxu0
    %v7743 = vadd.f32 0.0, %v7742
    %v7744 = vpop.f32.mrb[0].mxu0
    %7745 = vmatprep.mubr.f32.mxu0 0.0
    %7746 = vmatmul.mubr.f32.gmra.mrb[0].mxu0 %v7599
    %v7747 = vpop.f32.mrb[0].mxu0
    %v7748 = vadd.f32 0.0, %v7747
    %v7749 = vpop.f32.mrb[0].mxu0
    %7750 = vmatprep.mubr.f32.mxu0 0.0
    %7751 = vmatmul.mubr.f32.gmra.mrb[0].mxu0 %v7602
    %v7752 = vpop.f32.mrb[0].mxu0
    %v7753 = vadd.f32 0.0, %v7752
    %v7754 = vpop.f32.mrb[0].mxu0
    %7755 = vmatprep.mubr.f32.mxu0 0.0
    %7756 = vmatmul.mubr.f32.gmra.mrb[0].mxu0 %v7605
    %v7757 = vpop.f32.mrb[0].mxu0
    %v7758 = vadd.f32 0.0, %v7757
    %v7759 = vpop.f32.mrb[0].mxu0
    %7760 = vmatprep.mubr.f32.mxu0 0.0
    %7761 = vmatmul.mubr.f32.gmra.mrb[0].mxu0 %v7608
    %v7762 = vpop.f32.mrb[0].mxu0
    %v7763 = vadd.f32 0.0, %v7762
    %v7764 = vpop.f32.mrb[0].mxu0
    %7765 = vmatprep.mubr.f32.mxu0 0.0
    %7766 = vmatmul.mubr.f32.gmra.mrb[0].mxu0 %v7611
    %v7767 = vpop.f32.mrb[0].mxu0
    %v7768 = vadd.f32 0.0, %v7767
    %v7769 = vpop.f32.mrb[0].mxu0
    %7770 = vmatprep.mubr.f32.mxu0 0.0
    %7771 = vmatmul.mubr.f32.gmra.mrb[0].mxu0 %v7614
    %v7772 = vpop.f32.mrb[0].mxu0
    %v7773 = vadd.f32 0.0, %v7772
    %v7774 = vpop.f32.mrb[0].mxu0
    %7775 = vmatprep.mubr.f32.mxu0 0.0
    %7776 = vmatmul.mubr.f32.gmra.mrb[0].mxu0 %v7617
    %v7777 = vpop.f32.mrb[0].mxu0
    %v7778 = vadd.f32 0.0, %v7777
    %v7779 = vpop.f32.mrb[0].mxu0
    %7780 = vmatprep.mubr.f32.mxu0 0.0
    %7781 = vmatmul.mubr.f32.gmra.mrb[0].mxu0 %v7620
    %v7782 = vpop.f32.mrb[0].mxu0
    %v7783 = vadd.f32 0.0, %v7782
    %v7784 = vpop.f32.mrb[0].mxu0
    %7785 = vmatprep.mubr.f32.mxu0 0.0
    %7786 = vmatmul.mubr.f32.gmra.mrb[0].mxu0 %v7623
    %v7787 = vpop.f32.mrb[0].mxu0
    %v7788 = vadd.f32 0.0, %v7787
    %v7789 = vpop.f32.mrb[0].mxu0
    %7790 = vmatprep.mubr.f32.mxu0 0.0
    %7791 = vmatmul.mubr.f32.gmra.mrb[0].mxu0 %v7626
    %v7792 = vpop.f32.mrb[0].mxu0
    %v7793 = vadd.f32 0.0, %v7792
    %v7794 = vpop.f32.mrb[0].mxu0
    %7795 = vmatprep.mubr.f32.mxu0 0.0
    %7796 = vmatmul.mubr.f32.gmra.mrb[0].mxu0 %v7629
    %v7797 = vpop.f32.mrb[0].mxu0
    %v7798 = vadd.f32 0.0, %v7797
    %v7799 = vpop.f32.mrb[0].mxu0
    %7800 = vmatprep.mubr.f32.mxu0 0.0
    %7801 = vmatmul.mubr.f32.gmra.mrb[0].mxu0 %v7632
    %v7802 = vpop.f32.mrb[0].mxu0
    %v7803 = vadd.f32 0.0, %v7802
    %v7804 = vpop.f32.mrb[0].mxu0
    %7805 = vmatprep.mubr.f32.mxu0 0.0
    %7806 = vmatmul.mubr.f32.gmra.mrb[0].mxu0 %v7635
    %v7807 = vpop.f32.mrb[0].mxu0
    %v7808 = vadd.f32 0.0, %v7807
    %v7809 = vpop.f32.mrb[0].mxu0
    %7810 = vmatprep.mubr.f32.mxu0 0.0
    %7811 = vmatmul.mubr.f32.gmra.mrb[0].mxu0 %v7638
    %v7812 = vpop.f32.mrb[0].mxu0
    %v7813 = vadd.f32 0.0, %v7812
    %v7814 = vpop.f32.mrb[0].mxu0
    %7815 = vmatprep.mubr.f32.mxu0 0.0
    %7816 = vmatmul.mubr.f32.gmra.mrb[0].mxu0 %v7641
    %v7817 = vpop.f32.mrb[0].mxu0
    %v7818 = vadd.f32 0.0, %v7817
    %v7819 = vpop.f32.mrb[0].mxu0
    %7820 = vmatprep.mubr.f32.mxu0 0.0
    %7821 = vmatmul.mubr.f32.gmra.mrb[0].mxu0 %v7644
    %v7822 = vpop.f32.mrb[0].mxu0
    %v7823 = vadd.f32 0.0, %v7822
    %v7824 = vpop.f32.mrb[0].mxu0
    %7825 = vmatprep.mubr.f32.mxu0 0.0
    %7826 = vmatmul.mubr.f32.gmra.mrb[0].mxu0 %v7647
    %v7827 = vpop.f32.mrb[0].mxu0
    %v7828 = vadd.f32 0.0, %v7827
    %v7829 = vpop.f32.mrb[0].mxu0
    %7830 = vmatprep.mubr.f32.mxu0 0.0
    %7831 = vmatmul.mubr.f32.gmra.mrb[0].mxu0 %v7650
    %v7832 = vpop.f32.mrb[0].mxu0
    %v7833 = vadd.f32 0.0, %v7832
    %v7834 = vpop.f32.mrb[0].mxu0
    %7835 = vmatprep.mubr.f32.mxu0 0.0
    %7836 = vmatmul.mubr.f32.gmra.mrb[0].mxu0 %v7653
    %v7837 = vpop.f32.mrb[0].mxu0
    %v7838 = vadd.f32 0.0, %v7837
    %v7839 = vpop.f32.mrb[0].mxu0
    %7840 = vmatprep.mubr.f32.mxu0 0.0
    %7841 = vmatmul.mubr.f32.gmra.mrb[0].mxu0 %v7656
    %v7842 = vpop.f32.mrb[0].mxu0
    %v7843 = vadd.f32 0.0, %v7842
    %v7844 = vpop.f32.mrb[0].mxu0
    %7845 = vmatprep.mubr.f32.mxu0 0.0
    %7846 = vmatmul.mubr.f32.gmra.mrb[0].mxu0 %v7659
    %v7847 = vpop.f32.mrb[0].mxu0
    %v7848 = vadd.f32 0.0, %v7847
    %v7849 = vpop.f32.mrb[0].mxu0
    %7850 = vmatprep.mubr.f32.mxu0 0.0
    %7851 = vmatmul.mubr.f32.gmra.mrb[0].mxu0 %v7662
    %v7852 = vpop.f32.mrb[0].mxu0
    %v7853 = vadd.f32 0.0, %v7852
    %v7854 = vpop.f32.mrb[0].mxu0
    %7855 = vmatprep.mubr.f32.mxu0 0.0
    %7856 = vmatmul.mubr.f32.gmra.mrb[0].mxu0 %v7665
    %v7857 = vpop.f32.mrb[0].mxu0
    %v7858 = vadd.f32 0.0, %v7857
    %v7859 = vpop.f32.mrb[0].mxu0
    %7860 = vmatprep.mubr.f32.mxu0 0.0
    %7861 = vmatmul.mubr.f32.gmra.mrb[0].mxu0 %v7668
    %v7862 = vpop.f32.mrb[0].mxu0
    %v7863 = vadd.f32 0.0, %v7862
    %v7864 = vpop.f32.mrb[0].mxu0
    %7865 = vmatprep.mubr.f32.mxu0 0.0
    %7866 = vmatmul.mubr.f32.gmra.mrb[0].mxu0 %v7671
    %v7867 = vpop.f32.mrb[0].mxu0
    %v7868 = vadd.f32 0.0, %v7867
    %v7869 = vpop.f32.mrb[0].mxu0
    %7870 = vmatprep.mubr.f32.mxu0 0.0
    %7871 = vmatmul.mubr.f32.gmra.mrb[0].mxu0 %v7674
    %v7872 = vpop.f32.mrb[0].mxu0
    %v7873 = vadd.f32 0.0, %v7872
    %v7874 = vpop.f32.mrb[0].mxu0
    %7875 = vdwg.mxu0
    %7903 = vrot.lane.b32.xlu0 %v7743, 123
    %v7904 = vpop.permute.xlu0 %7903
    %7905 = vrot.lane.b32.xlu0 %v7748, 123
    %v7906 = vpop.permute.xlu0 %7905
    %7907 = vrot.lane.b32.xlu0 %v7753, 123
    %v7908 = vpop.permute.xlu0 %7907
    %7909 = vrot.lane.b32.xlu0 %v7758, 123
    %v7910 = vpop.permute.xlu0 %7909
    %7911 = vrot.lane.b32.xlu0 %v7763, 123
    %v7912 = vpop.permute.xlu0 %7911
    %7913 = vrot.lane.b32.xlu0 %v7768, 123
    %v7914 = vpop.permute.xlu0 %7913
    %7915 = vrot.lane.b32.xlu0 %v7773, 123
    %v7916 = vpop.permute.xlu0 %7915
    %7917 = vrot.lane.b32.xlu0 %v7778, 123
    %v7918 = vpop.permute.xlu0 %7917
    %7919 = vrot.lane.b32.xlu0 %v7783, 123
    %v7920 = vpop.permute.xlu0 %7919
    %7921 = vrot.lane.b32.xlu0 %v7788, 123
    %v7922 = vpop.permute.xlu0 %7921
    %7923 = vrot.lane.b32.xlu0 %v7793, 123
    %v7924 = vpop.permute.xlu0 %7923
    %7925 = vrot.lane.b32.xlu0 %v7798, 123
    %v7926 = vpop.permute.xlu0 %7925
    %7927 = vrot.lane.b32.xlu0 %v7803, 123
    %v7928 = vpop.permute.xlu0 %7927
    %7929 = vrot.lane.b32.xlu0 %v7808, 123
    %v7930 = vpop.permute.xlu0 %7929
    %7931 = vrot.lane.b32.xlu0 %v7813, 123
    %v7932 = vpop.permute.xlu0 %7931
    %7933 = vrot.lane.b32.xlu0 %v7818, 123
    %v7934 = vpop.permute.xlu0 %7933
    %7935 = vrot.lane.b32.xlu0 %v7823, 123
    %v7936 = vpop.permute.xlu0 %7935
    %7937 = vrot.lane.b32.xlu0 %v7828, 123
    %v7938 = vpop.permute.xlu0 %7937
    %7939 = vrot.lane.b32.xlu0 %v7833, 123
    %v7940 = vpop.permute.xlu0 %7939
    %7941 = vrot.lane.b32.xlu0 %v7838, 123
    %v7942 = vpop.permute.xlu0 %7941
    %7943 = vrot.lane.b32.xlu0 %v7843, 123
    %v7944 = vpop.permute.xlu0 %7943
    %7945 = vrot.lane.b32.xlu0 %v7848, 123
    %v7946 = vpop.permute.xlu0 %7945
    %7947 = vrot.lane.b32.xlu0 %v7853, 123
    %v7948 = vpop.permute.xlu0 %7947
    %7949 = vrot.lane.b32.xlu0 %v7858, 123
    %v7950 = vpop.permute.xlu0 %7949
    %7951 = vrot.lane.b32.xlu0 %v7863, 123
    %v7952 = vpop.permute.xlu0 %7951
    %7953 = vrot.lane.b32.xlu0 %v7868, 123
    %v7954 = vpop.permute.xlu0 %7953
    %7955 = vrot.lane.b32.xlu0 %v7873, 123
    %v7956 = vpop.permute.xlu0 %7955
    %v7984 = vmax.f32 %v7743, %v7904
    %v7985 = vmax.f32 %v7748, %v7906
    %v7986 = vmax.f32 %v7753, %v7908
    %v7987 = vmax.f32 %v7758, %v7910
    %v7988 = vmax.f32 %v7763, %v7912
    %v7989 = vmax.f32 %v7768, %v7914
    %v7990 = vmax.f32 %v7773, %v7916
    %v7991 = vmax.f32 %v7778, %v7918
    %v7992 = vmax.f32 %v7783, %v7920
    %v7993 = vmax.f32 %v7788, %v7922
    %v7994 = vmax.f32 %v7793, %v7924
    %v7995 = vmax.f32 %v7798, %v7926
    %v7996 = vmax.f32 %v7803, %v7928
    %v7997 = vmax.f32 %v7808, %v7930
    %v7998 = vmax.f32 %v7813, %v7932
    %v7999 = vmax.f32 %v7818, %v7934
    %v8000 = vmax.f32 %v7823, %v7936
    %v8001 = vmax.f32 %v7828, %v7938
    %v8002 = vmax.f32 %v7833, %v7940
    %v8003 = vmax.f32 %v7838, %v7942
    %v8004 = vmax.f32 %v7843, %v7944
    %v8005 = vmax.f32 %v7848, %v7946
    %v8006 = vmax.f32 %v7853, %v7948
    %v8007 = vmax.f32 %v7858, %v7950
    %v8008 = vmax.f32 %v7863, %v7952
    %v8009 = vmax.f32 %v7868, %v7954
    %v8010 = vmax.f32 %v7873, %v7956
    %8038 = vrot.lane.b32.xlu0 %v7984, 118
    %v8039 = vpop.permute.xlu0 %8038
    %8040 = vrot.lane.b32.xlu0 %v7985, 118
    %v8041 = vpop.permute.xlu0 %8040
    %8042 = vrot.lane.b32.xlu0 %v7986, 118
    %v8043 = vpop.permute.xlu0 %8042
    %8044 = vrot.lane.b32.xlu0 %v7987, 118
    %v8045 = vpop.permute.xlu0 %8044
    %8046 = vrot.lane.b32.xlu0 %v7988, 118
    %v8047 = vpop.permute.xlu0 %8046
    %8048 = vrot.lane.b32.xlu0 %v7989, 118
    %v8049 = vpop.permute.xlu0 %8048
    %8050 = vrot.lane.b32.xlu0 %v7990, 118
    %v8051 = vpop.permute.xlu0 %8050
    %8052 = vrot.lane.b32.xlu0 %v7991, 118
    %v8053 = vpop.permute.xlu0 %8052
    %8054 = vrot.lane.b32.xlu0 %v7992, 118
    %v8055 = vpop.permute.xlu0 %8054
    %8056 = vrot.lane.b32.xlu0 %v7993, 118
    %v8057 = vpop.permute.xlu0 %8056
    %8058 = vrot.lane.b32.xlu0 %v7994, 118
    %v8059 = vpop.permute.xlu0 %8058
    %8060 = vrot.lane.b32.xlu0 %v7995, 118
    %v8061 = vpop.permute.xlu0 %8060
    %8062 = vrot.lane.b32.xlu0 %v7996, 118
    %v8063 = vpop.permute.xlu0 %8062
    %8064 = vrot.lane.b32.xlu0 %v7997, 118
    %v8065 = vpop.permute.xlu0 %8064
    %8066 = vrot.lane.b32.xlu0 %v7998, 118
    %v8067 = vpop.permute.xlu0 %8066
    %8068 = vrot.lane.b32.xlu0 %v7999, 118
    %v8069 = vpop.permute.xlu0 %8068
    %8070 = vrot.lane.b32.xlu0 %v8000, 118
    %v8071 = vpop.permute.xlu0 %8070
    %8072 = vrot.lane.b32.xlu0 %v8001, 118
    %v8073 = vpop.permute.xlu0 %8072
    %8074 = vrot.lane.b32.xlu0 %v8002, 118
    %v8075 = vpop.permute.xlu0 %8074
    %8076 = vrot.lane.b32.xlu0 %v8003, 118
    %v8077 = vpop.permute.xlu0 %8076
    %8078 = vrot.lane.b32.xlu0 %v8004, 118
    %v8079 = vpop.permute.xlu0 %8078
    %8080 = vrot.lane.b32.xlu0 %v8005, 118
    %v8081 = vpop.permute.xlu0 %8080
    %8082 = vrot.lane.b32.xlu0 %v8006, 118
    %v8083 = vpop.permute.xlu0 %8082
    %8084 = vrot.lane.b32.xlu0 %v8007, 118
    %v8085 = vpop.permute.xlu0 %8084
    %8086 = vrot.lane.b32.xlu0 %v8008, 118
    %v8087 = vpop.permute.xlu0 %8086
    %8088 = vrot.lane.b32.xlu0 %v8009, 118
    %v8089 = vpop.permute.xlu0 %8088
    %8090 = vrot.lane.b32.xlu0 %v8010, 118
    %v8091 = vpop.permute.xlu0 %8090
    %v8119 = vmax.f32 %v7984, %v8039
    %v8120 = vmax.f32 %v7985, %v8041
    %v8121 = vmax.f32 %v7986, %v8043
    %v8122 = vmax.f32 %v7987, %v8045
    %v8123 = vmax.f32 %v7988, %v8047
    %v8124 = vmax.f32 %v7989, %v8049
    %v8125 = vmax.f32 %v7990, %v8051
    %v8126 = vmax.f32 %v7991, %v8053
    %v8127 = vmax.f32 %v7992, %v8055
    %v8128 = vmax.f32 %v7993, %v8057
    %v8129 = vmax.f32 %v7994, %v8059
    %v8130 = vmax.f32 %v7995, %v8061
    %v8131 = vmax.f32 %v7996, %v8063
    %v8132 = vmax.f32 %v7997, %v8065
    %v8133 = vmax.f32 %v7998, %v8067
    %v8134 = vmax.f32 %v7999, %v8069
    %v8135 = vmax.f32 %v8000, %v8071
    %v8136 = vmax.f32 %v8001, %v8073
    %v8137 = vmax.f32 %v8002, %v8075
    %v8138 = vmax.f32 %v8003, %v8077
    %v8139 = vmax.f32 %v8004, %v8079
    %v8140 = vmax.f32 %v8005, %v8081
    %v8141 = vmax.f32 %v8006, %v8083
    %v8142 = vmax.f32 %v8007, %v8085
    %v8143 = vmax.f32 %v8008, %v8087
    %v8144 = vmax.f32 %v8009, %v8089
    %v8145 = vmax.f32 %v8010, %v8091
    %v8146 = vadd.f32 %v8119, %v629
    %v8147 = vadd.f32 %v8120, %v629
    %v8148 = vadd.f32 %v8121, %v629
    %v8149 = vadd.f32 %v8122, %v629
    %v8150 = vadd.f32 %v8123, %v629
    %v8151 = vadd.f32 %v8124, %v629
    %v8152 = vadd.f32 %v8125, %v629
    %v8153 = vadd.f32 %v8126, %v629
    %v8154 = vadd.f32 %v8127, %v629
    %v8155 = vadd.f32 %v8128, %v629
    %v8156 = vadd.f32 %v8129, %v629
    %v8157 = vadd.f32 %v8130, %v629
    %v8158 = vadd.f32 %v8131, %v629
    %v8159 = vadd.f32 %v8132, %v629
    %v8160 = vadd.f32 %v8133, %v629
    %v8161 = vadd.f32 %v8134, %v629
    %v8162 = vadd.f32 %v8135, %v629
    %v8163 = vadd.f32 %v8136, %v629
    %v8164 = vadd.f32 %v8137, %v629
    %v8165 = vadd.f32 %v8138, %v629
    %v8166 = vadd.f32 %v8139, %v629
    %v8167 = vadd.f32 %v8140, %v629
    %v8168 = vadd.f32 %v8141, %v629
    %v8169 = vadd.f32 %v8142, %v629
    %v8170 = vadd.f32 %v8143, %v629
    %v8171 = vadd.f32 %v8144, %v629
    %v8172 = vadd.f32 %v8145, %v629
    %v8173 = vmax.f32 %v8146, 0.0
    %v8174 = vmax.f32 %v8147, 0.0
    %v8175 = vmax.f32 %v8148, 0.0
    %v8176 = vmax.f32 %v8149, 0.0
    %v8177 = vmax.f32 %v8150, 0.0
    %v8178 = vmax.f32 %v8151, 0.0
    %v8179 = vmax.f32 %v8152, 0.0
    %v8180 = vmax.f32 %v8153, 0.0
    %v8181 = vmax.f32 %v8154, 0.0
    %v8182 = vmax.f32 %v8155, 0.0
    %v8183 = vmax.f32 %v8156, 0.0
    %v8184 = vmax.f32 %v8157, 0.0
    %v8185 = vmax.f32 %v8158, 0.0
    %v8186 = vmax.f32 %v8159, 0.0
    %v8187 = vmax.f32 %v8160, 0.0
    %v8188 = vmax.f32 %v8161, 0.0
    %v8189 = vmax.f32 %v8162, 0.0
    %v8190 = vmax.f32 %v8163, 0.0
    %v8191 = vmax.f32 %v8164, 0.0
    %v8192 = vmax.f32 %v8165, 0.0
    %v8193 = vmax.f32 %v8166, 0.0
    %v8194 = vmax.f32 %v8167, 0.0
    %v8195 = vmax.f32 %v8168, 0.0
    %v8196 = vmax.f32 %v8169, 0.0
    %v8197 = vmax.f32 %v8170, 0.0
    %v8198 = vmax.f32 %v8171, 0.0
    %v8199 = vmax.f32 %v8172, 0.0
    %s8200 = scalar_lea.vmem %s3, 64
    %v8201 = vld [vmem:[%s8200] sm:$0x1f]
    %v8203 = vsel %vm1321, %v8173, 0
    %v8206 = vsel %vm1321, %v8174, 0
    %v8209 = vsel %vm1321, %v8175, 0
    %v8212 = vsel %vm1321, %v8176, 0
    %v8215 = vsel %vm1321, %v8177, 0
    %v8218 = vsel %vm1321, %v8178, 0
    %v8221 = vsel %vm1321, %v8179, 0
    %v8224 = vsel %vm1321, %v8180, 0
    %v8227 = vsel %vm1321, %v8181, 0
    %v8230 = vsel %vm1321, %v8182, 0
    %v8233 = vsel %vm1321, %v8183, 0
    %v8236 = vsel %vm1321, %v8184, 0
    %v8239 = vsel %vm1321, %v8185, 0
    %v8242 = vsel %vm1321, %v8186, 0
    %v8245 = vsel %vm1321, %v8187, 0
    %v8248 = vsel %vm1321, %v8188, 0
    %v8251 = vsel %vm1321, %v8189, 0
    %v8254 = vsel %vm1321, %v8190, 0
    %v8257 = vsel %vm1321, %v8191, 0
    %v8260 = vsel %vm1321, %v8192, 0
    %v8263 = vsel %vm1321, %v8193, 0
    %v8266 = vsel %vm1321, %v8194, 0
    %v8269 = vsel %vm1321, %v8195, 0
    %v8272 = vsel %vm1321, %v8196, 0
    %v8275 = vsel %vm1321, %v8197, 0
    %v8278 = vsel %vm1321, %v8198, 0
    %v8281 = vsel %vm1321, %v8199, 0
    %v8284 = vsel %vm1403, %v8201, 0
    %8286 = vmatprep.subr.mxu0 0.0
    %8287 = vmatpush1.msra.mxu0 %v8284
    %8288 = vmatprep.subr.mxu0 0.0
    %8289 = vmatpush1.msra.mxu0 0.0
    %8290 = vmatprep.subr.mxu0 0.0
    %8291 = vmatpush1.msra.mxu0 0.0
    %8292 = vmatprep.subr.mxu0 0.0
    %8293 = vmatpush1.msra.mxu0 0.0
    %8294 = vmatprep.subr.mxu0 0.0
    %8295 = vmatpush1.msra.mxu0 0.0
    %8296 = vmatprep.subr.mxu0 0.0
    %8297 = vmatpush1.msra.mxu0 0.0
    %8298 = vmatprep.subr.mxu0 0.0
    %8299 = vmatpush1.msra.mxu0 0.0
    %8300 = vmatprep.subr.mxu0 0.0
    %8301 = vmatpush1.msra.mxu0 0.0
    %8302 = vmatprep.subr.mxu0 0.0
    %8303 = vmatpush1.msra.mxu0 0.0
    %8304 = vmatprep.subr.mxu0 0.0
    %8305 = vmatpush1.msra.mxu0 0.0
    %8306 = vmatprep.subr.mxu0 0.0
    %8307 = vmatpush1.msra.mxu0 0.0
    %8308 = vmatprep.subr.mxu0 0.0
    %8309 = vmatpush1.msra.mxu0 0.0
    %8310 = vmatprep.subr.mxu0 0.0
    %8311 = vmatpush1.msra.mxu0 0.0
    %8312 = vmatprep.subr.mxu0 0.0
    %8313 = vmatpush1.msra.mxu0 0.0
    %8314 = vmatprep.subr.mxu0 0.0
    %8315 = vmatpush1.msra.mxu0 0.0
    %8316 = vmatprep.subr.mxu0 0.0
    %8317 = vmatpush1.msra.mxu0 0.0
    %8318 = vmatprep.subr.mxu0 0.0
    %8319 = vmatpush1.msra.mxu0 0.0
    %8320 = vmatprep.subr.mxu0 0.0
    %8321 = vmatpush1.msra.mxu0 0.0
    %8322 = vmatprep.subr.mxu0 0.0
    %8323 = vmatpush1.msra.mxu0 0.0
    %8324 = vmatprep.subr.mxu0 0.0
    %8325 = vmatpush1.msra.mxu0 0.0
    %8326 = vmatprep.subr.mxu0 0.0
    %8327 = vmatpush1.msra.mxu0 0.0
    %8328 = vmatprep.subr.mxu0 0.0
    %8329 = vmatpush1.msra.mxu0 0.0
    %8330 = vmatprep.subr.mxu0 0.0
    %8331 = vmatpush1.msra.mxu0 0.0
    %8332 = vmatprep.subr.mxu0 0.0
    %8333 = vmatpush1.msra.mxu0 0.0
    %8334 = vmatprep.subr.mxu0 0.0
    %8335 = vmatpush1.msra.mxu0 0.0
    %8336 = vmatprep.subr.mxu0 0.0
    %8337 = vmatpush1.msra.mxu0 0.0
    %8338 = vmatprep.subr.mxu0 0.0
    %8339 = vmatpush1.msra.mxu0 0.0
    %8340 = vmatprep.subr.mxu0 0.0
    %8341 = vmatpush1.msra.mxu0 0.0
    %8342 = vmatprep.subr.mxu0 0.0
    %8343 = vmatpush1.msra.mxu0 0.0
    %8344 = vmatprep.subr.mxu0 0.0
    %8345 = vmatpush1.msra.mxu0 0.0
    %8346 = vmatprep.subr.mxu0 0.0
    %8347 = vmatpush1.msra.mxu0 0.0
    %8348 = vmatprep.subr.mxu0 0.0
    %8349 = vmatpush1.msra.mxu0 0.0
    %8350 = vmatprep.mubr.f32.mxu0 0.0
    %8351 = vmatmul.mubr.f32.gmra.mrb[0].mxu0 %v8203
    %v8352 = vpop.f32.mrb[0].mxu0
    %v8353 = vadd.f32 0.0, %v8352
    %v8354 = vpop.f32.mrb[0].mxu0
    %8355 = vmatprep.mubr.f32.mxu0 0.0
    %8356 = vmatmul.mubr.f32.gmra.mrb[0].mxu0 %v8206
    %v8357 = vpop.f32.mrb[0].mxu0
    %v8358 = vadd.f32 0.0, %v8357
    %v8359 = vpop.f32.mrb[0].mxu0
    %8360 = vmatprep.mubr.f32.mxu0 0.0
    %8361 = vmatmul.mubr.f32.gmra.mrb[0].mxu0 %v8209
    %v8362 = vpop.f32.mrb[0].mxu0
    %v8363 = vadd.f32 0.0, %v8362
    %v8364 = vpop.f32.mrb[0].mxu0
    %8365 = vmatprep.mubr.f32.mxu0 0.0
    %8366 = vmatmul.mubr.f32.gmra.mrb[0].mxu0 %v8212
    %v8367 = vpop.f32.mrb[0].mxu0
    %v8368 = vadd.f32 0.0, %v8367
    %v8369 = vpop.f32.mrb[0].mxu0
    %8370 = vmatprep.mubr.f32.mxu0 0.0
    %8371 = vmatmul.mubr.f32.gmra.mrb[0].mxu0 %v8215
    %v8372 = vpop.f32.mrb[0].mxu0
    %v8373 = vadd.f32 0.0, %v8372
    %v8374 = vpop.f32.mrb[0].mxu0
    %8375 = vmatprep.mubr.f32.mxu0 0.0
    %8376 = vmatmul.mubr.f32.gmra.mrb[0].mxu0 %v8218
    %v8377 = vpop.f32.mrb[0].mxu0
    %v8378 = vadd.f32 0.0, %v8377
    %v8379 = vpop.f32.mrb[0].mxu0
    %8380 = vmatprep.mubr.f32.mxu0 0.0
    %8381 = vmatmul.mubr.f32.gmra.mrb[0].mxu0 %v8221
    %v8382 = vpop.f32.mrb[0].mxu0
    %v8383 = vadd.f32 0.0, %v8382
    %v8384 = vpop.f32.mrb[0].mxu0
    %8385 = vmatprep.mubr.f32.mxu0 0.0
    %8386 = vmatmul.mubr.f32.gmra.mrb[0].mxu0 %v8224
    %v8387 = vpop.f32.mrb[0].mxu0
    %v8388 = vadd.f32 0.0, %v8387
    %v8389 = vpop.f32.mrb[0].mxu0
    %8390 = vmatprep.mubr.f32.mxu0 0.0
    %8391 = vmatmul.mubr.f32.gmra.mrb[0].mxu0 %v8227
    %v8392 = vpop.f32.mrb[0].mxu0
    %v8393 = vadd.f32 0.0, %v8392
    %v8394 = vpop.f32.mrb[0].mxu0
    %8395 = vmatprep.mubr.f32.mxu0 0.0
    %8396 = vmatmul.mubr.f32.gmra.mrb[0].mxu0 %v8230
    %v8397 = vpop.f32.mrb[0].mxu0
    %v8398 = vadd.f32 0.0, %v8397
    %v8399 = vpop.f32.mrb[0].mxu0
    %8400 = vmatprep.mubr.f32.mxu0 0.0
    %8401 = vmatmul.mubr.f32.gmra.mrb[0].mxu0 %v8233
    %v8402 = vpop.f32.mrb[0].mxu0
    %v8403 = vadd.f32 0.0, %v8402
    %v8404 = vpop.f32.mrb[0].mxu0
    %8405 = vmatprep.mubr.f32.mxu0 0.0
    %8406 = vmatmul.mubr.f32.gmra.mrb[0].mxu0 %v8236
    %v8407 = vpop.f32.mrb[0].mxu0
    %v8408 = vadd.f32 0.0, %v8407
    %v8409 = vpop.f32.mrb[0].mxu0
    %8410 = vmatprep.mubr.f32.mxu0 0.0
    %8411 = vmatmul.mubr.f32.gmra.mrb[0].mxu0 %v8239
    %v8412 = vpop.f32.mrb[0].mxu0
    %v8413 = vadd.f32 0.0, %v8412
    %v8414 = vpop.f32.mrb[0].mxu0
    %8415 = vmatprep.mubr.f32.mxu0 0.0
    %8416 = vmatmul.mubr.f32.gmra.mrb[0].mxu0 %v8242
    %v8417 = vpop.f32.mrb[0].mxu0
    %v8418 = vadd.f32 0.0, %v8417
    %v8419 = vpop.f32.mrb[0].mxu0
    %8420 = vmatprep.mubr.f32.mxu0 0.0
    %8421 = vmatmul.mubr.f32.gmra.mrb[0].mxu0 %v8245
    %v8422 = vpop.f32.mrb[0].mxu0
    %v8423 = vadd.f32 0.0, %v8422
    %v8424 = vpop.f32.mrb[0].mxu0
    %8425 = vmatprep.mubr.f32.mxu0 0.0
    %8426 = vmatmul.mubr.f32.gmra.mrb[0].mxu0 %v8248
    %v8427 = vpop.f32.mrb[0].mxu0
    %v8428 = vadd.f32 0.0, %v8427
    %v8429 = vpop.f32.mrb[0].mxu0
    %8430 = vmatprep.mubr.f32.mxu0 0.0
    %8431 = vmatmul.mubr.f32.gmra.mrb[0].mxu0 %v8251
    %v8432 = vpop.f32.mrb[0].mxu0
    %v8433 = vadd.f32 0.0, %v8432
    %v8434 = vpop.f32.mrb[0].mxu0
    %8435 = vmatprep.mubr.f32.mxu0 0.0
    %8436 = vmatmul.mubr.f32.gmra.mrb[0].mxu0 %v8254
    %v8437 = vpop.f32.mrb[0].mxu0
    %v8438 = vadd.f32 0.0, %v8437
    %v8439 = vpop.f32.mrb[0].mxu0
    %8440 = vmatprep.mubr.f32.mxu0 0.0
    %8441 = vmatmul.mubr.f32.gmra.mrb[0].mxu0 %v8257
    %v8442 = vpop.f32.mrb[0].mxu0
    %v8443 = vadd.f32 0.0, %v8442
    %v8444 = vpop.f32.mrb[0].mxu0
    %8445 = vmatprep.mubr.f32.mxu0 0.0
    %8446 = vmatmul.mubr.f32.gmra.mrb[0].mxu0 %v8260
    %v8447 = vpop.f32.mrb[0].mxu0
    %v8448 = vadd.f32 0.0, %v8447
    %v8449 = vpop.f32.mrb[0].mxu0
    %8450 = vmatprep.mubr.f32.mxu0 0.0
    %8451 = vmatmul.mubr.f32.gmra.mrb[0].mxu0 %v8263
    %v8452 = vpop.f32.mrb[0].mxu0
    %v8453 = vadd.f32 0.0, %v8452
    %v8454 = vpop.f32.mrb[0].mxu0
    %8455 = vmatprep.mubr.f32.mxu0 0.0
    %8456 = vmatmul.mubr.f32.gmra.mrb[0].mxu0 %v8266
    %v8457 = vpop.f32.mrb[0].mxu0
    %v8458 = vadd.f32 0.0, %v8457
    %v8459 = vpop.f32.mrb[0].mxu0
    %8460 = vmatprep.mubr.f32.mxu0 0.0
    %8461 = vmatmul.mubr.f32.gmra.mrb[0].mxu0 %v8269
    %v8462 = vpop.f32.mrb[0].mxu0
    %v8463 = vadd.f32 0.0, %v8462
    %v8464 = vpop.f32.mrb[0].mxu0
    %8465 = vmatprep.mubr.f32.mxu0 0.0
    %8466 = vmatmul.mubr.f32.gmra.mrb[0].mxu0 %v8272
    %v8467 = vpop.f32.mrb[0].mxu0
    %v8468 = vadd.f32 0.0, %v8467
    %v8469 = vpop.f32.mrb[0].mxu0
    %8470 = vmatprep.mubr.f32.mxu0 0.0
    %8471 = vmatmul.mubr.f32.gmra.mrb[0].mxu0 %v8275
    %v8472 = vpop.f32.mrb[0].mxu0
    %v8473 = vadd.f32 0.0, %v8472
    %v8474 = vpop.f32.mrb[0].mxu0
    %8475 = vmatprep.mubr.f32.mxu0 0.0
    %8476 = vmatmul.mubr.f32.gmra.mrb[0].mxu0 %v8278
    %v8477 = vpop.f32.mrb[0].mxu0
    %v8478 = vadd.f32 0.0, %v8477
    %v8479 = vpop.f32.mrb[0].mxu0
    %8480 = vmatprep.mubr.f32.mxu0 0.0
    %8481 = vmatmul.mubr.f32.gmra.mrb[0].mxu0 %v8281
    %v8482 = vpop.f32.mrb[0].mxu0
    %v8483 = vadd.f32 0.0, %v8482
    %v8484 = vpop.f32.mrb[0].mxu0
    %8485 = vdwg.mxu0
    %v8486 = vadd.f32 %v7540, %v8353
    %v8487 = vadd.f32 %v7541, %v8358
    %v8488 = vadd.f32 %v7542, %v8363
    %v8489 = vadd.f32 %v7543, %v8368
    %v8490 = vadd.f32 %v7544, %v8373
    %v8491 = vadd.f32 %v7545, %v8378
    %v8492 = vadd.f32 %v7546, %v8383
    %v8493 = vadd.f32 %v7547, %v8388
    %v8494 = vadd.f32 %v7548, %v8393
    %v8495 = vadd.f32 %v7549, %v8398
    %v8496 = vadd.f32 %v7550, %v8403
    %v8497 = vadd.f32 %v7551, %v8408
    %v8498 = vadd.f32 %v7552, %v8413
    %v8499 = vadd.f32 %v7553, %v8418
    %v8500 = vadd.f32 %v7554, %v8423
    %v8501 = vadd.f32 %v7555, %v8428
    %v8502 = vadd.f32 %v7556, %v8433
    %v8503 = vadd.f32 %v7557, %v8438
    %v8504 = vadd.f32 %v7558, %v8443
    %v8505 = vadd.f32 %v7559, %v8448
    %v8506 = vadd.f32 %v7560, %v8453
    %v8507 = vadd.f32 %v7561, %v8458
    %v8508 = vadd.f32 %v7562, %v8463
    %v8509 = vadd.f32 %v7563, %v8468
    %v8510 = vadd.f32 %v7564, %v8473
    %v8511 = vadd.f32 %v7565, %v8478
    %v8512 = vadd.f32 %v7566, %v8483
    %8540 = vrot.lane.b32.xlu0 %v8486, 113
    %v8541 = vpop.permute.xlu0 %8540
    %8542 = vrot.lane.b32.xlu0 %v8487, 113
    %v8543 = vpop.permute.xlu0 %8542
    %8544 = vrot.lane.b32.xlu0 %v8488, 113
    %v8545 = vpop.permute.xlu0 %8544
    %8546 = vrot.lane.b32.xlu0 %v8489, 113
    %v8547 = vpop.permute.xlu0 %8546
    %8548 = vrot.lane.b32.xlu0 %v8490, 113
    %v8549 = vpop.permute.xlu0 %8548
    %8550 = vrot.lane.b32.xlu0 %v8491, 113
    %v8551 = vpop.permute.xlu0 %8550
    %8552 = vrot.lane.b32.xlu0 %v8492, 113
    %v8553 = vpop.permute.xlu0 %8552
    %8554 = vrot.lane.b32.xlu0 %v8493, 113
    %v8555 = vpop.permute.xlu0 %8554
    %8556 = vrot.lane.b32.xlu0 %v8494, 113
    %v8557 = vpop.permute.xlu0 %8556
    %8558 = vrot.lane.b32.xlu0 %v8495, 113
    %v8559 = vpop.permute.xlu0 %8558
    %8560 = vrot.lane.b32.xlu0 %v8496, 113
    %v8561 = vpop.permute.xlu0 %8560
    %8562 = vrot.lane.b32.xlu0 %v8497, 113
    %v8563 = vpop.permute.xlu0 %8562
    %8564 = vrot.lane.b32.xlu0 %v8498, 113
    %v8565 = vpop.permute.xlu0 %8564
    %8566 = vrot.lane.b32.xlu0 %v8499, 113
    %v8567 = vpop.permute.xlu0 %8566
    %8568 = vrot.lane.b32.xlu0 %v8500, 113
    %v8569 = vpop.permute.xlu0 %8568
    %8570 = vrot.lane.b32.xlu0 %v8501, 113
    %v8571 = vpop.permute.xlu0 %8570
    %8572 = vrot.lane.b32.xlu0 %v8502, 113
    %v8573 = vpop.permute.xlu0 %8572
    %8574 = vrot.lane.b32.xlu0 %v8503, 113
    %v8575 = vpop.permute.xlu0 %8574
    %8576 = vrot.lane.b32.xlu0 %v8504, 113
    %v8577 = vpop.permute.xlu0 %8576
    %8578 = vrot.lane.b32.xlu0 %v8505, 113
    %v8579 = vpop.permute.xlu0 %8578
    %8580 = vrot.lane.b32.xlu0 %v8506, 113
    %v8581 = vpop.permute.xlu0 %8580
    %8582 = vrot.lane.b32.xlu0 %v8507, 113
    %v8583 = vpop.permute.xlu0 %8582
    %8584 = vrot.lane.b32.xlu0 %v8508, 113
    %v8585 = vpop.permute.xlu0 %8584
    %8586 = vrot.lane.b32.xlu0 %v8509, 113
    %v8587 = vpop.permute.xlu0 %8586
    %8588 = vrot.lane.b32.xlu0 %v8510, 113
    %v8589 = vpop.permute.xlu0 %8588
    %8590 = vrot.lane.b32.xlu0 %v8511, 113
    %v8591 = vpop.permute.xlu0 %8590
    %8592 = vrot.lane.b32.xlu0 %v8512, 113
    %v8593 = vpop.permute.xlu0 %8592
    %v8621 = vmax.f32 %v8486, %v8541
    %v8622 = vmax.f32 %v8487, %v8543
    %v8623 = vmax.f32 %v8488, %v8545
    %v8624 = vmax.f32 %v8489, %v8547
    %v8625 = vmax.f32 %v8490, %v8549
    %v8626 = vmax.f32 %v8491, %v8551
    %v8627 = vmax.f32 %v8492, %v8553
    %v8628 = vmax.f32 %v8493, %v8555
    %v8629 = vmax.f32 %v8494, %v8557
    %v8630 = vmax.f32 %v8495, %v8559
    %v8631 = vmax.f32 %v8496, %v8561
    %v8632 = vmax.f32 %v8497, %v8563
    %v8633 = vmax.f32 %v8498, %v8565
    %v8634 = vmax.f32 %v8499, %v8567
    %v8635 = vmax.f32 %v8500, %v8569
    %v8636 = vmax.f32 %v8501, %v8571
    %v8637 = vmax.f32 %v8502, %v8573
    %v8638 = vmax.f32 %v8503, %v8575
    %v8639 = vmax.f32 %v8504, %v8577
    %v8640 = vmax.f32 %v8505, %v8579
    %v8641 = vmax.f32 %v8506, %v8581
    %v8642 = vmax.f32 %v8507, %v8583
    %v8643 = vmax.f32 %v8508, %v8585
    %v8644 = vmax.f32 %v8509, %v8587
    %v8645 = vmax.f32 %v8510, %v8589
    %v8646 = vmax.f32 %v8511, %v8591
    %v8647 = vmax.f32 %v8512, %v8593
    %8675 = vrot.lane.b32.xlu0 %v8621, 98
    %v8676 = vpop.permute.xlu0 %8675
    %8677 = vrot.lane.b32.xlu0 %v8622, 98
    %v8678 = vpop.permute.xlu0 %8677
    %8679 = vrot.lane.b32.xlu0 %v8623, 98
    %v8680 = vpop.permute.xlu0 %8679
    %8681 = vrot.lane.b32.xlu0 %v8624, 98
    %v8682 = vpop.permute.xlu0 %8681
    %8683 = vrot.lane.b32.xlu0 %v8625, 98
    %v8684 = vpop.permute.xlu0 %8683
    %8685 = vrot.lane.b32.xlu0 %v8626, 98
    %v8686 = vpop.permute.xlu0 %8685
    %8687 = vrot.lane.b32.xlu0 %v8627, 98
    %v8688 = vpop.permute.xlu0 %8687
    %8689 = vrot.lane.b32.xlu0 %v8628, 98
    %v8690 = vpop.permute.xlu0 %8689
    %8691 = vrot.lane.b32.xlu0 %v8629, 98
    %v8692 = vpop.permute.xlu0 %8691
    %8693 = vrot.lane.b32.xlu0 %v8630, 98
    %v8694 = vpop.permute.xlu0 %8693
    %8695 = vrot.lane.b32.xlu0 %v8631, 98
    %v8696 = vpop.permute.xlu0 %8695
    %8697 = vrot.lane.b32.xlu0 %v8632, 98
    %v8698 = vpop.permute.xlu0 %8697
    %8699 = vrot.lane.b32.xlu0 %v8633, 98
    %v8700 = vpop.permute.xlu0 %8699
    %8701 = vrot.lane.b32.xlu0 %v8634, 98
    %v8702 = vpop.permute.xlu0 %8701
    %8703 = vrot.lane.b32.xlu0 %v8635, 98
    %v8704 = vpop.permute.xlu0 %8703
    %8705 = vrot.lane.b32.xlu0 %v8636, 98
    %v8706 = vpop.permute.xlu0 %8705
    %8707 = vrot.lane.b32.xlu0 %v8637, 98
    %v8708 = vpop.permute.xlu0 %8707
    %8709 = vrot.lane.b32.xlu0 %v8638, 98
    %v8710 = vpop.permute.xlu0 %8709
    %8711 = vrot.lane.b32.xlu0 %v8639, 98
    %v8712 = vpop.permute.xlu0 %8711
    %8713 = vrot.lane.b32.xlu0 %v8640, 98
    %v8714 = vpop.permute.xlu0 %8713
    %8715 = vrot.lane.b32.xlu0 %v8641, 98
    %v8716 = vpop.permute.xlu0 %8715
    %8717 = vrot.lane.b32.xlu0 %v8642, 98
    %v8718 = vpop.permute.xlu0 %8717
    %8719 = vrot.lane.b32.xlu0 %v8643, 98
    %v8720 = vpop.permute.xlu0 %8719
    %8721 = vrot.lane.b32.xlu0 %v8644, 98
    %v8722 = vpop.permute.xlu0 %8721
    %8723 = vrot.lane.b32.xlu0 %v8645, 98
    %v8724 = vpop.permute.xlu0 %8723
    %8725 = vrot.lane.b32.xlu0 %v8646, 98
    %v8726 = vpop.permute.xlu0 %8725
    %8727 = vrot.lane.b32.xlu0 %v8647, 98
    %v8728 = vpop.permute.xlu0 %8727
    %v8756 = vmax.f32 %v8621, %v8676
    %v8757 = vmax.f32 %v8622, %v8678
    %v8758 = vmax.f32 %v8623, %v8680
    %v8759 = vmax.f32 %v8624, %v8682
    %v8760 = vmax.f32 %v8625, %v8684
    %v8761 = vmax.f32 %v8626, %v8686
    %v8762 = vmax.f32 %v8627, %v8688
    %v8763 = vmax.f32 %v8628, %v8690
    %v8764 = vmax.f32 %v8629, %v8692
    %v8765 = vmax.f32 %v8630, %v8694
    %v8766 = vmax.f32 %v8631, %v8696
    %v8767 = vmax.f32 %v8632, %v8698
    %v8768 = vmax.f32 %v8633, %v8700
    %v8769 = vmax.f32 %v8634, %v8702
    %v8770 = vmax.f32 %v8635, %v8704
    %v8771 = vmax.f32 %v8636, %v8706
    %v8772 = vmax.f32 %v8637, %v8708
    %v8773 = vmax.f32 %v8638, %v8710
    %v8774 = vmax.f32 %v8639, %v8712
    %v8775 = vmax.f32 %v8640, %v8714
    %v8776 = vmax.f32 %v8641, %v8716
    %v8777 = vmax.f32 %v8642, %v8718
    %v8778 = vmax.f32 %v8643, %v8720
    %v8779 = vmax.f32 %v8644, %v8722
    %v8780 = vmax.f32 %v8645, %v8724
    %v8781 = vmax.f32 %v8646, %v8726
    %v8782 = vmax.f32 %v8647, %v8728
    %v8783 = vld [vmem:[%s4] sm:$0x1]
    %v8785 = vlaneseq
    %v8786 = vshrl.u32 %v8785, 7
    %v8787 = vsub.s32 0, %v8786
    %v8788 = vrot.slane %v8783, %v8787
    %v8790 = vadd.f32 %v8756, %v8788
    %v8791 = vadd.f32 %v8757, %v8788
    %v8792 = vadd.f32 %v8758, %v8788
    %v8793 = vadd.f32 %v8759, %v8788
    %v8794 = vadd.f32 %v8760, %v8788
    %v8795 = vadd.f32 %v8761, %v8788
    %v8796 = vadd.f32 %v8762, %v8788
    %v8797 = vadd.f32 %v8763, %v8788
    %v8798 = vadd.f32 %v8764, %v8788
    %v8799 = vadd.f32 %v8765, %v8788
    %v8800 = vadd.f32 %v8766, %v8788
    %v8801 = vadd.f32 %v8767, %v8788
    %v8802 = vadd.f32 %v8768, %v8788
    %v8803 = vadd.f32 %v8769, %v8788
    %v8804 = vadd.f32 %v8770, %v8788
    %v8805 = vadd.f32 %v8771, %v8788
    %v8806 = vadd.f32 %v8772, %v8788
    %v8807 = vadd.f32 %v8773, %v8788
    %v8808 = vadd.f32 %v8774, %v8788
    %v8809 = vadd.f32 %v8775, %v8788
    %v8810 = vadd.f32 %v8776, %v8788
    %v8811 = vadd.f32 %v8777, %v8788
    %v8812 = vadd.f32 %v8778, %v8788
    %v8813 = vadd.f32 %v8779, %v8788
    %v8814 = vadd.f32 %v8780, %v8788
    %v8815 = vadd.f32 %v8781, %v8788
    %v8816 = vadd.f32 %v8782, %v8788
    %v8817 = vmax.f32 %v8790, 0.0
    %v8818 = vmax.f32 %v8791, 0.0
    %v8819 = vmax.f32 %v8792, 0.0
    %v8820 = vmax.f32 %v8793, 0.0
    %v8821 = vmax.f32 %v8794, 0.0
    %v8822 = vmax.f32 %v8795, 0.0
    %v8823 = vmax.f32 %v8796, 0.0
    %v8824 = vmax.f32 %v8797, 0.0
    %v8825 = vmax.f32 %v8798, 0.0
    %v8826 = vmax.f32 %v8799, 0.0
    %v8827 = vmax.f32 %v8800, 0.0
    %v8828 = vmax.f32 %v8801, 0.0
    %v8829 = vmax.f32 %v8802, 0.0
    %v8830 = vmax.f32 %v8803, 0.0
    %v8831 = vmax.f32 %v8804, 0.0
    %v8832 = vmax.f32 %v8805, 0.0
    %v8833 = vmax.f32 %v8806, 0.0
    %v8834 = vmax.f32 %v8807, 0.0
    %v8835 = vmax.f32 %v8808, 0.0
    %v8836 = vmax.f32 %v8809, 0.0
    %v8837 = vmax.f32 %v8810, 0.0
    %v8838 = vmax.f32 %v8811, 0.0
    %v8839 = vmax.f32 %v8812, 0.0
    %v8840 = vmax.f32 %v8813, 0.0
    %v8841 = vmax.f32 %v8814, 0.0
    %v8842 = vmax.f32 %v8815, 0.0
    %v8843 = vmax.f32 %v8816, 0.0
    %v8844 = vld [vmem:[%s5] sm:$0xff]
    %v8845 = vld [vmem:[%s5 + $0x8] sm:$0xff]
    %v8846 = vld [vmem:[%s5 + $0x10] sm:$0xff]
    %v8847 = vld [vmem:[%s5 + $0x18] sm:$0xff]
    %v8848 = vld [vmem:[%s5 + $0x20] sm:$0xff]
    %v8849 = vld [vmem:[%s5 + $0x28] sm:$0xff]
    %v8850 = vld [vmem:[%s5 + $0x30] sm:$0xff]
    %v8851 = vld [vmem:[%s5 + $0x38] sm:$0xff]
    %v8852 = vld [vmem:[%s5 + $0x40] sm:$0xff]
    %v8853 = vld [vmem:[%s5 + $0x48] sm:$0xff]
    %v8854 = vld [vmem:[%s5 + $0x50] sm:$0xff]
    %v8855 = vld [vmem:[%s5 + $0x58] sm:$0xff]
    %v8856 = vld [vmem:[%s5 + $0x60] sm:$0xff]
    %v8857 = vld [vmem:[%s5 + $0x68] sm:$0x1]
    %8859 = vset.pattern.permute.xlu0 0
    %8860 = vperm.xlu0 %8859, %v8817
    %v8861 = vpop.permute.xlu0 %8860
    %8864 = vset.pattern.permute.xlu0 0
    %8865 = vperm.xlu0 %8864, %v8818
    %v8866 = vpop.permute.xlu0 %8865
    %8869 = vset.pattern.permute.xlu0 0
    %8870 = vperm.xlu0 %8869, %v8819
    %v8871 = vpop.permute.xlu0 %8870
    %8874 = vset.pattern.permute.xlu0 0
    %8875 = vperm.xlu0 %8874, %v8820
    %v8876 = vpop.permute.xlu0 %8875
    %8879 = vset.pattern.permute.xlu0 0
    %8880 = vperm.xlu0 %8879, %v8821
    %v8881 = vpop.permute.xlu0 %8880
    %8884 = vset.pattern.permute.xlu0 0
    %8885 = vperm.xlu0 %8884, %v8822
    %v8886 = vpop.permute.xlu0 %8885
    %8889 = vset.pattern.permute.xlu0 0
    %8890 = vperm.xlu0 %8889, %v8823
    %v8891 = vpop.permute.xlu0 %8890
    %8894 = vset.pattern.permute.xlu0 0
    %8895 = vperm.xlu0 %8894, %v8824
    %v8896 = vpop.permute.xlu0 %8895
    %8899 = vset.pattern.permute.xlu0 0
    %8900 = vperm.xlu0 %8899, %v8825
    %v8901 = vpop.permute.xlu0 %8900
    %8904 = vset.pattern.permute.xlu0 0
    %8905 = vperm.xlu0 %8904, %v8826
    %v8906 = vpop.permute.xlu0 %8905
    %8909 = vset.pattern.permute.xlu0 0
    %8910 = vperm.xlu0 %8909, %v8827
    %v8911 = vpop.permute.xlu0 %8910
    %8914 = vset.pattern.permute.xlu0 0
    %8915 = vperm.xlu0 %8914, %v8828
    %v8916 = vpop.permute.xlu0 %8915
    %8919 = vset.pattern.permute.xlu0 0
    %8920 = vperm.xlu0 %8919, %v8829
    %v8921 = vpop.permute.xlu0 %8920
    %8924 = vset.pattern.permute.xlu0 0
    %8925 = vperm.xlu0 %8924, %v8830
    %v8926 = vpop.permute.xlu0 %8925
    %v8928 = vmul.f32 %v8861, %v8844
    %v8929 = vmul.f32 %v8866, %v8845
    %v8930 = vmul.f32 %v8871, %v8846
    %v8931 = vmul.f32 %v8876, %v8847
    %v8932 = vmul.f32 %v8881, %v8848
    %v8933 = vmul.f32 %v8886, %v8849
    %v8934 = vmul.f32 %v8891, %v8850
    %v8935 = vmul.f32 %v8896, %v8851
    %v8936 = vmul.f32 %v8901, %v8852
    %v8937 = vmul.f32 %v8906, %v8853
    %v8938 = vmul.f32 %v8911, %v8854
    %v8939 = vmul.f32 %v8916, %v8855
    %v8940 = vmul.f32 %v8921, %v8856
    %v8941 = vmul.f32 %v8926, %v8857
    %s8942 = scalar_lea.vmem %s5, 112
    %v8943 = vld [vmem:[%s8942] sm:$0xff]
    %v8944 = vld [vmem:[%s8942 + $0x8] sm:$0xff]
    %v8945 = vld [vmem:[%s8942 + $0x10] sm:$0xff]
    %v8946 = vld [vmem:[%s8942 + $0x18] sm:$0xff]
    %v8947 = vld [vmem:[%s8942 + $0x20] sm:$0xff]
    %v8948 = vld [vmem:[%s8942 + $0x28] sm:$0xff]
    %v8949 = vld [vmem:[%s8942 + $0x30] sm:$0xff]
    %v8950 = vld [vmem:[%s8942 + $0x38] sm:$0xff]
    %v8951 = vld [vmem:[%s8942 + $0x40] sm:$0xff]
    %v8952 = vld [vmem:[%s8942 + $0x48] sm:$0xff]
    %v8953 = vld [vmem:[%s8942 + $0x50] sm:$0xff]
    %v8954 = vld [vmem:[%s8942 + $0x58] sm:$0xff]
    %v8955 = vld [vmem:[%s8942 + $0x60] sm:$0xff]
    %v8956 = vld [vmem:[%s8942 + $0x68] sm:$0x1]
    %8957 = vset.pattern.permute.xlu0 1
    %8958 = vperm.xlu0 %8957, %v8817
    %v8959 = vpop.permute.xlu0 %8958
    %8961 = vset.pattern.permute.xlu0 1
    %8962 = vperm.xlu0 %8961, %v8818
    %v8963 = vpop.permute.xlu0 %8962
    %8965 = vset.pattern.permute.xlu0 1
    %8966 = vperm.xlu0 %8965, %v8819
    %v8967 = vpop.permute.xlu0 %8966
    %8969 = vset.pattern.permute.xlu0 1
    %8970 = vperm.xlu0 %8969, %v8820
    %v8971 = vpop.permute.xlu0 %8970
    %8973 = vset.pattern.permute.xlu0 1
    %8974 = vperm.xlu0 %8973, %v8821
    %v8975 = vpop.permute.xlu0 %8974
    %8977 = vset.pattern.permute.xlu0 1
    %8978 = vperm.xlu0 %8977, %v8822
    %v8979 = vpop.permute.xlu0 %8978
    %8981 = vset.pattern.permute.xlu0 1
    %8982 = vperm.xlu0 %8981, %v8823
    %v8983 = vpop.permute.xlu0 %8982
    %8985 = vset.pattern.permute.xlu0 1
    %8986 = vperm.xlu0 %8985, %v8824
    %v8987 = vpop.permute.xlu0 %8986
    %8989 = vset.pattern.permute.xlu0 1
    %8990 = vperm.xlu0 %8989, %v8825
    %v8991 = vpop.permute.xlu0 %8990
    %8993 = vset.pattern.permute.xlu0 1
    %8994 = vperm.xlu0 %8993, %v8826
    %v8995 = vpop.permute.xlu0 %8994
    %8997 = vset.pattern.permute.xlu0 1
    %8998 = vperm.xlu0 %8997, %v8827
    %v8999 = vpop.permute.xlu0 %8998
    %9001 = vset.pattern.permute.xlu0 1
    %9002 = vperm.xlu0 %9001, %v8828
    %v9003 = vpop.permute.xlu0 %9002
    %9005 = vset.pattern.permute.xlu0 1
    %9006 = vperm.xlu0 %9005, %v8829
    %v9007 = vpop.permute.xlu0 %9006
    %9009 = vset.pattern.permute.xlu0 1
    %9010 = vperm.xlu0 %9009, %v8830
    %v9011 = vpop.permute.xlu0 %9010
    %v9013 = vmul.f32 %v8959, %v8943
    %v9014 = vmul.f32 %v8963, %v8944
    %v9015 = vmul.f32 %v8967, %v8945
    %v9016 = vmul.f32 %v8971, %v8946
    %v9017 = vmul.f32 %v8975, %v8947
    %v9018 = vmul.f32 %v8979, %v8948
    %v9019 = vmul.f32 %v8983, %v8949
    %v9020 = vmul.f32 %v8987, %v8950
    %v9021 = vmul.f32 %v8991, %v8951
    %v9022 = vmul.f32 %v8995, %v8952
    %v9023 = vmul.f32 %v8999, %v8953
    %v9024 = vmul.f32 %v9003, %v8954
    %v9025 = vmul.f32 %v9007, %v8955
    %v9026 = vmul.f32 %v9011, %v8956
    %v9027 = vadd.f32 %v8928, %v9013
    %v9028 = vadd.f32 %v8929, %v9014
    %v9029 = vadd.f32 %v8930, %v9015
    %v9030 = vadd.f32 %v8931, %v9016
    %v9031 = vadd.f32 %v8932, %v9017
    %v9032 = vadd.f32 %v8933, %v9018
    %v9033 = vadd.f32 %v8934, %v9019
    %v9034 = vadd.f32 %v8935, %v9020
    %v9035 = vadd.f32 %v8936, %v9021
    %v9036 = vadd.f32 %v8937, %v9022
    %v9037 = vadd.f32 %v8938, %v9023
    %v9038 = vadd.f32 %v8939, %v9024
    %v9039 = vadd.f32 %v8940, %v9025
    %v9040 = vadd.f32 %v8941, %v9026
    %s9041 = scalar_lea.vmem %s5, 224
    %v9042 = vld [vmem:[%s9041] sm:$0xff]
    %v9043 = vld [vmem:[%s9041 + $0x8] sm:$0xff]
    %v9044 = vld [vmem:[%s9041 + $0x10] sm:$0xff]
    %v9045 = vld [vmem:[%s9041 + $0x18] sm:$0xff]
    %v9046 = vld [vmem:[%s9041 + $0x20] sm:$0xff]
    %v9047 = vld [vmem:[%s9041 + $0x28] sm:$0xff]
    %v9048 = vld [vmem:[%s9041 + $0x30] sm:$0xff]
    %v9049 = vld [vmem:[%s9041 + $0x38] sm:$0xff]
    %v9050 = vld [vmem:[%s9041 + $0x40] sm:$0xff]
    %v9051 = vld [vmem:[%s9041 + $0x48] sm:$0xff]
    %v9052 = vld [vmem:[%s9041 + $0x50] sm:$0xff]
    %v9053 = vld [vmem:[%s9041 + $0x58] sm:$0xff]
    %v9054 = vld [vmem:[%s9041 + $0x60] sm:$0xff]
    %v9055 = vld [vmem:[%s9041 + $0x68] sm:$0x1]
    %9056 = vset.pattern.permute.xlu0 2
    %9057 = vperm.xlu0 %9056, %v8817
    %v9058 = vpop.permute.xlu0 %9057
    %9060 = vset.pattern.permute.xlu0 2
    %9061 = vperm.xlu0 %9060, %v8818
    %v9062 = vpop.permute.xlu0 %9061
    %9064 = vset.pattern.permute.xlu0 2
    %9065 = vperm.xlu0 %9064, %v8819
    %v9066 = vpop.permute.xlu0 %9065
    %9068 = vset.pattern.permute.xlu0 2
    %9069 = vperm.xlu0 %9068, %v8820
    %v9070 = vpop.permute.xlu0 %9069
    %9072 = vset.pattern.permute.xlu0 2
    %9073 = vperm.xlu0 %9072, %v8821
    %v9074 = vpop.permute.xlu0 %9073
    %9076 = vset.pattern.permute.xlu0 2
    %9077 = vperm.xlu0 %9076, %v8822
    %v9078 = vpop.permute.xlu0 %9077
    %9080 = vset.pattern.permute.xlu0 2
    %9081 = vperm.xlu0 %9080, %v8823
    %v9082 = vpop.permute.xlu0 %9081
    %9084 = vset.pattern.permute.xlu0 2
    %9085 = vperm.xlu0 %9084, %v8824
    %v9086 = vpop.permute.xlu0 %9085
    %9088 = vset.pattern.permute.xlu0 2
    %9089 = vperm.xlu0 %9088, %v8825
    %v9090 = vpop.permute.xlu0 %9089
    %9092 = vset.pattern.permute.xlu0 2
    %9093 = vperm.xlu0 %9092, %v8826
    %v9094 = vpop.permute.xlu0 %9093
    %9096 = vset.pattern.permute.xlu0 2
    %9097 = vperm.xlu0 %9096, %v8827
    %v9098 = vpop.permute.xlu0 %9097
    %9100 = vset.pattern.permute.xlu0 2
    %9101 = vperm.xlu0 %9100, %v8828
    %v9102 = vpop.permute.xlu0 %9101
    %9104 = vset.pattern.permute.xlu0 2
    %9105 = vperm.xlu0 %9104, %v8829
    %v9106 = vpop.permute.xlu0 %9105
    %9108 = vset.pattern.permute.xlu0 2
    %9109 = vperm.xlu0 %9108, %v8830
    %v9110 = vpop.permute.xlu0 %9109
    %v9112 = vmul.f32 %v9058, %v9042
    %v9113 = vmul.f32 %v9062, %v9043
    %v9114 = vmul.f32 %v9066, %v9044
    %v9115 = vmul.f32 %v9070, %v9045
    %v9116 = vmul.f32 %v9074, %v9046
    %v9117 = vmul.f32 %v9078, %v9047
    %v9118 = vmul.f32 %v9082, %v9048
    %v9119 = vmul.f32 %v9086, %v9049
    %v9120 = vmul.f32 %v9090, %v9050
    %v9121 = vmul.f32 %v9094, %v9051
    %v9122 = vmul.f32 %v9098, %v9052
    %v9123 = vmul.f32 %v9102, %v9053
    %v9124 = vmul.f32 %v9106, %v9054
    %v9125 = vmul.f32 %v9110, %v9055
    %v9126 = vadd.f32 %v9027, %v9112
    %v9127 = vadd.f32 %v9028, %v9113
    %v9128 = vadd.f32 %v9029, %v9114
    %v9129 = vadd.f32 %v9030, %v9115
    %v9130 = vadd.f32 %v9031, %v9116
    %v9131 = vadd.f32 %v9032, %v9117
    %v9132 = vadd.f32 %v9033, %v9118
    %v9133 = vadd.f32 %v9034, %v9119
    %v9134 = vadd.f32 %v9035, %v9120
    %v9135 = vadd.f32 %v9036, %v9121
    %v9136 = vadd.f32 %v9037, %v9122
    %v9137 = vadd.f32 %v9038, %v9123
    %v9138 = vadd.f32 %v9039, %v9124
    %v9139 = vadd.f32 %v9040, %v9125
    %s9140 = scalar_lea.vmem %s5, 336
    %v9141 = vld [vmem:[%s9140] sm:$0xff]
    %v9142 = vld [vmem:[%s9140 + $0x8] sm:$0xff]
    %v9143 = vld [vmem:[%s9140 + $0x10] sm:$0xff]
    %v9144 = vld [vmem:[%s9140 + $0x18] sm:$0xff]
    %v9145 = vld [vmem:[%s9140 + $0x20] sm:$0xff]
    %v9146 = vld [vmem:[%s9140 + $0x28] sm:$0xff]
    %v9147 = vld [vmem:[%s9140 + $0x30] sm:$0xff]
    %v9148 = vld [vmem:[%s9140 + $0x38] sm:$0xff]
    %v9149 = vld [vmem:[%s9140 + $0x40] sm:$0xff]
    %v9150 = vld [vmem:[%s9140 + $0x48] sm:$0xff]
    %v9151 = vld [vmem:[%s9140 + $0x50] sm:$0xff]
    %v9152 = vld [vmem:[%s9140 + $0x58] sm:$0xff]
    %v9153 = vld [vmem:[%s9140 + $0x60] sm:$0xff]
    %v9154 = vld [vmem:[%s9140 + $0x68] sm:$0x1]
    %9155 = vset.pattern.permute.xlu0 3
    %9156 = vperm.xlu0 %9155, %v8817
    %v9157 = vpop.permute.xlu0 %9156
    %9159 = vset.pattern.permute.xlu0 3
    %9160 = vperm.xlu0 %9159, %v8818
    %v9161 = vpop.permute.xlu0 %9160
    %9163 = vset.pattern.permute.xlu0 3
    %9164 = vperm.xlu0 %9163, %v8819
    %v9165 = vpop.permute.xlu0 %9164
    %9167 = vset.pattern.permute.xlu0 3
    %9168 = vperm.xlu0 %9167, %v8820
    %v9169 = vpop.permute.xlu0 %9168
    %9171 = vset.pattern.permute.xlu0 3
    %9172 = vperm.xlu0 %9171, %v8821
    %v9173 = vpop.permute.xlu0 %9172
    %9175 = vset.pattern.permute.xlu0 3
    %9176 = vperm.xlu0 %9175, %v8822
    %v9177 = vpop.permute.xlu0 %9176
    %9179 = vset.pattern.permute.xlu0 3
    %9180 = vperm.xlu0 %9179, %v8823
    %v9181 = vpop.permute.xlu0 %9180
    %9183 = vset.pattern.permute.xlu0 3
    %9184 = vperm.xlu0 %9183, %v8824
    %v9185 = vpop.permute.xlu0 %9184
    %9187 = vset.pattern.permute.xlu0 3
    %9188 = vperm.xlu0 %9187, %v8825
    %v9189 = vpop.permute.xlu0 %9188
    %9191 = vset.pattern.permute.xlu0 3
    %9192 = vperm.xlu0 %9191, %v8826
    %v9193 = vpop.permute.xlu0 %9192
    %9195 = vset.pattern.permute.xlu0 3
    %9196 = vperm.xlu0 %9195, %v8827
    %v9197 = vpop.permute.xlu0 %9196
    %9199 = vset.pattern.permute.xlu0 3
    %9200 = vperm.xlu0 %9199, %v8828
    %v9201 = vpop.permute.xlu0 %9200
    %9203 = vset.pattern.permute.xlu0 3
    %9204 = vperm.xlu0 %9203, %v8829
    %v9205 = vpop.permute.xlu0 %9204
    %9207 = vset.pattern.permute.xlu0 3
    %9208 = vperm.xlu0 %9207, %v8830
    %v9209 = vpop.permute.xlu0 %9208
    %v9211 = vmul.f32 %v9157, %v9141
    %v9212 = vmul.f32 %v9161, %v9142
    %v9213 = vmul.f32 %v9165, %v9143
    %v9214 = vmul.f32 %v9169, %v9144
    %v9215 = vmul.f32 %v9173, %v9145
    %v9216 = vmul.f32 %v9177, %v9146
    %v9217 = vmul.f32 %v9181, %v9147
    %v9218 = vmul.f32 %v9185, %v9148
    %v9219 = vmul.f32 %v9189, %v9149
    %v9220 = vmul.f32 %v9193, %v9150
    %v9221 = vmul.f32 %v9197, %v9151
    %v9222 = vmul.f32 %v9201, %v9152
    %v9223 = vmul.f32 %v9205, %v9153
    %v9224 = vmul.f32 %v9209, %v9154
    %v9225 = vadd.f32 %v9126, %v9211
    %v9226 = vadd.f32 %v9127, %v9212
    %v9227 = vadd.f32 %v9128, %v9213
    %v9228 = vadd.f32 %v9129, %v9214
    %v9229 = vadd.f32 %v9130, %v9215
    %v9230 = vadd.f32 %v9131, %v9216
    %v9231 = vadd.f32 %v9132, %v9217
    %v9232 = vadd.f32 %v9133, %v9218
    %v9233 = vadd.f32 %v9134, %v9219
    %v9234 = vadd.f32 %v9135, %v9220
    %v9235 = vadd.f32 %v9136, %v9221
    %v9236 = vadd.f32 %v9137, %v9222
    %v9237 = vadd.f32 %v9138, %v9223
    %v9238 = vadd.f32 %v9139, %v9224
    %s9239 = scalar_lea.vmem %s5, 448
    %v9240 = vld [vmem:[%s9239] sm:$0xff]
    %v9241 = vld [vmem:[%s9239 + $0x8] sm:$0xff]
    %v9242 = vld [vmem:[%s9239 + $0x10] sm:$0xff]
    %v9243 = vld [vmem:[%s9239 + $0x18] sm:$0xff]
    %v9244 = vld [vmem:[%s9239 + $0x20] sm:$0xff]
    %v9245 = vld [vmem:[%s9239 + $0x28] sm:$0xff]
    %v9246 = vld [vmem:[%s9239 + $0x30] sm:$0xff]
    %v9247 = vld [vmem:[%s9239 + $0x38] sm:$0xff]
    %v9248 = vld [vmem:[%s9239 + $0x40] sm:$0xff]
    %v9249 = vld [vmem:[%s9239 + $0x48] sm:$0xff]
    %v9250 = vld [vmem:[%s9239 + $0x50] sm:$0xff]
    %v9251 = vld [vmem:[%s9239 + $0x58] sm:$0xff]
    %v9252 = vld [vmem:[%s9239 + $0x60] sm:$0xff]
    %v9253 = vld [vmem:[%s9239 + $0x68] sm:$0x1]
    %9254 = vset.pattern.permute.xlu0 4
    %9255 = vperm.xlu0 %9254, %v8817
    %v9256 = vpop.permute.xlu0 %9255
    %9258 = vset.pattern.permute.xlu0 4
    %9259 = vperm.xlu0 %9258, %v8818
    %v9260 = vpop.permute.xlu0 %9259
    %9262 = vset.pattern.permute.xlu0 4
    %9263 = vperm.xlu0 %9262, %v8819
    %v9264 = vpop.permute.xlu0 %9263
    %9266 = vset.pattern.permute.xlu0 4
    %9267 = vperm.xlu0 %9266, %v8820
    %v9268 = vpop.permute.xlu0 %9267
    %9270 = vset.pattern.permute.xlu0 4
    %9271 = vperm.xlu0 %9270, %v8821
    %v9272 = vpop.permute.xlu0 %9271
    %9274 = vset.pattern.permute.xlu0 4
    %9275 = vperm.xlu0 %9274, %v8822
    %v9276 = vpop.permute.xlu0 %9275
    %9278 = vset.pattern.permute.xlu0 4
    %9279 = vperm.xlu0 %9278, %v8823
    %v9280 = vpop.permute.xlu0 %9279
    %9282 = vset.pattern.permute.xlu0 4
    %9283 = vperm.xlu0 %9282, %v8824
    %v9284 = vpop.permute.xlu0 %9283
    %9286 = vset.pattern.permute.xlu0 4
    %9287 = vperm.xlu0 %9286, %v8825
    %v9288 = vpop.permute.xlu0 %9287
    %9290 = vset.pattern.permute.xlu0 4
    %9291 = vperm.xlu0 %9290, %v8826
    %v9292 = vpop.permute.xlu0 %9291
    %9294 = vset.pattern.permute.xlu0 4
    %9295 = vperm.xlu0 %9294, %v8827
    %v9296 = vpop.permute.xlu0 %9295
    %9298 = vset.pattern.permute.xlu0 4
    %9299 = vperm.xlu0 %9298, %v8828
    %v9300 = vpop.permute.xlu0 %9299
    %9302 = vset.pattern.permute.xlu0 4
    %9303 = vperm.xlu0 %9302, %v8829
    %v9304 = vpop.permute.xlu0 %9303
    %9306 = vset.pattern.permute.xlu0 4
    %9307 = vperm.xlu0 %9306, %v8830
    %v9308 = vpop.permute.xlu0 %9307
    %v9310 = vmul.f32 %v9256, %v9240
    %v9311 = vmul.f32 %v9260, %v9241
    %v9312 = vmul.f32 %v9264, %v9242
    %v9313 = vmul.f32 %v9268, %v9243
    %v9314 = vmul.f32 %v9272, %v9244
    %v9315 = vmul.f32 %v9276, %v9245
    %v9316 = vmul.f32 %v9280, %v9246
    %v9317 = vmul.f32 %v9284, %v9247
    %v9318 = vmul.f32 %v9288, %v9248
    %v9319 = vmul.f32 %v9292, %v9249
    %v9320 = vmul.f32 %v9296, %v9250
    %v9321 = vmul.f32 %v9300, %v9251
    %v9322 = vmul.f32 %v9304, %v9252
    %v9323 = vmul.f32 %v9308, %v9253
    %v9324 = vadd.f32 %v9225, %v9310
    %v9325 = vadd.f32 %v9226, %v9311
    %v9326 = vadd.f32 %v9227, %v9312
    %v9327 = vadd.f32 %v9228, %v9313
    %v9328 = vadd.f32 %v9229, %v9314
    %v9329 = vadd.f32 %v9230, %v9315
    %v9330 = vadd.f32 %v9231, %v9316
    %v9331 = vadd.f32 %v9232, %v9317
    %v9332 = vadd.f32 %v9233, %v9318
    %v9333 = vadd.f32 %v9234, %v9319
    %v9334 = vadd.f32 %v9235, %v9320
    %v9335 = vadd.f32 %v9236, %v9321
    %v9336 = vadd.f32 %v9237, %v9322
    %v9337 = vadd.f32 %v9238, %v9323
    %s9338 = scalar_lea.vmem %s5, 560
    %v9339 = vld [vmem:[%s9338] sm:$0xff]
    %v9340 = vld [vmem:[%s9338 + $0x8] sm:$0xff]
    %v9341 = vld [vmem:[%s9338 + $0x10] sm:$0xff]
    %v9342 = vld [vmem:[%s9338 + $0x18] sm:$0xff]
    %v9343 = vld [vmem:[%s9338 + $0x20] sm:$0xff]
    %v9344 = vld [vmem:[%s9338 + $0x28] sm:$0xff]
    %v9345 = vld [vmem:[%s9338 + $0x30] sm:$0xff]
    %v9346 = vld [vmem:[%s9338 + $0x38] sm:$0xff]
    %v9347 = vld [vmem:[%s9338 + $0x40] sm:$0xff]
    %v9348 = vld [vmem:[%s9338 + $0x48] sm:$0xff]
    %v9349 = vld [vmem:[%s9338 + $0x50] sm:$0xff]
    %v9350 = vld [vmem:[%s9338 + $0x58] sm:$0xff]
    %v9351 = vld [vmem:[%s9338 + $0x60] sm:$0xff]
    %v9352 = vld [vmem:[%s9338 + $0x68] sm:$0x1]
    %9353 = vset.pattern.permute.xlu0 5
    %9354 = vperm.xlu0 %9353, %v8817
    %v9355 = vpop.permute.xlu0 %9354
    %9357 = vset.pattern.permute.xlu0 5
    %9358 = vperm.xlu0 %9357, %v8818
    %v9359 = vpop.permute.xlu0 %9358
    %9361 = vset.pattern.permute.xlu0 5
    %9362 = vperm.xlu0 %9361, %v8819
    %v9363 = vpop.permute.xlu0 %9362
    %9365 = vset.pattern.permute.xlu0 5
    %9366 = vperm.xlu0 %9365, %v8820
    %v9367 = vpop.permute.xlu0 %9366
    %9369 = vset.pattern.permute.xlu0 5
    %9370 = vperm.xlu0 %9369, %v8821
    %v9371 = vpop.permute.xlu0 %9370
    %9373 = vset.pattern.permute.xlu0 5
    %9374 = vperm.xlu0 %9373, %v8822
    %v9375 = vpop.permute.xlu0 %9374
    %9377 = vset.pattern.permute.xlu0 5
    %9378 = vperm.xlu0 %9377, %v8823
    %v9379 = vpop.permute.xlu0 %9378
    %9381 = vset.pattern.permute.xlu0 5
    %9382 = vperm.xlu0 %9381, %v8824
    %v9383 = vpop.permute.xlu0 %9382
    %9385 = vset.pattern.permute.xlu0 5
    %9386 = vperm.xlu0 %9385, %v8825
    %v9387 = vpop.permute.xlu0 %9386
    %9389 = vset.pattern.permute.xlu0 5
    %9390 = vperm.xlu0 %9389, %v8826
    %v9391 = vpop.permute.xlu0 %9390
    %9393 = vset.pattern.permute.xlu0 5
    %9394 = vperm.xlu0 %9393, %v8827
    %v9395 = vpop.permute.xlu0 %9394
    %9397 = vset.pattern.permute.xlu0 5
    %9398 = vperm.xlu0 %9397, %v8828
    %v9399 = vpop.permute.xlu0 %9398
    %9401 = vset.pattern.permute.xlu0 5
    %9402 = vperm.xlu0 %9401, %v8829
    %v9403 = vpop.permute.xlu0 %9402
    %9405 = vset.pattern.permute.xlu0 5
    %9406 = vperm.xlu0 %9405, %v8830
    %v9407 = vpop.permute.xlu0 %9406
    %v9409 = vmul.f32 %v9355, %v9339
    %v9410 = vmul.f32 %v9359, %v9340
    %v9411 = vmul.f32 %v9363, %v9341
    %v9412 = vmul.f32 %v9367, %v9342
    %v9413 = vmul.f32 %v9371, %v9343
    %v9414 = vmul.f32 %v9375, %v9344
    %v9415 = vmul.f32 %v9379, %v9345
    %v9416 = vmul.f32 %v9383, %v9346
    %v9417 = vmul.f32 %v9387, %v9347
    %v9418 = vmul.f32 %v9391, %v9348
    %v9419 = vmul.f32 %v9395, %v9349
    %v9420 = vmul.f32 %v9399, %v9350
    %v9421 = vmul.f32 %v9403, %v9351
    %v9422 = vmul.f32 %v9407, %v9352
    %v9423 = vadd.f32 %v9324, %v9409
    %v9424 = vadd.f32 %v9325, %v9410
    %v9425 = vadd.f32 %v9326, %v9411
    %v9426 = vadd.f32 %v9327, %v9412
    %v9427 = vadd.f32 %v9328, %v9413
    %v9428 = vadd.f32 %v9329, %v9414
    %v9429 = vadd.f32 %v9330, %v9415
    %v9430 = vadd.f32 %v9331, %v9416
    %v9431 = vadd.f32 %v9332, %v9417
    %v9432 = vadd.f32 %v9333, %v9418
    %v9433 = vadd.f32 %v9334, %v9419
    %v9434 = vadd.f32 %v9335, %v9420
    %v9435 = vadd.f32 %v9336, %v9421
    %v9436 = vadd.f32 %v9337, %v9422
    %s9437 = scalar_lea.vmem %s5, 672
    %v9438 = vld [vmem:[%s9437] sm:$0xff]
    %v9439 = vld [vmem:[%s9437 + $0x8] sm:$0xff]
    %v9440 = vld [vmem:[%s9437 + $0x10] sm:$0xff]
    %v9441 = vld [vmem:[%s9437 + $0x18] sm:$0xff]
    %v9442 = vld [vmem:[%s9437 + $0x20] sm:$0xff]
    %v9443 = vld [vmem:[%s9437 + $0x28] sm:$0xff]
    %v9444 = vld [vmem:[%s9437 + $0x30] sm:$0xff]
    %v9445 = vld [vmem:[%s9437 + $0x38] sm:$0xff]
    %v9446 = vld [vmem:[%s9437 + $0x40] sm:$0xff]
    %v9447 = vld [vmem:[%s9437 + $0x48] sm:$0xff]
    %v9448 = vld [vmem:[%s9437 + $0x50] sm:$0xff]
    %v9449 = vld [vmem:[%s9437 + $0x58] sm:$0xff]
    %v9450 = vld [vmem:[%s9437 + $0x60] sm:$0xff]
    %v9451 = vld [vmem:[%s9437 + $0x68] sm:$0x1]
    %9452 = vset.pattern.permute.xlu0 6
    %9453 = vperm.xlu0 %9452, %v8817
    %v9454 = vpop.permute.xlu0 %9453
    %9456 = vset.pattern.permute.xlu0 6
    %9457 = vperm.xlu0 %9456, %v8818
    %v9458 = vpop.permute.xlu0 %9457
    %9460 = vset.pattern.permute.xlu0 6
    %9461 = vperm.xlu0 %9460, %v8819
    %v9462 = vpop.permute.xlu0 %9461
    %9464 = vset.pattern.permute.xlu0 6
    %9465 = vperm.xlu0 %9464, %v8820
    %v9466 = vpop.permute.xlu0 %9465
    %9468 = vset.pattern.permute.xlu0 6
    %9469 = vperm.xlu0 %9468, %v8821
    %v9470 = vpop.permute.xlu0 %9469
    %9472 = vset.pattern.permute.xlu0 6
    %9473 = vperm.xlu0 %9472, %v8822
    %v9474 = vpop.permute.xlu0 %9473
    %9476 = vset.pattern.permute.xlu0 6
    %9477 = vperm.xlu0 %9476, %v8823
    %v9478 = vpop.permute.xlu0 %9477
    %9480 = vset.pattern.permute.xlu0 6
    %9481 = vperm.xlu0 %9480, %v8824
    %v9482 = vpop.permute.xlu0 %9481
    %9484 = vset.pattern.permute.xlu0 6
    %9485 = vperm.xlu0 %9484, %v8825
    %v9486 = vpop.permute.xlu0 %9485
    %9488 = vset.pattern.permute.xlu0 6
    %9489 = vperm.xlu0 %9488, %v8826
    %v9490 = vpop.permute.xlu0 %9489
    %9492 = vset.pattern.permute.xlu0 6
    %9493 = vperm.xlu0 %9492, %v8827
    %v9494 = vpop.permute.xlu0 %9493
    %9496 = vset.pattern.permute.xlu0 6
    %9497 = vperm.xlu0 %9496, %v8828
    %v9498 = vpop.permute.xlu0 %9497
    %9500 = vset.pattern.permute.xlu0 6
    %9501 = vperm.xlu0 %9500, %v8829
    %v9502 = vpop.permute.xlu0 %9501
    %9504 = vset.pattern.permute.xlu0 6
    %9505 = vperm.xlu0 %9504, %v8830
    %v9506 = vpop.permute.xlu0 %9505
    %v9508 = vmul.f32 %v9454, %v9438
    %v9509 = vmul.f32 %v9458, %v9439
    %v9510 = vmul.f32 %v9462, %v9440
    %v9511 = vmul.f32 %v9466, %v9441
    %v9512 = vmul.f32 %v9470, %v9442
    %v9513 = vmul.f32 %v9474, %v9443
    %v9514 = vmul.f32 %v9478, %v9444
    %v9515 = vmul.f32 %v9482, %v9445
    %v9516 = vmul.f32 %v9486, %v9446
    %v9517 = vmul.f32 %v9490, %v9447
    %v9518 = vmul.f32 %v9494, %v9448
    %v9519 = vmul.f32 %v9498, %v9449
    %v9520 = vmul.f32 %v9502, %v9450
    %v9521 = vmul.f32 %v9506, %v9451
    %v9522 = vadd.f32 %v9423, %v9508
    %v9523 = vadd.f32 %v9424, %v9509
    %v9524 = vadd.f32 %v9425, %v9510
    %v9525 = vadd.f32 %v9426, %v9511
    %v9526 = vadd.f32 %v9427, %v9512
    %v9527 = vadd.f32 %v9428, %v9513
    %v9528 = vadd.f32 %v9429, %v9514
    %v9529 = vadd.f32 %v9430, %v9515
    %v9530 = vadd.f32 %v9431, %v9516
    %v9531 = vadd.f32 %v9432, %v9517
    %v9532 = vadd.f32 %v9433, %v9518
    %v9533 = vadd.f32 %v9434, %v9519
    %v9534 = vadd.f32 %v9435, %v9520
    %v9535 = vadd.f32 %v9436, %v9521
    %s9536 = scalar_lea.vmem %s5, 784
    %v9537 = vld [vmem:[%s9536] sm:$0xff]
    %v9538 = vld [vmem:[%s9536 + $0x8] sm:$0xff]
    %v9539 = vld [vmem:[%s9536 + $0x10] sm:$0xff]
    %v9540 = vld [vmem:[%s9536 + $0x18] sm:$0xff]
    %v9541 = vld [vmem:[%s9536 + $0x20] sm:$0xff]
    %v9542 = vld [vmem:[%s9536 + $0x28] sm:$0xff]
    %v9543 = vld [vmem:[%s9536 + $0x30] sm:$0xff]
    %v9544 = vld [vmem:[%s9536 + $0x38] sm:$0xff]
    %v9545 = vld [vmem:[%s9536 + $0x40] sm:$0xff]
    %v9546 = vld [vmem:[%s9536 + $0x48] sm:$0xff]
    %v9547 = vld [vmem:[%s9536 + $0x50] sm:$0xff]
    %v9548 = vld [vmem:[%s9536 + $0x58] sm:$0xff]
    %v9549 = vld [vmem:[%s9536 + $0x60] sm:$0xff]
    %v9550 = vld [vmem:[%s9536 + $0x68] sm:$0x1]
    %9551 = vset.pattern.permute.xlu0 7
    %9552 = vperm.xlu0 %9551, %v8817
    %v9553 = vpop.permute.xlu0 %9552
    %9555 = vset.pattern.permute.xlu0 7
    %9556 = vperm.xlu0 %9555, %v8818
    %v9557 = vpop.permute.xlu0 %9556
    %9559 = vset.pattern.permute.xlu0 7
    %9560 = vperm.xlu0 %9559, %v8819
    %v9561 = vpop.permute.xlu0 %9560
    %9563 = vset.pattern.permute.xlu0 7
    %9564 = vperm.xlu0 %9563, %v8820
    %v9565 = vpop.permute.xlu0 %9564
    %9567 = vset.pattern.permute.xlu0 7
    %9568 = vperm.xlu0 %9567, %v8821
    %v9569 = vpop.permute.xlu0 %9568
    %9571 = vset.pattern.permute.xlu0 7
    %9572 = vperm.xlu0 %9571, %v8822
    %v9573 = vpop.permute.xlu0 %9572
    %9575 = vset.pattern.permute.xlu0 7
    %9576 = vperm.xlu0 %9575, %v8823
    %v9577 = vpop.permute.xlu0 %9576
    %9579 = vset.pattern.permute.xlu0 7
    %9580 = vperm.xlu0 %9579, %v8824
    %v9581 = vpop.permute.xlu0 %9580
    %9583 = vset.pattern.permute.xlu0 7
    %9584 = vperm.xlu0 %9583, %v8825
    %v9585 = vpop.permute.xlu0 %9584
    %9587 = vset.pattern.permute.xlu0 7
    %9588 = vperm.xlu0 %9587, %v8826
    %v9589 = vpop.permute.xlu0 %9588
    %9591 = vset.pattern.permute.xlu0 7
    %9592 = vperm.xlu0 %9591, %v8827
    %v9593 = vpop.permute.xlu0 %9592
    %9595 = vset.pattern.permute.xlu0 7
    %9596 = vperm.xlu0 %9595, %v8828
    %v9597 = vpop.permute.xlu0 %9596
    %9599 = vset.pattern.permute.xlu0 7
    %9600 = vperm.xlu0 %9599, %v8829
    %v9601 = vpop.permute.xlu0 %9600
    %9603 = vset.pattern.permute.xlu0 7
    %9604 = vperm.xlu0 %9603, %v8830
    %v9605 = vpop.permute.xlu0 %9604
    %v9607 = vmul.f32 %v9553, %v9537
    %v9608 = vmul.f32 %v9557, %v9538
    %v9609 = vmul.f32 %v9561, %v9539
    %v9610 = vmul.f32 %v9565, %v9540
    %v9611 = vmul.f32 %v9569, %v9541
    %v9612 = vmul.f32 %v9573, %v9542
    %v9613 = vmul.f32 %v9577, %v9543
    %v9614 = vmul.f32 %v9581, %v9544
    %v9615 = vmul.f32 %v9585, %v9545
    %v9616 = vmul.f32 %v9589, %v9546
    %v9617 = vmul.f32 %v9593, %v9547
    %v9618 = vmul.f32 %v9597, %v9548
    %v9619 = vmul.f32 %v9601, %v9549
    %v9620 = vmul.f32 %v9605, %v9550
    %v9621 = vadd.f32 %v9522, %v9607
    %v9622 = vadd.f32 %v9523, %v9608
    %v9623 = vadd.f32 %v9524, %v9609
    %v9624 = vadd.f32 %v9525, %v9610
    %v9625 = vadd.f32 %v9526, %v9611
    %v9626 = vadd.f32 %v9527, %v9612
    %v9627 = vadd.f32 %v9528, %v9613
    %v9628 = vadd.f32 %v9529, %v9614
    %v9629 = vadd.f32 %v9530, %v9615
    %v9630 = vadd.f32 %v9531, %v9616
    %v9631 = vadd.f32 %v9532, %v9617
    %v9632 = vadd.f32 %v9533, %v9618
    %v9633 = vadd.f32 %v9534, %v9619
    %v9634 = vadd.f32 %v9535, %v9620
    %s9635 = scalar_lea.vmem %s5, 896
    %v9636 = vld [vmem:[%s9635] sm:$0xff]
    %v9637 = vld [vmem:[%s9635 + $0x8] sm:$0xff]
    %v9638 = vld [vmem:[%s9635 + $0x10] sm:$0xff]
    %v9639 = vld [vmem:[%s9635 + $0x18] sm:$0xff]
    %v9640 = vld [vmem:[%s9635 + $0x20] sm:$0xff]
    %v9641 = vld [vmem:[%s9635 + $0x28] sm:$0xff]
    %v9642 = vld [vmem:[%s9635 + $0x30] sm:$0xff]
    %v9643 = vld [vmem:[%s9635 + $0x38] sm:$0xff]
    %v9644 = vld [vmem:[%s9635 + $0x40] sm:$0xff]
    %v9645 = vld [vmem:[%s9635 + $0x48] sm:$0xff]
    %v9646 = vld [vmem:[%s9635 + $0x50] sm:$0xff]
    %v9647 = vld [vmem:[%s9635 + $0x58] sm:$0xff]
    %v9648 = vld [vmem:[%s9635 + $0x60] sm:$0xff]
    %v9649 = vld [vmem:[%s9635 + $0x68] sm:$0x1]
    %9650 = vset.pattern.permute.xlu0 8
    %9651 = vperm.xlu0 %9650, %v8817
    %v9652 = vpop.permute.xlu0 %9651
    %9654 = vset.pattern.permute.xlu0 8
    %9655 = vperm.xlu0 %9654, %v8818
    %v9656 = vpop.permute.xlu0 %9655
    %9658 = vset.pattern.permute.xlu0 8
    %9659 = vperm.xlu0 %9658, %v8819
    %v9660 = vpop.permute.xlu0 %9659
    %9662 = vset.pattern.permute.xlu0 8
    %9663 = vperm.xlu0 %9662, %v8820
    %v9664 = vpop.permute.xlu0 %9663
    %9666 = vset.pattern.permute.xlu0 8
    %9667 = vperm.xlu0 %9666, %v8821
    %v9668 = vpop.permute.xlu0 %9667
    %9670 = vset.pattern.permute.xlu0 8
    %9671 = vperm.xlu0 %9670, %v8822
    %v9672 = vpop.permute.xlu0 %9671
    %9674 = vset.pattern.permute.xlu0 8
    %9675 = vperm.xlu0 %9674, %v8823
    %v9676 = vpop.permute.xlu0 %9675
    %9678 = vset.pattern.permute.xlu0 8
    %9679 = vperm.xlu0 %9678, %v8824
    %v9680 = vpop.permute.xlu0 %9679
    %9682 = vset.pattern.permute.xlu0 8
    %9683 = vperm.xlu0 %9682, %v8825
    %v9684 = vpop.permute.xlu0 %9683
    %9686 = vset.pattern.permute.xlu0 8
    %9687 = vperm.xlu0 %9686, %v8826
    %v9688 = vpop.permute.xlu0 %9687
    %9690 = vset.pattern.permute.xlu0 8
    %9691 = vperm.xlu0 %9690, %v8827
    %v9692 = vpop.permute.xlu0 %9691
    %9694 = vset.pattern.permute.xlu0 8
    %9695 = vperm.xlu0 %9694, %v8828
    %v9696 = vpop.permute.xlu0 %9695
    %9698 = vset.pattern.permute.xlu0 8
    %9699 = vperm.xlu0 %9698, %v8829
    %v9700 = vpop.permute.xlu0 %9699
    %9702 = vset.pattern.permute.xlu0 8
    %9703 = vperm.xlu0 %9702, %v8830
    %v9704 = vpop.permute.xlu0 %9703
    %v9706 = vmul.f32 %v9652, %v9636
    %v9707 = vmul.f32 %v9656, %v9637
    %v9708 = vmul.f32 %v9660, %v9638
    %v9709 = vmul.f32 %v9664, %v9639
    %v9710 = vmul.f32 %v9668, %v9640
    %v9711 = vmul.f32 %v9672, %v9641
    %v9712 = vmul.f32 %v9676, %v9642
    %v9713 = vmul.f32 %v9680, %v9643
    %v9714 = vmul.f32 %v9684, %v9644
    %v9715 = vmul.f32 %v9688, %v9645
    %v9716 = vmul.f32 %v9692, %v9646
    %v9717 = vmul.f32 %v9696, %v9647
    %v9718 = vmul.f32 %v9700, %v9648
    %v9719 = vmul.f32 %v9704, %v9649
    %v9720 = vadd.f32 %v9621, %v9706
    %v9721 = vadd.f32 %v9622, %v9707
    %v9722 = vadd.f32 %v9623, %v9708
    %v9723 = vadd.f32 %v9624, %v9709
    %v9724 = vadd.f32 %v9625, %v9710
    %v9725 = vadd.f32 %v9626, %v9711
    %v9726 = vadd.f32 %v9627, %v9712
    %v9727 = vadd.f32 %v9628, %v9713
    %v9728 = vadd.f32 %v9629, %v9714
    %v9729 = vadd.f32 %v9630, %v9715
    %v9730 = vadd.f32 %v9631, %v9716
    %v9731 = vadd.f32 %v9632, %v9717
    %v9732 = vadd.f32 %v9633, %v9718
    %v9733 = vadd.f32 %v9634, %v9719
    %s9734 = scalar_lea.vmem %s5, 1008
    %v9735 = vld [vmem:[%s9734] sm:$0xff]
    %v9736 = vld [vmem:[%s9734 + $0x8] sm:$0xff]
    %v9737 = vld [vmem:[%s9734 + $0x10] sm:$0xff]
    %v9738 = vld [vmem:[%s9734 + $0x18] sm:$0xff]
    %v9739 = vld [vmem:[%s9734 + $0x20] sm:$0xff]
    %v9740 = vld [vmem:[%s9734 + $0x28] sm:$0xff]
    %v9741 = vld [vmem:[%s9734 + $0x30] sm:$0xff]
    %v9742 = vld [vmem:[%s9734 + $0x38] sm:$0xff]
    %v9743 = vld [vmem:[%s9734 + $0x40] sm:$0xff]
    %v9744 = vld [vmem:[%s9734 + $0x48] sm:$0xff]
    %v9745 = vld [vmem:[%s9734 + $0x50] sm:$0xff]
    %v9746 = vld [vmem:[%s9734 + $0x58] sm:$0xff]
    %v9747 = vld [vmem:[%s9734 + $0x60] sm:$0xff]
    %v9748 = vld [vmem:[%s9734 + $0x68] sm:$0x1]
    %9749 = vset.pattern.permute.xlu0 9
    %9750 = vperm.xlu0 %9749, %v8817
    %v9751 = vpop.permute.xlu0 %9750
    %9753 = vset.pattern.permute.xlu0 9
    %9754 = vperm.xlu0 %9753, %v8818
    %v9755 = vpop.permute.xlu0 %9754
    %9757 = vset.pattern.permute.xlu0 9
    %9758 = vperm.xlu0 %9757, %v8819
    %v9759 = vpop.permute.xlu0 %9758
    %9761 = vset.pattern.permute.xlu0 9
    %9762 = vperm.xlu0 %9761, %v8820
    %v9763 = vpop.permute.xlu0 %9762
    %9765 = vset.pattern.permute.xlu0 9
    %9766 = vperm.xlu0 %9765, %v8821
    %v9767 = vpop.permute.xlu0 %9766
    %9769 = vset.pattern.permute.xlu0 9
    %9770 = vperm.xlu0 %9769, %v8822
    %v9771 = vpop.permute.xlu0 %9770
    %9773 = vset.pattern.permute.xlu0 9
    %9774 = vperm.xlu0 %9773, %v8823
    %v9775 = vpop.permute.xlu0 %9774
    %9777 = vset.pattern.permute.xlu0 9
    %9778 = vperm.xlu0 %9777, %v8824
    %v9779 = vpop.permute.xlu0 %9778
    %9781 = vset.pattern.permute.xlu0 9
    %9782 = vperm.xlu0 %9781, %v8825
    %v9783 = vpop.permute.xlu0 %9782
    %9785 = vset.pattern.permute.xlu0 9
    %9786 = vperm.xlu0 %9785, %v8826
    %v9787 = vpop.permute.xlu0 %9786
    %9789 = vset.pattern.permute.xlu0 9
    %9790 = vperm.xlu0 %9789, %v8827
    %v9791 = vpop.permute.xlu0 %9790
    %9793 = vset.pattern.permute.xlu0 9
    %9794 = vperm.xlu0 %9793, %v8828
    %v9795 = vpop.permute.xlu0 %9794
    %9797 = vset.pattern.permute.xlu0 9
    %9798 = vperm.xlu0 %9797, %v8829
    %v9799 = vpop.permute.xlu0 %9798
    %9801 = vset.pattern.permute.xlu0 9
    %9802 = vperm.xlu0 %9801, %v8830
    %v9803 = vpop.permute.xlu0 %9802
    %v9805 = vmul.f32 %v9751, %v9735
    %v9806 = vmul.f32 %v9755, %v9736
    %v9807 = vmul.f32 %v9759, %v9737
    %v9808 = vmul.f32 %v9763, %v9738
    %v9809 = vmul.f32 %v9767, %v9739
    %v9810 = vmul.f32 %v9771, %v9740
    %v9811 = vmul.f32 %v9775, %v9741
    %v9812 = vmul.f32 %v9779, %v9742
    %v9813 = vmul.f32 %v9783, %v9743
    %v9814 = vmul.f32 %v9787, %v9744
    %v9815 = vmul.f32 %v9791, %v9745
    %v9816 = vmul.f32 %v9795, %v9746
    %v9817 = vmul.f32 %v9799, %v9747
    %v9818 = vmul.f32 %v9803, %v9748
    %v9819 = vadd.f32 %v9720, %v9805
    %v9820 = vadd.f32 %v9721, %v9806
    %v9821 = vadd.f32 %v9722, %v9807
    %v9822 = vadd.f32 %v9723, %v9808
    %v9823 = vadd.f32 %v9724, %v9809
    %v9824 = vadd.f32 %v9725, %v9810
    %v9825 = vadd.f32 %v9726, %v9811
    %v9826 = vadd.f32 %v9727, %v9812
    %v9827 = vadd.f32 %v9728, %v9813
    %v9828 = vadd.f32 %v9729, %v9814
    %v9829 = vadd.f32 %v9730, %v9815
    %v9830 = vadd.f32 %v9731, %v9816
    %v9831 = vadd.f32 %v9732, %v9817
    %v9832 = vadd.f32 %v9733, %v9818
    %s9833 = scalar_lea.vmem %s5, 1120
    %v9834 = vld [vmem:[%s9833] sm:$0xff]
    %v9835 = vld [vmem:[%s9833 + $0x8] sm:$0xff]
    %v9836 = vld [vmem:[%s9833 + $0x10] sm:$0xff]
    %v9837 = vld [vmem:[%s9833 + $0x18] sm:$0xff]
    %v9838 = vld [vmem:[%s9833 + $0x20] sm:$0xff]
    %v9839 = vld [vmem:[%s9833 + $0x28] sm:$0xff]
    %v9840 = vld [vmem:[%s9833 + $0x30] sm:$0xff]
    %v9841 = vld [vmem:[%s9833 + $0x38] sm:$0xff]
    %v9842 = vld [vmem:[%s9833 + $0x40] sm:$0xff]
    %v9843 = vld [vmem:[%s9833 + $0x48] sm:$0xff]
    %v9844 = vld [vmem:[%s9833 + $0x50] sm:$0xff]
    %v9845 = vld [vmem:[%s9833 + $0x58] sm:$0xff]
    %v9846 = vld [vmem:[%s9833 + $0x60] sm:$0xff]
    %v9847 = vld [vmem:[%s9833 + $0x68] sm:$0x1]
    %9848 = vset.pattern.permute.xlu0 10
    %9849 = vperm.xlu0 %9848, %v8817
    %v9850 = vpop.permute.xlu0 %9849
    %9852 = vset.pattern.permute.xlu0 10
    %9853 = vperm.xlu0 %9852, %v8818
    %v9854 = vpop.permute.xlu0 %9853
    %9856 = vset.pattern.permute.xlu0 10
    %9857 = vperm.xlu0 %9856, %v8819
    %v9858 = vpop.permute.xlu0 %9857
    %9860 = vset.pattern.permute.xlu0 10
    %9861 = vperm.xlu0 %9860, %v8820
    %v9862 = vpop.permute.xlu0 %9861
    %9864 = vset.pattern.permute.xlu0 10
    %9865 = vperm.xlu0 %9864, %v8821
    %v9866 = vpop.permute.xlu0 %9865
    %9868 = vset.pattern.permute.xlu0 10
    %9869 = vperm.xlu0 %9868, %v8822
    %v9870 = vpop.permute.xlu0 %9869
    %9872 = vset.pattern.permute.xlu0 10
    %9873 = vperm.xlu0 %9872, %v8823
    %v9874 = vpop.permute.xlu0 %9873
    %9876 = vset.pattern.permute.xlu0 10
    %9877 = vperm.xlu0 %9876, %v8824
    %v9878 = vpop.permute.xlu0 %9877
    %9880 = vset.pattern.permute.xlu0 10
    %9881 = vperm.xlu0 %9880, %v8825
    %v9882 = vpop.permute.xlu0 %9881
    %9884 = vset.pattern.permute.xlu0 10
    %9885 = vperm.xlu0 %9884, %v8826
    %v9886 = vpop.permute.xlu0 %9885
    %9888 = vset.pattern.permute.xlu0 10
    %9889 = vperm.xlu0 %9888, %v8827
    %v9890 = vpop.permute.xlu0 %9889
    %9892 = vset.pattern.permute.xlu0 10
    %9893 = vperm.xlu0 %9892, %v8828
    %v9894 = vpop.permute.xlu0 %9893
    %9896 = vset.pattern.permute.xlu0 10
    %9897 = vperm.xlu0 %9896, %v8829
    %v9898 = vpop.permute.xlu0 %9897
    %9900 = vset.pattern.permute.xlu0 10
    %9901 = vperm.xlu0 %9900, %v8830
    %v9902 = vpop.permute.xlu0 %9901
    %v9904 = vmul.f32 %v9850, %v9834
    %v9905 = vmul.f32 %v9854, %v9835
    %v9906 = vmul.f32 %v9858, %v9836
    %v9907 = vmul.f32 %v9862, %v9837
    %v9908 = vmul.f32 %v9866, %v9838
    %v9909 = vmul.f32 %v9870, %v9839
    %v9910 = vmul.f32 %v9874, %v9840
    %v9911 = vmul.f32 %v9878, %v9841
    %v9912 = vmul.f32 %v9882, %v9842
    %v9913 = vmul.f32 %v9886, %v9843
    %v9914 = vmul.f32 %v9890, %v9844
    %v9915 = vmul.f32 %v9894, %v9845
    %v9916 = vmul.f32 %v9898, %v9846
    %v9917 = vmul.f32 %v9902, %v9847
    %v9918 = vadd.f32 %v9819, %v9904
    %v9919 = vadd.f32 %v9820, %v9905
    %v9920 = vadd.f32 %v9821, %v9906
    %v9921 = vadd.f32 %v9822, %v9907
    %v9922 = vadd.f32 %v9823, %v9908
    %v9923 = vadd.f32 %v9824, %v9909
    %v9924 = vadd.f32 %v9825, %v9910
    %v9925 = vadd.f32 %v9826, %v9911
    %v9926 = vadd.f32 %v9827, %v9912
    %v9927 = vadd.f32 %v9828, %v9913
    %v9928 = vadd.f32 %v9829, %v9914
    %v9929 = vadd.f32 %v9830, %v9915
    %v9930 = vadd.f32 %v9831, %v9916
    %v9931 = vadd.f32 %v9832, %v9917
    %s9932 = scalar_lea.vmem %s5, 1232
    %v9933 = vld [vmem:[%s9932] sm:$0xff]
    %v9934 = vld [vmem:[%s9932 + $0x8] sm:$0xff]
    %v9935 = vld [vmem:[%s9932 + $0x10] sm:$0xff]
    %v9936 = vld [vmem:[%s9932 + $0x18] sm:$0xff]
    %v9937 = vld [vmem:[%s9932 + $0x20] sm:$0xff]
    %v9938 = vld [vmem:[%s9932 + $0x28] sm:$0xff]
    %v9939 = vld [vmem:[%s9932 + $0x30] sm:$0xff]
    %v9940 = vld [vmem:[%s9932 + $0x38] sm:$0xff]
    %v9941 = vld [vmem:[%s9932 + $0x40] sm:$0xff]
    %v9942 = vld [vmem:[%s9932 + $0x48] sm:$0xff]
    %v9943 = vld [vmem:[%s9932 + $0x50] sm:$0xff]
    %v9944 = vld [vmem:[%s9932 + $0x58] sm:$0xff]
    %v9945 = vld [vmem:[%s9932 + $0x60] sm:$0xff]
    %v9946 = vld [vmem:[%s9932 + $0x68] sm:$0x1]
    %9947 = vset.pattern.permute.xlu0 11
    %9948 = vperm.xlu0 %9947, %v8817
    %v9949 = vpop.permute.xlu0 %9948
    %9951 = vset.pattern.permute.xlu0 11
    %9952 = vperm.xlu0 %9951, %v8818
    %v9953 = vpop.permute.xlu0 %9952
    %9955 = vset.pattern.permute.xlu0 11
    %9956 = vperm.xlu0 %9955, %v8819
    %v9957 = vpop.permute.xlu0 %9956
    %9959 = vset.pattern.permute.xlu0 11
    %9960 = vperm.xlu0 %9959, %v8820
    %v9961 = vpop.permute.xlu0 %9960
    %9963 = vset.pattern.permute.xlu0 11
    %9964 = vperm.xlu0 %9963, %v8821
    %v9965 = vpop.permute.xlu0 %9964
    %9967 = vset.pattern.permute.xlu0 11
    %9968 = vperm.xlu0 %9967, %v8822
    %v9969 = vpop.permute.xlu0 %9968
    %9971 = vset.pattern.permute.xlu0 11
    %9972 = vperm.xlu0 %9971, %v8823
    %v9973 = vpop.permute.xlu0 %9972
    %9975 = vset.pattern.permute.xlu0 11
    %9976 = vperm.xlu0 %9975, %v8824
    %v9977 = vpop.permute.xlu0 %9976
    %9979 = vset.pattern.permute.xlu0 11
    %9980 = vperm.xlu0 %9979, %v8825
    %v9981 = vpop.permute.xlu0 %9980
    %9983 = vset.pattern.permute.xlu0 11
    %9984 = vperm.xlu0 %9983, %v8826
    %v9985 = vpop.permute.xlu0 %9984
    %9987 = vset.pattern.permute.xlu0 11
    %9988 = vperm.xlu0 %9987, %v8827
    %v9989 = vpop.permute.xlu0 %9988
    %9991 = vset.pattern.permute.xlu0 11
    %9992 = vperm.xlu0 %9991, %v8828
    %v9993 = vpop.permute.xlu0 %9992
    %9995 = vset.pattern.permute.xlu0 11
    %9996 = vperm.xlu0 %9995, %v8829
    %v9997 = vpop.permute.xlu0 %9996
    %9999 = vset.pattern.permute.xlu0 11
    %10000 = vperm.xlu0 %9999, %v8830
    %v10001 = vpop.permute.xlu0 %10000
    %v10003 = vmul.f32 %v9949, %v9933
    %v10004 = vmul.f32 %v9953, %v9934
    %v10005 = vmul.f32 %v9957, %v9935
    %v10006 = vmul.f32 %v9961, %v9936
    %v10007 = vmul.f32 %v9965, %v9937
    %v10008 = vmul.f32 %v9969, %v9938
    %v10009 = vmul.f32 %v9973, %v9939
    %v10010 = vmul.f32 %v9977, %v9940
    %v10011 = vmul.f32 %v9981, %v9941
    %v10012 = vmul.f32 %v9985, %v9942
    %v10013 = vmul.f32 %v9989, %v9943
    %v10014 = vmul.f32 %v9993, %v9944
    %v10015 = vmul.f32 %v9997, %v9945
    %v10016 = vmul.f32 %v10001, %v9946
    %v10017 = vadd.f32 %v9918, %v10003
    %v10018 = vadd.f32 %v9919, %v10004
    %v10019 = vadd.f32 %v9920, %v10005
    %v10020 = vadd.f32 %v9921, %v10006
    %v10021 = vadd.f32 %v9922, %v10007
    %v10022 = vadd.f32 %v9923, %v10008
    %v10023 = vadd.f32 %v9924, %v10009
    %v10024 = vadd.f32 %v9925, %v10010
    %v10025 = vadd.f32 %v9926, %v10011
    %v10026 = vadd.f32 %v9927, %v10012
    %v10027 = vadd.f32 %v9928, %v10013
    %v10028 = vadd.f32 %v9929, %v10014
    %v10029 = vadd.f32 %v9930, %v10015
    %v10030 = vadd.f32 %v9931, %v10016
    %s10031 = scalar_lea.vmem %s5, 1344
    %v10032 = vld [vmem:[%s10031] sm:$0xff]
    %v10033 = vld [vmem:[%s10031 + $0x8] sm:$0xff]
    %v10034 = vld [vmem:[%s10031 + $0x10] sm:$0xff]
    %v10035 = vld [vmem:[%s10031 + $0x18] sm:$0xff]
    %v10036 = vld [vmem:[%s10031 + $0x20] sm:$0xff]
    %v10037 = vld [vmem:[%s10031 + $0x28] sm:$0xff]
    %v10038 = vld [vmem:[%s10031 + $0x30] sm:$0xff]
    %v10039 = vld [vmem:[%s10031 + $0x38] sm:$0xff]
    %v10040 = vld [vmem:[%s10031 + $0x40] sm:$0xff]
    %v10041 = vld [vmem:[%s10031 + $0x48] sm:$0xff]
    %v10042 = vld [vmem:[%s10031 + $0x50] sm:$0xff]
    %v10043 = vld [vmem:[%s10031 + $0x58] sm:$0xff]
    %v10044 = vld [vmem:[%s10031 + $0x60] sm:$0xff]
    %v10045 = vld [vmem:[%s10031 + $0x68] sm:$0x1]
    %10046 = vset.pattern.permute.xlu0 12
    %10047 = vperm.xlu0 %10046, %v8817
    %v10048 = vpop.permute.xlu0 %10047
    %10050 = vset.pattern.permute.xlu0 12
    %10051 = vperm.xlu0 %10050, %v8818
    %v10052 = vpop.permute.xlu0 %10051
    %10054 = vset.pattern.permute.xlu0 12
    %10055 = vperm.xlu0 %10054, %v8819
    %v10056 = vpop.permute.xlu0 %10055
    %10058 = vset.pattern.permute.xlu0 12
    %10059 = vperm.xlu0 %10058, %v8820
    %v10060 = vpop.permute.xlu0 %10059
    %10062 = vset.pattern.permute.xlu0 12
    %10063 = vperm.xlu0 %10062, %v8821
    %v10064 = vpop.permute.xlu0 %10063
    %10066 = vset.pattern.permute.xlu0 12
    %10067 = vperm.xlu0 %10066, %v8822
    %v10068 = vpop.permute.xlu0 %10067
    %10070 = vset.pattern.permute.xlu0 12
    %10071 = vperm.xlu0 %10070, %v8823
    %v10072 = vpop.permute.xlu0 %10071
    %10074 = vset.pattern.permute.xlu0 12
    %10075 = vperm.xlu0 %10074, %v8824
    %v10076 = vpop.permute.xlu0 %10075
    %10078 = vset.pattern.permute.xlu0 12
    %10079 = vperm.xlu0 %10078, %v8825
    %v10080 = vpop.permute.xlu0 %10079
    %10082 = vset.pattern.permute.xlu0 12
    %10083 = vperm.xlu0 %10082, %v8826
    %v10084 = vpop.permute.xlu0 %10083
    %10086 = vset.pattern.permute.xlu0 12
    %10087 = vperm.xlu0 %10086, %v8827
    %v10088 = vpop.permute.xlu0 %10087
    %10090 = vset.pattern.permute.xlu0 12
    %10091 = vperm.xlu0 %10090, %v8828
    %v10092 = vpop.permute.xlu0 %10091
    %10094 = vset.pattern.permute.xlu0 12
    %10095 = vperm.xlu0 %10094, %v8829
    %v10096 = vpop.permute.xlu0 %10095
    %10098 = vset.pattern.permute.xlu0 12
    %10099 = vperm.xlu0 %10098, %v8830
    %v10100 = vpop.permute.xlu0 %10099
    %v10102 = vmul.f32 %v10048, %v10032
    %v10103 = vmul.f32 %v10052, %v10033
    %v10104 = vmul.f32 %v10056, %v10034
    %v10105 = vmul.f32 %v10060, %v10035
    %v10106 = vmul.f32 %v10064, %v10036
    %v10107 = vmul.f32 %v10068, %v10037
    %v10108 = vmul.f32 %v10072, %v10038
    %v10109 = vmul.f32 %v10076, %v10039
    %v10110 = vmul.f32 %v10080, %v10040
    %v10111 = vmul.f32 %v10084, %v10041
    %v10112 = vmul.f32 %v10088, %v10042
    %v10113 = vmul.f32 %v10092, %v10043
    %v10114 = vmul.f32 %v10096, %v10044
    %v10115 = vmul.f32 %v10100, %v10045
    %v10116 = vadd.f32 %v10017, %v10102
    %v10117 = vadd.f32 %v10018, %v10103
    %v10118 = vadd.f32 %v10019, %v10104
    %v10119 = vadd.f32 %v10020, %v10105
    %v10120 = vadd.f32 %v10021, %v10106
    %v10121 = vadd.f32 %v10022, %v10107
    %v10122 = vadd.f32 %v10023, %v10108
    %v10123 = vadd.f32 %v10024, %v10109
    %v10124 = vadd.f32 %v10025, %v10110
    %v10125 = vadd.f32 %v10026, %v10111
    %v10126 = vadd.f32 %v10027, %v10112
    %v10127 = vadd.f32 %v10028, %v10113
    %v10128 = vadd.f32 %v10029, %v10114
    %v10129 = vadd.f32 %v10030, %v10115
    %s10130 = scalar_lea.vmem %s5, 1456
    %v10131 = vld [vmem:[%s10130] sm:$0xff]
    %v10132 = vld [vmem:[%s10130 + $0x8] sm:$0xff]
    %v10133 = vld [vmem:[%s10130 + $0x10] sm:$0xff]
    %v10134 = vld [vmem:[%s10130 + $0x18] sm:$0xff]
    %v10135 = vld [vmem:[%s10130 + $0x20] sm:$0xff]
    %v10136 = vld [vmem:[%s10130 + $0x28] sm:$0xff]
    %v10137 = vld [vmem:[%s10130 + $0x30] sm:$0xff]
    %v10138 = vld [vmem:[%s10130 + $0x38] sm:$0xff]
    %v10139 = vld [vmem:[%s10130 + $0x40] sm:$0xff]
    %v10140 = vld [vmem:[%s10130 + $0x48] sm:$0xff]
    %v10141 = vld [vmem:[%s10130 + $0x50] sm:$0xff]
    %v10142 = vld [vmem:[%s10130 + $0x58] sm:$0xff]
    %v10143 = vld [vmem:[%s10130 + $0x60] sm:$0xff]
    %v10144 = vld [vmem:[%s10130 + $0x68] sm:$0x1]
    %10145 = vset.pattern.permute.xlu0 13
    %10146 = vperm.xlu0 %10145, %v8817
    %v10147 = vpop.permute.xlu0 %10146
    %10149 = vset.pattern.permute.xlu0 13
    %10150 = vperm.xlu0 %10149, %v8818
    %v10151 = vpop.permute.xlu0 %10150
    %10153 = vset.pattern.permute.xlu0 13
    %10154 = vperm.xlu0 %10153, %v8819
    %v10155 = vpop.permute.xlu0 %10154
    %10157 = vset.pattern.permute.xlu0 13
    %10158 = vperm.xlu0 %10157, %v8820
    %v10159 = vpop.permute.xlu0 %10158
    %10161 = vset.pattern.permute.xlu0 13
    %10162 = vperm.xlu0 %10161, %v8821
    %v10163 = vpop.permute.xlu0 %10162
    %10165 = vset.pattern.permute.xlu0 13
    %10166 = vperm.xlu0 %10165, %v8822
    %v10167 = vpop.permute.xlu0 %10166
    %10169 = vset.pattern.permute.xlu0 13
    %10170 = vperm.xlu0 %10169, %v8823
    %v10171 = vpop.permute.xlu0 %10170
    %10173 = vset.pattern.permute.xlu0 13
    %10174 = vperm.xlu0 %10173, %v8824
    %v10175 = vpop.permute.xlu0 %10174
    %10177 = vset.pattern.permute.xlu0 13
    %10178 = vperm.xlu0 %10177, %v8825
    %v10179 = vpop.permute.xlu0 %10178
    %10181 = vset.pattern.permute.xlu0 13
    %10182 = vperm.xlu0 %10181, %v8826
    %v10183 = vpop.permute.xlu0 %10182
    %10185 = vset.pattern.permute.xlu0 13
    %10186 = vperm.xlu0 %10185, %v8827
    %v10187 = vpop.permute.xlu0 %10186
    %10189 = vset.pattern.permute.xlu0 13
    %10190 = vperm.xlu0 %10189, %v8828
    %v10191 = vpop.permute.xlu0 %10190
    %10193 = vset.pattern.permute.xlu0 13
    %10194 = vperm.xlu0 %10193, %v8829
    %v10195 = vpop.permute.xlu0 %10194
    %10197 = vset.pattern.permute.xlu0 13
    %10198 = vperm.xlu0 %10197, %v8830
    %v10199 = vpop.permute.xlu0 %10198
    %v10201 = vmul.f32 %v10147, %v10131
    %v10202 = vmul.f32 %v10151, %v10132
    %v10203 = vmul.f32 %v10155, %v10133
    %v10204 = vmul.f32 %v10159, %v10134
    %v10205 = vmul.f32 %v10163, %v10135
    %v10206 = vmul.f32 %v10167, %v10136
    %v10207 = vmul.f32 %v10171, %v10137
    %v10208 = vmul.f32 %v10175, %v10138
    %v10209 = vmul.f32 %v10179, %v10139
    %v10210 = vmul.f32 %v10183, %v10140
    %v10211 = vmul.f32 %v10187, %v10141
    %v10212 = vmul.f32 %v10191, %v10142
    %v10213 = vmul.f32 %v10195, %v10143
    %v10214 = vmul.f32 %v10199, %v10144
    %v10215 = vadd.f32 %v10116, %v10201
    %v10216 = vadd.f32 %v10117, %v10202
    %v10217 = vadd.f32 %v10118, %v10203
    %v10218 = vadd.f32 %v10119, %v10204
    %v10219 = vadd.f32 %v10120, %v10205
    %v10220 = vadd.f32 %v10121, %v10206
    %v10221 = vadd.f32 %v10122, %v10207
    %v10222 = vadd.f32 %v10123, %v10208
    %v10223 = vadd.f32 %v10124, %v10209
    %v10224 = vadd.f32 %v10125, %v10210
    %v10225 = vadd.f32 %v10126, %v10211
    %v10226 = vadd.f32 %v10127, %v10212
    %v10227 = vadd.f32 %v10128, %v10213
    %v10228 = vadd.f32 %v10129, %v10214
    %s10229 = scalar_lea.vmem %s5, 1568
    %v10230 = vld [vmem:[%s10229] sm:$0xff]
    %v10231 = vld [vmem:[%s10229 + $0x8] sm:$0xff]
    %v10232 = vld [vmem:[%s10229 + $0x10] sm:$0xff]
    %v10233 = vld [vmem:[%s10229 + $0x18] sm:$0xff]
    %v10234 = vld [vmem:[%s10229 + $0x20] sm:$0xff]
    %v10235 = vld [vmem:[%s10229 + $0x28] sm:$0xff]
    %v10236 = vld [vmem:[%s10229 + $0x30] sm:$0xff]
    %v10237 = vld [vmem:[%s10229 + $0x38] sm:$0xff]
    %v10238 = vld [vmem:[%s10229 + $0x40] sm:$0xff]
    %v10239 = vld [vmem:[%s10229 + $0x48] sm:$0xff]
    %v10240 = vld [vmem:[%s10229 + $0x50] sm:$0xff]
    %v10241 = vld [vmem:[%s10229 + $0x58] sm:$0xff]
    %v10242 = vld [vmem:[%s10229 + $0x60] sm:$0xff]
    %v10243 = vld [vmem:[%s10229 + $0x68] sm:$0x1]
    %10244 = vset.pattern.permute.xlu0 14
    %10245 = vperm.xlu0 %10244, %v8817
    %v10246 = vpop.permute.xlu0 %10245
    %10248 = vset.pattern.permute.xlu0 14
    %10249 = vperm.xlu0 %10248, %v8818
    %v10250 = vpop.permute.xlu0 %10249
    %10252 = vset.pattern.permute.xlu0 14
    %10253 = vperm.xlu0 %10252, %v8819
    %v10254 = vpop.permute.xlu0 %10253
    %10256 = vset.pattern.permute.xlu0 14
    %10257 = vperm.xlu0 %10256, %v8820
    %v10258 = vpop.permute.xlu0 %10257
    %10260 = vset.pattern.permute.xlu0 14
    %10261 = vperm.xlu0 %10260, %v8821
    %v10262 = vpop.permute.xlu0 %10261
    %10264 = vset.pattern.permute.xlu0 14
    %10265 = vperm.xlu0 %10264, %v8822
    %v10266 = vpop.permute.xlu0 %10265
    %10268 = vset.pattern.permute.xlu0 14
    %10269 = vperm.xlu0 %10268, %v8823
    %v10270 = vpop.permute.xlu0 %10269
    %10272 = vset.pattern.permute.xlu0 14
    %10273 = vperm.xlu0 %10272, %v8824
    %v10274 = vpop.permute.xlu0 %10273
    %10276 = vset.pattern.permute.xlu0 14
    %10277 = vperm.xlu0 %10276, %v8825
    %v10278 = vpop.permute.xlu0 %10277
    %10280 = vset.pattern.permute.xlu0 14
    %10281 = vperm.xlu0 %10280, %v8826
    %v10282 = vpop.permute.xlu0 %10281
    %10284 = vset.pattern.permute.xlu0 14
    %10285 = vperm.xlu0 %10284, %v8827
    %v10286 = vpop.permute.xlu0 %10285
    %10288 = vset.pattern.permute.xlu0 14
    %10289 = vperm.xlu0 %10288, %v8828
    %v10290 = vpop.permute.xlu0 %10289
    %10292 = vset.pattern.permute.xlu0 14
    %10293 = vperm.xlu0 %10292, %v8829
    %v10294 = vpop.permute.xlu0 %10293
    %10296 = vset.pattern.permute.xlu0 14
    %10297 = vperm.xlu0 %10296, %v8830
    %v10298 = vpop.permute.xlu0 %10297
    %v10300 = vmul.f32 %v10246, %v10230
    %v10301 = vmul.f32 %v10250, %v10231
    %v10302 = vmul.f32 %v10254, %v10232
    %v10303 = vmul.f32 %v10258, %v10233
    %v10304 = vmul.f32 %v10262, %v10234
    %v10305 = vmul.f32 %v10266, %v10235
    %v10306 = vmul.f32 %v10270, %v10236
    %v10307 = vmul.f32 %v10274, %v10237
    %v10308 = vmul.f32 %v10278, %v10238
    %v10309 = vmul.f32 %v10282, %v10239
    %v10310 = vmul.f32 %v10286, %v10240
    %v10311 = vmul.f32 %v10290, %v10241
    %v10312 = vmul.f32 %v10294, %v10242
    %v10313 = vmul.f32 %v10298, %v10243
    %v10314 = vadd.f32 %v10215, %v10300
    %v10315 = vadd.f32 %v10216, %v10301
    %v10316 = vadd.f32 %v10217, %v10302
    %v10317 = vadd.f32 %v10218, %v10303
    %v10318 = vadd.f32 %v10219, %v10304
    %v10319 = vadd.f32 %v10220, %v10305
    %v10320 = vadd.f32 %v10221, %v10306
    %v10321 = vadd.f32 %v10222, %v10307
    %v10322 = vadd.f32 %v10223, %v10308
    %v10323 = vadd.f32 %v10224, %v10309
    %v10324 = vadd.f32 %v10225, %v10310
    %v10325 = vadd.f32 %v10226, %v10311
    %v10326 = vadd.f32 %v10227, %v10312
    %v10327 = vadd.f32 %v10228, %v10313
    %vm10328 = vcmask 859136
    %v10330 = vsel %vm10328, 1.0, 0
    %v10333 = vsel %vm151, %v10327, 0
    %10335 = vmatprep.subr.mxu0 0.0
    %10336 = vmatpush1.msra.mxu0 %v10314
    %10337 = vmatprep.subr.mxu0 0.0
    %10338 = vmatpush1.msra.mxu0 %v10315
    %10339 = vmatprep.subr.mxu0 0.0
    %10340 = vmatpush1.msra.mxu0 %v10316
    %10341 = vmatprep.subr.mxu0 0.0
    %10342 = vmatpush1.msra.mxu0 %v10317
    %10343 = vmatprep.subr.mxu0 0.0
    %10344 = vmatpush1.msra.mxu0 %v10318
    %10345 = vmatprep.subr.mxu0 0.0
    %10346 = vmatpush1.msra.mxu0 %v10319
    %10347 = vmatprep.subr.mxu0 0.0
    %10348 = vmatpush1.msra.mxu0 %v10320
    %10349 = vmatprep.subr.mxu0 0.0
    %10350 = vmatpush1.msra.mxu0 %v10321
    %10351 = vmatprep.subr.mxu0 0.0
    %10352 = vmatpush1.msra.mxu0 %v10322
    %10353 = vmatprep.subr.mxu0 0.0
    %10354 = vmatpush1.msra.mxu0 %v10323
    %10355 = vmatprep.subr.mxu0 0.0
    %10356 = vmatpush1.msra.mxu0 %v10324
    %10357 = vmatprep.subr.mxu0 0.0
    %10358 = vmatpush1.msra.mxu0 %v10325
    %10359 = vmatprep.subr.mxu0 0.0
    %10360 = vmatpush1.msra.mxu0 %v10326
    %10361 = vmatprep.subr.mxu0 0.0
    %10362 = vmatpush1.msra.mxu0 %v10333
    %10363 = vmatprep.subr.mxu0 0.0
    %10364 = vmatpush1.msra.mxu0 0.0
    %10365 = vmatprep.subr.mxu0 0.0
    %10366 = vmatpush1.msra.mxu0 0.0
    %10367 = vmatprep.subr.mxu0 0.0
    %10368 = vmatpush1.msra.mxu0 0.0
    %10369 = vmatprep.subr.mxu0 0.0
    %10370 = vmatpush1.msra.mxu0 0.0
    %10371 = vmatprep.subr.mxu0 0.0
    %10372 = vmatpush1.msra.mxu0 0.0
    %10373 = vmatprep.subr.mxu0 0.0
    %10374 = vmatpush1.msra.mxu0 0.0
    %10375 = vmatprep.subr.mxu0 0.0
    %10376 = vmatpush1.msra.mxu0 0.0
    %10377 = vmatprep.subr.mxu0 0.0
    %10378 = vmatpush1.msra.mxu0 0.0
    %10379 = vmatprep.subr.mxu0 0.0
    %10380 = vmatpush1.msra.mxu0 0.0
    %10381 = vmatprep.subr.mxu0 0.0
    %10382 = vmatpush1.msra.mxu0 0.0
    %10383 = vmatprep.subr.mxu0 0.0
    %10384 = vmatpush1.msra.mxu0 0.0
    %10385 = vmatprep.subr.mxu0 0.0
    %10386 = vmatpush1.msra.mxu0 0.0
    %10387 = vmatprep.subr.mxu0 0.0
    %10388 = vmatpush1.msra.mxu0 0.0
    %10389 = vmatprep.subr.mxu0 0.0
    %10390 = vmatpush1.msra.mxu0 0.0
    %10391 = vmatprep.subr.mxu0 0.0
    %10392 = vmatpush1.msra.mxu0 0.0
    %10393 = vmatprep.subr.mxu0 0.0
    %10394 = vmatpush1.msra.mxu0 0.0
    %10395 = vmatprep.subr.mxu0 0.0
    %10396 = vmatpush1.msra.mxu0 0.0
    %10397 = vmatprep.subr.mxu0 0.0
    %10398 = vmatpush1.msra.mxu0 0.0
    %10399 = vmatprep.mubr.f32.mxu0 0.0
    %10400 = vmatmul.mubr.f32.gmra.mrb[0].mxu0 %v10330
    %v10401 = vpop.f32.mrb[0].mxu0
    %v10402 = vadd.f32 0.0, %v10401
    %v10403 = vpop.f32.mrb[0].mxu0
    %10404 = vdwg.mxu0
    %10406 = vset.pattern.permute.xlu0 0
    %10407 = vperm.xlu0 %10406, %v8831
    %v10408 = vpop.permute.xlu0 %10407
    %10411 = vset.pattern.permute.xlu0 0
    %10412 = vperm.xlu0 %10411, %v8832
    %v10413 = vpop.permute.xlu0 %10412
    %10416 = vset.pattern.permute.xlu0 0
    %10417 = vperm.xlu0 %10416, %v8833
    %v10418 = vpop.permute.xlu0 %10417
    %10421 = vset.pattern.permute.xlu0 0
    %10422 = vperm.xlu0 %10421, %v8834
    %v10423 = vpop.permute.xlu0 %10422
    %10426 = vset.pattern.permute.xlu0 0
    %10427 = vperm.xlu0 %10426, %v8835
    %v10428 = vpop.permute.xlu0 %10427
    %10431 = vset.pattern.permute.xlu0 0
    %10432 = vperm.xlu0 %10431, %v8836
    %v10433 = vpop.permute.xlu0 %10432
    %10436 = vset.pattern.permute.xlu0 0
    %10437 = vperm.xlu0 %10436, %v8837
    %v10438 = vpop.permute.xlu0 %10437
    %10441 = vset.pattern.permute.xlu0 0
    %10442 = vperm.xlu0 %10441, %v8838
    %v10443 = vpop.permute.xlu0 %10442
    %10446 = vset.pattern.permute.xlu0 0
    %10447 = vperm.xlu0 %10446, %v8839
    %v10448 = vpop.permute.xlu0 %10447
    %10451 = vset.pattern.permute.xlu0 0
    %10452 = vperm.xlu0 %10451, %v8840
    %v10453 = vpop.permute.xlu0 %10452
    %10456 = vset.pattern.permute.xlu0 0
    %10457 = vperm.xlu0 %10456, %v8841
    %v10458 = vpop.permute.xlu0 %10457
    %10461 = vset.pattern.permute.xlu0 0
    %10462 = vperm.xlu0 %10461, %v8842
    %v10463 = vpop.permute.xlu0 %10462
    %10466 = vset.pattern.permute.xlu0 0
    %10467 = vperm.xlu0 %10466, %v8843
    %v10468 = vpop.permute.xlu0 %10467
    %v10484 = vrot.slane %v8844, 7
    %v10485 = vrot.slane %v8845, 7
    %v10486 = vsel %vm151, %v10484, %v10485
    %v10487 = vrot.slane %v8846, 7
    %v10488 = vsel %vm151, %v10485, %v10487
    %v10489 = vrot.slane %v8847, 7
    %v10490 = vsel %vm151, %v10487, %v10489
    %v10491 = vrot.slane %v8848, 7
    %v10492 = vsel %vm151, %v10489, %v10491
    %v10493 = vrot.slane %v8849, 7
    %v10494 = vsel %vm151, %v10491, %v10493
    %v10495 = vrot.slane %v8850, 7
    %v10496 = vsel %vm151, %v10493, %v10495
    %v10497 = vrot.slane %v8851, 7
    %v10498 = vsel %vm151, %v10495, %v10497
    %v10499 = vrot.slane %v8852, 7
    %v10500 = vsel %vm151, %v10497, %v10499
    %v10501 = vrot.slane %v8853, 7
    %v10502 = vsel %vm151, %v10499, %v10501
    %v10503 = vrot.slane %v8854, 7
    %v10504 = vsel %vm151, %v10501, %v10503
    %v10505 = vrot.slane %v8855, 7
    %v10506 = vsel %vm151, %v10503, %v10505
    %v10507 = vrot.slane %v8856, 7
    %v10508 = vsel %vm151, %v10505, %v10507
    %v10509 = vrot.slane %v8857, 7
    %v10510 = vsel %vm151, %v10507, %v10509
    %v10525 = vmul.f32 %v8926, %v10484
    %v10526 = vmul.f32 %v10408, %v10486
    %v10527 = vmul.f32 %v10413, %v10488
    %v10528 = vmul.f32 %v10418, %v10490
    %v10529 = vmul.f32 %v10423, %v10492
    %v10530 = vmul.f32 %v10428, %v10494
    %v10531 = vmul.f32 %v10433, %v10496
    %v10532 = vmul.f32 %v10438, %v10498
    %v10533 = vmul.f32 %v10443, %v10500
    %v10534 = vmul.f32 %v10448, %v10502
    %v10535 = vmul.f32 %v10453, %v10504
    %v10536 = vmul.f32 %v10458, %v10506
    %v10537 = vmul.f32 %v10463, %v10508
    %v10538 = vmul.f32 %v10468, %v10510
    %10539 = vset.pattern.permute.xlu0 1
    %10540 = vperm.xlu0 %10539, %v8831
    %v10541 = vpop.permute.xlu0 %10540
    %10543 = vset.pattern.permute.xlu0 1
    %10544 = vperm.xlu0 %10543, %v8832
    %v10545 = vpop.permute.xlu0 %10544
    %10547 = vset.pattern.permute.xlu0 1
    %10548 = vperm.xlu0 %10547, %v8833
    %v10549 = vpop.permute.xlu0 %10548
    %10551 = vset.pattern.permute.xlu0 1
    %10552 = vperm.xlu0 %10551, %v8834
    %v10553 = vpop.permute.xlu0 %10552
    %10555 = vset.pattern.permute.xlu0 1
    %10556 = vperm.xlu0 %10555, %v8835
    %v10557 = vpop.permute.xlu0 %10556
    %10559 = vset.pattern.permute.xlu0 1
    %10560 = vperm.xlu0 %10559, %v8836
    %v10561 = vpop.permute.xlu0 %10560
    %10563 = vset.pattern.permute.xlu0 1
    %10564 = vperm.xlu0 %10563, %v8837
    %v10565 = vpop.permute.xlu0 %10564
    %10567 = vset.pattern.permute.xlu0 1
    %10568 = vperm.xlu0 %10567, %v8838
    %v10569 = vpop.permute.xlu0 %10568
    %10571 = vset.pattern.permute.xlu0 1
    %10572 = vperm.xlu0 %10571, %v8839
    %v10573 = vpop.permute.xlu0 %10572
    %10575 = vset.pattern.permute.xlu0 1
    %10576 = vperm.xlu0 %10575, %v8840
    %v10577 = vpop.permute.xlu0 %10576
    %10579 = vset.pattern.permute.xlu0 1
    %10580 = vperm.xlu0 %10579, %v8841
    %v10581 = vpop.permute.xlu0 %10580
    %10583 = vset.pattern.permute.xlu0 1
    %10584 = vperm.xlu0 %10583, %v8842
    %v10585 = vpop.permute.xlu0 %10584
    %10587 = vset.pattern.permute.xlu0 1
    %10588 = vperm.xlu0 %10587, %v8843
    %v10589 = vpop.permute.xlu0 %10588
    %v10605 = vrot.slane %v8943, 7
    %v10606 = vrot.slane %v8944, 7
    %v10607 = vsel %vm151, %v10605, %v10606
    %v10608 = vrot.slane %v8945, 7
    %v10609 = vsel %vm151, %v10606, %v10608
    %v10610 = vrot.slane %v8946, 7
    %v10611 = vsel %vm151, %v10608, %v10610
    %v10612 = vrot.slane %v8947, 7
    %v10613 = vsel %vm151, %v10610, %v10612
    %v10614 = vrot.slane %v8948, 7
    %v10615 = vsel %vm151, %v10612, %v10614
    %v10616 = vrot.slane %v8949, 7
    %v10617 = vsel %vm151, %v10614, %v10616
    %v10618 = vrot.slane %v8950, 7
    %v10619 = vsel %vm151, %v10616, %v10618
    %v10620 = vrot.slane %v8951, 7
    %v10621 = vsel %vm151, %v10618, %v10620
    %v10622 = vrot.slane %v8952, 7
    %v10623 = vsel %vm151, %v10620, %v10622
    %v10624 = vrot.slane %v8953, 7
    %v10625 = vsel %vm151, %v10622, %v10624
    %v10626 = vrot.slane %v8954, 7
    %v10627 = vsel %vm151, %v10624, %v10626
    %v10628 = vrot.slane %v8955, 7
    %v10629 = vsel %vm151, %v10626, %v10628
    %v10630 = vrot.slane %v8956, 7
    %v10631 = vsel %vm151, %v10628, %v10630
    %v10646 = vmul.f32 %v9011, %v10605
    %v10647 = vmul.f32 %v10541, %v10607
    %v10648 = vmul.f32 %v10545, %v10609
    %v10649 = vmul.f32 %v10549, %v10611
    %v10650 = vmul.f32 %v10553, %v10613
    %v10651 = vmul.f32 %v10557, %v10615
    %v10652 = vmul.f32 %v10561, %v10617
    %v10653 = vmul.f32 %v10565, %v10619
    %v10654 = vmul.f32 %v10569, %v10621
    %v10655 = vmul.f32 %v10573, %v10623
    %v10656 = vmul.f32 %v10577, %v10625
    %v10657 = vmul.f32 %v10581, %v10627
    %v10658 = vmul.f32 %v10585, %v10629
    %v10659 = vmul.f32 %v10589, %v10631
    %v10660 = vadd.f32 %v10525, %v10646
    %v10661 = vadd.f32 %v10526, %v10647
    %v10662 = vadd.f32 %v10527, %v10648
    %v10663 = vadd.f32 %v10528, %v10649
    %v10664 = vadd.f32 %v10529, %v10650
    %v10665 = vadd.f32 %v10530, %v10651
    %v10666 = vadd.f32 %v10531, %v10652
    %v10667 = vadd.f32 %v10532, %v10653
    %v10668 = vadd.f32 %v10533, %v10654
    %v10669 = vadd.f32 %v10534, %v10655
    %v10670 = vadd.f32 %v10535, %v10656
    %v10671 = vadd.f32 %v10536, %v10657
    %v10672 = vadd.f32 %v10537, %v10658
    %v10673 = vadd.f32 %v10538, %v10659
    %10674 = vset.pattern.permute.xlu0 2
    %10675 = vperm.xlu0 %10674, %v8831
    %v10676 = vpop.permute.xlu0 %10675
    %10678 = vset.pattern.permute.xlu0 2
    %10679 = vperm.xlu0 %10678, %v8832
    %v10680 = vpop.permute.xlu0 %10679
    %10682 = vset.pattern.permute.xlu0 2
    %10683 = vperm.xlu0 %10682, %v8833
    %v10684 = vpop.permute.xlu0 %10683
    %10686 = vset.pattern.permute.xlu0 2
    %10687 = vperm.xlu0 %10686, %v8834
    %v10688 = vpop.permute.xlu0 %10687
    %10690 = vset.pattern.permute.xlu0 2
    %10691 = vperm.xlu0 %10690, %v8835
    %v10692 = vpop.permute.xlu0 %10691
    %10694 = vset.pattern.permute.xlu0 2
    %10695 = vperm.xlu0 %10694, %v8836
    %v10696 = vpop.permute.xlu0 %10695
    %10698 = vset.pattern.permute.xlu0 2
    %10699 = vperm.xlu0 %10698, %v8837
    %v10700 = vpop.permute.xlu0 %10699
    %10702 = vset.pattern.permute.xlu0 2
    %10703 = vperm.xlu0 %10702, %v8838
    %v10704 = vpop.permute.xlu0 %10703
    %10706 = vset.pattern.permute.xlu0 2
    %10707 = vperm.xlu0 %10706, %v8839
    %v10708 = vpop.permute.xlu0 %10707
    %10710 = vset.pattern.permute.xlu0 2
    %10711 = vperm.xlu0 %10710, %v8840
    %v10712 = vpop.permute.xlu0 %10711
    %10714 = vset.pattern.permute.xlu0 2
    %10715 = vperm.xlu0 %10714, %v8841
    %v10716 = vpop.permute.xlu0 %10715
    %10718 = vset.pattern.permute.xlu0 2
    %10719 = vperm.xlu0 %10718, %v8842
    %v10720 = vpop.permute.xlu0 %10719
    %10722 = vset.pattern.permute.xlu0 2
    %10723 = vperm.xlu0 %10722, %v8843
    %v10724 = vpop.permute.xlu0 %10723
    %v10740 = vrot.slane %v9042, 7
    %v10741 = vrot.slane %v9043, 7
    %v10742 = vsel %vm151, %v10740, %v10741
    %v10743 = vrot.slane %v9044, 7
    %v10744 = vsel %vm151, %v10741, %v10743
    %v10745 = vrot.slane %v9045, 7
    %v10746 = vsel %vm151, %v10743, %v10745
    %v10747 = vrot.slane %v9046, 7
    %v10748 = vsel %vm151, %v10745, %v10747
    %v10749 = vrot.slane %v9047, 7
    %v10750 = vsel %vm151, %v10747, %v10749
    %v10751 = vrot.slane %v9048, 7
    %v10752 = vsel %vm151, %v10749, %v10751
    %v10753 = vrot.slane %v9049, 7
    %v10754 = vsel %vm151, %v10751, %v10753
    %v10755 = vrot.slane %v9050, 7
    %v10756 = vsel %vm151, %v10753, %v10755
    %v10757 = vrot.slane %v9051, 7
    %v10758 = vsel %vm151, %v10755, %v10757
    %v10759 = vrot.slane %v9052, 7
    %v10760 = vsel %vm151, %v10757, %v10759
    %v10761 = vrot.slane %v9053, 7
    %v10762 = vsel %vm151, %v10759, %v10761
    %v10763 = vrot.slane %v9054, 7
    %v10764 = vsel %vm151, %v10761, %v10763
    %v10765 = vrot.slane %v9055, 7
    %v10766 = vsel %vm151, %v10763, %v10765
    %v10781 = vmul.f32 %v9110, %v10740
    %v10782 = vmul.f32 %v10676, %v10742
    %v10783 = vmul.f32 %v10680, %v10744
    %v10784 = vmul.f32 %v10684, %v10746
    %v10785 = vmul.f32 %v10688, %v10748
    %v10786 = vmul.f32 %v10692, %v10750
    %v10787 = vmul.f32 %v10696, %v10752
    %v10788 = vmul.f32 %v10700, %v10754
    %v10789 = vmul.f32 %v10704, %v10756
    %v10790 = vmul.f32 %v10708, %v10758
    %v10791 = vmul.f32 %v10712, %v10760
    %v10792 = vmul.f32 %v10716, %v10762
    %v10793 = vmul.f32 %v10720, %v10764
    %v10794 = vmul.f32 %v10724, %v10766
    %v10795 = vadd.f32 %v10660, %v10781
    %v10796 = vadd.f32 %v10661, %v10782
    %v10797 = vadd.f32 %v10662, %v10783
    %v10798 = vadd.f32 %v10663, %v10784
    %v10799 = vadd.f32 %v10664, %v10785
    %v10800 = vadd.f32 %v10665, %v10786
    %v10801 = vadd.f32 %v10666, %v10787
    %v10802 = vadd.f32 %v10667, %v10788
    %v10803 = vadd.f32 %v10668, %v10789
    %v10804 = vadd.f32 %v10669, %v10790
    %v10805 = vadd.f32 %v10670, %v10791
    %v10806 = vadd.f32 %v10671, %v10792
    %v10807 = vadd.f32 %v10672, %v10793
    %v10808 = vadd.f32 %v10673, %v10794
    %10809 = vset.pattern.permute.xlu0 3
    %10810 = vperm.xlu0 %10809, %v8831
    %v10811 = vpop.permute.xlu0 %10810
    %10813 = vset.pattern.permute.xlu0 3
    %10814 = vperm.xlu0 %10813, %v8832
    %v10815 = vpop.permute.xlu0 %10814
    %10817 = vset.pattern.permute.xlu0 3
    %10818 = vperm.xlu0 %10817, %v8833
    %v10819 = vpop.permute.xlu0 %10818
    %10821 = vset.pattern.permute.xlu0 3
    %10822 = vperm.xlu0 %10821, %v8834
    %v10823 = vpop.permute.xlu0 %10822
    %10825 = vset.pattern.permute.xlu0 3
    %10826 = vperm.xlu0 %10825, %v8835
    %v10827 = vpop.permute.xlu0 %10826
    %10829 = vset.pattern.permute.xlu0 3
    %10830 = vperm.xlu0 %10829, %v8836
    %v10831 = vpop.permute.xlu0 %10830
    %10833 = vset.pattern.permute.xlu0 3
    %10834 = vperm.xlu0 %10833, %v8837
    %v10835 = vpop.permute.xlu0 %10834
    %10837 = vset.pattern.permute.xlu0 3
    %10838 = vperm.xlu0 %10837, %v8838
    %v10839 = vpop.permute.xlu0 %10838
    %10841 = vset.pattern.permute.xlu0 3
    %10842 = vperm.xlu0 %10841, %v8839
    %v10843 = vpop.permute.xlu0 %10842
    %10845 = vset.pattern.permute.xlu0 3
    %10846 = vperm.xlu0 %10845, %v8840
    %v10847 = vpop.permute.xlu0 %10846
    %10849 = vset.pattern.permute.xlu0 3
    %10850 = vperm.xlu0 %10849, %v8841
    %v10851 = vpop.permute.xlu0 %10850
    %10853 = vset.pattern.permute.xlu0 3
    %10854 = vperm.xlu0 %10853, %v8842
    %v10855 = vpop.permute.xlu0 %10854
    %10857 = vset.pattern.permute.xlu0 3
    %10858 = vperm.xlu0 %10857, %v8843
    %v10859 = vpop.permute.xlu0 %10858
    %v10875 = vrot.slane %v9141, 7
    %v10876 = vrot.slane %v9142, 7
    %v10877 = vsel %vm151, %v10875, %v10876
    %v10878 = vrot.slane %v9143, 7
    %v10879 = vsel %vm151, %v10876, %v10878
    %v10880 = vrot.slane %v9144, 7
    %v10881 = vsel %vm151, %v10878, %v10880
    %v10882 = vrot.slane %v9145, 7
    %v10883 = vsel %vm151, %v10880, %v10882
    %v10884 = vrot.slane %v9146, 7
    %v10885 = vsel %vm151, %v10882, %v10884
    %v10886 = vrot.slane %v9147, 7
    %v10887 = vsel %vm151, %v10884, %v10886
    %v10888 = vrot.slane %v9148, 7
    %v10889 = vsel %vm151, %v10886, %v10888
    %v10890 = vrot.slane %v9149, 7
    %v10891 = vsel %vm151, %v10888, %v10890
    %v10892 = vrot.slane %v9150, 7
    %v10893 = vsel %vm151, %v10890, %v10892
    %v10894 = vrot.slane %v9151, 7
    %v10895 = vsel %vm151, %v10892, %v10894
    %v10896 = vrot.slane %v9152, 7
    %v10897 = vsel %vm151, %v10894, %v10896
    %v10898 = vrot.slane %v9153, 7
    %v10899 = vsel %vm151, %v10896, %v10898
    %v10900 = vrot.slane %v9154, 7
    %v10901 = vsel %vm151, %v10898, %v10900
    %v10916 = vmul.f32 %v9209, %v10875
    %v10917 = vmul.f32 %v10811, %v10877
    %v10918 = vmul.f32 %v10815, %v10879
    %v10919 = vmul.f32 %v10819, %v10881
    %v10920 = vmul.f32 %v10823, %v10883
    %v10921 = vmul.f32 %v10827, %v10885
    %v10922 = vmul.f32 %v10831, %v10887
    %v10923 = vmul.f32 %v10835, %v10889
    %v10924 = vmul.f32 %v10839, %v10891
    %v10925 = vmul.f32 %v10843, %v10893
    %v10926 = vmul.f32 %v10847, %v10895
    %v10927 = vmul.f32 %v10851, %v10897
    %v10928 = vmul.f32 %v10855, %v10899
    %v10929 = vmul.f32 %v10859, %v10901
    %v10930 = vadd.f32 %v10795, %v10916
    %v10931 = vadd.f32 %v10796, %v10917
    %v10932 = vadd.f32 %v10797, %v10918
    %v10933 = vadd.f32 %v10798, %v10919
    %v10934 = vadd.f32 %v10799, %v10920
    %v10935 = vadd.f32 %v10800, %v10921
    %v10936 = vadd.f32 %v10801, %v10922
    %v10937 = vadd.f32 %v10802, %v10923
    %v10938 = vadd.f32 %v10803, %v10924
    %v10939 = vadd.f32 %v10804, %v10925
    %v10940 = vadd.f32 %v10805, %v10926
    %v10941 = vadd.f32 %v10806, %v10927
    %v10942 = vadd.f32 %v10807, %v10928
    %v10943 = vadd.f32 %v10808, %v10929
    %10944 = vset.pattern.permute.xlu0 4
    %10945 = vperm.xlu0 %10944, %v8831
    %v10946 = vpop.permute.xlu0 %10945
    %10948 = vset.pattern.permute.xlu0 4
    %10949 = vperm.xlu0 %10948, %v8832
    %v10950 = vpop.permute.xlu0 %10949
    %10952 = vset.pattern.permute.xlu0 4
    %10953 = vperm.xlu0 %10952, %v8833
    %v10954 = vpop.permute.xlu0 %10953
    %10956 = vset.pattern.permute.xlu0 4
    %10957 = vperm.xlu0 %10956, %v8834
    %v10958 = vpop.permute.xlu0 %10957
    %10960 = vset.pattern.permute.xlu0 4
    %10961 = vperm.xlu0 %10960, %v8835
    %v10962 = vpop.permute.xlu0 %10961
    %10964 = vset.pattern.permute.xlu0 4
    %10965 = vperm.xlu0 %10964, %v8836
    %v10966 = vpop.permute.xlu0 %10965
    %10968 = vset.pattern.permute.xlu0 4
    %10969 = vperm.xlu0 %10968, %v8837
    %v10970 = vpop.permute.xlu0 %10969
    %10972 = vset.pattern.permute.xlu0 4
    %10973 = vperm.xlu0 %10972, %v8838
    %v10974 = vpop.permute.xlu0 %10973
    %10976 = vset.pattern.permute.xlu0 4
    %10977 = vperm.xlu0 %10976, %v8839
    %v10978 = vpop.permute.xlu0 %10977
    %10980 = vset.pattern.permute.xlu0 4
    %10981 = vperm.xlu0 %10980, %v8840
    %v10982 = vpop.permute.xlu0 %10981
    %10984 = vset.pattern.permute.xlu0 4
    %10985 = vperm.xlu0 %10984, %v8841
    %v10986 = vpop.permute.xlu0 %10985
    %10988 = vset.pattern.permute.xlu0 4
    %10989 = vperm.xlu0 %10988, %v8842
    %v10990 = vpop.permute.xlu0 %10989
    %10992 = vset.pattern.permute.xlu0 4
    %10993 = vperm.xlu0 %10992, %v8843
    %v10994 = vpop.permute.xlu0 %10993
    %v11010 = vrot.slane %v9240, 7
    %v11011 = vrot.slane %v9241, 7
    %v11012 = vsel %vm151, %v11010, %v11011
    %v11013 = vrot.slane %v9242, 7
    %v11014 = vsel %vm151, %v11011, %v11013
    %v11015 = vrot.slane %v9243, 7
    %v11016 = vsel %vm151, %v11013, %v11015
    %v11017 = vrot.slane %v9244, 7
    %v11018 = vsel %vm151, %v11015, %v11017
    %v11019 = vrot.slane %v9245, 7
    %v11020 = vsel %vm151, %v11017, %v11019
    %v11021 = vrot.slane %v9246, 7
    %v11022 = vsel %vm151, %v11019, %v11021
    %v11023 = vrot.slane %v9247, 7
    %v11024 = vsel %vm151, %v11021, %v11023
    %v11025 = vrot.slane %v9248, 7
    %v11026 = vsel %vm151, %v11023, %v11025
    %v11027 = vrot.slane %v9249, 7
    %v11028 = vsel %vm151, %v11025, %v11027
    %v11029 = vrot.slane %v9250, 7
    %v11030 = vsel %vm151, %v11027, %v11029
    %v11031 = vrot.slane %v9251, 7
    %v11032 = vsel %vm151, %v11029, %v11031
    %v11033 = vrot.slane %v9252, 7
    %v11034 = vsel %vm151, %v11031, %v11033
    %v11035 = vrot.slane %v9253, 7
    %v11036 = vsel %vm151, %v11033, %v11035
    %v11051 = vmul.f32 %v9308, %v11010
    %v11052 = vmul.f32 %v10946, %v11012
    %v11053 = vmul.f32 %v10950, %v11014
    %v11054 = vmul.f32 %v10954, %v11016
    %v11055 = vmul.f32 %v10958, %v11018
    %v11056 = vmul.f32 %v10962, %v11020
    %v11057 = vmul.f32 %v10966, %v11022
    %v11058 = vmul.f32 %v10970, %v11024
    %v11059 = vmul.f32 %v10974, %v11026
    %v11060 = vmul.f32 %v10978, %v11028
    %v11061 = vmul.f32 %v10982, %v11030
    %v11062 = vmul.f32 %v10986, %v11032
    %v11063 = vmul.f32 %v10990, %v11034
    %v11064 = vmul.f32 %v10994, %v11036
    %v11065 = vadd.f32 %v10930, %v11051
    %v11066 = vadd.f32 %v10931, %v11052
    %v11067 = vadd.f32 %v10932, %v11053
    %v11068 = vadd.f32 %v10933, %v11054
    %v11069 = vadd.f32 %v10934, %v11055
    %v11070 = vadd.f32 %v10935, %v11056
    %v11071 = vadd.f32 %v10936, %v11057
    %v11072 = vadd.f32 %v10937, %v11058
    %v11073 = vadd.f32 %v10938, %v11059
    %v11074 = vadd.f32 %v10939, %v11060
    %v11075 = vadd.f32 %v10940, %v11061
    %v11076 = vadd.f32 %v10941, %v11062
    %v11077 = vadd.f32 %v10942, %v11063
    %v11078 = vadd.f32 %v10943, %v11064
    %11079 = vset.pattern.permute.xlu0 5
    %11080 = vperm.xlu0 %11079, %v8831
    %v11081 = vpop.permute.xlu0 %11080
    %11083 = vset.pattern.permute.xlu0 5
    %11084 = vperm.xlu0 %11083, %v8832
    %v11085 = vpop.permute.xlu0 %11084
    %11087 = vset.pattern.permute.xlu0 5
    %11088 = vperm.xlu0 %11087, %v8833
    %v11089 = vpop.permute.xlu0 %11088
    %11091 = vset.pattern.permute.xlu0 5
    %11092 = vperm.xlu0 %11091, %v8834
    %v11093 = vpop.permute.xlu0 %11092
    %11095 = vset.pattern.permute.xlu0 5
    %11096 = vperm.xlu0 %11095, %v8835
    %v11097 = vpop.permute.xlu0 %11096
    %11099 = vset.pattern.permute.xlu0 5
    %11100 = vperm.xlu0 %11099, %v8836
    %v11101 = vpop.permute.xlu0 %11100
    %11103 = vset.pattern.permute.xlu0 5
    %11104 = vperm.xlu0 %11103, %v8837
    %v11105 = vpop.permute.xlu0 %11104
    %11107 = vset.pattern.permute.xlu0 5
    %11108 = vperm.xlu0 %11107, %v8838
    %v11109 = vpop.permute.xlu0 %11108
    %11111 = vset.pattern.permute.xlu0 5
    %11112 = vperm.xlu0 %11111, %v8839
    %v11113 = vpop.permute.xlu0 %11112
    %11115 = vset.pattern.permute.xlu0 5
    %11116 = vperm.xlu0 %11115, %v8840
    %v11117 = vpop.permute.xlu0 %11116
    %11119 = vset.pattern.permute.xlu0 5
    %11120 = vperm.xlu0 %11119, %v8841
    %v11121 = vpop.permute.xlu0 %11120
    %11123 = vset.pattern.permute.xlu0 5
    %11124 = vperm.xlu0 %11123, %v8842
    %v11125 = vpop.permute.xlu0 %11124
    %11127 = vset.pattern.permute.xlu0 5
    %11128 = vperm.xlu0 %11127, %v8843
    %v11129 = vpop.permute.xlu0 %11128
    %v11145 = vrot.slane %v9339, 7
    %v11146 = vrot.slane %v9340, 7
    %v11147 = vsel %vm151, %v11145, %v11146
    %v11148 = vrot.slane %v9341, 7
    %v11149 = vsel %vm151, %v11146, %v11148
    %v11150 = vrot.slane %v9342, 7
    %v11151 = vsel %vm151, %v11148, %v11150
    %v11152 = vrot.slane %v9343, 7
    %v11153 = vsel %vm151, %v11150, %v11152
    %v11154 = vrot.slane %v9344, 7
    %v11155 = vsel %vm151, %v11152, %v11154
    %v11156 = vrot.slane %v9345, 7
    %v11157 = vsel %vm151, %v11154, %v11156
    %v11158 = vrot.slane %v9346, 7
    %v11159 = vsel %vm151, %v11156, %v11158
    %v11160 = vrot.slane %v9347, 7
    %v11161 = vsel %vm151, %v11158, %v11160
    %v11162 = vrot.slane %v9348, 7
    %v11163 = vsel %vm151, %v11160, %v11162
    %v11164 = vrot.slane %v9349, 7
    %v11165 = vsel %vm151, %v11162, %v11164
    %v11166 = vrot.slane %v9350, 7
    %v11167 = vsel %vm151, %v11164, %v11166
    %v11168 = vrot.slane %v9351, 7
    %v11169 = vsel %vm151, %v11166, %v11168
    %v11170 = vrot.slane %v9352, 7
    %v11171 = vsel %vm151, %v11168, %v11170
    %v11186 = vmul.f32 %v9407, %v11145
    %v11187 = vmul.f32 %v11081, %v11147
    %v11188 = vmul.f32 %v11085, %v11149
    %v11189 = vmul.f32 %v11089, %v11151
    %v11190 = vmul.f32 %v11093, %v11153
    %v11191 = vmul.f32 %v11097, %v11155
    %v11192 = vmul.f32 %v11101, %v11157
    %v11193 = vmul.f32 %v11105, %v11159
    %v11194 = vmul.f32 %v11109, %v11161
    %v11195 = vmul.f32 %v11113, %v11163
    %v11196 = vmul.f32 %v11117, %v11165
    %v11197 = vmul.f32 %v11121, %v11167
    %v11198 = vmul.f32 %v11125, %v11169
    %v11199 = vmul.f32 %v11129, %v11171
    %v11200 = vadd.f32 %v11065, %v11186
    %v11201 = vadd.f32 %v11066, %v11187
    %v11202 = vadd.f32 %v11067, %v11188
    %v11203 = vadd.f32 %v11068, %v11189
    %v11204 = vadd.f32 %v11069, %v11190
    %v11205 = vadd.f32 %v11070, %v11191
    %v11206 = vadd.f32 %v11071, %v11192
    %v11207 = vadd.f32 %v11072, %v11193
    %v11208 = vadd.f32 %v11073, %v11194
    %v11209 = vadd.f32 %v11074, %v11195
    %v11210 = vadd.f32 %v11075, %v11196
    %v11211 = vadd.f32 %v11076, %v11197
    %v11212 = vadd.f32 %v11077, %v11198
    %v11213 = vadd.f32 %v11078, %v11199
    %11214 = vset.pattern.permute.xlu0 6
    %11215 = vperm.xlu0 %11214, %v8831
    %v11216 = vpop.permute.xlu0 %11215
    %11218 = vset.pattern.permute.xlu0 6
    %11219 = vperm.xlu0 %11218, %v8832
    %v11220 = vpop.permute.xlu0 %11219
    %11222 = vset.pattern.permute.xlu0 6
    %11223 = vperm.xlu0 %11222, %v8833
    %v11224 = vpop.permute.xlu0 %11223
    %11226 = vset.pattern.permute.xlu0 6
    %11227 = vperm.xlu0 %11226, %v8834
    %v11228 = vpop.permute.xlu0 %11227
    %11230 = vset.pattern.permute.xlu0 6
    %11231 = vperm.xlu0 %11230, %v8835
    %v11232 = vpop.permute.xlu0 %11231
    %11234 = vset.pattern.permute.xlu0 6
    %11235 = vperm.xlu0 %11234, %v8836
    %v11236 = vpop.permute.xlu0 %11235
    %11238 = vset.pattern.permute.xlu0 6
    %11239 = vperm.xlu0 %11238, %v8837
    %v11240 = vpop.permute.xlu0 %11239
    %11242 = vset.pattern.permute.xlu0 6
    %11243 = vperm.xlu0 %11242, %v8838
    %v11244 = vpop.permute.xlu0 %11243
    %11246 = vset.pattern.permute.xlu0 6
    %11247 = vperm.xlu0 %11246, %v8839
    %v11248 = vpop.permute.xlu0 %11247
    %11250 = vset.pattern.permute.xlu0 6
    %11251 = vperm.xlu0 %11250, %v8840
    %v11252 = vpop.permute.xlu0 %11251
    %11254 = vset.pattern.permute.xlu0 6
    %11255 = vperm.xlu0 %11254, %v8841
    %v11256 = vpop.permute.xlu0 %11255
    %11258 = vset.pattern.permute.xlu0 6
    %11259 = vperm.xlu0 %11258, %v8842
    %v11260 = vpop.permute.xlu0 %11259
    %11262 = vset.pattern.permute.xlu0 6
    %11263 = vperm.xlu0 %11262, %v8843
    %v11264 = vpop.permute.xlu0 %11263
    %v11280 = vrot.slane %v9438, 7
    %v11281 = vrot.slane %v9439, 7
    %v11282 = vsel %vm151, %v11280, %v11281
    %v11283 = vrot.slane %v9440, 7
    %v11284 = vsel %vm151, %v11281, %v11283
    %v11285 = vrot.slane %v9441, 7
    %v11286 = vsel %vm151, %v11283, %v11285
    %v11287 = vrot.slane %v9442, 7
    %v11288 = vsel %vm151, %v11285, %v11287
    %v11289 = vrot.slane %v9443, 7
    %v11290 = vsel %vm151, %v11287, %v11289
    %v11291 = vrot.slane %v9444, 7
    %v11292 = vsel %vm151, %v11289, %v11291
    %v11293 = vrot.slane %v9445, 7
    %v11294 = vsel %vm151, %v11291, %v11293
    %v11295 = vrot.slane %v9446, 7
    %v11296 = vsel %vm151, %v11293, %v11295
    %v11297 = vrot.slane %v9447, 7
    %v11298 = vsel %vm151, %v11295, %v11297
    %v11299 = vrot.slane %v9448, 7
    %v11300 = vsel %vm151, %v11297, %v11299
    %v11301 = vrot.slane %v9449, 7
    %v11302 = vsel %vm151, %v11299, %v11301
    %v11303 = vrot.slane %v9450, 7
    %v11304 = vsel %vm151, %v11301, %v11303
    %v11305 = vrot.slane %v9451, 7
    %v11306 = vsel %vm151, %v11303, %v11305
    %v11321 = vmul.f32 %v9506, %v11280
    %v11322 = vmul.f32 %v11216, %v11282
    %v11323 = vmul.f32 %v11220, %v11284
    %v11324 = vmul.f32 %v11224, %v11286
    %v11325 = vmul.f32 %v11228, %v11288
    %v11326 = vmul.f32 %v11232, %v11290
    %v11327 = vmul.f32 %v11236, %v11292
    %v11328 = vmul.f32 %v11240, %v11294
    %v11329 = vmul.f32 %v11244, %v11296
    %v11330 = vmul.f32 %v11248, %v11298
    %v11331 = vmul.f32 %v11252, %v11300
    %v11332 = vmul.f32 %v11256, %v11302
    %v11333 = vmul.f32 %v11260, %v11304
    %v11334 = vmul.f32 %v11264, %v11306
    %v11335 = vadd.f32 %v11200, %v11321
    %v11336 = vadd.f32 %v11201, %v11322
    %v11337 = vadd.f32 %v11202, %v11323
    %v11338 = vadd.f32 %v11203, %v11324
    %v11339 = vadd.f32 %v11204, %v11325
    %v11340 = vadd.f32 %v11205, %v11326
    %v11341 = vadd.f32 %v11206, %v11327
    %v11342 = vadd.f32 %v11207, %v11328
    %v11343 = vadd.f32 %v11208, %v11329
    %v11344 = vadd.f32 %v11209, %v11330
    %v11345 = vadd.f32 %v11210, %v11331
    %v11346 = vadd.f32 %v11211, %v11332
    %v11347 = vadd.f32 %v11212, %v11333
    %v11348 = vadd.f32 %v11213, %v11334
    %11349 = vset.pattern.permute.xlu0 7
    %11350 = vperm.xlu0 %11349, %v8831
    %v11351 = vpop.permute.xlu0 %11350
    %11353 = vset.pattern.permute.xlu0 7
    %11354 = vperm.xlu0 %11353, %v8832
    %v11355 = vpop.permute.xlu0 %11354
    %11357 = vset.pattern.permute.xlu0 7
    %11358 = vperm.xlu0 %11357, %v8833
    %v11359 = vpop.permute.xlu0 %11358
    %11361 = vset.pattern.permute.xlu0 7
    %11362 = vperm.xlu0 %11361, %v8834
    %v11363 = vpop.permute.xlu0 %11362
    %11365 = vset.pattern.permute.xlu0 7
    %11366 = vperm.xlu0 %11365, %v8835
    %v11367 = vpop.permute.xlu0 %11366
    %11369 = vset.pattern.permute.xlu0 7
    %11370 = vperm.xlu0 %11369, %v8836
    %v11371 = vpop.permute.xlu0 %11370
    %11373 = vset.pattern.permute.xlu0 7
    %11374 = vperm.xlu0 %11373, %v8837
    %v11375 = vpop.permute.xlu0 %11374
    %11377 = vset.pattern.permute.xlu0 7
    %11378 = vperm.xlu0 %11377, %v8838
    %v11379 = vpop.permute.xlu0 %11378
    %11381 = vset.pattern.permute.xlu0 7
    %11382 = vperm.xlu0 %11381, %v8839
    %v11383 = vpop.permute.xlu0 %11382
    %11385 = vset.pattern.permute.xlu0 7
    %11386 = vperm.xlu0 %11385, %v8840
    %v11387 = vpop.permute.xlu0 %11386
    %11389 = vset.pattern.permute.xlu0 7
    %11390 = vperm.xlu0 %11389, %v8841
    %v11391 = vpop.permute.xlu0 %11390
    %11393 = vset.pattern.permute.xlu0 7
    %11394 = vperm.xlu0 %11393, %v8842
    %v11395 = vpop.permute.xlu0 %11394
    %11397 = vset.pattern.permute.xlu0 7
    %11398 = vperm.xlu0 %11397, %v8843
    %v11399 = vpop.permute.xlu0 %11398
    %v11415 = vrot.slane %v9537, 7
    %v11416 = vrot.slane %v9538, 7
    %v11417 = vsel %vm151, %v11415, %v11416
    %v11418 = vrot.slane %v9539, 7
    %v11419 = vsel %vm151, %v11416, %v11418
    %v11420 = vrot.slane %v9540, 7
    %v11421 = vsel %vm151, %v11418, %v11420
    %v11422 = vrot.slane %v9541, 7
    %v11423 = vsel %vm151, %v11420, %v11422
    %v11424 = vrot.slane %v9542, 7
    %v11425 = vsel %vm151, %v11422, %v11424
    %v11426 = vrot.slane %v9543, 7
    %v11427 = vsel %vm151, %v11424, %v11426
    %v11428 = vrot.slane %v9544, 7
    %v11429 = vsel %vm151, %v11426, %v11428
    %v11430 = vrot.slane %v9545, 7
    %v11431 = vsel %vm151, %v11428, %v11430
    %v11432 = vrot.slane %v9546, 7
    %v11433 = vsel %vm151, %v11430, %v11432
    %v11434 = vrot.slane %v9547, 7
    %v11435 = vsel %vm151, %v11432, %v11434
    %v11436 = vrot.slane %v9548, 7
    %v11437 = vsel %vm151, %v11434, %v11436
    %v11438 = vrot.slane %v9549, 7
    %v11439 = vsel %vm151, %v11436, %v11438
    %v11440 = vrot.slane %v9550, 7
    %v11441 = vsel %vm151, %v11438, %v11440
    %v11456 = vmul.f32 %v9605, %v11415
    %v11457 = vmul.f32 %v11351, %v11417
    %v11458 = vmul.f32 %v11355, %v11419
    %v11459 = vmul.f32 %v11359, %v11421
    %v11460 = vmul.f32 %v11363, %v11423
    %v11461 = vmul.f32 %v11367, %v11425
    %v11462 = vmul.f32 %v11371, %v11427
    %v11463 = vmul.f32 %v11375, %v11429
    %v11464 = vmul.f32 %v11379, %v11431
    %v11465 = vmul.f32 %v11383, %v11433
    %v11466 = vmul.f32 %v11387, %v11435
    %v11467 = vmul.f32 %v11391, %v11437
    %v11468 = vmul.f32 %v11395, %v11439
    %v11469 = vmul.f32 %v11399, %v11441
    %v11470 = vadd.f32 %v11335, %v11456
    %v11471 = vadd.f32 %v11336, %v11457
    %v11472 = vadd.f32 %v11337, %v11458
    %v11473 = vadd.f32 %v11338, %v11459
    %v11474 = vadd.f32 %v11339, %v11460
    %v11475 = vadd.f32 %v11340, %v11461
    %v11476 = vadd.f32 %v11341, %v11462
    %v11477 = vadd.f32 %v11342, %v11463
    %v11478 = vadd.f32 %v11343, %v11464
    %v11479 = vadd.f32 %v11344, %v11465
    %v11480 = vadd.f32 %v11345, %v11466
    %v11481 = vadd.f32 %v11346, %v11467
    %v11482 = vadd.f32 %v11347, %v11468
    %v11483 = vadd.f32 %v11348, %v11469
    %11484 = vset.pattern.permute.xlu0 8
    %11485 = vperm.xlu0 %11484, %v8831
    %v11486 = vpop.permute.xlu0 %11485
    %11488 = vset.pattern.permute.xlu0 8
    %11489 = vperm.xlu0 %11488, %v8832
    %v11490 = vpop.permute.xlu0 %11489
    %11492 = vset.pattern.permute.xlu0 8
    %11493 = vperm.xlu0 %11492, %v8833
    %v11494 = vpop.permute.xlu0 %11493
    %11496 = vset.pattern.permute.xlu0 8
    %11497 = vperm.xlu0 %11496, %v8834
    %v11498 = vpop.permute.xlu0 %11497
    %11500 = vset.pattern.permute.xlu0 8
    %11501 = vperm.xlu0 %11500, %v8835
    %v11502 = vpop.permute.xlu0 %11501
    %11504 = vset.pattern.permute.xlu0 8
    %11505 = vperm.xlu0 %11504, %v8836
    %v11506 = vpop.permute.xlu0 %11505
    %11508 = vset.pattern.permute.xlu0 8
    %11509 = vperm.xlu0 %11508, %v8837
    %v11510 = vpop.permute.xlu0 %11509
    %11512 = vset.pattern.permute.xlu0 8
    %11513 = vperm.xlu0 %11512, %v8838
    %v11514 = vpop.permute.xlu0 %11513
    %11516 = vset.pattern.permute.xlu0 8
    %11517 = vperm.xlu0 %11516, %v8839
    %v11518 = vpop.permute.xlu0 %11517
    %11520 = vset.pattern.permute.xlu0 8
    %11521 = vperm.xlu0 %11520, %v8840
    %v11522 = vpop.permute.xlu0 %11521
    %11524 = vset.pattern.permute.xlu0 8
    %11525 = vperm.xlu0 %11524, %v8841
    %v11526 = vpop.permute.xlu0 %11525
    %11528 = vset.pattern.permute.xlu0 8
    %11529 = vperm.xlu0 %11528, %v8842
    %v11530 = vpop.permute.xlu0 %11529
    %11532 = vset.pattern.permute.xlu0 8
    %11533 = vperm.xlu0 %11532, %v8843
    %v11534 = vpop.permute.xlu0 %11533
    %v11550 = vrot.slane %v9636, 7
    %v11551 = vrot.slane %v9637, 7
    %v11552 = vsel %vm151, %v11550, %v11551
    %v11553 = vrot.slane %v9638, 7
    %v11554 = vsel %vm151, %v11551, %v11553
    %v11555 = vrot.slane %v9639, 7
    %v11556 = vsel %vm151, %v11553, %v11555
    %v11557 = vrot.slane %v9640, 7
    %v11558 = vsel %vm151, %v11555, %v11557
    %v11559 = vrot.slane %v9641, 7
    %v11560 = vsel %vm151, %v11557, %v11559
    %v11561 = vrot.slane %v9642, 7
    %v11562 = vsel %vm151, %v11559, %v11561
    %v11563 = vrot.slane %v9643, 7
    %v11564 = vsel %vm151, %v11561, %v11563
    %v11565 = vrot.slane %v9644, 7
    %v11566 = vsel %vm151, %v11563, %v11565
    %v11567 = vrot.slane %v9645, 7
    %v11568 = vsel %vm151, %v11565, %v11567
    %v11569 = vrot.slane %v9646, 7
    %v11570 = vsel %vm151, %v11567, %v11569
    %v11571 = vrot.slane %v9647, 7
    %v11572 = vsel %vm151, %v11569, %v11571
    %v11573 = vrot.slane %v9648, 7
    %v11574 = vsel %vm151, %v11571, %v11573
    %v11575 = vrot.slane %v9649, 7
    %v11576 = vsel %vm151, %v11573, %v11575
    %v11591 = vmul.f32 %v9704, %v11550
    %v11592 = vmul.f32 %v11486, %v11552
    %v11593 = vmul.f32 %v11490, %v11554
    %v11594 = vmul.f32 %v11494, %v11556
    %v11595 = vmul.f32 %v11498, %v11558
    %v11596 = vmul.f32 %v11502, %v11560
    %v11597 = vmul.f32 %v11506, %v11562
    %v11598 = vmul.f32 %v11510, %v11564
    %v11599 = vmul.f32 %v11514, %v11566
    %v11600 = vmul.f32 %v11518, %v11568
    %v11601 = vmul.f32 %v11522, %v11570
    %v11602 = vmul.f32 %v11526, %v11572
    %v11603 = vmul.f32 %v11530, %v11574
    %v11604 = vmul.f32 %v11534, %v11576
    %v11605 = vadd.f32 %v11470, %v11591
    %v11606 = vadd.f32 %v11471, %v11592
    %v11607 = vadd.f32 %v11472, %v11593
    %v11608 = vadd.f32 %v11473, %v11594
    %v11609 = vadd.f32 %v11474, %v11595
    %v11610 = vadd.f32 %v11475, %v11596
    %v11611 = vadd.f32 %v11476, %v11597
    %v11612 = vadd.f32 %v11477, %v11598
    %v11613 = vadd.f32 %v11478, %v11599
    %v11614 = vadd.f32 %v11479, %v11600
    %v11615 = vadd.f32 %v11480, %v11601
    %v11616 = vadd.f32 %v11481, %v11602
    %v11617 = vadd.f32 %v11482, %v11603
    %v11618 = vadd.f32 %v11483, %v11604
    %11619 = vset.pattern.permute.xlu0 9
    %11620 = vperm.xlu0 %11619, %v8831
    %v11621 = vpop.permute.xlu0 %11620
    %11623 = vset.pattern.permute.xlu0 9
    %11624 = vperm.xlu0 %11623, %v8832
    %v11625 = vpop.permute.xlu0 %11624
    %11627 = vset.pattern.permute.xlu0 9
    %11628 = vperm.xlu0 %11627, %v8833
    %v11629 = vpop.permute.xlu0 %11628
    %11631 = vset.pattern.permute.xlu0 9
    %11632 = vperm.xlu0 %11631, %v8834
    %v11633 = vpop.permute.xlu0 %11632
    %11635 = vset.pattern.permute.xlu0 9
    %11636 = vperm.xlu0 %11635, %v8835
    %v11637 = vpop.permute.xlu0 %11636
    %11639 = vset.pattern.permute.xlu0 9
    %11640 = vperm.xlu0 %11639, %v8836
    %v11641 = vpop.permute.xlu0 %11640
    %11643 = vset.pattern.permute.xlu0 9
    %11644 = vperm.xlu0 %11643, %v8837
    %v11645 = vpop.permute.xlu0 %11644
    %11647 = vset.pattern.permute.xlu0 9
    %11648 = vperm.xlu0 %11647, %v8838
    %v11649 = vpop.permute.xlu0 %11648
    %11651 = vset.pattern.permute.xlu0 9
    %11652 = vperm.xlu0 %11651, %v8839
    %v11653 = vpop.permute.xlu0 %11652
    %11655 = vset.pattern.permute.xlu0 9
    %11656 = vperm.xlu0 %11655, %v8840
    %v11657 = vpop.permute.xlu0 %11656
    %11659 = vset.pattern.permute.xlu0 9
    %11660 = vperm.xlu0 %11659, %v8841
    %v11661 = vpop.permute.xlu0 %11660
    %11663 = vset.pattern.permute.xlu0 9
    %11664 = vperm.xlu0 %11663, %v8842
    %v11665 = vpop.permute.xlu0 %11664
    %11667 = vset.pattern.permute.xlu0 9
    %11668 = vperm.xlu0 %11667, %v8843
    %v11669 = vpop.permute.xlu0 %11668
    %v11685 = vrot.slane %v9735, 7
    %v11686 = vrot.slane %v9736, 7
    %v11687 = vsel %vm151, %v11685, %v11686
    %v11688 = vrot.slane %v9737, 7
    %v11689 = vsel %vm151, %v11686, %v11688
    %v11690 = vrot.slane %v9738, 7
    %v11691 = vsel %vm151, %v11688, %v11690
    %v11692 = vrot.slane %v9739, 7
    %v11693 = vsel %vm151, %v11690, %v11692
    %v11694 = vrot.slane %v9740, 7
    %v11695 = vsel %vm151, %v11692, %v11694
    %v11696 = vrot.slane %v9741, 7
    %v11697 = vsel %vm151, %v11694, %v11696
    %v11698 = vrot.slane %v9742, 7
    %v11699 = vsel %vm151, %v11696, %v11698
    %v11700 = vrot.slane %v9743, 7
    %v11701 = vsel %vm151, %v11698, %v11700
    %v11702 = vrot.slane %v9744, 7
    %v11703 = vsel %vm151, %v11700, %v11702
    %v11704 = vrot.slane %v9745, 7
    %v11705 = vsel %vm151, %v11702, %v11704
    %v11706 = vrot.slane %v9746, 7
    %v11707 = vsel %vm151, %v11704, %v11706
    %v11708 = vrot.slane %v9747, 7
    %v11709 = vsel %vm151, %v11706, %v11708
    %v11710 = vrot.slane %v9748, 7
    %v11711 = vsel %vm151, %v11708, %v11710
    %v11726 = vmul.f32 %v9803, %v11685
    %v11727 = vmul.f32 %v11621, %v11687
    %v11728 = vmul.f32 %v11625, %v11689
    %v11729 = vmul.f32 %v11629, %v11691
    %v11730 = vmul.f32 %v11633, %v11693
    %v11731 = vmul.f32 %v11637, %v11695
    %v11732 = vmul.f32 %v11641, %v11697
    %v11733 = vmul.f32 %v11645, %v11699
    %v11734 = vmul.f32 %v11649, %v11701
    %v11735 = vmul.f32 %v11653, %v11703
    %v11736 = vmul.f32 %v11657, %v11705
    %v11737 = vmul.f32 %v11661, %v11707
    %v11738 = vmul.f32 %v11665, %v11709
    %v11739 = vmul.f32 %v11669, %v11711
    %v11740 = vadd.f32 %v11605, %v11726
    %v11741 = vadd.f32 %v11606, %v11727
    %v11742 = vadd.f32 %v11607, %v11728
    %v11743 = vadd.f32 %v11608, %v11729
    %v11744 = vadd.f32 %v11609, %v11730
    %v11745 = vadd.f32 %v11610, %v11731
    %v11746 = vadd.f32 %v11611, %v11732
    %v11747 = vadd.f32 %v11612, %v11733
    %v11748 = vadd.f32 %v11613, %v11734
    %v11749 = vadd.f32 %v11614, %v11735
    %v11750 = vadd.f32 %v11615, %v11736
    %v11751 = vadd.f32 %v11616, %v11737
    %v11752 = vadd.f32 %v11617, %v11738
    %v11753 = vadd.f32 %v11618, %v11739
    %11754 = vset.pattern.permute.xlu0 10
    %11755 = vperm.xlu0 %11754, %v8831
    %v11756 = vpop.permute.xlu0 %11755
    %11758 = vset.pattern.permute.xlu0 10
    %11759 = vperm.xlu0 %11758, %v8832
    %v11760 = vpop.permute.xlu0 %11759
    %11762 = vset.pattern.permute.xlu0 10
    %11763 = vperm.xlu0 %11762, %v8833
    %v11764 = vpop.permute.xlu0 %11763
    %11766 = vset.pattern.permute.xlu0 10
    %11767 = vperm.xlu0 %11766, %v8834
    %v11768 = vpop.permute.xlu0 %11767
    %11770 = vset.pattern.permute.xlu0 10
    %11771 = vperm.xlu0 %11770, %v8835
    %v11772 = vpop.permute.xlu0 %11771
    %11774 = vset.pattern.permute.xlu0 10
    %11775 = vperm.xlu0 %11774, %v8836
    %v11776 = vpop.permute.xlu0 %11775
    %11778 = vset.pattern.permute.xlu0 10
    %11779 = vperm.xlu0 %11778, %v8837
    %v11780 = vpop.permute.xlu0 %11779
    %11782 = vset.pattern.permute.xlu0 10
    %11783 = vperm.xlu0 %11782, %v8838
    %v11784 = vpop.permute.xlu0 %11783
    %11786 = vset.pattern.permute.xlu0 10
    %11787 = vperm.xlu0 %11786, %v8839
    %v11788 = vpop.permute.xlu0 %11787
    %11790 = vset.pattern.permute.xlu0 10
    %11791 = vperm.xlu0 %11790, %v8840
    %v11792 = vpop.permute.xlu0 %11791
    %11794 = vset.pattern.permute.xlu0 10
    %11795 = vperm.xlu0 %11794, %v8841
    %v11796 = vpop.permute.xlu0 %11795
    %11798 = vset.pattern.permute.xlu0 10
    %11799 = vperm.xlu0 %11798, %v8842
    %v11800 = vpop.permute.xlu0 %11799
    %11802 = vset.pattern.permute.xlu0 10
    %11803 = vperm.xlu0 %11802, %v8843
    %v11804 = vpop.permute.xlu0 %11803
    %v11820 = vrot.slane %v9834, 7
    %v11821 = vrot.slane %v9835, 7
    %v11822 = vsel %vm151, %v11820, %v11821
    %v11823 = vrot.slane %v9836, 7
    %v11824 = vsel %vm151, %v11821, %v11823
    %v11825 = vrot.slane %v9837, 7
    %v11826 = vsel %vm151, %v11823, %v11825
    %v11827 = vrot.slane %v9838, 7
    %v11828 = vsel %vm151, %v11825, %v11827
    %v11829 = vrot.slane %v9839, 7
    %v11830 = vsel %vm151, %v11827, %v11829
    %v11831 = vrot.slane %v9840, 7
    %v11832 = vsel %vm151, %v11829, %v11831
    %v11833 = vrot.slane %v9841, 7
    %v11834 = vsel %vm151, %v11831, %v11833
    %v11835 = vrot.slane %v9842, 7
    %v11836 = vsel %vm151, %v11833, %v11835
    %v11837 = vrot.slane %v9843, 7
    %v11838 = vsel %vm151, %v11835, %v11837
    %v11839 = vrot.slane %v9844, 7
    %v11840 = vsel %vm151, %v11837, %v11839
    %v11841 = vrot.slane %v9845, 7
    %v11842 = vsel %vm151, %v11839, %v11841
    %v11843 = vrot.slane %v9846, 7
    %v11844 = vsel %vm151, %v11841, %v11843
    %v11845 = vrot.slane %v9847, 7
    %v11846 = vsel %vm151, %v11843, %v11845
    %v11861 = vmul.f32 %v9902, %v11820
    %v11862 = vmul.f32 %v11756, %v11822
    %v11863 = vmul.f32 %v11760, %v11824
    %v11864 = vmul.f32 %v11764, %v11826
    %v11865 = vmul.f32 %v11768, %v11828
    %v11866 = vmul.f32 %v11772, %v11830
    %v11867 = vmul.f32 %v11776, %v11832
    %v11868 = vmul.f32 %v11780, %v11834
    %v11869 = vmul.f32 %v11784, %v11836
    %v11870 = vmul.f32 %v11788, %v11838
    %v11871 = vmul.f32 %v11792, %v11840
    %v11872 = vmul.f32 %v11796, %v11842
    %v11873 = vmul.f32 %v11800, %v11844
    %v11874 = vmul.f32 %v11804, %v11846
    %v11875 = vadd.f32 %v11740, %v11861
    %v11876 = vadd.f32 %v11741, %v11862
    %v11877 = vadd.f32 %v11742, %v11863
    %v11878 = vadd.f32 %v11743, %v11864
    %v11879 = vadd.f32 %v11744, %v11865
    %v11880 = vadd.f32 %v11745, %v11866
    %v11881 = vadd.f32 %v11746, %v11867
    %v11882 = vadd.f32 %v11747, %v11868
    %v11883 = vadd.f32 %v11748, %v11869
    %v11884 = vadd.f32 %v11749, %v11870
    %v11885 = vadd.f32 %v11750, %v11871
    %v11886 = vadd.f32 %v11751, %v11872
    %v11887 = vadd.f32 %v11752, %v11873
    %v11888 = vadd.f32 %v11753, %v11874
    %11889 = vset.pattern.permute.xlu0 11
    %11890 = vperm.xlu0 %11889, %v8831
    %v11891 = vpop.permute.xlu0 %11890
    %11893 = vset.pattern.permute.xlu0 11
    %11894 = vperm.xlu0 %11893, %v8832
    %v11895 = vpop.permute.xlu0 %11894
    %11897 = vset.pattern.permute.xlu0 11
    %11898 = vperm.xlu0 %11897, %v8833
    %v11899 = vpop.permute.xlu0 %11898
    %11901 = vset.pattern.permute.xlu0 11
    %11902 = vperm.xlu0 %11901, %v8834
    %v11903 = vpop.permute.xlu0 %11902
    %11905 = vset.pattern.permute.xlu0 11
    %11906 = vperm.xlu0 %11905, %v8835
    %v11907 = vpop.permute.xlu0 %11906
    %11909 = vset.pattern.permute.xlu0 11
    %11910 = vperm.xlu0 %11909, %v8836
    %v11911 = vpop.permute.xlu0 %11910
    %11913 = vset.pattern.permute.xlu0 11
    %11914 = vperm.xlu0 %11913, %v8837
    %v11915 = vpop.permute.xlu0 %11914
    %11917 = vset.pattern.permute.xlu0 11
    %11918 = vperm.xlu0 %11917, %v8838
    %v11919 = vpop.permute.xlu0 %11918
    %11921 = vset.pattern.permute.xlu0 11
    %11922 = vperm.xlu0 %11921, %v8839
    %v11923 = vpop.permute.xlu0 %11922
    %11925 = vset.pattern.permute.xlu0 11
    %11926 = vperm.xlu0 %11925, %v8840
    %v11927 = vpop.permute.xlu0 %11926
    %11929 = vset.pattern.permute.xlu0 11
    %11930 = vperm.xlu0 %11929, %v8841
    %v11931 = vpop.permute.xlu0 %11930
    %11933 = vset.pattern.permute.xlu0 11
    %11934 = vperm.xlu0 %11933, %v8842
    %v11935 = vpop.permute.xlu0 %11934
    %11937 = vset.pattern.permute.xlu0 11
    %11938 = vperm.xlu0 %11937, %v8843
    %v11939 = vpop.permute.xlu0 %11938
    %v11955 = vrot.slane %v9933, 7
    %v11956 = vrot.slane %v9934, 7
    %v11957 = vsel %vm151, %v11955, %v11956
    %v11958 = vrot.slane %v9935, 7
    %v11959 = vsel %vm151, %v11956, %v11958
    %v11960 = vrot.slane %v9936, 7
    %v11961 = vsel %vm151, %v11958, %v11960
    %v11962 = vrot.slane %v9937, 7
    %v11963 = vsel %vm151, %v11960, %v11962
    %v11964 = vrot.slane %v9938, 7
    %v11965 = vsel %vm151, %v11962, %v11964
    %v11966 = vrot.slane %v9939, 7
    %v11967 = vsel %vm151, %v11964, %v11966
    %v11968 = vrot.slane %v9940, 7
    %v11969 = vsel %vm151, %v11966, %v11968
    %v11970 = vrot.slane %v9941, 7
    %v11971 = vsel %vm151, %v11968, %v11970
    %v11972 = vrot.slane %v9942, 7
    %v11973 = vsel %vm151, %v11970, %v11972
    %v11974 = vrot.slane %v9943, 7
    %v11975 = vsel %vm151, %v11972, %v11974
    %v11976 = vrot.slane %v9944, 7
    %v11977 = vsel %vm151, %v11974, %v11976
    %v11978 = vrot.slane %v9945, 7
    %v11979 = vsel %vm151, %v11976, %v11978
    %v11980 = vrot.slane %v9946, 7
    %v11981 = vsel %vm151, %v11978, %v11980
    %v11996 = vmul.f32 %v10001, %v11955
    %v11997 = vmul.f32 %v11891, %v11957
    %v11998 = vmul.f32 %v11895, %v11959
    %v11999 = vmul.f32 %v11899, %v11961
    %v12000 = vmul.f32 %v11903, %v11963
    %v12001 = vmul.f32 %v11907, %v11965
    %v12002 = vmul.f32 %v11911, %v11967
    %v12003 = vmul.f32 %v11915, %v11969
    %v12004 = vmul.f32 %v11919, %v11971
    %v12005 = vmul.f32 %v11923, %v11973
    %v12006 = vmul.f32 %v11927, %v11975
    %v12007 = vmul.f32 %v11931, %v11977
    %v12008 = vmul.f32 %v11935, %v11979
    %v12009 = vmul.f32 %v11939, %v11981
    %v12010 = vadd.f32 %v11875, %v11996
    %v12011 = vadd.f32 %v11876, %v11997
    %v12012 = vadd.f32 %v11877, %v11998
    %v12013 = vadd.f32 %v11878, %v11999
    %v12014 = vadd.f32 %v11879, %v12000
    %v12015 = vadd.f32 %v11880, %v12001
    %v12016 = vadd.f32 %v11881, %v12002
    %v12017 = vadd.f32 %v11882, %v12003
    %v12018 = vadd.f32 %v11883, %v12004
    %v12019 = vadd.f32 %v11884, %v12005
    %v12020 = vadd.f32 %v11885, %v12006
    %v12021 = vadd.f32 %v11886, %v12007
    %v12022 = vadd.f32 %v11887, %v12008
    %v12023 = vadd.f32 %v11888, %v12009
    %12024 = vset.pattern.permute.xlu0 12
    %12025 = vperm.xlu0 %12024, %v8831
    %v12026 = vpop.permute.xlu0 %12025
    %12028 = vset.pattern.permute.xlu0 12
    %12029 = vperm.xlu0 %12028, %v8832
    %v12030 = vpop.permute.xlu0 %12029
    %12032 = vset.pattern.permute.xlu0 12
    %12033 = vperm.xlu0 %12032, %v8833
    %v12034 = vpop.permute.xlu0 %12033
    %12036 = vset.pattern.permute.xlu0 12
    %12037 = vperm.xlu0 %12036, %v8834
    %v12038 = vpop.permute.xlu0 %12037
    %12040 = vset.pattern.permute.xlu0 12
    %12041 = vperm.xlu0 %12040, %v8835
    %v12042 = vpop.permute.xlu0 %12041
    %12044 = vset.pattern.permute.xlu0 12
    %12045 = vperm.xlu0 %12044, %v8836
    %v12046 = vpop.permute.xlu0 %12045
    %12048 = vset.pattern.permute.xlu0 12
    %12049 = vperm.xlu0 %12048, %v8837
    %v12050 = vpop.permute.xlu0 %12049
    %12052 = vset.pattern.permute.xlu0 12
    %12053 = vperm.xlu0 %12052, %v8838
    %v12054 = vpop.permute.xlu0 %12053
    %12056 = vset.pattern.permute.xlu0 12
    %12057 = vperm.xlu0 %12056, %v8839
    %v12058 = vpop.permute.xlu0 %12057
    %12060 = vset.pattern.permute.xlu0 12
    %12061 = vperm.xlu0 %12060, %v8840
    %v12062 = vpop.permute.xlu0 %12061
    %12064 = vset.pattern.permute.xlu0 12
    %12065 = vperm.xlu0 %12064, %v8841
    %v12066 = vpop.permute.xlu0 %12065
    %12068 = vset.pattern.permute.xlu0 12
    %12069 = vperm.xlu0 %12068, %v8842
    %v12070 = vpop.permute.xlu0 %12069
    %12072 = vset.pattern.permute.xlu0 12
    %12073 = vperm.xlu0 %12072, %v8843
    %v12074 = vpop.permute.xlu0 %12073
    %v12090 = vrot.slane %v10032, 7
    %v12091 = vrot.slane %v10033, 7
    %v12092 = vsel %vm151, %v12090, %v12091
    %v12093 = vrot.slane %v10034, 7
    %v12094 = vsel %vm151, %v12091, %v12093
    %v12095 = vrot.slane %v10035, 7
    %v12096 = vsel %vm151, %v12093, %v12095
    %v12097 = vrot.slane %v10036, 7
    %v12098 = vsel %vm151, %v12095, %v12097
    %v12099 = vrot.slane %v10037, 7
    %v12100 = vsel %vm151, %v12097, %v12099
    %v12101 = vrot.slane %v10038, 7
    %v12102 = vsel %vm151, %v12099, %v12101
    %v12103 = vrot.slane %v10039, 7
    %v12104 = vsel %vm151, %v12101, %v12103
    %v12105 = vrot.slane %v10040, 7
    %v12106 = vsel %vm151, %v12103, %v12105
    %v12107 = vrot.slane %v10041, 7
    %v12108 = vsel %vm151, %v12105, %v12107
    %v12109 = vrot.slane %v10042, 7
    %v12110 = vsel %vm151, %v12107, %v12109
    %v12111 = vrot.slane %v10043, 7
    %v12112 = vsel %vm151, %v12109, %v12111
    %v12113 = vrot.slane %v10044, 7
    %v12114 = vsel %vm151, %v12111, %v12113
    %v12115 = vrot.slane %v10045, 7
    %v12116 = vsel %vm151, %v12113, %v12115
    %v12131 = vmul.f32 %v10100, %v12090
    %v12132 = vmul.f32 %v12026, %v12092
    %v12133 = vmul.f32 %v12030, %v12094
    %v12134 = vmul.f32 %v12034, %v12096
    %v12135 = vmul.f32 %v12038, %v12098
    %v12136 = vmul.f32 %v12042, %v12100
    %v12137 = vmul.f32 %v12046, %v12102
    %v12138 = vmul.f32 %v12050, %v12104
    %v12139 = vmul.f32 %v12054, %v12106
    %v12140 = vmul.f32 %v12058, %v12108
    %v12141 = vmul.f32 %v12062, %v12110
    %v12142 = vmul.f32 %v12066, %v12112
    %v12143 = vmul.f32 %v12070, %v12114
    %v12144 = vmul.f32 %v12074, %v12116
    %v12145 = vadd.f32 %v12010, %v12131
    %v12146 = vadd.f32 %v12011, %v12132
    %v12147 = vadd.f32 %v12012, %v12133
    %v12148 = vadd.f32 %v12013, %v12134
    %v12149 = vadd.f32 %v12014, %v12135
    %v12150 = vadd.f32 %v12015, %v12136
    %v12151 = vadd.f32 %v12016, %v12137
    %v12152 = vadd.f32 %v12017, %v12138
    %v12153 = vadd.f32 %v12018, %v12139
    %v12154 = vadd.f32 %v12019, %v12140
    %v12155 = vadd.f32 %v12020, %v12141
    %v12156 = vadd.f32 %v12021, %v12142
    %v12157 = vadd.f32 %v12022, %v12143
    %v12158 = vadd.f32 %v12023, %v12144
    %12159 = vset.pattern.permute.xlu0 13
    %12160 = vperm.xlu0 %12159, %v8831
    %v12161 = vpop.permute.xlu0 %12160
    %12163 = vset.pattern.permute.xlu0 13
    %12164 = vperm.xlu0 %12163, %v8832
    %v12165 = vpop.permute.xlu0 %12164
    %12167 = vset.pattern.permute.xlu0 13
    %12168 = vperm.xlu0 %12167, %v8833
    %v12169 = vpop.permute.xlu0 %12168
    %12171 = vset.pattern.permute.xlu0 13
    %12172 = vperm.xlu0 %12171, %v8834
    %v12173 = vpop.permute.xlu0 %12172
    %12175 = vset.pattern.permute.xlu0 13
    %12176 = vperm.xlu0 %12175, %v8835
    %v12177 = vpop.permute.xlu0 %12176
    %12179 = vset.pattern.permute.xlu0 13
    %12180 = vperm.xlu0 %12179, %v8836
    %v12181 = vpop.permute.xlu0 %12180
    %12183 = vset.pattern.permute.xlu0 13
    %12184 = vperm.xlu0 %12183, %v8837
    %v12185 = vpop.permute.xlu0 %12184
    %12187 = vset.pattern.permute.xlu0 13
    %12188 = vperm.xlu0 %12187, %v8838
    %v12189 = vpop.permute.xlu0 %12188
    %12191 = vset.pattern.permute.xlu0 13
    %12192 = vperm.xlu0 %12191, %v8839
    %v12193 = vpop.permute.xlu0 %12192
    %12195 = vset.pattern.permute.xlu0 13
    %12196 = vperm.xlu0 %12195, %v8840
    %v12197 = vpop.permute.xlu0 %12196
    %12199 = vset.pattern.permute.xlu0 13
    %12200 = vperm.xlu0 %12199, %v8841
    %v12201 = vpop.permute.xlu0 %12200
    %12203 = vset.pattern.permute.xlu0 13
    %12204 = vperm.xlu0 %12203, %v8842
    %v12205 = vpop.permute.xlu0 %12204
    %12207 = vset.pattern.permute.xlu0 13
    %12208 = vperm.xlu0 %12207, %v8843
    %v12209 = vpop.permute.xlu0 %12208
    %v12225 = vrot.slane %v10131, 7
    %v12226 = vrot.slane %v10132, 7
    %v12227 = vsel %vm151, %v12225, %v12226
    %v12228 = vrot.slane %v10133, 7
    %v12229 = vsel %vm151, %v12226, %v12228
    %v12230 = vrot.slane %v10134, 7
    %v12231 = vsel %vm151, %v12228, %v12230
    %v12232 = vrot.slane %v10135, 7
    %v12233 = vsel %vm151, %v12230, %v12232
    %v12234 = vrot.slane %v10136, 7
    %v12235 = vsel %vm151, %v12232, %v12234
    %v12236 = vrot.slane %v10137, 7
    %v12237 = vsel %vm151, %v12234, %v12236
    %v12238 = vrot.slane %v10138, 7
    %v12239 = vsel %vm151, %v12236, %v12238
    %v12240 = vrot.slane %v10139, 7
    %v12241 = vsel %vm151, %v12238, %v12240
    %v12242 = vrot.slane %v10140, 7
    %v12243 = vsel %vm151, %v12240, %v12242
    %v12244 = vrot.slane %v10141, 7
    %v12245 = vsel %vm151, %v12242, %v12244
    %v12246 = vrot.slane %v10142, 7
    %v12247 = vsel %vm151, %v12244, %v12246
    %v12248 = vrot.slane %v10143, 7
    %v12249 = vsel %vm151, %v12246, %v12248
    %v12250 = vrot.slane %v10144, 7
    %v12251 = vsel %vm151, %v12248, %v12250
    %v12266 = vmul.f32 %v10199, %v12225
    %v12267 = vmul.f32 %v12161, %v12227
    %v12268 = vmul.f32 %v12165, %v12229
    %v12269 = vmul.f32 %v12169, %v12231
    %v12270 = vmul.f32 %v12173, %v12233
    %v12271 = vmul.f32 %v12177, %v12235
    %v12272 = vmul.f32 %v12181, %v12237
    %v12273 = vmul.f32 %v12185, %v12239
    %v12274 = vmul.f32 %v12189, %v12241
    %v12275 = vmul.f32 %v12193, %v12243
    %v12276 = vmul.f32 %v12197, %v12245
    %v12277 = vmul.f32 %v12201, %v12247
    %v12278 = vmul.f32 %v12205, %v12249
    %v12279 = vmul.f32 %v12209, %v12251
    %v12280 = vadd.f32 %v12145, %v12266
    %v12281 = vadd.f32 %v12146, %v12267
    %v12282 = vadd.f32 %v12147, %v12268
    %v12283 = vadd.f32 %v12148, %v12269
    %v12284 = vadd.f32 %v12149, %v12270
    %v12285 = vadd.f32 %v12150, %v12271
    %v12286 = vadd.f32 %v12151, %v12272
    %v12287 = vadd.f32 %v12152, %v12273
    %v12288 = vadd.f32 %v12153, %v12274
    %v12289 = vadd.f32 %v12154, %v12275
    %v12290 = vadd.f32 %v12155, %v12276
    %v12291 = vadd.f32 %v12156, %v12277
    %v12292 = vadd.f32 %v12157, %v12278
    %v12293 = vadd.f32 %v12158, %v12279
    %12294 = vset.pattern.permute.xlu0 14
    %12295 = vperm.xlu0 %12294, %v8831
    %v12296 = vpop.permute.xlu0 %12295
    %12298 = vset.pattern.permute.xlu0 14
    %12299 = vperm.xlu0 %12298, %v8832
    %v12300 = vpop.permute.xlu0 %12299
    %12302 = vset.pattern.permute.xlu0 14
    %12303 = vperm.xlu0 %12302, %v8833
    %v12304 = vpop.permute.xlu0 %12303
    %12306 = vset.pattern.permute.xlu0 14
    %12307 = vperm.xlu0 %12306, %v8834
    %v12308 = vpop.permute.xlu0 %12307
    %12310 = vset.pattern.permute.xlu0 14
    %12311 = vperm.xlu0 %12310, %v8835
    %v12312 = vpop.permute.xlu0 %12311
    %12314 = vset.pattern.permute.xlu0 14
    %12315 = vperm.xlu0 %12314, %v8836
    %v12316 = vpop.permute.xlu0 %12315
    %12318 = vset.pattern.permute.xlu0 14
    %12319 = vperm.xlu0 %12318, %v8837
    %v12320 = vpop.permute.xlu0 %12319
    %12322 = vset.pattern.permute.xlu0 14
    %12323 = vperm.xlu0 %12322, %v8838
    %v12324 = vpop.permute.xlu0 %12323
    %12326 = vset.pattern.permute.xlu0 14
    %12327 = vperm.xlu0 %12326, %v8839
    %v12328 = vpop.permute.xlu0 %12327
    %12330 = vset.pattern.permute.xlu0 14
    %12331 = vperm.xlu0 %12330, %v8840
    %v12332 = vpop.permute.xlu0 %12331
    %12334 = vset.pattern.permute.xlu0 14
    %12335 = vperm.xlu0 %12334, %v8841
    %v12336 = vpop.permute.xlu0 %12335
    %12338 = vset.pattern.permute.xlu0 14
    %12339 = vperm.xlu0 %12338, %v8842
    %v12340 = vpop.permute.xlu0 %12339
    %12342 = vset.pattern.permute.xlu0 14
    %12343 = vperm.xlu0 %12342, %v8843
    %v12344 = vpop.permute.xlu0 %12343
    %v12360 = vrot.slane %v10230, 7
    %v12361 = vrot.slane %v10231, 7
    %v12362 = vsel %vm151, %v12360, %v12361
    %v12363 = vrot.slane %v10232, 7
    %v12364 = vsel %vm151, %v12361, %v12363
    %v12365 = vrot.slane %v10233, 7
    %v12366 = vsel %vm151, %v12363, %v12365
    %v12367 = vrot.slane %v10234, 7
    %v12368 = vsel %vm151, %v12365, %v12367
    %v12369 = vrot.slane %v10235, 7
    %v12370 = vsel %vm151, %v12367, %v12369
    %v12371 = vrot.slane %v10236, 7
    %v12372 = vsel %vm151, %v12369, %v12371
    %v12373 = vrot.slane %v10237, 7
    %v12374 = vsel %vm151, %v12371, %v12373
    %v12375 = vrot.slane %v10238, 7
    %v12376 = vsel %vm151, %v12373, %v12375
    %v12377 = vrot.slane %v10239, 7
    %v12378 = vsel %vm151, %v12375, %v12377
    %v12379 = vrot.slane %v10240, 7
    %v12380 = vsel %vm151, %v12377, %v12379
    %v12381 = vrot.slane %v10241, 7
    %v12382 = vsel %vm151, %v12379, %v12381
    %v12383 = vrot.slane %v10242, 7
    %v12384 = vsel %vm151, %v12381, %v12383
    %v12385 = vrot.slane %v10243, 7
    %v12386 = vsel %vm151, %v12383, %v12385
    %v12401 = vmul.f32 %v10298, %v12360
    %v12402 = vmul.f32 %v12296, %v12362
    %v12403 = vmul.f32 %v12300, %v12364
    %v12404 = vmul.f32 %v12304, %v12366
    %v12405 = vmul.f32 %v12308, %v12368
    %v12406 = vmul.f32 %v12312, %v12370
    %v12407 = vmul.f32 %v12316, %v12372
    %v12408 = vmul.f32 %v12320, %v12374
    %v12409 = vmul.f32 %v12324, %v12376
    %v12410 = vmul.f32 %v12328, %v12378
    %v12411 = vmul.f32 %v12332, %v12380
    %v12412 = vmul.f32 %v12336, %v12382
    %v12413 = vmul.f32 %v12340, %v12384
    %v12414 = vmul.f32 %v12344, %v12386
    %v12415 = vadd.f32 %v12280, %v12401
    %v12416 = vadd.f32 %v12281, %v12402
    %v12417 = vadd.f32 %v12282, %v12403
    %v12418 = vadd.f32 %v12283, %v12404
    %v12419 = vadd.f32 %v12284, %v12405
    %v12420 = vadd.f32 %v12285, %v12406
    %v12421 = vadd.f32 %v12286, %v12407
    %v12422 = vadd.f32 %v12287, %v12408
    %v12423 = vadd.f32 %v12288, %v12409
    %v12424 = vadd.f32 %v12289, %v12410
    %v12425 = vadd.f32 %v12290, %v12411
    %v12426 = vadd.f32 %v12291, %v12412
    %v12427 = vadd.f32 %v12292, %v12413
    %v12428 = vadd.f32 %v12293, %v12414
    %vm12443 = vcmask 1046528
    %v12444 = vrot.slane %v12415, 1
    %v12445 = vrot.slane %v12416, 1
    %v12446 = vsel %vm12443, %v12444, %v12445
    %v12447 = vrot.slane %v12417, 1
    %v12448 = vsel %vm12443, %v12445, %v12447
    %v12449 = vrot.slane %v12418, 1
    %v12450 = vsel %vm12443, %v12447, %v12449
    %v12451 = vrot.slane %v12419, 1
    %v12452 = vsel %vm12443, %v12449, %v12451
    %v12453 = vrot.slane %v12420, 1
    %v12454 = vsel %vm12443, %v12451, %v12453
    %v12455 = vrot.slane %v12421, 1
    %v12456 = vsel %vm12443, %v12453, %v12455
    %v12457 = vrot.slane %v12422, 1
    %v12458 = vsel %vm12443, %v12455, %v12457
    %v12459 = vrot.slane %v12423, 1
    %v12460 = vsel %vm12443, %v12457, %v12459
    %v12461 = vrot.slane %v12424, 1
    %v12462 = vsel %vm12443, %v12459, %v12461
    %v12463 = vrot.slane %v12425, 1
    %v12464 = vsel %vm12443, %v12461, %v12463
    %v12465 = vrot.slane %v12426, 1
    %v12466 = vsel %vm12443, %v12463, %v12465
    %v12467 = vrot.slane %v12427, 1
    %v12468 = vsel %vm12443, %v12465, %v12467
    %v12469 = vrot.slane %v12428, 1
    %v12470 = vsel %vm12443, %v12467, %v12469
    %v12484 = vsel %vm151, %v12469, 0
    %12486 = vmatprep.subr.mxu0 0.0
    %12487 = vmatpush1.msra.mxu0 %v12446
    %12488 = vmatprep.subr.mxu0 0.0
    %12489 = vmatpush1.msra.mxu0 %v12448
    %12490 = vmatprep.subr.mxu0 0.0
    %12491 = vmatpush1.msra.mxu0 %v12450
    %12492 = vmatprep.subr.mxu0 0.0
    %12493 = vmatpush1.msra.mxu0 %v12452
    %12494 = vmatprep.subr.mxu0 0.0
    %12495 = vmatpush1.msra.mxu0 %v12454
    %12496 = vmatprep.subr.mxu0 0.0
    %12497 = vmatpush1.msra.mxu0 %v12456
    %12498 = vmatprep.subr.mxu0 0.0
    %12499 = vmatpush1.msra.mxu0 %v12458
    %12500 = vmatprep.subr.mxu0 0.0
    %12501 = vmatpush1.msra.mxu0 %v12460
    %12502 = vmatprep.subr.mxu0 0.0
    %12503 = vmatpush1.msra.mxu0 %v12462
    %12504 = vmatprep.subr.mxu0 0.0
    %12505 = vmatpush1.msra.mxu0 %v12464
    %12506 = vmatprep.subr.mxu0 0.0
    %12507 = vmatpush1.msra.mxu0 %v12466
    %12508 = vmatprep.subr.mxu0 0.0
    %12509 = vmatpush1.msra.mxu0 %v12468
    %12510 = vmatprep.subr.mxu0 0.0
    %12511 = vmatpush1.msra.mxu0 %v12470
    %12512 = vmatprep.subr.mxu0 0.0
    %12513 = vmatpush1.msra.mxu0 %v12484
    %12514 = vmatprep.subr.mxu0 0.0
    %12515 = vmatpush1.msra.mxu0 0.0
    %12516 = vmatprep.subr.mxu0 0.0
    %12517 = vmatpush1.msra.mxu0 0.0
    %12518 = vmatprep.subr.mxu0 0.0
    %12519 = vmatpush1.msra.mxu0 0.0
    %12520 = vmatprep.subr.mxu0 0.0
    %12521 = vmatpush1.msra.mxu0 0.0
    %12522 = vmatprep.subr.mxu0 0.0
    %12523 = vmatpush1.msra.mxu0 0.0
    %12524 = vmatprep.subr.mxu0 0.0
    %12525 = vmatpush1.msra.mxu0 0.0
    %12526 = vmatprep.subr.mxu0 0.0
    %12527 = vmatpush1.msra.mxu0 0.0
    %12528 = vmatprep.subr.mxu0 0.0
    %12529 = vmatpush1.msra.mxu0 0.0
    %12530 = vmatprep.subr.mxu0 0.0
    %12531 = vmatpush1.msra.mxu0 0.0
    %12532 = vmatprep.subr.mxu0 0.0
    %12533 = vmatpush1.msra.mxu0 0.0
    %12534 = vmatprep.subr.mxu0 0.0
    %12535 = vmatpush1.msra.mxu0 0.0
    %12536 = vmatprep.subr.mxu0 0.0
    %12537 = vmatpush1.msra.mxu0 0.0
    %12538 = vmatprep.subr.mxu0 0.0
    %12539 = vmatpush1.msra.mxu0 0.0
    %12540 = vmatprep.subr.mxu0 0.0
    %12541 = vmatpush1.msra.mxu0 0.0
    %12542 = vmatprep.subr.mxu0 0.0
    %12543 = vmatpush1.msra.mxu0 0.0
    %12544 = vmatprep.subr.mxu0 0.0
    %12545 = vmatpush1.msra.mxu0 0.0
    %12546 = vmatprep.subr.mxu0 0.0
    %12547 = vmatpush1.msra.mxu0 0.0
    %12548 = vmatprep.subr.mxu0 0.0
    %12549 = vmatpush1.msra.mxu0 0.0
    %12550 = vmatprep.mubr.f32.mxu0 0.0
    %12551 = vmatmul.mubr.f32.gmra.mrb[0].mxu0 %v10330
    %v12552 = vpop.f32.mrb[0].mxu0
    %v12553 = vadd.f32 0.0, %v12552
    %v12554 = vpop.f32.mrb[0].mxu0
    %12555 = vdwg.mxu0
    %v12557 = vrot.slane %v12553, 7
    %v12559 = vsel %vm151, %v10402, %v12557
    %v12560 = vld [vmem:[%s6] sm:$0x1]
    %v12562 = vlaneseq
    %v12563 = vshrl.u32 %v12562, 7
    %v12564 = vsub.s32 0, %v12563
    %v12565 = vrot.slane %v12560, %v12564
    %v12567 = vadd.f32 %v12559, %v12565
    %v12568 = vmax.f32 %v12567, 0.0
    %v12569 = vld [vmem:[%s7] sm:$0xff]
    %v12570 = vld [vmem:[%s7 + $0x8] sm:$0xff]
    %v12571 = vld [vmem:[%s7 + $0x10] sm:$0xff]
    %v12572 = vld [vmem:[%s7 + $0x18] sm:$0xff]
    %v12573 = vld [vmem:[%s7 + $0x20] sm:$0xff]
    %v12574 = vld [vmem:[%s7 + $0x28] sm:$0xff]
    %v12575 = vld [vmem:[%s7 + $0x30] sm:$0xff]
    %v12576 = vld [vmem:[%s7 + $0x38] sm:$0xff]
    %v12577 = vld [vmem:[%s7 + $0x40] sm:$0xff]
    %v12578 = vld [vmem:[%s7 + $0x48] sm:$0xff]
    %v12579 = vld [vmem:[%s7 + $0x50] sm:$0xff]
    %v12580 = vld [vmem:[%s7 + $0x58] sm:$0xff]
    %v12581 = vld [vmem:[%s7 + $0x60] sm:$0xff]
    %v12582 = vld [vmem:[%s7 + $0x68] sm:$0xff]
    %v12583 = vld [vmem:[%s7 + $0x70] sm:$0xff]
    %v12584 = vld [vmem:[%s8] sm:$0x1]
    %v12586 = vlaneseq
    %v12587 = vshrl.u32 %v12586, 7
    %v12588 = vsub.s32 0, %v12587
    %v12589 = vrot.slane %v12584, %v12588
    %vm12591 = vcmask 982016
    %v12593 = vsel %vm12591, %v12568, 0
    %12595 = vmatprep.subr.mxu0 0.0
    %12596 = vmatpush1.msra.mxu0 %v12569
    %12597 = vmatprep.subr.mxu0 0.0
    %12598 = vmatpush1.msra.mxu0 %v12570
    %12599 = vmatprep.subr.mxu0 0.0
    %12600 = vmatpush1.msra.mxu0 %v12571
    %12601 = vmatprep.subr.mxu0 0.0
    %12602 = vmatpush1.msra.mxu0 %v12572
    %12603 = vmatprep.subr.mxu0 0.0
    %12604 = vmatpush1.msra.mxu0 %v12573
    %12605 = vmatprep.subr.mxu0 0.0
    %12606 = vmatpush1.msra.mxu0 %v12574
    %12607 = vmatprep.subr.mxu0 0.0
    %12608 = vmatpush1.msra.mxu0 %v12575
    %12609 = vmatprep.subr.mxu0 0.0
    %12610 = vmatpush1.msra.mxu0 %v12576
    %12611 = vmatprep.subr.mxu0 0.0
    %12612 = vmatpush1.msra.mxu0 %v12577
    %12613 = vmatprep.subr.mxu0 0.0
    %12614 = vmatpush1.msra.mxu0 %v12578
    %12615 = vmatprep.subr.mxu0 0.0
    %12616 = vmatpush1.msra.mxu0 %v12579
    %12617 = vmatprep.subr.mxu0 0.0
    %12618 = vmatpush1.msra.mxu0 %v12580
    %12619 = vmatprep.subr.mxu0 0.0
    %12620 = vmatpush1.msra.mxu0 %v12581
    %12621 = vmatprep.subr.mxu0 0.0
    %12622 = vmatpush1.msra.mxu0 %v12582
    %12623 = vmatprep.subr.mxu0 0.0
    %12624 = vmatpush1.msra.mxu0 %v12583
    %12625 = vmatprep.subr.mxu0 0.0
    %12626 = vmatpush1.msra.mxu0 0.0
    %12627 = vmatprep.subr.mxu0 0.0
    %12628 = vmatpush1.msra.mxu0 0.0
    %12629 = vmatprep.subr.mxu0 0.0
    %12630 = vmatpush1.msra.mxu0 0.0
    %12631 = vmatprep.subr.mxu0 0.0
    %12632 = vmatpush1.msra.mxu0 0.0
    %12633 = vmatprep.subr.mxu0 0.0
    %12634 = vmatpush1.msra.mxu0 0.0
    %12635 = vmatprep.subr.mxu0 0.0
    %12636 = vmatpush1.msra.mxu0 0.0
    %12637 = vmatprep.subr.mxu0 0.0
    %12638 = vmatpush1.msra.mxu0 0.0
    %12639 = vmatprep.subr.mxu0 0.0
    %12640 = vmatpush1.msra.mxu0 0.0
    %12641 = vmatprep.subr.mxu0 0.0
    %12642 = vmatpush1.msra.mxu0 0.0
    %12643 = vmatprep.subr.mxu0 0.0
    %12644 = vmatpush1.msra.mxu0 0.0
    %12645 = vmatprep.subr.mxu0 0.0
    %12646 = vmatpush1.msra.mxu0 0.0
    %12647 = vmatprep.subr.mxu0 0.0
    %12648 = vmatpush1.msra.mxu0 0.0
    %12649 = vmatprep.subr.mxu0 0.0
    %12650 = vmatpush1.msra.mxu0 0.0
    %12651 = vmatprep.subr.mxu0 0.0
    %12652 = vmatpush1.msra.mxu0 0.0
    %12653 = vmatprep.subr.mxu0 0.0
    %12654 = vmatpush1.msra.mxu0 0.0
    %12655 = vmatprep.subr.mxu0 0.0
    %12656 = vmatpush1.msra.mxu0 0.0
    %12657 = vmatprep.subr.mxu0 0.0
    %12658 = vmatpush1.msra.mxu0 0.0
    %12659 = vmatprep.mubr.f32.mxu0 0.0
    %12660 = vmatmul.mubr.f32.gmra.mrb[0].mxu0 %v12593
    %v12661 = vpop.f32.mrb[0].mxu0
    %v12662 = vadd.f32 %v12589, %v12661
    %v12663 = vpop.f32.mrb[0].mxu0
    %12664 = vdwg.mxu0
    %v12665 = vmax.f32 %v12662, 0.0
    %v12666 = vld [vmem:[%s9] sm:$0xff]
    %v12667 = vld [vmem:[%s9 + $0x8] sm:$0xff]
    %v12668 = vld [vmem:[%s9 + $0x10] sm:$0xff]
    %v12669 = vld [vmem:[%s9 + $0x18] sm:$0xff]
    %v12670 = vld [vmem:[%s9 + $0x20] sm:$0xff]
    %v12671 = vld [vmem:[%s9 + $0x28] sm:$0xff]
    %v12672 = vld [vmem:[%s9 + $0x30] sm:$0xff]
    %v12673 = vld [vmem:[%s9 + $0x38] sm:$0xff]
    %v12674 = vld [vmem:[%s9 + $0x40] sm:$0xff]
    %v12675 = vld [vmem:[%s9 + $0x48] sm:$0xff]
    %v12676 = vld [vmem:[%s9 + $0x50] sm:$0xf]
    %v12677 = vld [vmem:[%s10] sm:$0x1]
    %v12679 = vlaneseq
    %v12680 = vshrl.u32 %v12679, 7
    %v12681 = vsub.s32 0, %v12680
    %v12682 = vrot.slane %v12677, %v12681
    %vm12684 = vcmask 687104
    %v12686 = vsel %vm12684, %v12665, 0
    %vm12688 = vcmask 1043456
    %v12690 = vsel %vm12688, %v12676, 0
    %12692 = vmatprep.subr.mxu0 0.0
    %12693 = vmatpush1.msra.mxu0 %v12666
    %12694 = vmatprep.subr.mxu0 0.0
    %12695 = vmatpush1.msra.mxu0 %v12667
    %12696 = vmatprep.subr.mxu0 0.0
    %12697 = vmatpush1.msra.mxu0 %v12668
    %12698 = vmatprep.subr.mxu0 0.0
    %12699 = vmatpush1.msra.mxu0 %v12669
    %12700 = vmatprep.subr.mxu0 0.0
    %12701 = vmatpush1.msra.mxu0 %v12670
    %12702 = vmatprep.subr.mxu0 0.0
    %12703 = vmatpush1.msra.mxu0 %v12671
    %12704 = vmatprep.subr.mxu0 0.0
    %12705 = vmatpush1.msra.mxu0 %v12672
    %12706 = vmatprep.subr.mxu0 0.0
    %12707 = vmatpush1.msra.mxu0 %v12673
    %12708 = vmatprep.subr.mxu0 0.0
    %12709 = vmatpush1.msra.mxu0 %v12674
    %12710 = vmatprep.subr.mxu0 0.0
    %12711 = vmatpush1.msra.mxu0 %v12675
    %12712 = vmatprep.subr.mxu0 0.0
    %12713 = vmatpush1.msra.mxu0 %v12690
    %12714 = vmatprep.subr.mxu0 0.0
    %12715 = vmatpush1.msra.mxu0 0.0
    %12716 = vmatprep.subr.mxu0 0.0
    %12717 = vmatpush1.msra.mxu0 0.0
    %12718 = vmatprep.subr.mxu0 0.0
    %12719 = vmatpush1.msra.mxu0 0.0
    %12720 = vmatprep.subr.mxu0 0.0
    %12721 = vmatpush1.msra.mxu0 0.0
    %12722 = vmatprep.subr.mxu0 0.0
    %12723 = vmatpush1.msra.mxu0 0.0
    %12724 = vmatprep.subr.mxu0 0.0
    %12725 = vmatpush1.msra.mxu0 0.0
    %12726 = vmatprep.subr.mxu0 0.0
    %12727 = vmatpush1.msra.mxu0 0.0
    %12728 = vmatprep.subr.mxu0 0.0
    %12729 = vmatpush1.msra.mxu0 0.0
    %12730 = vmatprep.subr.mxu0 0.0
    %12731 = vmatpush1.msra.mxu0 0.0
    %12732 = vmatprep.subr.mxu0 0.0
    %12733 = vmatpush1.msra.mxu0 0.0
    %12734 = vmatprep.subr.mxu0 0.0
    %12735 = vmatpush1.msra.mxu0 0.0
    %12736 = vmatprep.subr.mxu0 0.0
    %12737 = vmatpush1.msra.mxu0 0.0
    %12738 = vmatprep.subr.mxu0 0.0
    %12739 = vmatpush1.msra.mxu0 0.0
    %12740 = vmatprep.subr.mxu0 0.0
    %12741 = vmatpush1.msra.mxu0 0.0
    %12742 = vmatprep.subr.mxu0 0.0
    %12743 = vmatpush1.msra.mxu0 0.0
    %12744 = vmatprep.subr.mxu0 0.0
    %12745 = vmatpush1.msra.mxu0 0.0
    %12746 = vmatprep.subr.mxu0 0.0
    %12747 = vmatpush1.msra.mxu0 0.0
    %12748 = vmatprep.subr.mxu0 0.0
    %12749 = vmatpush1.msra.mxu0 0.0
    %12750 = vmatprep.subr.mxu0 0.0
    %12751 = vmatpush1.msra.mxu0 0.0
    %12752 = vmatprep.subr.mxu0 0.0
    %12753 = vmatpush1.msra.mxu0 0.0
    %12754 = vmatprep.subr.mxu0 0.0
    %12755 = vmatpush1.msra.mxu0 0.0
    %12756 = vmatprep.mubr.f32.mxu0 0.0
    %12757 = vmatmul.mubr.f32.gmra.mrb[0].mxu0 %v12686
    %v12758 = vpop.f32.mrb[0].mxu0
    %v12759 = vadd.f32 %v12682, %v12758
    %v12760 = vpop.f32.mrb[0].mxu0
    %12761 = vdwg.mxu0
    %vm12762 = vcmask 17408
    %12763 = vst.msk [vmem:[#allocation2] sm:$0x3] %vm12762, %v12759
    // Predicated region
    $region46: #{lenet_forward_pallas.1} parent=1 // pred_check
      _
    $region47: #{lenet_forward_pallas.1} parent=1 // pred_check_branch
      %12765 = sbr.rel (0) target = $region49
    $region48: #{lenet_forward_pallas.1} parent=1 // pred_region
      %s12767 = ssub.s32 32, 32
      %12768 = vsyncadd [#allocation3], %s12767
      %s12770 = sshll.u32 [#allocation2], 4
      %s12771 = int_to_ptr.vmem [resolvable:$true] %s12770
      %12773 = dma.vmem_to_hbm [thread:$0]  %s12771, 32, %s11, [#allocation3]
    $region49: #{lenet_forward_pallas.1} parent=1 // pred_fallthru
      _
    // Predicated region
    $region50: #{lenet_forward_pallas.1} parent=1 // pred_check
      _
    $region51: #{lenet_forward_pallas.1} parent=1 // pred_check_branch
      %12775 = sbr.rel (0) target = $region53
    $region52: #{lenet_forward_pallas.1} parent=1 // pred_region
      %12776 = dma.done [#allocation3], 32
    $region53: #{lenet_forward_pallas.1} parent=1 // pred_fallthru
      _
    %12777 = vsyncpa [#allocation3], 1

</llo_original>
